<compile_context>
chip_gen: v7x
topology: tpu7x:2x2x1
jax: 0.10.0
libtpu: 0.0.40
codegen_flags: <defaults>
</compile_context>

<pallas_src>
import math

import numpy as np
import jax
import jax.numpy as jnp
from jax import lax
from jax.experimental import pallas as pl
from jax.experimental.pallas import tpu as pltpu

# ----------------------------- configuration --------------------------------
BATCH        = 2
IN_CHANS     = 3
IMG          = 32
NUM_STAGE    = 2
SCALE_DIMS   = (16, 32)      # encoder.scale_dims
DOWN_FACTORS = (4, 2)        # per-stage downsample strides
MLP_RATIO    = 2
D_MODEL      = 32
NUM_QUERIES  = 8
NUM_CLASSES  = 16
SCALE_SKIP   = 0
FFN_DIM      = 2 * D_MODEL
LN_EPS       = 1e-5
NEG_INF      = -1e9

# derived static sizes
H1 = W1 = IMG // DOWN_FACTORS[0]        # 8
L1 = H1 * W1                            # 64
H2 = W2 = H1 // DOWN_FACTORS[1]         # 4
L2 = H2 * W2                            # 16
C1, C2 = SCALE_DIMS
FF2 = DOWN_FACTORS[1] ** 2              # 4 patch positions for stage-2 embed
BL1 = BATCH * L1                        # 128  (batch-flat stage-1 tokens)
BL2 = BATCH * L2                        # 32
BQ  = BATCH * NUM_QUERIES               # 16

# neighbor enumeration order shared by the host-side weight builder and the
# in-kernel roll loop (must match).
_NEIGHBORS = [(di, dj) for di in (-1, 0, 1) for dj in (-1, 0, 1)
              if not (di == 0 and dj == 0)]


# ----------------------------- shared math -----------------------------------
def _ln(x, g, b):
    mu = jnp.mean(x, axis=-1, keepdims=True)
    var = jnp.mean(jnp.square(x - mu), axis=-1, keepdims=True)
    return (x - mu) * lax.rsqrt(var + LN_EPS) * g + b


def _im2col(x, f):
    # (B, H, W, C) -> (B, (H/f)*(W/f), f*f*C), patch vector ordered (di, dj, c)
    B, H, W, C = x.shape
    ph, pw = H // f, W // f
    xp = x.reshape(B, ph, f, pw, f, C).transpose(0, 1, 3, 2, 4, 5)
    return xp.reshape(B, ph * pw, f * f * C)


# ----------------------------- host-side constants ----------------------------
def _pool_weight_block(H, W, B):
    # Per-token weights for the 3x3 avg-pool residual (count_include_pad=False)
    # expressed as shifts: column 0 weights the center (1/cnt - 1), columns
    # 1..8 weight the rolled neighbors (mask/cnt).  Handles image borders AND
    # batch boundaries in the batch-flat (B*H*W, C) layout.
    L = H * W
    out = np.zeros((B * L, 1 + len(_NEIGHBORS)), np.float32)
    for b in range(B):
        for i in range(H):
            for j in range(W):
                p = b * L + i * W + j
                valid = [(di, dj) for (di, dj) in _NEIGHBORS
                         if 0 <= i + di < H and 0 <= j + dj < W]
                cnt = float(len(valid) + 1)
                out[p, 0] = 1.0 / cnt - 1.0
                for k, (di, dj) in enumerate(_NEIGHBORS):
                    if (di, dj) in valid:
                        out[p, k + 1] = 1.0 / cnt
    return out


def _gather_matrices(H, W, f, B):
    # Stage-2 im2col as FF2 block-diagonal row-selection matrices stacked along
    # rows: shape (f*f*B*L2, B*L1).  Row block j selects token (pi*f+di, pj*f+dj)
    # for j = di*f + dj, matching the _im2col ordering above.
    ph, pw = H // f, W // f
    l1, l2 = H * W, ph * pw
    g = np.zeros((f * f, l2, l1), np.float32)
    for pi in range(ph):
        for pj in range(pw):
            p = pi * pw + pj
            for di in range(f):
                for dj in range(f):
                    g[di * f + dj, p, (pi * f + di) * W + (pj * f + dj)] = 1.0
    eyeb = np.eye(B, dtype=np.float32)
    return np.concatenate([np.kron(eyeb, g[k]) for k in range(f * f)], axis=0)


def _attn_mask(B, Q, L):
    # additive bias blocking cross-batch attention in the batch-flat layout
    rq = np.arange(B * Q) // Q
    rl = np.arange(B * L) // L
    return np.where(rq[:, None] == rl[None, :], 0.0, NEG_INF).astype(np.float32)


def sine_pos_embed(H, W, d_model, temperature=10000.0, eps=1e-6):
    # DETR-style normalized sine positional encoding, returned as (H*W, d_model)
    nf = d_model // 2
    y = jnp.arange(1, H + 1, dtype=jnp.float32)[:, None] * jnp.ones((1, W), jnp.float32)
    x = jnp.ones((H, 1), jnp.float32) * jnp.arange(1, W + 1, dtype=jnp.float32)[None, :]
    scale = 2.0 * math.pi
    y = y / (H + eps) * scale
    x = x / (W + eps) * scale
    dim_t = temperature ** (2.0 * (jnp.arange(nf) // 2).astype(jnp.float32) / nf)
    px = x[..., None] / dim_t
    py = y[..., None] / dim_t
    px = jnp.stack([jnp.sin(px[..., 0::2]), jnp.cos(px[..., 1::2])], axis=-1).reshape(H, W, nf)
    py = jnp.stack([jnp.sin(py[..., 0::2]), jnp.cos(py[..., 1::2])], axis=-1).reshape(H, W, nf)
    return jnp.concatenate([py, px], axis=-1).reshape(H * W, d_model)


# ----------------------------- slab packing -----------------------------------
def _pad8(n):
    return -(-n // 8) * 8


class _Packer:
    """Packs 2-D parameter blocks into one (rows, 128) slab, 8-row aligned."""

    def __init__(self):
        self._chunks = []
        self._off = {}
        self._rows = 0

    def add(self, name, arr):
        arr = np.asarray(arr, np.float32)
        if arr.ndim == 1:
            arr = arr[None, :]
        r, c = arr.shape
        assert c <= 128, (name, arr.shape)
        rp = _pad8(r)
        buf = np.zeros((rp, 128), np.float32)
        buf[:r, :c] = arr
        self._chunks.append(buf)
        self._off[name] = (self._rows, r, c)
        self._rows += rp

    def finalize(self, dtype):
        slab = np.concatenate(self._chunks, axis=0)
        return jnp.asarray(slab).astype(dtype), self._off


def _pack_all(params):
    wpk = _Packer()   # bf16 MXU weights (token-M matmuls)
    fpk = _Packer()   # f32 everything else

    dn, st, ft, dec = params['down'], params['stage'], params['feats_trans'], params['decoder']

    # encoder patch embeds + gather constant
    wpk.add('down0_w', dn[0]['w'])
    wpk.add('down1_w', dn[1]['w'])
    wpk.add('gsel', _gather_matrices(H1, W1, DOWN_FACTORS[1], BATCH))
    fpk.add('down0_b', dn[0]['b'])
    fpk.add('down1_b', dn[1]['b'])

    # MetaFormer stages
    for s in range(NUM_STAGE):
        wpk.add(f'st{s}_w1', st[s]['w1'])
        wpk.add(f'st{s}_w2', st[s]['w2'])
        for nm in ('ln1_g', 'ln1_b', 'ln2_g', 'ln2_b', 'b1', 'b2'):
            fpk.add(f'st{s}_{nm}', st[s][nm])
    fpk.add('pool0', _pool_weight_block(H1, W1, BATCH))
    fpk.add('pool1', _pool_weight_block(H2, W2, BATCH))

    # feats_trans
    for s in range(len(ft)):
        wpk.add(f'ft{s}_w', ft[s]['w'])
        for nm in ('g1', 'b1', 'bw', 'g2', 'b2'):
            fpk.add(f'ft{s}_{nm}', ft[s][nm])

    # decoder (fused K/V; pos @ Wk folded to an additive constant)
    fpk.add('qinit', np.tile(np.asarray(params['query_embed']), (BATCH, 1)))
    spatial = ((H1, W1, L1), (H2, W2, L2))
    for s, d in enumerate(dec):
        Hs, Ws, Ls = spatial[s]
        wpk.add(f'dec{s}_wkv',
                np.concatenate([np.asarray(d['wk']), np.asarray(d['wv'])], axis=1))
        pe = np.asarray(sine_pos_embed(Hs, Ws, D_MODEL))
        fpk.add(f'dec{s}_posk', np.tile(pe @ np.asarray(d['wk']), (BATCH, 1)))
        fpk.add(f'dec{s}_mask', _attn_mask(BATCH, NUM_QUERIES, Ls))
        for nm in ('wq', 'wo', 'w1', 'w2', 'g1', 'b1', 'bf1', 'bf2', 'g2', 'b2'):
            fpk.add(f'dec{s}_{nm}', d[nm])

    # cls head + per-batch segment-sum matrix for the softmax-over-queries head
    fpk.add('cls_w', params['cls_head']['w'])
    fpk.add('cls_b', params['cls_head']['b'])
    seg = np.zeros((BATCH, BQ), np.float32)
    for b in range(BATCH):
        seg[b, b * NUM_QUERIES:(b + 1) * NUM_QUERIES] = 1.0
    fpk.add('segsum', seg)

    wslab, woff = wpk.finalize(jnp.bfloat16)
    fslab, foff = fpk.finalize(jnp.float32)
    return wslab, fslab, woff, foff


# ----------------------------- the fused Pallas kernel ------------------------
def _make_kernel(woff, foff):
    def kernel(xp_ref, w_ref, f_ref, o_ref):
        f32, bf16 = jnp.float32, jnp.bfloat16

        def W(name):                       # bf16 matmul weight slice
            off, r, c = woff[name]
            return w_ref[off:off + r, :c]

        def F(name):                       # f32 parameter / constant slice
            off, r, c = foff[name]
            return f_ref[off:off + r, :c]

        def mxdot(a, b):                   # bf16 operands, f32 accumulation
            return jnp.dot(a.astype(bf16), b.astype(bf16), preferred_element_type=f32)

        def fdot(a, b):                    # tiny query-side matmuls stay f32
            return jnp.dot(a, b, preferred_element_type=f32)

        # ----- encoder stage 1: patch-embed on batch-flat im2col tokens -----
        x = mxdot(xp_ref[...], W('down0_w')) + F('down0_b')          # (BL1, C1)

        def pool_mix(x, stage, width):
            # avgpool3x3(LN(x)) - LN(x) via 8 static token-axis rolls + masked
            # per-token weight columns (no constant matmul).
            y = _ln(x, F(f'st{stage}_ln1_g'), F(f'st{stage}_ln1_b'))
            pw = F(f'pool{stage}')                                   # (rows, 9)
            acc = y * pw[:, 0:1]
            for k, (di, dj) in enumerate(_NEIGHBORS):
                d = di * width + dj
                acc = acc + jnp.roll(y, -d, axis=0) * pw[:, k + 1:k + 2]
            return x + acc

        def mlp(x, stage):
            y = _ln(x, F(f'st{stage}_ln2_g'), F(f'st{stage}_ln2_b'))
            h = jax.nn.gelu(mxdot(y, W(f'st{stage}_w1')) + F(f'st{stage}_b1'),
                            approximate=True)
            return x + mxdot(h, W(f'st{stage}_w2')) + F(f'st{stage}_b2')

        x1 = mlp(pool_mix(x, 0, W1), 0)                              # (BL1, C1)

        # ----- encoder stage 2: gather matmul + lane concat + single embed -----
        G = mxdot(W('gsel'), x1)                                     # (FF2*BL2, C1)
        Gcat = jnp.concatenate([G[j * BL2:(j + 1) * BL2, :] for j in range(FF2)],
                               axis=1)                               # (BL2, FF2*C1)
        x = mxdot(Gcat, W('down1_w')) + F('down1_b')                 # (BL2, C2)
        x2 = mlp(pool_mix(x, 1, W2), 1)                              # (BL2, C2)

        # ----- feats_trans per scale: LayerNorm -> Linear -> LayerNorm -----
        def ftrans(xs, s):
            y = _ln(xs, F(f'ft{s}_g1'), F(f'ft{s}_b1'))
            y = mxdot(y, W(f'ft{s}_w')) + F(f'ft{s}_bw')
            return _ln(y, F(f'ft{s}_g2'), F(f'ft{s}_b2'))

        mems = (ftrans(x1, 0), ftrans(x2, 1))

        # ----- decoder: single-head cross-attn (+pos on keys) + FFN per scale -----
        q = F('qinit')                                               # (BQ, D)
        inv_sqrt_d = 1.0 / math.sqrt(D_MODEL)
        for s, mem in enumerate(mems):
            qp = fdot(q, F(f'dec{s}_wq'))                            # (BQ, D)
            kv = mxdot(mem, W(f'dec{s}_wkv'))                        # (BL, 2D)
            kp = kv[:, :D_MODEL] + F(f'dec{s}_posk')                 # (mem+pos) @ Wk
            vp = kv[:, D_MODEL:]
            sc = lax.dot_general(qp, kp, (((1,), (1,)), ((), ())),
                                 preferred_element_type=f32)         # (BQ, BL)
            sc = sc * inv_sqrt_d + F(f'dec{s}_mask')
            e = jnp.exp(sc - jnp.max(sc, axis=-1, keepdims=True))
            attn = e * pl.reciprocal(jnp.sum(e, axis=-1, keepdims=True), approx=True)
            ctx = fdot(fdot(attn, vp), F(f'dec{s}_wo'))
            xq = _ln(q + ctx, F(f'dec{s}_g1'), F(f'dec{s}_b1'))
            h = jax.nn.gelu(fdot(xq, F(f'dec{s}_w1')) + F(f'dec{s}_bf1'),
                            approximate=True)
            h = fdot(h, F(f'dec{s}_w2')) + F(f'dec{s}_bf2')
            q = _ln(xq + h, F(f'dec{s}_g2'), F(f'dec{s}_b2'))

        # ----- cls head + softmax-over-queries weighted sum (vectorized) -----
        lg = fdot(q, F('cls_w')) + F('cls_b')                        # (BQ, CLS)
        # Per-class global max is constant within every batch segment, so the
        # segment softmax is unchanged; exact division for the final head.
        m = jnp.max(lg, axis=0, keepdims=True)
        e = jnp.exp(lg - m)
        seg = F('segsum')                                            # (B, BQ)
        num = fdot(seg, lg * e)                                      # (B, CLS)
        den = fdot(seg, e)
        o_ref[...] = num / den

    return kernel


def _full_spec(shape):
    nd = len(shape)
    return pl.BlockSpec(tuple(shape), lambda *_: (0,) * nd)


# ----------------------------- fused pallas forward ---------------------------
def build_forward(params):
    wslab, fslab, woff, foff = _pack_all(params)        # packed once, reused
    kernel = _make_kernel(woff, foff)

    def _fwd(x_nchw, wslab, fslab):
        x = jnp.transpose(x_nchw, (0, 2, 3, 1)).astype(jnp.float32)  # NCHW -> NHWC
        xp1 = _im2col(x, DOWN_FACTORS[0]).reshape(BL1, DOWN_FACTORS[0] ** 2 * IN_CHANS)
        return pl.pallas_call(
            kernel,
            grid=(1,),
            in_specs=[_full_spec(xp1.shape),
                      _full_spec(tuple(wslab.shape)),
                      _full_spec(tuple(fslab.shape))],
            out_specs=_full_spec((BATCH, NUM_CLASSES)),
            out_shape=jax.ShapeDtypeStruct((BATCH, NUM_CLASSES), jnp.float32),
            compiler_params=pltpu.CompilerParams(dimension_semantics=("arbitrary",)),
        )(xp1, wslab, fslab)

    return jax.jit(_fwd), wslab, fslab


# ----------------------------- pure-JAX reference -----------------------------
def _ref_pool_mixer(y):
    win = (1, 3, 3, 1)
    s = lax.reduce_window(y, 0.0, lax.add, win, (1, 1, 1, 1), 'SAME')
    c = lax.reduce_window(jnp.ones_like(y[..., :1]), 0.0, lax.add, win,
                          (1, 1, 1, 1), 'SAME')
    return s / c - y


def ml_metaformer_forward_ref(x_nchw, params):
    x = jnp.transpose(x_nchw, (0, 2, 3, 1)).astype(jnp.float32)
    feats = []
    for i in range(NUM_STAGE):
        B, H, W, _ = x.shape
        f = DOWN_FACTORS[i]
        xp = _im2col(x, f)
        y = jnp.matmul(xp, params['down'][i]['w']) + params['down'][i]['b']
        H, W = H // f, W // f
        x = y.reshape(B, H, W, -1)
        p = params['stage'][i]
        yt = _ln(x.reshape(B, H * W, -1), p['ln1_g'], p['ln1_b']).reshape(B, H, W, -1)
        x = x + _ref_pool_mixer(yt)
        xt = x.reshape(B, H * W, -1)
        h = jax.nn.gelu(jnp.matmul(_ln(xt, p['ln2_g'], p['ln2_b']), p['w1']) + p['b1'],
                        approximate=True)
        xt = xt + jnp.matmul(h, p['w2']) + p['b2']
        x = xt.reshape(B, H, W, -1)
        if i >= SCALE_SKIP:
            feats.append(x)

    B = x.shape[0]
    q = jnp.broadcast_to(params['query_embed'][None], (B, NUM_QUERIES, D_MODEL))
    mems, poss = [], []
    for fm, ft in zip(feats, params['feats_trans']):
        Bf, Hf, Wf, Cf = fm.shape
        poss.append(jnp.broadcast_to(sine_pos_embed(Hf, Wf, D_MODEL)[None],
                                     (Bf, Hf * Wf, D_MODEL)))
        xt = fm.reshape(Bf, Hf * Wf, Cf)
        y = jnp.matmul(_ln(xt, ft['g1'], ft['b1']), ft['w']) + ft['bw']
        mems.append(_ln(y, ft['g2'], ft['b2']))
    for mem, pe, p in zip(mems, poss, params['decoder']):
        Qp = jnp.matmul(q, p['wq'])
        Kp = jnp.matmul(mem + pe, p['wk'])
        Vp = jnp.matmul(mem, p['wv'])
        scores = jnp.einsum('bqd,bld->bql', Qp, Kp) / math.sqrt(D_MODEL)
        attn = jax.nn.softmax(scores, axis=-1)
        ctx = jnp.matmul(jnp.einsum('bql,bld->bqd', attn, Vp), p['wo'])
        xq = _ln(q + ctx, p['g1'], p['b1'])
        h = jax.nn.gelu(jnp.matmul(xq, p['w1']) + p['bf1'], approximate=True)
        h = jnp.matmul(h, p['w2']) + p['bf2']
        q = _ln(xq + h, p['g2'], p['b2'])
    logits = jnp.matmul(q, params['cls_head']['w']) + params['cls_head']['b']
    sm = jax.nn.softmax(logits, axis=1)                 # softmax over queries
    return jnp.sum(logits * sm, axis=1)


# ----------------------------- parameters -------------------------------------
def init_params(key):
    kit = iter(jax.random.split(key, 64))

    def w_init(shape, fan_in):
        return jax.random.normal(next(kit), shape, jnp.float32) / math.sqrt(fan_in)

    zeros = lambda *s: jnp.zeros(s, jnp.float32)
    ones = lambda *s: jnp.ones(s, jnp.float32)

    params = {'down': [], 'stage': [], 'feats_trans': [], 'decoder': []}
    cin = IN_CHANS
    for dim, f in zip(SCALE_DIMS, DOWN_FACTORS):
        k = f * f * cin
        params['down'].append({'w': w_init((k, dim), k), 'b': zeros(1, dim)})
        hid = dim * MLP_RATIO
        params['stage'].append({
            'ln1_g': ones(1, dim), 'ln1_b': zeros(1, dim),
            'ln2_g': ones(1, dim), 'ln2_b': zeros(1, dim),
            'w1': w_init((dim, hid), dim), 'b1': zeros(1, hid),
            'w2': w_init((hid, dim), hid), 'b2': zeros(1, dim),
        })
        cin = dim
    for dim in SCALE_DIMS[SCALE_SKIP:]:
        params['feats_trans'].append({
            'g1': ones(1, dim), 'b1': zeros(1, dim),
            'w': w_init((dim, D_MODEL), dim), 'bw': zeros(1, D_MODEL),
            'g2': ones(1, D_MODEL), 'b2': zeros(1, D_MODEL),
        })
        params['decoder'].append({
            'wq': w_init((D_MODEL, D_MODEL), D_MODEL),
            'wk': w_init((D_MODEL, D_MODEL), D_MODEL),
            'wv': w_init((D_MODEL, D_MODEL), D_MODEL),
            'wo': w_init((D_MODEL, D_MODEL), D_MODEL),
            'g1': ones(1, D_MODEL), 'b1': zeros(1, D_MODEL),
            'w1': w_init((D_MODEL, FFN_DIM), D_MODEL), 'bf1': zeros(1, FFN_DIM),
            'w2': w_init((FFN_DIM, D_MODEL), FFN_DIM), 'bf2': zeros(1, D_MODEL),
            'g2': ones(1, D_MODEL), 'b2': zeros(1, D_MODEL),
        })
    params['query_embed'] = jax.random.normal(next(kit), (NUM_QUERIES, D_MODEL), jnp.float32)
    params['cls_head'] = {'w': w_init((D_MODEL, NUM_CLASSES), D_MODEL),
                          'b': zeros(1, NUM_CLASSES)}
    return params


# ----------------------------- main --------------------------------------------
if __name__ == "__main__":
    key = jax.random.PRNGKey(0)
    kparams, kx = jax.random.split(key)
    params = init_params(kparams)
    x = jax.random.normal(kx, (BATCH, IN_CHANS, IMG, IMG), jnp.float32)

    fwd, wslab, fslab = build_forward(params)
    out = jax.block_until_ready(fwd(x, wslab, fslab))

    ref = jax.block_until_ready(ml_metaformer_forward_ref(x, params))

    assert out.shape == (BATCH, NUM_CLASSES), out.shape
    assert bool(jnp.all(jnp.isfinite(out)))
    err = float(jnp.max(jnp.abs(out - ref)))
    assert err < 5e-2, f"pallas vs reference mismatch: {err}"
    print("KERNEL_OK")
</pallas_src>

<mosaic_0001>
module attributes {stable_mosaic.version = 11 : i64} {
  func.func @kernel(%arg0: i32, %arg1: memref<128x48xf32, #tpu.memory_space<vmem>>, %arg2: memref<496x128xbf16, #tpu.memory_space<vmem>>, %arg3: memref<1024x128xf32, #tpu.memory_space<vmem>>, %arg4: memref<2x16xf32, #tpu.memory_space<vmem>>) attributes {dimension_semantics = [#tpu.dimension_semantics<arbitrary>], iteration_bounds = array<i64: 1>, scalar_prefetch = 0 : i64, scratch_operands = 0 : i64, tpu.core_type = #tpu.core_type<tc>, window_params = [{pipeline_mode = #tpu.pipeline_mode<synchronous>, transform_indices = @transform_0, window_bounds = array<i64: 128, 48>}, {pipeline_mode = #tpu.pipeline_mode<synchronous>, transform_indices = @transform_1, window_bounds = array<i64: 496, 128>}, {pipeline_mode = #tpu.pipeline_mode<synchronous>, transform_indices = @transform_2, window_bounds = array<i64: 1024, 128>}, {pipeline_mode = #tpu.pipeline_mode<synchronous>, transform_indices = @transform_3, window_bounds = array<i64: 2, 16>}]} {
    %c0 = arith.constant 0 : index
    %c0_0 = arith.constant 0 : index
    %0 = vector.load %arg1[%c0, %c0_0] : memref<128x48xf32, #tpu.memory_space<vmem>>, vector<128x48xf32>
    %c0_1 = arith.constant 0 : index
    %c0_2 = arith.constant 0 : index
    %1 = vector.load %arg2[%c0_1, %c0_2] : memref<496x128xbf16, #tpu.memory_space<vmem>>, vector<48x16xbf16>
    %2 = arith.truncf %0 : vector<128x48xf32> to vector<128x48xbf16>
    %cst = arith.constant dense<0.000000e+00> : vector<128x16xf32>
    %3 = tpu.matmul %2, %1, %cst {dimension_numbers = #tpu.dot_dimension_numbers<[1], [0], [0], [1], [0, 0, 1, 1], [], []>} : vector<128x48xbf16>, vector<48x16xbf16>, vector<128x16xf32> -> vector<128x16xf32>
    %c0_3 = arith.constant 0 : index
    %c0_4 = arith.constant 0 : index
    %4 = vector.load %arg3[%c0_3, %c0_4] : memref<1024x128xf32, #tpu.memory_space<vmem>>, vector<1x16xf32>
    %5 = vector.broadcast %4 : vector<1x16xf32> to vector<128x16xf32>
    %6 = arith.addf %3, %5 : vector<128x16xf32>
    %c16 = arith.constant 16 : index
    %c0_5 = arith.constant 0 : index
    %7 = vector.load %arg3[%c16, %c0_5] : memref<1024x128xf32, #tpu.memory_space<vmem>>, vector<1x16xf32>
    %c24 = arith.constant 24 : index
    %c0_6 = arith.constant 0 : index
    %8 = vector.load %arg3[%c24, %c0_6] : memref<1024x128xf32, #tpu.memory_space<vmem>>, vector<1x16xf32>
    %cst_7 = arith.constant dense<0.000000e+00> : vector<128xf32>
    %9 = vector.multi_reduction <add>, %6, %cst_7 [1] : vector<128x16xf32> to vector<128xf32>
    %10 = vector.shape_cast %9 : vector<128xf32> to vector<128x1xf32>
    %cst_8 = arith.constant 1.600000e+01 : f32
    %11 = vector.broadcast %cst_8 : f32 to vector<128x1xf32>
    %12 = arith.divf %10, %11 : vector<128x1xf32>
    %13 = vector.broadcast %12 : vector<128x1xf32> to vector<128x16xf32>
    %14 = arith.subf %6, %13 : vector<128x16xf32>
    %15 = arith.mulf %14, %14 : vector<128x16xf32>
    %cst_9 = arith.constant dense<0.000000e+00> : vector<128xf32>
    %16 = vector.multi_reduction <add>, %15, %cst_9 [1] : vector<128x16xf32> to vector<128xf32>
    %17 = vector.shape_cast %16 : vector<128xf32> to vector<128x1xf32>
    %cst_10 = arith.constant 1.600000e+01 : f32
    %18 = vector.broadcast %cst_10 : f32 to vector<128x1xf32>
    %19 = arith.divf %17, %18 : vector<128x1xf32>
    %20 = vector.broadcast %12 : vector<128x1xf32> to vector<128x16xf32>
    %21 = arith.subf %6, %20 : vector<128x16xf32>
    %cst_11 = arith.constant 9.99999974E-6 : f32
    %22 = vector.broadcast %cst_11 : f32 to vector<128x1xf32>
    %23 = arith.addf %19, %22 : vector<128x1xf32>
    %24 = math.rsqrt %23 : vector<128x1xf32>
    %25 = vector.broadcast %24 : vector<128x1xf32> to vector<128x16xf32>
    %26 = arith.mulf %21, %25 : vector<128x16xf32>
    %27 = vector.broadcast %7 : vector<1x16xf32> to vector<128x16xf32>
    %28 = arith.mulf %26, %27 : vector<128x16xf32>
    %29 = vector.broadcast %8 : vector<1x16xf32> to vector<128x16xf32>
    %30 = arith.addf %28, %29 : vector<128x16xf32>
    %c112 = arith.constant 112 : index
    %c0_12 = arith.constant 0 : index
    %31 = vector.load %arg3[%c112, %c0_12] : memref<1024x128xf32, #tpu.memory_space<vmem>>, vector<128x9xf32>
    %32 = vector.extract_strided_slice %31 {offsets = [0, 0], sizes = [128, 1], strides = [1, 1]} : vector<128x9xf32> to vector<128x1xf32>
    %33 = vector.broadcast %32 : vector<128x1xf32> to vector<128x16xf32>
    %34 = arith.mulf %30, %33 : vector<128x16xf32>
    %35 = vector.extract_strided_slice %30 {offsets = [119, 0], sizes = [9, 16], strides = [1, 1]} : vector<128x16xf32> to vector<9x16xf32>
    %36 = vector.extract_strided_slice %30 {offsets = [0, 0], sizes = [119, 16], strides = [1, 1]} : vector<128x16xf32> to vector<119x16xf32>
    %37 = tpu.concatenate %35, %36 in 0 : vector<9x16xf32>, vector<119x16xf32> -> vector<128x16xf32>
    %38 = vector.extract_strided_slice %31 {offsets = [0, 1], sizes = [128, 1], strides = [1, 1]} : vector<128x9xf32> to vector<128x1xf32>
    %39 = vector.broadcast %38 : vector<128x1xf32> to vector<128x16xf32>
    %40 = arith.mulf %37, %39 : vector<128x16xf32>
    %41 = arith.addf %34, %40 : vector<128x16xf32>
    %42 = vector.extract_strided_slice %30 {offsets = [120, 0], sizes = [8, 16], strides = [1, 1]} : vector<128x16xf32> to vector<8x16xf32>
    %43 = vector.extract_strided_slice %30 {offsets = [0, 0], sizes = [120, 16], strides = [1, 1]} : vector<128x16xf32> to vector<120x16xf32>
    %44 = tpu.concatenate %42, %43 in 0 : vector<8x16xf32>, vector<120x16xf32> -> vector<128x16xf32>
    %45 = vector.extract_strided_slice %31 {offsets = [0, 2], sizes = [128, 1], strides = [1, 1]} : vector<128x9xf32> to vector<128x1xf32>
    %46 = vector.broadcast %45 : vector<128x1xf32> to vector<128x16xf32>
    %47 = arith.mulf %44, %46 : vector<128x16xf32>
    %48 = arith.addf %41, %47 : vector<128x16xf32>
    %49 = vector.extract_strided_slice %30 {offsets = [121, 0], sizes = [7, 16], strides = [1, 1]} : vector<128x16xf32> to vector<7x16xf32>
    %50 = vector.extract_strided_slice %30 {offsets = [0, 0], sizes = [121, 16], strides = [1, 1]} : vector<128x16xf32> to vector<121x16xf32>
    %51 = tpu.concatenate %49, %50 in 0 : vector<7x16xf32>, vector<121x16xf32> -> vector<128x16xf32>
    %52 = vector.extract_strided_slice %31 {offsets = [0, 3], sizes = [128, 1], strides = [1, 1]} : vector<128x9xf32> to vector<128x1xf32>
    %53 = vector.broadcast %52 : vector<128x1xf32> to vector<128x16xf32>
    %54 = arith.mulf %51, %53 : vector<128x16xf32>
    %55 = arith.addf %48, %54 : vector<128x16xf32>
    %56 = vector.extract_strided_slice %30 {offsets = [127, 0], sizes = [1, 16], strides = [1, 1]} : vector<128x16xf32> to vector<1x16xf32>
    %57 = vector.extract_strided_slice %30 {offsets = [0, 0], sizes = [127, 16], strides = [1, 1]} : vector<128x16xf32> to vector<127x16xf32>
    %58 = tpu.concatenate %56, %57 in 0 : vector<1x16xf32>, vector<127x16xf32> -> vector<128x16xf32>
    %59 = vector.extract_strided_slice %31 {offsets = [0, 4], sizes = [128, 1], strides = [1, 1]} : vector<128x9xf32> to vector<128x1xf32>
    %60 = vector.broadcast %59 : vector<128x1xf32> to vector<128x16xf32>
    %61 = arith.mulf %58, %60 : vector<128x16xf32>
    %62 = arith.addf %55, %61 : vector<128x16xf32>
    %63 = vector.extract_strided_slice %30 {offsets = [1, 0], sizes = [127, 16], strides = [1, 1]} : vector<128x16xf32> to vector<127x16xf32>
    %64 = vector.extract_strided_slice %30 {offsets = [0, 0], sizes = [1, 16], strides = [1, 1]} : vector<128x16xf32> to vector<1x16xf32>
    %65 = tpu.concatenate %63, %64 in 0 : vector<127x16xf32>, vector<1x16xf32> -> vector<128x16xf32>
    %66 = vector.extract_strided_slice %31 {offsets = [0, 5], sizes = [128, 1], strides = [1, 1]} : vector<128x9xf32> to vector<128x1xf32>
    %67 = vector.broadcast %66 : vector<128x1xf32> to vector<128x16xf32>
    %68 = arith.mulf %65, %67 : vector<128x16xf32>
    %69 = arith.addf %62, %68 : vector<128x16xf32>
    %70 = vector.extract_strided_slice %30 {offsets = [7, 0], sizes = [121, 16], strides = [1, 1]} : vector<128x16xf32> to vector<121x16xf32>
    %71 = vector.extract_strided_slice %30 {offsets = [0, 0], sizes = [7, 16], strides = [1, 1]} : vector<128x16xf32> to vector<7x16xf32>
    %72 = tpu.concatenate %70, %71 in 0 : vector<121x16xf32>, vector<7x16xf32> -> vector<128x16xf32>
    %73 = vector.extract_strided_slice %31 {offsets = [0, 6], sizes = [128, 1], strides = [1, 1]} : vector<128x9xf32> to vector<128x1xf32>
    %74 = vector.broadcast %73 : vector<128x1xf32> to vector<128x16xf32>
    %75 = arith.mulf %72, %74 : vector<128x16xf32>
    %76 = arith.addf %69, %75 : vector<128x16xf32>
    %77 = vector.extract_strided_slice %30 {offsets = [8, 0], sizes = [120, 16], strides = [1, 1]} : vector<128x16xf32> to vector<120x16xf32>
    %78 = vector.extract_strided_slice %30 {offsets = [0, 0], sizes = [8, 16], strides = [1, 1]} : vector<128x16xf32> to vector<8x16xf32>
    %79 = tpu.concatenate %77, %78 in 0 : vector<120x16xf32>, vector<8x16xf32> -> vector<128x16xf32>
    %80 = vector.extract_strided_slice %31 {offsets = [0, 7], sizes = [128, 1], strides = [1, 1]} : vector<128x9xf32> to vector<128x1xf32>
    %81 = vector.broadcast %80 : vector<128x1xf32> to vector<128x16xf32>
    %82 = arith.mulf %79, %81 : vector<128x16xf32>
    %83 = arith.addf %76, %82 : vector<128x16xf32>
    %84 = vector.extract_strided_slice %30 {offsets = [9, 0], sizes = [119, 16], strides = [1, 1]} : vector<128x16xf32> to vector<119x16xf32>
    %85 = vector.extract_strided_slice %30 {offsets = [0, 0], sizes = [9, 16], strides = [1, 1]} : vector<128x16xf32> to vector<9x16xf32>
    %86 = tpu.concatenate %84, %85 in 0 : vector<119x16xf32>, vector<9x16xf32> -> vector<128x16xf32>
    %87 = vector.extract_strided_slice %31 {offsets = [0, 8], sizes = [128, 1], strides = [1, 1]} : vector<128x9xf32> to vector<128x1xf32>
    %88 = vector.broadcast %87 : vector<128x1xf32> to vector<128x16xf32>
    %89 = arith.mulf %86, %88 : vector<128x16xf32>
    %90 = arith.addf %83, %89 : vector<128x16xf32>
    %91 = arith.addf %6, %90 : vector<128x16xf32>
    %c32 = arith.constant 32 : index
    %c0_13 = arith.constant 0 : index
    %92 = vector.load %arg3[%c32, %c0_13] : memref<1024x128xf32, #tpu.memory_space<vmem>>, vector<1x16xf32>
    %c40 = arith.constant 40 : index
    %c0_14 = arith.constant 0 : index
    %93 = vector.load %arg3[%c40, %c0_14] : memref<1024x128xf32, #tpu.memory_space<vmem>>, vector<1x16xf32>
    %cst_15 = arith.constant dense<0.000000e+00> : vector<128xf32>
    %94 = vector.multi_reduction <add>, %91, %cst_15 [1] : vector<128x16xf32> to vector<128xf32>
    %95 = vector.shape_cast %94 : vector<128xf32> to vector<128x1xf32>
    %cst_16 = arith.constant 1.600000e+01 : f32
    %96 = vector.broadcast %cst_16 : f32 to vector<128x1xf32>
    %97 = arith.divf %95, %96 : vector<128x1xf32>
    %98 = vector.broadcast %97 : vector<128x1xf32> to vector<128x16xf32>
    %99 = arith.subf %91, %98 : vector<128x16xf32>
    %100 = arith.mulf %99, %99 : vector<128x16xf32>
    %cst_17 = arith.constant dense<0.000000e+00> : vector<128xf32>
    %101 = vector.multi_reduction <add>, %100, %cst_17 [1] : vector<128x16xf32> to vector<128xf32>
    %102 = vector.shape_cast %101 : vector<128xf32> to vector<128x1xf32>
    %cst_18 = arith.constant 1.600000e+01 : f32
    %103 = vector.broadcast %cst_18 : f32 to vector<128x1xf32>
    %104 = arith.divf %102, %103 : vector<128x1xf32>
    %105 = vector.broadcast %97 : vector<128x1xf32> to vector<128x16xf32>
    %106 = arith.subf %91, %105 : vector<128x16xf32>
    %cst_19 = arith.constant 9.99999974E-6 : f32
    %107 = vector.broadcast %cst_19 : f32 to vector<128x1xf32>
    %108 = arith.addf %104, %107 : vector<128x1xf32>
    %109 = math.rsqrt %108 : vector<128x1xf32>
    %110 = vector.broadcast %109 : vector<128x1xf32> to vector<128x16xf32>
    %111 = arith.mulf %106, %110 : vector<128x16xf32>
    %112 = vector.broadcast %92 : vector<1x16xf32> to vector<128x16xf32>
    %113 = arith.mulf %111, %112 : vector<128x16xf32>
    %114 = vector.broadcast %93 : vector<1x16xf32> to vector<128x16xf32>
    %115 = arith.addf %113, %114 : vector<128x16xf32>
    %c240 = arith.constant 240 : index
    %c0_20 = arith.constant 0 : index
    %116 = vector.load %arg2[%c240, %c0_20] : memref<496x128xbf16, #tpu.memory_space<vmem>>, vector<16x32xbf16>
    %117 = arith.truncf %115 : vector<128x16xf32> to vector<128x16xbf16>
    %cst_21 = arith.constant dense<0.000000e+00> : vector<128x32xf32>
    %118 = tpu.matmul %117, %116, %cst_21 {dimension_numbers = #tpu.dot_dimension_numbers<[1], [0], [0], [1], [0, 0, 1, 1], [], []>} : vector<128x16xbf16>, vector<16x32xbf16>, vector<128x32xf32> -> vector<128x32xf32>
    %c48 = arith.constant 48 : index
    %c0_22 = arith.constant 0 : index
    %119 = vector.load %arg3[%c48, %c0_22] : memref<1024x128xf32, #tpu.memory_space<vmem>>, vector<1x32xf32>
    %120 = vector.broadcast %119 : vector<1x32xf32> to vector<128x32xf32>
    %121 = arith.addf %118, %120 : vector<128x32xf32>
    %122 = arith.mulf %121, %121 : vector<128x32xf32>
    %123 = arith.mulf %121, %122 : vector<128x32xf32>
    %cst_23 = arith.constant 4.471500e-02 : f32
    %124 = vector.broadcast %cst_23 : f32 to vector<128x32xf32>
    %125 = arith.mulf %124, %123 : vector<128x32xf32>
    %126 = arith.addf %121, %125 : vector<128x32xf32>
    %cst_24 = arith.constant 0.797884583 : f32
    %127 = vector.broadcast %cst_24 : f32 to vector<128x32xf32>
    %128 = arith.mulf %127, %126 : vector<128x32xf32>
    %129 = math.tanh %128 : vector<128x32xf32>
    %cst_25 = arith.constant 1.000000e+00 : f32
    %130 = vector.broadcast %cst_25 : f32 to vector<128x32xf32>
    %131 = arith.addf %130, %129 : vector<128x32xf32>
    %cst_26 = arith.constant 5.000000e-01 : f32
    %132 = vector.broadcast %cst_26 : f32 to vector<128x32xf32>
    %133 = arith.mulf %132, %131 : vector<128x32xf32>
    %134 = arith.mulf %121, %133 : vector<128x32xf32>
    %c256 = arith.constant 256 : index
    %c0_27 = arith.constant 0 : index
    %135 = vector.load %arg2[%c256, %c0_27] : memref<496x128xbf16, #tpu.memory_space<vmem>>, vector<32x16xbf16>
    %136 = arith.truncf %134 : vector<128x32xf32> to vector<128x32xbf16>
    %cst_28 = arith.constant dense<0.000000e+00> : vector<128x16xf32>
    %137 = tpu.matmul %136, %135, %cst_28 {dimension_numbers = #tpu.dot_dimension_numbers<[1], [0], [0], [1], [0, 0, 1, 1], [], []>} : vector<128x32xbf16>, vector<32x16xbf16>, vector<128x16xf32> -> vector<128x16xf32>
    %138 = arith.addf %91, %137 : vector<128x16xf32>
    %c56 = arith.constant 56 : index
    %c0_29 = arith.constant 0 : index
    %139 = vector.load %arg3[%c56, %c0_29] : memref<1024x128xf32, #tpu.memory_space<vmem>>, vector<1x16xf32>
    %140 = vector.broadcast %139 : vector<1x16xf32> to vector<128x16xf32>
    %141 = arith.addf %138, %140 : vector<128x16xf32>
    %c112_30 = arith.constant 112 : index
    %c0_31 = arith.constant 0 : index
    %142 = vector.load %arg2[%c112_30, %c0_31] : memref<496x128xbf16, #tpu.memory_space<vmem>>, vector<128x128xbf16>
    %143 = arith.truncf %141 : vector<128x16xf32> to vector<128x16xbf16>
    %cst_32 = arith.constant dense<0.000000e+00> : vector<128x16xf32>
    %144 = tpu.matmul %142, %143, %cst_32 {dimension_numbers = #tpu.dot_dimension_numbers<[1], [0], [0], [1], [0, 0, 1, 1], [], []>} : vector<128x128xbf16>, vector<128x16xbf16>, vector<128x16xf32> -> vector<128x16xf32>
    %145 = vector.extract_strided_slice %144 {offsets = [0, 0], sizes = [32, 16], strides = [1, 1]} : vector<128x16xf32> to vector<32x16xf32>
    %146 = vector.extract_strided_slice %144 {offsets = [32, 0], sizes = [32, 16], strides = [1, 1]} : vector<128x16xf32> to vector<32x16xf32>
    %147 = vector.extract_strided_slice %144 {offsets = [64, 0], sizes = [32, 16], strides = [1, 1]} : vector<128x16xf32> to vector<32x16xf32>
    %148 = vector.extract_strided_slice %144 {offsets = [96, 0], sizes = [32, 16], strides = [1, 1]} : vector<128x16xf32> to vector<32x16xf32>
    %149 = tpu.concatenate %145, %146, %147, %148 in 1 : vector<32x16xf32>, vector<32x16xf32>, vector<32x16xf32>, vector<32x16xf32> -> vector<32x64xf32>
    %c48_33 = arith.constant 48 : index
    %c0_34 = arith.constant 0 : index
    %150 = vector.load %arg2[%c48_33, %c0_34] : memref<496x128xbf16, #tpu.memory_space<vmem>>, vector<64x32xbf16>
    %151 = arith.truncf %149 : vector<32x64xf32> to vector<32x64xbf16>
    %cst_35 = arith.constant dense<0.000000e+00> : vector<32x32xf32>
    %152 = tpu.matmul %151, %150, %cst_35 {dimension_numbers = #tpu.dot_dimension_numbers<[1], [0], [0], [1], [0, 0, 1, 1], [], []>} : vector<32x64xbf16>, vector<64x32xbf16>, vector<32x32xf32> -> vector<32x32xf32>
    %c8 = arith.constant 8 : index
    %c0_36 = arith.constant 0 : index
    %153 = vector.load %arg3[%c8, %c0_36] : memref<1024x128xf32, #tpu.memory_space<vmem>>, vector<1x32xf32>
    %154 = vector.broadcast %153 : vector<1x32xf32> to vector<32x32xf32>
    %155 = arith.addf %152, %154 : vector<32x32xf32>
    %c64 = arith.constant 64 : index
    %c0_37 = arith.constant 0 : index
    %156 = vector.load %arg3[%c64, %c0_37] : memref<1024x128xf32, #tpu.memory_space<vmem>>, vector<1x32xf32>
    %c72 = arith.constant 72 : index
    %c0_38 = arith.constant 0 : index
    %157 = vector.load %arg3[%c72, %c0_38] : memref<1024x128xf32, #tpu.memory_space<vmem>>, vector<1x32xf32>
    %cst_39 = arith.constant dense<0.000000e+00> : vector<32xf32>
    %158 = vector.multi_reduction <add>, %155, %cst_39 [1] : vector<32x32xf32> to vector<32xf32>
    %159 = vector.shape_cast %158 : vector<32xf32> to vector<32x1xf32>
    %cst_40 = arith.constant 3.200000e+01 : f32
    %160 = vector.broadcast %cst_40 : f32 to vector<32x1xf32>
    %161 = arith.divf %159, %160 : vector<32x1xf32>
    %162 = vector.broadcast %161 : vector<32x1xf32> to vector<32x32xf32>
    %163 = arith.subf %155, %162 : vector<32x32xf32>
    %164 = arith.mulf %163, %163 : vector<32x32xf32>
    %cst_41 = arith.constant dense<0.000000e+00> : vector<32xf32>
    %165 = vector.multi_reduction <add>, %164, %cst_41 [1] : vector<32x32xf32> to vector<32xf32>
    %166 = vector.shape_cast %165 : vector<32xf32> to vector<32x1xf32>
    %cst_42 = arith.constant 3.200000e+01 : f32
    %167 = vector.broadcast %cst_42 : f32 to vector<32x1xf32>
    %168 = arith.divf %166, %167 : vector<32x1xf32>
    %169 = vector.broadcast %161 : vector<32x1xf32> to vector<32x32xf32>
    %170 = arith.subf %155, %169 : vector<32x32xf32>
    %cst_43 = arith.constant 9.99999974E-6 : f32
    %171 = vector.broadcast %cst_43 : f32 to vector<32x1xf32>
    %172 = arith.addf %168, %171 : vector<32x1xf32>
    %173 = math.rsqrt %172 : vector<32x1xf32>
    %174 = vector.broadcast %173 : vector<32x1xf32> to vector<32x32xf32>
    %175 = arith.mulf %170, %174 : vector<32x32xf32>
    %176 = vector.broadcast %156 : vector<1x32xf32> to vector<32x32xf32>
    %177 = arith.mulf %175, %176 : vector<32x32xf32>
    %178 = vector.broadcast %157 : vector<1x32xf32> to vector<32x32xf32>
    %179 = arith.addf %177, %178 : vector<32x32xf32>
    %c240_44 = arith.constant 240 : index
    %c0_45 = arith.constant 0 : index
    %180 = vector.load %arg3[%c240_44, %c0_45] : memref<1024x128xf32, #tpu.memory_space<vmem>>, vector<32x9xf32>
    %181 = vector.extract_strided_slice %180 {offsets = [0, 0], sizes = [32, 1], strides = [1, 1]} : vector<32x9xf32> to vector<32x1xf32>
    %182 = vector.broadcast %181 : vector<32x1xf32> to vector<32x32xf32>
    %183 = arith.mulf %179, %182 : vector<32x32xf32>
    %184 = vector.extract_strided_slice %179 {offsets = [27, 0], sizes = [5, 32], strides = [1, 1]} : vector<32x32xf32> to vector<5x32xf32>
    %185 = vector.extract_strided_slice %179 {offsets = [0, 0], sizes = [27, 32], strides = [1, 1]} : vector<32x32xf32> to vector<27x32xf32>
    %186 = tpu.concatenate %184, %185 in 0 : vector<5x32xf32>, vector<27x32xf32> -> vector<32x32xf32>
    %187 = vector.extract_strided_slice %180 {offsets = [0, 1], sizes = [32, 1], strides = [1, 1]} : vector<32x9xf32> to vector<32x1xf32>
    %188 = vector.broadcast %187 : vector<32x1xf32> to vector<32x32xf32>
    %189 = arith.mulf %186, %188 : vector<32x32xf32>
    %190 = arith.addf %183, %189 : vector<32x32xf32>
    %191 = vector.extract_strided_slice %179 {offsets = [28, 0], sizes = [4, 32], strides = [1, 1]} : vector<32x32xf32> to vector<4x32xf32>
    %192 = vector.extract_strided_slice %179 {offsets = [0, 0], sizes = [28, 32], strides = [1, 1]} : vector<32x32xf32> to vector<28x32xf32>
    %193 = tpu.concatenate %191, %192 in 0 : vector<4x32xf32>, vector<28x32xf32> -> vector<32x32xf32>
    %194 = vector.extract_strided_slice %180 {offsets = [0, 2], sizes = [32, 1], strides = [1, 1]} : vector<32x9xf32> to vector<32x1xf32>
    %195 = vector.broadcast %194 : vector<32x1xf32> to vector<32x32xf32>
    %196 = arith.mulf %193, %195 : vector<32x32xf32>
    %197 = arith.addf %190, %196 : vector<32x32xf32>
    %198 = vector.extract_strided_slice %179 {offsets = [29, 0], sizes = [3, 32], strides = [1, 1]} : vector<32x32xf32> to vector<3x32xf32>
    %199 = vector.extract_strided_slice %179 {offsets = [0, 0], sizes = [29, 32], strides = [1, 1]} : vector<32x32xf32> to vector<29x32xf32>
    %200 = tpu.concatenate %198, %199 in 0 : vector<3x32xf32>, vector<29x32xf32> -> vector<32x32xf32>
    %201 = vector.extract_strided_slice %180 {offsets = [0, 3], sizes = [32, 1], strides = [1, 1]} : vector<32x9xf32> to vector<32x1xf32>
    %202 = vector.broadcast %201 : vector<32x1xf32> to vector<32x32xf32>
    %203 = arith.mulf %200, %202 : vector<32x32xf32>
    %204 = arith.addf %197, %203 : vector<32x32xf32>
    %205 = vector.extract_strided_slice %179 {offsets = [31, 0], sizes = [1, 32], strides = [1, 1]} : vector<32x32xf32> to vector<1x32xf32>
    %206 = vector.extract_strided_slice %179 {offsets = [0, 0], sizes = [31, 32], strides = [1, 1]} : vector<32x32xf32> to vector<31x32xf32>
    %207 = tpu.concatenate %205, %206 in 0 : vector<1x32xf32>, vector<31x32xf32> -> vector<32x32xf32>
    %208 = vector.extract_strided_slice %180 {offsets = [0, 4], sizes = [32, 1], strides = [1, 1]} : vector<32x9xf32> to vector<32x1xf32>
    %209 = vector.broadcast %208 : vector<32x1xf32> to vector<32x32xf32>
    %210 = arith.mulf %207, %209 : vector<32x32xf32>
    %211 = arith.addf %204, %210 : vector<32x32xf32>
    %212 = vector.extract_strided_slice %179 {offsets = [1, 0], sizes = [31, 32], strides = [1, 1]} : vector<32x32xf32> to vector<31x32xf32>
    %213 = vector.extract_strided_slice %179 {offsets = [0, 0], sizes = [1, 32], strides = [1, 1]} : vector<32x32xf32> to vector<1x32xf32>
    %214 = tpu.concatenate %212, %213 in 0 : vector<31x32xf32>, vector<1x32xf32> -> vector<32x32xf32>
    %215 = vector.extract_strided_slice %180 {offsets = [0, 5], sizes = [32, 1], strides = [1, 1]} : vector<32x9xf32> to vector<32x1xf32>
    %216 = vector.broadcast %215 : vector<32x1xf32> to vector<32x32xf32>
    %217 = arith.mulf %214, %216 : vector<32x32xf32>
    %218 = arith.addf %211, %217 : vector<32x32xf32>
    %219 = vector.extract_strided_slice %179 {offsets = [3, 0], sizes = [29, 32], strides = [1, 1]} : vector<32x32xf32> to vector<29x32xf32>
    %220 = vector.extract_strided_slice %179 {offsets = [0, 0], sizes = [3, 32], strides = [1, 1]} : vector<32x32xf32> to vector<3x32xf32>
    %221 = tpu.concatenate %219, %220 in 0 : vector<29x32xf32>, vector<3x32xf32> -> vector<32x32xf32>
    %222 = vector.extract_strided_slice %180 {offsets = [0, 6], sizes = [32, 1], strides = [1, 1]} : vector<32x9xf32> to vector<32x1xf32>
    %223 = vector.broadcast %222 : vector<32x1xf32> to vector<32x32xf32>
    %224 = arith.mulf %221, %223 : vector<32x32xf32>
    %225 = arith.addf %218, %224 : vector<32x32xf32>
    %226 = vector.extract_strided_slice %179 {offsets = [4, 0], sizes = [28, 32], strides = [1, 1]} : vector<32x32xf32> to vector<28x32xf32>
    %227 = vector.extract_strided_slice %179 {offsets = [0, 0], sizes = [4, 32], strides = [1, 1]} : vector<32x32xf32> to vector<4x32xf32>
    %228 = tpu.concatenate %226, %227 in 0 : vector<28x32xf32>, vector<4x32xf32> -> vector<32x32xf32>
    %229 = vector.extract_strided_slice %180 {offsets = [0, 7], sizes = [32, 1], strides = [1, 1]} : vector<32x9xf32> to vector<32x1xf32>
    %230 = vector.broadcast %229 : vector<32x1xf32> to vector<32x32xf32>
    %231 = arith.mulf %228, %230 : vector<32x32xf32>
    %232 = arith.addf %225, %231 : vector<32x32xf32>
    %233 = vector.extract_strided_slice %179 {offsets = [5, 0], sizes = [27, 32], strides = [1, 1]} : vector<32x32xf32> to vector<27x32xf32>
    %234 = vector.extract_strided_slice %179 {offsets = [0, 0], sizes = [5, 32], strides = [1, 1]} : vector<32x32xf32> to vector<5x32xf32>
    %235 = tpu.concatenate %233, %234 in 0 : vector<27x32xf32>, vector<5x32xf32> -> vector<32x32xf32>
    %236 = vector.extract_strided_slice %180 {offsets = [0, 8], sizes = [32, 1], strides = [1, 1]} : vector<32x9xf32> to vector<32x1xf32>
    %237 = vector.broadcast %236 : vector<32x1xf32> to vector<32x32xf32>
    %238 = arith.mulf %235, %237 : vector<32x32xf32>
    %239 = arith.addf %232, %238 : vector<32x32xf32>
    %240 = arith.addf %155, %239 : vector<32x32xf32>
    %c80 = arith.constant 80 : index
    %c0_46 = arith.constant 0 : index
    %241 = vector.load %arg3[%c80, %c0_46] : memref<1024x128xf32, #tpu.memory_space<vmem>>, vector<1x32xf32>
    %c88 = arith.constant 88 : index
    %c0_47 = arith.constant 0 : index
    %242 = vector.load %arg3[%c88, %c0_47] : memref<1024x128xf32, #tpu.memory_space<vmem>>, vector<1x32xf32>
    %cst_48 = arith.constant dense<0.000000e+00> : vector<32xf32>
    %243 = vector.multi_reduction <add>, %240, %cst_48 [1] : vector<32x32xf32> to vector<32xf32>
    %244 = vector.shape_cast %243 : vector<32xf32> to vector<32x1xf32>
    %cst_49 = arith.constant 3.200000e+01 : f32
    %245 = vector.broadcast %cst_49 : f32 to vector<32x1xf32>
    %246 = arith.divf %244, %245 : vector<32x1xf32>
    %247 = vector.broadcast %246 : vector<32x1xf32> to vector<32x32xf32>
    %248 = arith.subf %240, %247 : vector<32x32xf32>
    %249 = arith.mulf %248, %248 : vector<32x32xf32>
    %cst_50 = arith.constant dense<0.000000e+00> : vector<32xf32>
    %250 = vector.multi_reduction <add>, %249, %cst_50 [1] : vector<32x32xf32> to vector<32xf32>
    %251 = vector.shape_cast %250 : vector<32xf32> to vector<32x1xf32>
    %cst_51 = arith.constant 3.200000e+01 : f32
    %252 = vector.broadcast %cst_51 : f32 to vector<32x1xf32>
    %253 = arith.divf %251, %252 : vector<32x1xf32>
    %254 = vector.broadcast %246 : vector<32x1xf32> to vector<32x32xf32>
    %255 = arith.subf %240, %254 : vector<32x32xf32>
    %cst_52 = arith.constant 9.99999974E-6 : f32
    %256 = vector.broadcast %cst_52 : f32 to vector<32x1xf32>
    %257 = arith.addf %253, %256 : vector<32x1xf32>
    %258 = math.rsqrt %257 : vector<32x1xf32>
    %259 = vector.broadcast %258 : vector<32x1xf32> to vector<32x32xf32>
    %260 = arith.mulf %255, %259 : vector<32x32xf32>
    %261 = vector.broadcast %241 : vector<1x32xf32> to vector<32x32xf32>
    %262 = arith.mulf %260, %261 : vector<32x32xf32>
    %263 = vector.broadcast %242 : vector<1x32xf32> to vector<32x32xf32>
    %264 = arith.addf %262, %263 : vector<32x32xf32>
    %c288 = arith.constant 288 : index
    %c0_53 = arith.constant 0 : index
    %265 = vector.load %arg2[%c288, %c0_53] : memref<496x128xbf16, #tpu.memory_space<vmem>>, vector<32x64xbf16>
    %266 = arith.truncf %264 : vector<32x32xf32> to vector<32x32xbf16>
    %cst_54 = arith.constant dense<0.000000e+00> : vector<32x64xf32>
    %267 = tpu.matmul %266, %265, %cst_54 {dimension_numbers = #tpu.dot_dimension_numbers<[1], [0], [0], [1], [0, 0, 1, 1], [], []>} : vector<32x32xbf16>, vector<32x64xbf16>, vector<32x64xf32> -> vector<32x64xf32>
    %c96 = arith.constant 96 : index
    %c0_55 = arith.constant 0 : index
    %268 = vector.load %arg3[%c96, %c0_55] : memref<1024x128xf32, #tpu.memory_space<vmem>>, vector<1x64xf32>
    %269 = vector.broadcast %268 : vector<1x64xf32> to vector<32x64xf32>
    %270 = arith.addf %267, %269 : vector<32x64xf32>
    %271 = arith.mulf %270, %270 : vector<32x64xf32>
    %272 = arith.mulf %270, %271 : vector<32x64xf32>
    %cst_56 = arith.constant 4.471500e-02 : f32
    %273 = vector.broadcast %cst_56 : f32 to vector<32x64xf32>
    %274 = arith.mulf %273, %272 : vector<32x64xf32>
    %275 = arith.addf %270, %274 : vector<32x64xf32>
    %cst_57 = arith.constant 0.797884583 : f32
    %276 = vector.broadcast %cst_57 : f32 to vector<32x64xf32>
    %277 = arith.mulf %276, %275 : vector<32x64xf32>
    %278 = math.tanh %277 : vector<32x64xf32>
    %cst_58 = arith.constant 1.000000e+00 : f32
    %279 = vector.broadcast %cst_58 : f32 to vector<32x64xf32>
    %280 = arith.addf %279, %278 : vector<32x64xf32>
    %cst_59 = arith.constant 5.000000e-01 : f32
    %281 = vector.broadcast %cst_59 : f32 to vector<32x64xf32>
    %282 = arith.mulf %281, %280 : vector<32x64xf32>
    %283 = arith.mulf %270, %282 : vector<32x64xf32>
    %c320 = arith.constant 320 : index
    %c0_60 = arith.constant 0 : index
    %284 = vector.load %arg2[%c320, %c0_60] : memref<496x128xbf16, #tpu.memory_space<vmem>>, vector<64x32xbf16>
    %285 = arith.truncf %283 : vector<32x64xf32> to vector<32x64xbf16>
    %cst_61 = arith.constant dense<0.000000e+00> : vector<32x32xf32>
    %286 = tpu.matmul %285, %284, %cst_61 {dimension_numbers = #tpu.dot_dimension_numbers<[1], [0], [0], [1], [0, 0, 1, 1], [], []>} : vector<32x64xbf16>, vector<64x32xbf16>, vector<32x32xf32> -> vector<32x32xf32>
    %287 = arith.addf %240, %286 : vector<32x32xf32>
    %c104 = arith.constant 104 : index
    %c0_62 = arith.constant 0 : index
    %288 = vector.load %arg3[%c104, %c0_62] : memref<1024x128xf32, #tpu.memory_space<vmem>>, vector<1x32xf32>
    %289 = vector.broadcast %288 : vector<1x32xf32> to vector<32x32xf32>
    %290 = arith.addf %287, %289 : vector<32x32xf32>
    %c272 = arith.constant 272 : index
    %c0_63 = arith.constant 0 : index
    %291 = vector.load %arg3[%c272, %c0_63] : memref<1024x128xf32, #tpu.memory_space<vmem>>, vector<1x16xf32>
    %c280 = arith.constant 280 : index
    %c0_64 = arith.constant 0 : index
    %292 = vector.load %arg3[%c280, %c0_64] : memref<1024x128xf32, #tpu.memory_space<vmem>>, vector<1x16xf32>
    %cst_65 = arith.constant dense<0.000000e+00> : vector<128xf32>
    %293 = vector.multi_reduction <add>, %141, %cst_65 [1] : vector<128x16xf32> to vector<128xf32>
    %294 = vector.shape_cast %293 : vector<128xf32> to vector<128x1xf32>
    %cst_66 = arith.constant 1.600000e+01 : f32
    %295 = vector.broadcast %cst_66 : f32 to vector<128x1xf32>
    %296 = arith.divf %294, %295 : vector<128x1xf32>
    %297 = vector.broadcast %296 : vector<128x1xf32> to vector<128x16xf32>
    %298 = arith.subf %141, %297 : vector<128x16xf32>
    %299 = arith.mulf %298, %298 : vector<128x16xf32>
    %cst_67 = arith.constant dense<0.000000e+00> : vector<128xf32>
    %300 = vector.multi_reduction <add>, %299, %cst_67 [1] : vector<128x16xf32> to vector<128xf32>
    %301 = vector.shape_cast %300 : vector<128xf32> to vector<128x1xf32>
    %cst_68 = arith.constant 1.600000e+01 : f32
    %302 = vector.broadcast %cst_68 : f32 to vector<128x1xf32>
    %303 = arith.divf %301, %302 : vector<128x1xf32>
    %304 = vector.broadcast %296 : vector<128x1xf32> to vector<128x16xf32>
    %305 = arith.subf %141, %304 : vector<128x16xf32>
    %cst_69 = arith.constant 9.99999974E-6 : f32
    %306 = vector.broadcast %cst_69 : f32 to vector<128x1xf32>
    %307 = arith.addf %303, %306 : vector<128x1xf32>
    %308 = math.rsqrt %307 : vector<128x1xf32>
    %309 = vector.broadcast %308 : vector<128x1xf32> to vector<128x16xf32>
    %310 = arith.mulf %305, %309 : vector<128x16xf32>
    %311 = vector.broadcast %291 : vector<1x16xf32> to vector<128x16xf32>
    %312 = arith.mulf %310, %311 : vector<128x16xf32>
    %313 = vector.broadcast %292 : vector<1x16xf32> to vector<128x16xf32>
    %314 = arith.addf %312, %313 : vector<128x16xf32>
    %c384 = arith.constant 384 : index
    %c0_70 = arith.constant 0 : index
    %315 = vector.load %arg2[%c384, %c0_70] : memref<496x128xbf16, #tpu.memory_space<vmem>>, vector<16x32xbf16>
    %316 = arith.truncf %314 : vector<128x16xf32> to vector<128x16xbf16>
    %cst_71 = arith.constant dense<0.000000e+00> : vector<128x32xf32>
    %317 = tpu.matmul %316, %315, %cst_71 {dimension_numbers = #tpu.dot_dimension_numbers<[1], [0], [0], [1], [0, 0, 1, 1], [], []>} : vector<128x16xbf16>, vector<16x32xbf16>, vector<128x32xf32> -> vector<128x32xf32>
    %c288_72 = arith.constant 288 : index
    %c0_73 = arith.constant 0 : index
    %318 = vector.load %arg3[%c288_72, %c0_73] : memref<1024x128xf32, #tpu.memory_space<vmem>>, vector<1x32xf32>
    %319 = vector.broadcast %318 : vector<1x32xf32> to vector<128x32xf32>
    %320 = arith.addf %317, %319 : vector<128x32xf32>
    %c296 = arith.constant 296 : index
    %c0_74 = arith.constant 0 : index
    %321 = vector.load %arg3[%c296, %c0_74] : memref<1024x128xf32, #tpu.memory_space<vmem>>, vector<1x32xf32>
    %c304 = arith.constant 304 : index
    %c0_75 = arith.constant 0 : index
    %322 = vector.load %arg3[%c304, %c0_75] : memref<1024x128xf32, #tpu.memory_space<vmem>>, vector<1x32xf32>
    %cst_76 = arith.constant dense<0.000000e+00> : vector<128xf32>
    %323 = vector.multi_reduction <add>, %320, %cst_76 [1] : vector<128x32xf32> to vector<128xf32>
    %324 = vector.shape_cast %323 : vector<128xf32> to vector<128x1xf32>
    %cst_77 = arith.constant 3.200000e+01 : f32
    %325 = vector.broadcast %cst_77 : f32 to vector<128x1xf32>
    %326 = arith.divf %324, %325 : vector<128x1xf32>
    %327 = vector.broadcast %326 : vector<128x1xf32> to vector<128x32xf32>
    %328 = arith.subf %320, %327 : vector<128x32xf32>
    %329 = arith.mulf %328, %328 : vector<128x32xf32>
    %cst_78 = arith.constant dense<0.000000e+00> : vector<128xf32>
    %330 = vector.multi_reduction <add>, %329, %cst_78 [1] : vector<128x32xf32> to vector<128xf32>
    %331 = vector.shape_cast %330 : vector<128xf32> to vector<128x1xf32>
    %cst_79 = arith.constant 3.200000e+01 : f32
    %332 = vector.broadcast %cst_79 : f32 to vector<128x1xf32>
    %333 = arith.divf %331, %332 : vector<128x1xf32>
    %334 = vector.broadcast %326 : vector<128x1xf32> to vector<128x32xf32>
    %335 = arith.subf %320, %334 : vector<128x32xf32>
    %cst_80 = arith.constant 9.99999974E-6 : f32
    %336 = vector.broadcast %cst_80 : f32 to vector<128x1xf32>
    %337 = arith.addf %333, %336 : vector<128x1xf32>
    %338 = math.rsqrt %337 : vector<128x1xf32>
    %339 = vector.broadcast %338 : vector<128x1xf32> to vector<128x32xf32>
    %340 = arith.mulf %335, %339 : vector<128x32xf32>
    %341 = vector.broadcast %321 : vector<1x32xf32> to vector<128x32xf32>
    %342 = arith.mulf %340, %341 : vector<128x32xf32>
    %343 = vector.broadcast %322 : vector<1x32xf32> to vector<128x32xf32>
    %344 = arith.addf %342, %343 : vector<128x32xf32>
    %c312 = arith.constant 312 : index
    %c0_81 = arith.constant 0 : index
    %345 = vector.load %arg3[%c312, %c0_81] : memref<1024x128xf32, #tpu.memory_space<vmem>>, vector<1x32xf32>
    %c320_82 = arith.constant 320 : index
    %c0_83 = arith.constant 0 : index
    %346 = vector.load %arg3[%c320_82, %c0_83] : memref<1024x128xf32, #tpu.memory_space<vmem>>, vector<1x32xf32>
    %cst_84 = arith.constant dense<0.000000e+00> : vector<32xf32>
    %347 = vector.multi_reduction <add>, %290, %cst_84 [1] : vector<32x32xf32> to vector<32xf32>
    %348 = vector.shape_cast %347 : vector<32xf32> to vector<32x1xf32>
    %cst_85 = arith.constant 3.200000e+01 : f32
    %349 = vector.broadcast %cst_85 : f32 to vector<32x1xf32>
    %350 = arith.divf %348, %349 : vector<32x1xf32>
    %351 = vector.broadcast %350 : vector<32x1xf32> to vector<32x32xf32>
    %352 = arith.subf %290, %351 : vector<32x32xf32>
    %353 = arith.mulf %352, %352 : vector<32x32xf32>
    %cst_86 = arith.constant dense<0.000000e+00> : vector<32xf32>
    %354 = vector.multi_reduction <add>, %353, %cst_86 [1] : vector<32x32xf32> to vector<32xf32>
    %355 = vector.shape_cast %354 : vector<32xf32> to vector<32x1xf32>
    %cst_87 = arith.constant 3.200000e+01 : f32
    %356 = vector.broadcast %cst_87 : f32 to vector<32x1xf32>
    %357 = arith.divf %355, %356 : vector<32x1xf32>
    %358 = vector.broadcast %350 : vector<32x1xf32> to vector<32x32xf32>
    %359 = arith.subf %290, %358 : vector<32x32xf32>
    %cst_88 = arith.constant 9.99999974E-6 : f32
    %360 = vector.broadcast %cst_88 : f32 to vector<32x1xf32>
    %361 = arith.addf %357, %360 : vector<32x1xf32>
    %362 = math.rsqrt %361 : vector<32x1xf32>
    %363 = vector.broadcast %362 : vector<32x1xf32> to vector<32x32xf32>
    %364 = arith.mulf %359, %363 : vector<32x32xf32>
    %365 = vector.broadcast %345 : vector<1x32xf32> to vector<32x32xf32>
    %366 = arith.mulf %364, %365 : vector<32x32xf32>
    %367 = vector.broadcast %346 : vector<1x32xf32> to vector<32x32xf32>
    %368 = arith.addf %366, %367 : vector<32x32xf32>
    %c400 = arith.constant 400 : index
    %c0_89 = arith.constant 0 : index
    %369 = vector.load %arg2[%c400, %c0_89] : memref<496x128xbf16, #tpu.memory_space<vmem>>, vector<32x32xbf16>
    %370 = arith.truncf %368 : vector<32x32xf32> to vector<32x32xbf16>
    %cst_90 = arith.constant dense<0.000000e+00> : vector<32x32xf32>
    %371 = tpu.matmul %370, %369, %cst_90 {dimension_numbers = #tpu.dot_dimension_numbers<[1], [0], [0], [1], [0, 0, 1, 1], [], []>} : vector<32x32xbf16>, vector<32x32xbf16>, vector<32x32xf32> -> vector<32x32xf32>
    %c328 = arith.constant 328 : index
    %c0_91 = arith.constant 0 : index
    %372 = vector.load %arg3[%c328, %c0_91] : memref<1024x128xf32, #tpu.memory_space<vmem>>, vector<1x32xf32>
    %373 = vector.broadcast %372 : vector<1x32xf32> to vector<32x32xf32>
    %374 = arith.addf %371, %373 : vector<32x32xf32>
    %c336 = arith.constant 336 : index
    %c0_92 = arith.constant 0 : index
    %375 = vector.load %arg3[%c336, %c0_92] : memref<1024x128xf32, #tpu.memory_space<vmem>>, vector<1x32xf32>
    %c344 = arith.constant 344 : index
    %c0_93 = arith.constant 0 : index
    %376 = vector.load %arg3[%c344, %c0_93] : memref<1024x128xf32, #tpu.memory_space<vmem>>, vector<1x32xf32>
    %cst_94 = arith.constant dense<0.000000e+00> : vector<32xf32>
    %377 = vector.multi_reduction <add>, %374, %cst_94 [1] : vector<32x32xf32> to vector<32xf32>
    %378 = vector.shape_cast %377 : vector<32xf32> to vector<32x1xf32>
    %cst_95 = arith.constant 3.200000e+01 : f32
    %379 = vector.broadcast %cst_95 : f32 to vector<32x1xf32>
    %380 = arith.divf %378, %379 : vector<32x1xf32>
    %381 = vector.broadcast %380 : vector<32x1xf32> to vector<32x32xf32>
    %382 = arith.subf %374, %381 : vector<32x32xf32>
    %383 = arith.mulf %382, %382 : vector<32x32xf32>
    %cst_96 = arith.constant dense<0.000000e+00> : vector<32xf32>
    %384 = vector.multi_reduction <add>, %383, %cst_96 [1] : vector<32x32xf32> to vector<32xf32>
    %385 = vector.shape_cast %384 : vector<32xf32> to vector<32x1xf32>
    %cst_97 = arith.constant 3.200000e+01 : f32
    %386 = vector.broadcast %cst_97 : f32 to vector<32x1xf32>
    %387 = arith.divf %385, %386 : vector<32x1xf32>
    %388 = vector.broadcast %380 : vector<32x1xf32> to vector<32x32xf32>
    %389 = arith.subf %374, %388 : vector<32x32xf32>
    %cst_98 = arith.constant 9.99999974E-6 : f32
    %390 = vector.broadcast %cst_98 : f32 to vector<32x1xf32>
    %391 = arith.addf %387, %390 : vector<32x1xf32>
    %392 = math.rsqrt %391 : vector<32x1xf32>
    %393 = vector.broadcast %392 : vector<32x1xf32> to vector<32x32xf32>
    %394 = arith.mulf %389, %393 : vector<32x32xf32>
    %395 = vector.broadcast %375 : vector<1x32xf32> to vector<32x32xf32>
    %396 = arith.mulf %394, %395 : vector<32x32xf32>
    %397 = vector.broadcast %376 : vector<1x32xf32> to vector<32x32xf32>
    %398 = arith.addf %396, %397 : vector<32x32xf32>
    %c352 = arith.constant 352 : index
    %c0_99 = arith.constant 0 : index
    %399 = vector.load %arg3[%c352, %c0_99] : memref<1024x128xf32, #tpu.memory_space<vmem>>, vector<16x32xf32>
    %c512 = arith.constant 512 : index
    %c0_100 = arith.constant 0 : index
    %400 = vector.load %arg3[%c512, %c0_100] : memref<1024x128xf32, #tpu.memory_space<vmem>>, vector<32x32xf32>
    %cst_101 = arith.constant dense<0.000000e+00> : vector<16x32xf32>
    %401 = tpu.matmul %399, %400, %cst_101 {dimension_numbers = #tpu.dot_dimension_numbers<[1], [0], [0], [1], [0, 0, 1, 1], [], []>} : vector<16x32xf32>, vector<32x32xf32>, vector<16x32xf32> -> vector<16x32xf32>
    %c432 = arith.constant 432 : index
    %c0_102 = arith.constant 0 : index
    %402 = vector.load %arg2[%c432, %c0_102] : memref<496x128xbf16, #tpu.memory_space<vmem>>, vector<32x64xbf16>
    %403 = arith.truncf %344 : vector<128x32xf32> to vector<128x32xbf16>
    %cst_103 = arith.constant dense<0.000000e+00> : vector<128x64xf32>
    %404 = tpu.matmul %403, %402, %cst_103 {dimension_numbers = #tpu.dot_dimension_numbers<[1], [0], [0], [1], [0, 0, 1, 1], [], []>} : vector<128x32xbf16>, vector<32x64xbf16>, vector<128x64xf32> -> vector<128x64xf32>
    %405 = vector.extract_strided_slice %404 {offsets = [0, 0], sizes = [128, 32], strides = [1, 1]} : vector<128x64xf32> to vector<128x32xf32>
    %c368 = arith.constant 368 : index
    %c0_104 = arith.constant 0 : index
    %406 = vector.load %arg3[%c368, %c0_104] : memref<1024x128xf32, #tpu.memory_space<vmem>>, vector<128x32xf32>
    %407 = arith.addf %405, %406 : vector<128x32xf32>
    %408 = vector.extract_strided_slice %404 {offsets = [0, 32], sizes = [128, 32], strides = [1, 1]} : vector<128x64xf32> to vector<128x32xf32>
    %cst_105 = arith.constant dense<0.000000e+00> : vector<16x128xf32>
    %409 = tpu.matmul %401, %407, %cst_105 {dimension_numbers = #tpu.dot_dimension_numbers<[1], [1], [0], [0], [0, 0, 1, 0], [], []>} : vector<16x32xf32>, vector<128x32xf32>, vector<16x128xf32> -> vector<16x128xf32>
    %cst_106 = arith.constant 0.176776692 : f32
    %410 = vector.broadcast %cst_106 : f32 to vector<16x128xf32>
    %411 = arith.mulf %409, %410 : vector<16x128xf32>
    %c496 = arith.constant 496 : index
    %c0_107 = arith.constant 0 : index
    %412 = vector.load %arg3[%c496, %c0_107] : memref<1024x128xf32, #tpu.memory_space<vmem>>, vector<16x128xf32>
    %413 = arith.addf %411, %412 : vector<16x128xf32>
    %cst_108 = arith.constant dense<0xFF800000> : vector<16xf32>
    %414 = vector.multi_reduction <maximumf>, %413, %cst_108 [1] : vector<16x128xf32> to vector<16xf32>
    %415 = vector.shape_cast %414 : vector<16xf32> to vector<16x1xf32>
    %416 = vector.broadcast %415 : vector<16x1xf32> to vector<16x128xf32>
    %417 = arith.subf %413, %416 : vector<16x128xf32>
    %418 = math.exp %417 : vector<16x128xf32>
    %cst_109 = arith.constant dense<0.000000e+00> : vector<16xf32>
    %419 = vector.multi_reduction <add>, %418, %cst_109 [1] : vector<16x128xf32> to vector<16xf32>
    %420 = vector.shape_cast %419 : vector<16xf32> to vector<16x1xf32>
    %421 = tpu.reciprocal %420 {approx = true} : vector<16x1xf32> -> vector<16x1xf32>
    %422 = vector.broadcast %421 : vector<16x1xf32> to vector<16x128xf32>
    %423 = arith.mulf %418, %422 : vector<16x128xf32>
    %cst_110 = arith.constant dense<0.000000e+00> : vector<16x32xf32>
    %424 = tpu.matmul %423, %408, %cst_110 {dimension_numbers = #tpu.dot_dimension_numbers<[1], [0], [0], [1], [0, 0, 1, 1], [], []>} : vector<16x128xf32>, vector<128x32xf32>, vector<16x32xf32> -> vector<16x32xf32>
    %c544 = arith.constant 544 : index
    %c0_111 = arith.constant 0 : index
    %425 = vector.load %arg3[%c544, %c0_111] : memref<1024x128xf32, #tpu.memory_space<vmem>>, vector<32x32xf32>
    %cst_112 = arith.constant dense<0.000000e+00> : vector<16x32xf32>
    %426 = tpu.matmul %424, %425, %cst_112 {dimension_numbers = #tpu.dot_dimension_numbers<[1], [0], [0], [1], [0, 0, 1, 1], [], []>} : vector<16x32xf32>, vector<32x32xf32>, vector<16x32xf32> -> vector<16x32xf32>
    %427 = arith.addf %399, %426 : vector<16x32xf32>
    %c672 = arith.constant 672 : index
    %c0_113 = arith.constant 0 : index
    %428 = vector.load %arg3[%c672, %c0_113] : memref<1024x128xf32, #tpu.memory_space<vmem>>, vector<1x32xf32>
    %c680 = arith.constant 680 : index
    %c0_114 = arith.constant 0 : index
    %429 = vector.load %arg3[%c680, %c0_114] : memref<1024x128xf32, #tpu.memory_space<vmem>>, vector<1x32xf32>
    %cst_115 = arith.constant dense<0.000000e+00> : vector<16xf32>
    %430 = vector.multi_reduction <add>, %427, %cst_115 [1] : vector<16x32xf32> to vector<16xf32>
    %431 = vector.shape_cast %430 : vector<16xf32> to vector<16x1xf32>
    %cst_116 = arith.constant 3.200000e+01 : f32
    %432 = vector.broadcast %cst_116 : f32 to vector<16x1xf32>
    %433 = arith.divf %431, %432 : vector<16x1xf32>
    %434 = vector.broadcast %433 : vector<16x1xf32> to vector<16x32xf32>
    %435 = arith.subf %427, %434 : vector<16x32xf32>
    %436 = arith.mulf %435, %435 : vector<16x32xf32>
    %cst_117 = arith.constant dense<0.000000e+00> : vector<16xf32>
    %437 = vector.multi_reduction <add>, %436, %cst_117 [1] : vector<16x32xf32> to vector<16xf32>
    %438 = vector.shape_cast %437 : vector<16xf32> to vector<16x1xf32>
    %cst_118 = arith.constant 3.200000e+01 : f32
    %439 = vector.broadcast %cst_118 : f32 to vector<16x1xf32>
    %440 = arith.divf %438, %439 : vector<16x1xf32>
    %441 = vector.broadcast %433 : vector<16x1xf32> to vector<16x32xf32>
    %442 = arith.subf %427, %441 : vector<16x32xf32>
    %cst_119 = arith.constant 9.99999974E-6 : f32
    %443 = vector.broadcast %cst_119 : f32 to vector<16x1xf32>
    %444 = arith.addf %440, %443 : vector<16x1xf32>
    %445 = math.rsqrt %444 : vector<16x1xf32>
    %446 = vector.broadcast %445 : vector<16x1xf32> to vector<16x32xf32>
    %447 = arith.mulf %442, %446 : vector<16x32xf32>
    %448 = vector.broadcast %428 : vector<1x32xf32> to vector<16x32xf32>
    %449 = arith.mulf %447, %448 : vector<16x32xf32>
    %450 = vector.broadcast %429 : vector<1x32xf32> to vector<16x32xf32>
    %451 = arith.addf %449, %450 : vector<16x32xf32>
    %c576 = arith.constant 576 : index
    %c0_120 = arith.constant 0 : index
    %452 = vector.load %arg3[%c576, %c0_120] : memref<1024x128xf32, #tpu.memory_space<vmem>>, vector<32x64xf32>
    %cst_121 = arith.constant dense<0.000000e+00> : vector<16x64xf32>
    %453 = tpu.matmul %451, %452, %cst_121 {dimension_numbers = #tpu.dot_dimension_numbers<[1], [0], [0], [1], [0, 0, 1, 1], [], []>} : vector<16x32xf32>, vector<32x64xf32>, vector<16x64xf32> -> vector<16x64xf32>
    %c688 = arith.constant 688 : index
    %c0_122 = arith.constant 0 : index
    %454 = vector.load %arg3[%c688, %c0_122] : memref<1024x128xf32, #tpu.memory_space<vmem>>, vector<1x64xf32>
    %455 = vector.broadcast %454 : vector<1x64xf32> to vector<16x64xf32>
    %456 = arith.addf %453, %455 : vector<16x64xf32>
    %457 = arith.mulf %456, %456 : vector<16x64xf32>
    %458 = arith.mulf %456, %457 : vector<16x64xf32>
    %cst_123 = arith.constant 4.471500e-02 : f32
    %459 = vector.broadcast %cst_123 : f32 to vector<16x64xf32>
    %460 = arith.mulf %459, %458 : vector<16x64xf32>
    %461 = arith.addf %456, %460 : vector<16x64xf32>
    %cst_124 = arith.constant 0.797884583 : f32
    %462 = vector.broadcast %cst_124 : f32 to vector<16x64xf32>
    %463 = arith.mulf %462, %461 : vector<16x64xf32>
    %464 = math.tanh %463 : vector<16x64xf32>
    %cst_125 = arith.constant 1.000000e+00 : f32
    %465 = vector.broadcast %cst_125 : f32 to vector<16x64xf32>
    %466 = arith.addf %465, %464 : vector<16x64xf32>
    %cst_126 = arith.constant 5.000000e-01 : f32
    %467 = vector.broadcast %cst_126 : f32 to vector<16x64xf32>
    %468 = arith.mulf %467, %466 : vector<16x64xf32>
    %469 = arith.mulf %456, %468 : vector<16x64xf32>
    %c608 = arith.constant 608 : index
    %c0_127 = arith.constant 0 : index
    %470 = vector.load %arg3[%c608, %c0_127] : memref<1024x128xf32, #tpu.memory_space<vmem>>, vector<64x32xf32>
    %cst_128 = arith.constant dense<0.000000e+00> : vector<16x32xf32>
    %471 = tpu.matmul %469, %470, %cst_128 {dimension_numbers = #tpu.dot_dimension_numbers<[1], [0], [0], [1], [0, 0, 1, 1], [], []>} : vector<16x64xf32>, vector<64x32xf32>, vector<16x32xf32> -> vector<16x32xf32>
    %c696 = arith.constant 696 : index
    %c0_129 = arith.constant 0 : index
    %472 = vector.load %arg3[%c696, %c0_129] : memref<1024x128xf32, #tpu.memory_space<vmem>>, vector<1x32xf32>
    %473 = vector.broadcast %472 : vector<1x32xf32> to vector<16x32xf32>
    %474 = arith.addf %471, %473 : vector<16x32xf32>
    %475 = arith.addf %451, %474 : vector<16x32xf32>
    %c704 = arith.constant 704 : index
    %c0_130 = arith.constant 0 : index
    %476 = vector.load %arg3[%c704, %c0_130] : memref<1024x128xf32, #tpu.memory_space<vmem>>, vector<1x32xf32>
    %c712 = arith.constant 712 : index
    %c0_131 = arith.constant 0 : index
    %477 = vector.load %arg3[%c712, %c0_131] : memref<1024x128xf32, #tpu.memory_space<vmem>>, vector<1x32xf32>
    %cst_132 = arith.constant dense<0.000000e+00> : vector<16xf32>
    %478 = vector.multi_reduction <add>, %475, %cst_132 [1] : vector<16x32xf32> to vector<16xf32>
    %479 = vector.shape_cast %478 : vector<16xf32> to vector<16x1xf32>
    %cst_133 = arith.constant 3.200000e+01 : f32
    %480 = vector.broadcast %cst_133 : f32 to vector<16x1xf32>
    %481 = arith.divf %479, %480 : vector<16x1xf32>
    %482 = vector.broadcast %481 : vector<16x1xf32> to vector<16x32xf32>
    %483 = arith.subf %475, %482 : vector<16x32xf32>
    %484 = arith.mulf %483, %483 : vector<16x32xf32>
    %cst_134 = arith.constant dense<0.000000e+00> : vector<16xf32>
    %485 = vector.multi_reduction <add>, %484, %cst_134 [1] : vector<16x32xf32> to vector<16xf32>
    %486 = vector.shape_cast %485 : vector<16xf32> to vector<16x1xf32>
    %cst_135 = arith.constant 3.200000e+01 : f32
    %487 = vector.broadcast %cst_135 : f32 to vector<16x1xf32>
    %488 = arith.divf %486, %487 : vector<16x1xf32>
    %489 = vector.broadcast %481 : vector<16x1xf32> to vector<16x32xf32>
    %490 = arith.subf %475, %489 : vector<16x32xf32>
    %cst_136 = arith.constant 9.99999974E-6 : f32
    %491 = vector.broadcast %cst_136 : f32 to vector<16x1xf32>
    %492 = arith.addf %488, %491 : vector<16x1xf32>
    %493 = math.rsqrt %492 : vector<16x1xf32>
    %494 = vector.broadcast %493 : vector<16x1xf32> to vector<16x32xf32>
    %495 = arith.mulf %490, %494 : vector<16x32xf32>
    %496 = vector.broadcast %476 : vector<1x32xf32> to vector<16x32xf32>
    %497 = arith.mulf %495, %496 : vector<16x32xf32>
    %498 = vector.broadcast %477 : vector<1x32xf32> to vector<16x32xf32>
    %499 = arith.addf %497, %498 : vector<16x32xf32>
    %c768 = arith.constant 768 : index
    %c0_137 = arith.constant 0 : index
    %500 = vector.load %arg3[%c768, %c0_137] : memref<1024x128xf32, #tpu.memory_space<vmem>>, vector<32x32xf32>
    %cst_138 = arith.constant dense<0.000000e+00> : vector<16x32xf32>
    %501 = tpu.matmul %499, %500, %cst_138 {dimension_numbers = #tpu.dot_dimension_numbers<[1], [0], [0], [1], [0, 0, 1, 1], [], []>} : vector<16x32xf32>, vector<32x32xf32>, vector<16x32xf32> -> vector<16x32xf32>
    %c464 = arith.constant 464 : index
    %c0_139 = arith.constant 0 : index
    %502 = vector.load %arg2[%c464, %c0_139] : memref<496x128xbf16, #tpu.memory_space<vmem>>, vector<32x64xbf16>
    %503 = arith.truncf %398 : vector<32x32xf32> to vector<32x32xbf16>
    %cst_140 = arith.constant dense<0.000000e+00> : vector<32x64xf32>
    %504 = tpu.matmul %503, %502, %cst_140 {dimension_numbers = #tpu.dot_dimension_numbers<[1], [0], [0], [1], [0, 0, 1, 1], [], []>} : vector<32x32xbf16>, vector<32x64xbf16>, vector<32x64xf32> -> vector<32x64xf32>
    %505 = vector.extract_strided_slice %504 {offsets = [0, 0], sizes = [32, 32], strides = [1, 1]} : vector<32x64xf32> to vector<32x32xf32>
    %c720 = arith.constant 720 : index
    %c0_141 = arith.constant 0 : index
    %506 = vector.load %arg3[%c720, %c0_141] : memref<1024x128xf32, #tpu.memory_space<vmem>>, vector<32x32xf32>
    %507 = arith.addf %505, %506 : vector<32x32xf32>
    %508 = vector.extract_strided_slice %504 {offsets = [0, 32], sizes = [32, 32], strides = [1, 1]} : vector<32x64xf32> to vector<32x32xf32>
    %cst_142 = arith.constant dense<0.000000e+00> : vector<16x32xf32>
    %509 = tpu.matmul %501, %507, %cst_142 {dimension_numbers = #tpu.dot_dimension_numbers<[1], [1], [0], [0], [0, 0, 1, 0], [], []>} : vector<16x32xf32>, vector<32x32xf32>, vector<16x32xf32> -> vector<16x32xf32>
    %cst_143 = arith.constant 0.176776692 : f32
    %510 = vector.broadcast %cst_143 : f32 to vector<16x32xf32>
    %511 = arith.mulf %509, %510 : vector<16x32xf32>
    %c752 = arith.constant 752 : index
    %c0_144 = arith.constant 0 : index
    %512 = vector.load %arg3[%c752, %c0_144] : memref<1024x128xf32, #tpu.memory_space<vmem>>, vector<16x32xf32>
    %513 = arith.addf %511, %512 : vector<16x32xf32>
    %cst_145 = arith.constant dense<0xFF800000> : vector<16xf32>
    %514 = vector.multi_reduction <maximumf>, %513, %cst_145 [1] : vector<16x32xf32> to vector<16xf32>
    %515 = vector.shape_cast %514 : vector<16xf32> to vector<16x1xf32>
    %516 = vector.broadcast %515 : vector<16x1xf32> to vector<16x32xf32>
    %517 = arith.subf %513, %516 : vector<16x32xf32>
    %518 = math.exp %517 : vector<16x32xf32>
    %cst_146 = arith.constant dense<0.000000e+00> : vector<16xf32>
    %519 = vector.multi_reduction <add>, %518, %cst_146 [1] : vector<16x32xf32> to vector<16xf32>
    %520 = vector.shape_cast %519 : vector<16xf32> to vector<16x1xf32>
    %521 = tpu.reciprocal %520 {approx = true} : vector<16x1xf32> -> vector<16x1xf32>
    %522 = vector.broadcast %521 : vector<16x1xf32> to vector<16x32xf32>
    %523 = arith.mulf %518, %522 : vector<16x32xf32>
    %cst_147 = arith.constant dense<0.000000e+00> : vector<16x32xf32>
    %524 = tpu.matmul %523, %508, %cst_147 {dimension_numbers = #tpu.dot_dimension_numbers<[1], [0], [0], [1], [0, 0, 1, 1], [], []>} : vector<16x32xf32>, vector<32x32xf32>, vector<16x32xf32> -> vector<16x32xf32>
    %c800 = arith.constant 800 : index
    %c0_148 = arith.constant 0 : index
    %525 = vector.load %arg3[%c800, %c0_148] : memref<1024x128xf32, #tpu.memory_space<vmem>>, vector<32x32xf32>
    %cst_149 = arith.constant dense<0.000000e+00> : vector<16x32xf32>
    %526 = tpu.matmul %524, %525, %cst_149 {dimension_numbers = #tpu.dot_dimension_numbers<[1], [0], [0], [1], [0, 0, 1, 1], [], []>} : vector<16x32xf32>, vector<32x32xf32>, vector<16x32xf32> -> vector<16x32xf32>
    %527 = arith.addf %499, %526 : vector<16x32xf32>
    %c928 = arith.constant 928 : index
    %c0_150 = arith.constant 0 : index
    %528 = vector.load %arg3[%c928, %c0_150] : memref<1024x128xf32, #tpu.memory_space<vmem>>, vector<1x32xf32>
    %c936 = arith.constant 936 : index
    %c0_151 = arith.constant 0 : index
    %529 = vector.load %arg3[%c936, %c0_151] : memref<1024x128xf32, #tpu.memory_space<vmem>>, vector<1x32xf32>
    %cst_152 = arith.constant dense<0.000000e+00> : vector<16xf32>
    %530 = vector.multi_reduction <add>, %527, %cst_152 [1] : vector<16x32xf32> to vector<16xf32>
    %531 = vector.shape_cast %530 : vector<16xf32> to vector<16x1xf32>
    %cst_153 = arith.constant 3.200000e+01 : f32
    %532 = vector.broadcast %cst_153 : f32 to vector<16x1xf32>
    %533 = arith.divf %531, %532 : vector<16x1xf32>
    %534 = vector.broadcast %533 : vector<16x1xf32> to vector<16x32xf32>
    %535 = arith.subf %527, %534 : vector<16x32xf32>
    %536 = arith.mulf %535, %535 : vector<16x32xf32>
    %cst_154 = arith.constant dense<0.000000e+00> : vector<16xf32>
    %537 = vector.multi_reduction <add>, %536, %cst_154 [1] : vector<16x32xf32> to vector<16xf32>
    %538 = vector.shape_cast %537 : vector<16xf32> to vector<16x1xf32>
    %cst_155 = arith.constant 3.200000e+01 : f32
    %539 = vector.broadcast %cst_155 : f32 to vector<16x1xf32>
    %540 = arith.divf %538, %539 : vector<16x1xf32>
    %541 = vector.broadcast %533 : vector<16x1xf32> to vector<16x32xf32>
    %542 = arith.subf %527, %541 : vector<16x32xf32>
    %cst_156 = arith.constant 9.99999974E-6 : f32
    %543 = vector.broadcast %cst_156 : f32 to vector<16x1xf32>
    %544 = arith.addf %540, %543 : vector<16x1xf32>
    %545 = math.rsqrt %544 : vector<16x1xf32>
    %546 = vector.broadcast %545 : vector<16x1xf32> to vector<16x32xf32>
    %547 = arith.mulf %542, %546 : vector<16x32xf32>
    %548 = vector.broadcast %528 : vector<1x32xf32> to vector<16x32xf32>
    %549 = arith.mulf %547, %548 : vector<16x32xf32>
    %550 = vector.broadcast %529 : vector<1x32xf32> to vector<16x32xf32>
    %551 = arith.addf %549, %550 : vector<16x32xf32>
    %c832 = arith.constant 832 : index
    %c0_157 = arith.constant 0 : index
    %552 = vector.load %arg3[%c832, %c0_157] : memref<1024x128xf32, #tpu.memory_space<vmem>>, vector<32x64xf32>
    %cst_158 = arith.constant dense<0.000000e+00> : vector<16x64xf32>
    %553 = tpu.matmul %551, %552, %cst_158 {dimension_numbers = #tpu.dot_dimension_numbers<[1], [0], [0], [1], [0, 0, 1, 1], [], []>} : vector<16x32xf32>, vector<32x64xf32>, vector<16x64xf32> -> vector<16x64xf32>
    %c944 = arith.constant 944 : index
    %c0_159 = arith.constant 0 : index
    %554 = vector.load %arg3[%c944, %c0_159] : memref<1024x128xf32, #tpu.memory_space<vmem>>, vector<1x64xf32>
    %555 = vector.broadcast %554 : vector<1x64xf32> to vector<16x64xf32>
    %556 = arith.addf %553, %555 : vector<16x64xf32>
    %557 = arith.mulf %556, %556 : vector<16x64xf32>
    %558 = arith.mulf %556, %557 : vector<16x64xf32>
    %cst_160 = arith.constant 4.471500e-02 : f32
    %559 = vector.broadcast %cst_160 : f32 to vector<16x64xf32>
    %560 = arith.mulf %559, %558 : vector<16x64xf32>
    %561 = arith.addf %556, %560 : vector<16x64xf32>
    %cst_161 = arith.constant 0.797884583 : f32
    %562 = vector.broadcast %cst_161 : f32 to vector<16x64xf32>
    %563 = arith.mulf %562, %561 : vector<16x64xf32>
    %564 = math.tanh %563 : vector<16x64xf32>
    %cst_162 = arith.constant 1.000000e+00 : f32
    %565 = vector.broadcast %cst_162 : f32 to vector<16x64xf32>
    %566 = arith.addf %565, %564 : vector<16x64xf32>
    %cst_163 = arith.constant 5.000000e-01 : f32
    %567 = vector.broadcast %cst_163 : f32 to vector<16x64xf32>
    %568 = arith.mulf %567, %566 : vector<16x64xf32>
    %569 = arith.mulf %556, %568 : vector<16x64xf32>
    %c864 = arith.constant 864 : index
    %c0_164 = arith.constant 0 : index
    %570 = vector.load %arg3[%c864, %c0_164] : memref<1024x128xf32, #tpu.memory_space<vmem>>, vector<64x32xf32>
    %cst_165 = arith.constant dense<0.000000e+00> : vector<16x32xf32>
    %571 = tpu.matmul %569, %570, %cst_165 {dimension_numbers = #tpu.dot_dimension_numbers<[1], [0], [0], [1], [0, 0, 1, 1], [], []>} : vector<16x64xf32>, vector<64x32xf32>, vector<16x32xf32> -> vector<16x32xf32>
    %c952 = arith.constant 952 : index
    %c0_166 = arith.constant 0 : index
    %572 = vector.load %arg3[%c952, %c0_166] : memref<1024x128xf32, #tpu.memory_space<vmem>>, vector<1x32xf32>
    %573 = vector.broadcast %572 : vector<1x32xf32> to vector<16x32xf32>
    %574 = arith.addf %571, %573 : vector<16x32xf32>
    %575 = arith.addf %551, %574 : vector<16x32xf32>
    %c960 = arith.constant 960 : index
    %c0_167 = arith.constant 0 : index
    %576 = vector.load %arg3[%c960, %c0_167] : memref<1024x128xf32, #tpu.memory_space<vmem>>, vector<1x32xf32>
    %c968 = arith.constant 968 : index
    %c0_168 = arith.constant 0 : index
    %577 = vector.load %arg3[%c968, %c0_168] : memref<1024x128xf32, #tpu.memory_space<vmem>>, vector<1x32xf32>
    %cst_169 = arith.constant dense<0.000000e+00> : vector<16xf32>
    %578 = vector.multi_reduction <add>, %575, %cst_169 [1] : vector<16x32xf32> to vector<16xf32>
    %579 = vector.shape_cast %578 : vector<16xf32> to vector<16x1xf32>
    %cst_170 = arith.constant 3.200000e+01 : f32
    %580 = vector.broadcast %cst_170 : f32 to vector<16x1xf32>
    %581 = arith.divf %579, %580 : vector<16x1xf32>
    %582 = vector.broadcast %581 : vector<16x1xf32> to vector<16x32xf32>
    %583 = arith.subf %575, %582 : vector<16x32xf32>
    %584 = arith.mulf %583, %583 : vector<16x32xf32>
    %cst_171 = arith.constant dense<0.000000e+00> : vector<16xf32>
    %585 = vector.multi_reduction <add>, %584, %cst_171 [1] : vector<16x32xf32> to vector<16xf32>
    %586 = vector.shape_cast %585 : vector<16xf32> to vector<16x1xf32>
    %cst_172 = arith.constant 3.200000e+01 : f32
    %587 = vector.broadcast %cst_172 : f32 to vector<16x1xf32>
    %588 = arith.divf %586, %587 : vector<16x1xf32>
    %589 = vector.broadcast %581 : vector<16x1xf32> to vector<16x32xf32>
    %590 = arith.subf %575, %589 : vector<16x32xf32>
    %cst_173 = arith.constant 9.99999974E-6 : f32
    %591 = vector.broadcast %cst_173 : f32 to vector<16x1xf32>
    %592 = arith.addf %588, %591 : vector<16x1xf32>
    %593 = math.rsqrt %592 : vector<16x1xf32>
    %594 = vector.broadcast %593 : vector<16x1xf32> to vector<16x32xf32>
    %595 = arith.mulf %590, %594 : vector<16x32xf32>
    %596 = vector.broadcast %576 : vector<1x32xf32> to vector<16x32xf32>
    %597 = arith.mulf %595, %596 : vector<16x32xf32>
    %598 = vector.broadcast %577 : vector<1x32xf32> to vector<16x32xf32>
    %599 = arith.addf %597, %598 : vector<16x32xf32>
    %c976 = arith.constant 976 : index
    %c0_174 = arith.constant 0 : index
    %600 = vector.load %arg3[%c976, %c0_174] : memref<1024x128xf32, #tpu.memory_space<vmem>>, vector<32x16xf32>
    %cst_175 = arith.constant dense<0.000000e+00> : vector<16x16xf32>
    %601 = tpu.matmul %599, %600, %cst_175 {dimension_numbers = #tpu.dot_dimension_numbers<[1], [0], [0], [1], [0, 0, 1, 1], [], []>} : vector<16x32xf32>, vector<32x16xf32>, vector<16x16xf32> -> vector<16x16xf32>
    %c1008 = arith.constant 1008 : index
    %c0_176 = arith.constant 0 : index
    %602 = vector.load %arg3[%c1008, %c0_176] : memref<1024x128xf32, #tpu.memory_space<vmem>>, vector<1x16xf32>
    %603 = vector.broadcast %602 : vector<1x16xf32> to vector<16x16xf32>
    %604 = arith.addf %601, %603 : vector<16x16xf32>
    %cst_177 = arith.constant dense<0xFF800000> : vector<16xf32>
    %605 = vector.multi_reduction <maximumf>, %604, %cst_177 [0] : vector<16x16xf32> to vector<16xf32>
    %606 = vector.shape_cast %605 : vector<16xf32> to vector<1x16xf32>
    %607 = vector.broadcast %606 : vector<1x16xf32> to vector<16x16xf32>
    %608 = arith.subf %604, %607 : vector<16x16xf32>
    %609 = math.exp %608 : vector<16x16xf32>
    %c1016 = arith.constant 1016 : index
    %c0_178 = arith.constant 0 : index
    %610 = vector.load %arg3[%c1016, %c0_178] : memref<1024x128xf32, #tpu.memory_space<vmem>>, vector<2x16xf32>
    %611 = arith.mulf %604, %609 : vector<16x16xf32>
    %cst_179 = arith.constant dense<0.000000e+00> : vector<2x16xf32>
    %612 = tpu.matmul %610, %611, %cst_179 {dimension_numbers = #tpu.dot_dimension_numbers<[1], [0], [0], [1], [0, 0, 1, 1], [], []>} : vector<2x16xf32>, vector<16x16xf32>, vector<2x16xf32> -> vector<2x16xf32>
    %cst_180 = arith.constant dense<0.000000e+00> : vector<2x16xf32>
    %613 = tpu.matmul %610, %609, %cst_180 {dimension_numbers = #tpu.dot_dimension_numbers<[1], [0], [0], [1], [0, 0, 1, 1], [], []>} : vector<2x16xf32>, vector<16x16xf32>, vector<2x16xf32> -> vector<2x16xf32>
    %614 = arith.divf %612, %613 : vector<2x16xf32>
    %c0_181 = arith.constant 0 : index
    %c0_182 = arith.constant 0 : index
    %615 = vector.load %arg4[%c0_181, %c0_182] : memref<2x16xf32, #tpu.memory_space<vmem>>, vector<2x16xf32>
    tpu.vector_store %arg4[%c0_181, %c0_182], %614 {strides = array<i32>} : memref<2x16xf32, #tpu.memory_space<vmem>>, vector<2x16xf32>,
    return
  }
  func.func @transform_0(%arg0: i32) -> (i32, i32) {
    %c0_i32 = arith.constant 0 : i32
    %c0_i32_0 = arith.constant 0 : i32
    %c0_i32_1 = arith.constant 0 : i32
    return %c0_i32, %c0_i32_0 : i32, i32
  }
  func.func @transform_1(%arg0: i32) -> (i32, i32) {
    %c0_i32 = arith.constant 0 : i32
    %c0_i32_0 = arith.constant 0 : i32
    %c0_i32_1 = arith.constant 0 : i32
    return %c0_i32, %c0_i32_0 : i32, i32
  }
  func.func @transform_2(%arg0: i32) -> (i32, i32) {
    %c0_i32 = arith.constant 0 : i32
    %c0_i32_0 = arith.constant 0 : i32
    %c0_i32_1 = arith.constant 0 : i32
    return %c0_i32, %c0_i32_0 : i32, i32
  }
  func.func @transform_3(%arg0: i32) -> (i32, i32) {
    %c0_i32 = arith.constant 0 : i32
    %c0_i32_0 = arith.constant 0 : i32
    %c0_i32_1 = arith.constant 0 : i32
    return %c0_i32, %c0_i32_0 : i32, i32
  }
}

</mosaic_0001>

<llo_original>
// kernel: _fwd.1
$region0: #{_fwd.1}
  #allocation0 [shape = 'u32[]', space=smem, size = 0x4, offset = 0x4, fixed_abs, tag = 'smem constant byte address 0x4 - core index']
  #allocation1 [shape = 'u32[144,128]{1,0:T(1,128)}', space=vmem, size = 0x12000, scoped, tag = 'internal scratch']
  %s0 = inlined_call_operand.vmem [shape: f32[128,48], index: 0, kind: input, shape index: {}]
  %s1 = inlined_call_operand.vmem [shape: bf16[496,128], index: 1, kind: input, shape index: {}]
  %s2 = inlined_call_operand.vmem [shape: f32[1024,128], index: 2, kind: input, shape index: {}]
  %s3 = inlined_call_operand.hbm [shape: f32[2,16], index: 3, kind: output, shape index: {}]
  %s4 = sld [smem:[#allocation0]]
  $region22: #{_fwd.1} parent=0
    _
  %s6 = ssub.s32 1, %s4
  %s7 = scalar_select 0, %s6, %s4
  $region1: #{_fwd.1} parent=0
    #allocation2 [shape = 'u8[1024]{0}', space=vmem, size = 0x400, scoped, tag = 'output window, operand 0, single buffered']
    #allocation3 [shape = 's32[1]{0}', space=sflag, size = 0x4, scoped, tag = 'scoped memory for _fwd.1']
    %8 = vsyncpa [#allocation3], 0
    // Predicated region
    $region2: #{_fwd.1} parent=1 // pred_check
      _
    $region3: #{_fwd.1} parent=1 // pred_check_branch
      %10 = sbr.rel (0) target = $region5
    $region4: #{_fwd.1} parent=1 // pred_region
      _
    $region5: #{_fwd.1} parent=1 // pred_fallthru
      _
    // Predicated region
    $region6: #{_fwd.1} parent=1 // pred_check
      _
    $region7: #{_fwd.1} parent=1 // pred_check_branch
      %12 = sbr.rel (0) target = $region9
    $region8: #{_fwd.1} parent=1 // pred_region
      _
    $region9: #{_fwd.1} parent=1 // pred_fallthru
      _
    // Predicated region
    $region10: #{_fwd.1} parent=1 // pred_check
      _
    $region11: #{_fwd.1} parent=1 // pred_check_branch
      %14 = sbr.rel (0) target = $region13
    $region12: #{_fwd.1} parent=1 // pred_region
      _
    $region13: #{_fwd.1} parent=1 // pred_fallthru
      _
    %v16 = vld [vmem:[%s0] sm:$0xff]
    %v17 = vld [vmem:[%s0 + $0x8] sm:$0xff]
    %v18 = vld [vmem:[%s0 + $0x10] sm:$0xff]
    %v19 = vld [vmem:[%s0 + $0x18] sm:$0xff]
    %v20 = vld [vmem:[%s0 + $0x20] sm:$0xff]
    %v21 = vld [vmem:[%s0 + $0x28] sm:$0xff]
    %v22 = vld [vmem:[%s0 + $0x30] sm:$0xff]
    %v23 = vld [vmem:[%s0 + $0x38] sm:$0xff]
    %v24 = vld [vmem:[%s0 + $0x40] sm:$0xff]
    %v25 = vld [vmem:[%s0 + $0x48] sm:$0xff]
    %v26 = vld [vmem:[%s0 + $0x50] sm:$0xff]
    %v27 = vld [vmem:[%s0 + $0x58] sm:$0xff]
    %v28 = vld [vmem:[%s0 + $0x60] sm:$0xff]
    %v29 = vld [vmem:[%s0 + $0x68] sm:$0xff]
    %v30 = vld [vmem:[%s0 + $0x70] sm:$0xff]
    %v31 = vld [vmem:[%s0 + $0x78] sm:$0xff]
    %v32 = vld [vmem:[%s1] sm:$0xf]
    %v33 = vld [vmem:[%s1 + $0x4] sm:$0xf]
    %v34 = vld [vmem:[%s1 + $0x8] sm:$0xf]
    %v35 = vld [vmem:[%s1 + $0xc] sm:$0xf]
    %v36 = vld [vmem:[%s1 + $0x10] sm:$0xf]
    %v37 = vld [vmem:[%s1 + $0x14] sm:$0xf]
    %v38 = vpack.c.bf16 %v17, %v16
    %v39 = vpack.c.bf16 %v19, %v18
    %v40 = vpack.c.bf16 %v21, %v20
    %v41 = vpack.c.bf16 %v23, %v22
    %v42 = vpack.c.bf16 %v25, %v24
    %v43 = vpack.c.bf16 %v27, %v26
    %v44 = vpack.c.bf16 %v29, %v28
    %v45 = vpack.c.bf16 %v31, %v30
    %v46 = vld [vmem:[%s2] sm:$0x1]
    %v47 = vlaneseq
    %v48 = vshrl.u32 %v47, 7
    %v49 = vsub.s32 0, %v48
    %v50 = vrot.slane %v46, %v49
    %v57 = vunpack.c.l.b16 %v32
    %v58 = vunpack.c.l.b16 %v33
    %v59 = vunpack.c.l.b16 %v34
    %v60 = vunpack.c.l.b16 %v35
    %v61 = vunpack.c.l.b16 %v36
    %v62 = vunpack.c.l.b16 %v37
    %v63 = vpack.c.b16 %v58, %v57
    %v64 = vpack.c.b16 %v60, %v59
    %v65 = vpack.c.b16 %v62, %v61
    %vm69 = vcmask 392192
    %v71 = vsel %vm69, %v38, 0
    %v74 = vsel %vm69, %v39, 0
    %v77 = vsel %vm69, %v40, 0
    %v80 = vsel %vm69, %v41, 0
    %v83 = vsel %vm69, %v42, 0
    %v86 = vsel %vm69, %v43, 0
    %v89 = vsel %vm69, %v44, 0
    %v92 = vsel %vm69, %v45, 0
    %94 = vmatprep.subr.bf16.mxu0 0
    %95 = vmatpush1.bf16.msra.mxu0 %v63
    %96 = vmatprep.subr.bf16.mxu0 0
    %97 = vmatpush1.bf16.msra.mxu0 %v64
    %98 = vmatprep.subr.bf16.mxu0 0
    %99 = vmatpush1.bf16.msra.mxu0 %v65
    %100 = vmatprep.subr.bf16.mxu0 0
    %101 = vmatpush1.bf16.msra.mxu0 0
    %102 = vmatprep.subr.bf16.mxu0 0
    %103 = vmatpush1.bf16.msra.mxu0 0
    %104 = vmatprep.subr.bf16.mxu0 0
    %105 = vmatpush1.bf16.msra.mxu0 0
    %106 = vmatprep.subr.bf16.mxu0 0
    %107 = vmatpush1.bf16.msra.mxu0 0
    %108 = vmatprep.subr.bf16.mxu0 0
    %109 = vmatpush1.bf16.msra.mxu0 0
    %110 = vmatprep.subr.bf16.mxu0 0
    %111 = vmatpush1.bf16.msra.mxu0 0
    %112 = vmatprep.subr.bf16.mxu0 0
    %113 = vmatpush1.bf16.msra.mxu0 0
    %114 = vmatprep.subr.bf16.mxu0 0
    %115 = vmatpush1.bf16.msra.mxu0 0
    %116 = vmatprep.subr.bf16.mxu0 0
    %117 = vmatpush1.bf16.msra.mxu0 0
    %118 = vmatprep.subr.bf16.mxu0 0
    %119 = vmatpush1.bf16.msra.mxu0 0
    %120 = vmatprep.subr.bf16.mxu0 0
    %121 = vmatpush1.bf16.msra.mxu0 0
    %122 = vmatprep.subr.bf16.mxu0 0
    %123 = vmatpush1.bf16.msra.mxu0 0
    %124 = vmatprep.subr.bf16.mxu0 0
    %125 = vmatpush1.bf16.msra.mxu0 0
    %126 = vmatprep.mubr.bf16.mxu0 0
    %127 = vmatmul.mubr.bf16.gmra.mrb[0].mxu0 %v71
    %v128 = vpop.f32.mrb[0].mxu0
    %v129 = vadd.f32 %v50, %v128
    %v130 = vpop.f32.mrb[0].mxu0
    %v131 = vpop.f32.mrb[0].mxu0
    %v132 = vadd.f32 %v50, %v131
    %v133 = vpop.f32.mrb[0].mxu0
    %134 = vmatprep.mubr.bf16.mxu0 0
    %135 = vmatmul.mubr.bf16.gmra.mrb[0].mxu0 %v74
    %v136 = vpop.f32.mrb[0].mxu0
    %v137 = vadd.f32 %v50, %v136
    %v138 = vpop.f32.mrb[0].mxu0
    %v139 = vpop.f32.mrb[0].mxu0
    %v140 = vadd.f32 %v50, %v139
    %v141 = vpop.f32.mrb[0].mxu0
    %142 = vmatprep.mubr.bf16.mxu0 0
    %143 = vmatmul.mubr.bf16.gmra.mrb[0].mxu0 %v77
    %v144 = vpop.f32.mrb[0].mxu0
    %v145 = vadd.f32 %v50, %v144
    %v146 = vpop.f32.mrb[0].mxu0
    %v147 = vpop.f32.mrb[0].mxu0
    %v148 = vadd.f32 %v50, %v147
    %v149 = vpop.f32.mrb[0].mxu0
    %150 = vmatprep.mubr.bf16.mxu0 0
    %151 = vmatmul.mubr.bf16.gmra.mrb[0].mxu0 %v80
    %v152 = vpop.f32.mrb[0].mxu0
    %v153 = vadd.f32 %v50, %v152
    %v154 = vpop.f32.mrb[0].mxu0
    %v155 = vpop.f32.mrb[0].mxu0
    %v156 = vadd.f32 %v50, %v155
    %v157 = vpop.f32.mrb[0].mxu0
    %158 = vmatprep.mubr.bf16.mxu0 0
    %159 = vmatmul.mubr.bf16.gmra.mrb[0].mxu0 %v83
    %v160 = vpop.f32.mrb[0].mxu0
    %v161 = vadd.f32 %v50, %v160
    %v162 = vpop.f32.mrb[0].mxu0
    %v163 = vpop.f32.mrb[0].mxu0
    %v164 = vadd.f32 %v50, %v163
    %v165 = vpop.f32.mrb[0].mxu0
    %166 = vmatprep.mubr.bf16.mxu0 0
    %167 = vmatmul.mubr.bf16.gmra.mrb[0].mxu0 %v86
    %v168 = vpop.f32.mrb[0].mxu0
    %v169 = vadd.f32 %v50, %v168
    %v170 = vpop.f32.mrb[0].mxu0
    %v171 = vpop.f32.mrb[0].mxu0
    %v172 = vadd.f32 %v50, %v171
    %v173 = vpop.f32.mrb[0].mxu0
    %174 = vmatprep.mubr.bf16.mxu0 0
    %175 = vmatmul.mubr.bf16.gmra.mrb[0].mxu0 %v89
    %v176 = vpop.f32.mrb[0].mxu0
    %v177 = vadd.f32 %v50, %v176
    %v178 = vpop.f32.mrb[0].mxu0
    %v179 = vpop.f32.mrb[0].mxu0
    %v180 = vadd.f32 %v50, %v179
    %v181 = vpop.f32.mrb[0].mxu0
    %182 = vmatprep.mubr.bf16.mxu0 0
    %183 = vmatmul.mubr.bf16.gmra.mrb[0].mxu0 %v92
    %v184 = vpop.f32.mrb[0].mxu0
    %v185 = vadd.f32 %v50, %v184
    %v186 = vpop.f32.mrb[0].mxu0
    %v187 = vpop.f32.mrb[0].mxu0
    %v188 = vadd.f32 %v50, %v187
    %v189 = vpop.f32.mrb[0].mxu0
    %190 = vdwg.mxu0
    %v191 = vld [vmem:[%s2 + $0x10] sm:$0x1]
    %v192 = vld [vmem:[%s2 + $0x18] sm:$0x1]
    %vm193 = vcmask 130048
    %v194 = vsel %vm193, %v129, 0.0
    %195 = vadd.xlane.f32.xlu0 %v194
    %v196 = vpop.xlane.xlu0 %195
    %v197 = vsel %vm193, %v132, 0.0
    %198 = vadd.xlane.f32.xlu0 %v197
    %v199 = vpop.xlane.xlu0 %198
    %v200 = vsel %vm193, %v137, 0.0
    %201 = vadd.xlane.f32.xlu0 %v200
    %v202 = vpop.xlane.xlu0 %201
    %v203 = vsel %vm193, %v140, 0.0
    %204 = vadd.xlane.f32.xlu0 %v203
    %v205 = vpop.xlane.xlu0 %204
    %v206 = vsel %vm193, %v145, 0.0
    %207 = vadd.xlane.f32.xlu0 %v206
    %v208 = vpop.xlane.xlu0 %207
    %v209 = vsel %vm193, %v148, 0.0
    %210 = vadd.xlane.f32.xlu0 %v209
    %v211 = vpop.xlane.xlu0 %210
    %v212 = vsel %vm193, %v153, 0.0
    %213 = vadd.xlane.f32.xlu0 %v212
    %v214 = vpop.xlane.xlu0 %213
    %v215 = vsel %vm193, %v156, 0.0
    %216 = vadd.xlane.f32.xlu0 %v215
    %v217 = vpop.xlane.xlu0 %216
    %v218 = vsel %vm193, %v161, 0.0
    %219 = vadd.xlane.f32.xlu0 %v218
    %v220 = vpop.xlane.xlu0 %219
    %v221 = vsel %vm193, %v164, 0.0
    %222 = vadd.xlane.f32.xlu0 %v221
    %v223 = vpop.xlane.xlu0 %222
    %v224 = vsel %vm193, %v169, 0.0
    %225 = vadd.xlane.f32.xlu0 %v224
    %v226 = vpop.xlane.xlu0 %225
    %v227 = vsel %vm193, %v172, 0.0
    %228 = vadd.xlane.f32.xlu0 %v227
    %v229 = vpop.xlane.xlu0 %228
    %v230 = vsel %vm193, %v177, 0.0
    %231 = vadd.xlane.f32.xlu0 %v230
    %v232 = vpop.xlane.xlu0 %231
    %v233 = vsel %vm193, %v180, 0.0
    %234 = vadd.xlane.f32.xlu0 %v233
    %v235 = vpop.xlane.xlu0 %234
    %v236 = vsel %vm193, %v185, 0.0
    %237 = vadd.xlane.f32.xlu0 %v236
    %v238 = vpop.xlane.xlu0 %237
    %v239 = vsel %vm193, %v188, 0.0
    %240 = vadd.xlane.f32.xlu0 %v239
    %v241 = vpop.xlane.xlu0 %240
    %v242 = vrcp.pop 16.0
    %v243 = vmul.f32 %v196, %v242
    %v244 = vmul.f32 %v199, %v242
    %v245 = vmul.f32 %v202, %v242
    %v246 = vmul.f32 %v205, %v242
    %v247 = vmul.f32 %v208, %v242
    %v248 = vmul.f32 %v211, %v242
    %v249 = vmul.f32 %v214, %v242
    %v250 = vmul.f32 %v217, %v242
    %v251 = vmul.f32 %v220, %v242
    %v252 = vmul.f32 %v223, %v242
    %v253 = vmul.f32 %v226, %v242
    %v254 = vmul.f32 %v229, %v242
    %v255 = vmul.f32 %v232, %v242
    %v256 = vmul.f32 %v235, %v242
    %v257 = vmul.f32 %v238, %v242
    %v258 = vmul.f32 %v241, %v242
    %v259 = vsub.f32 %v129, %v243
    %v260 = vsub.f32 %v132, %v244
    %v261 = vsub.f32 %v137, %v245
    %v262 = vsub.f32 %v140, %v246
    %v263 = vsub.f32 %v145, %v247
    %v264 = vsub.f32 %v148, %v248
    %v265 = vsub.f32 %v153, %v249
    %v266 = vsub.f32 %v156, %v250
    %v267 = vsub.f32 %v161, %v251
    %v268 = vsub.f32 %v164, %v252
    %v269 = vsub.f32 %v169, %v253
    %v270 = vsub.f32 %v172, %v254
    %v271 = vsub.f32 %v177, %v255
    %v272 = vsub.f32 %v180, %v256
    %v273 = vsub.f32 %v185, %v257
    %v274 = vsub.f32 %v188, %v258
    %v275 = vmul.f32 %v259, %v259
    %v276 = vmul.f32 %v260, %v260
    %v277 = vmul.f32 %v261, %v261
    %v278 = vmul.f32 %v262, %v262
    %v279 = vmul.f32 %v263, %v263
    %v280 = vmul.f32 %v264, %v264
    %v281 = vmul.f32 %v265, %v265
    %v282 = vmul.f32 %v266, %v266
    %v283 = vmul.f32 %v267, %v267
    %v284 = vmul.f32 %v268, %v268
    %v285 = vmul.f32 %v269, %v269
    %v286 = vmul.f32 %v270, %v270
    %v287 = vmul.f32 %v271, %v271
    %v288 = vmul.f32 %v272, %v272
    %v289 = vmul.f32 %v273, %v273
    %v290 = vmul.f32 %v274, %v274
    %v291 = vsel %vm193, %v275, 0.0
    %292 = vadd.xlane.f32.xlu0 %v291
    %v293 = vpop.xlane.xlu0 %292
    %v294 = vsel %vm193, %v276, 0.0
    %295 = vadd.xlane.f32.xlu0 %v294
    %v296 = vpop.xlane.xlu0 %295
    %v297 = vsel %vm193, %v277, 0.0
    %298 = vadd.xlane.f32.xlu0 %v297
    %v299 = vpop.xlane.xlu0 %298
    %v300 = vsel %vm193, %v278, 0.0
    %301 = vadd.xlane.f32.xlu0 %v300
    %v302 = vpop.xlane.xlu0 %301
    %v303 = vsel %vm193, %v279, 0.0
    %304 = vadd.xlane.f32.xlu0 %v303
    %v305 = vpop.xlane.xlu0 %304
    %v306 = vsel %vm193, %v280, 0.0
    %307 = vadd.xlane.f32.xlu0 %v306
    %v308 = vpop.xlane.xlu0 %307
    %v309 = vsel %vm193, %v281, 0.0
    %310 = vadd.xlane.f32.xlu0 %v309
    %v311 = vpop.xlane.xlu0 %310
    %v312 = vsel %vm193, %v282, 0.0
    %313 = vadd.xlane.f32.xlu0 %v312
    %v314 = vpop.xlane.xlu0 %313
    %v315 = vsel %vm193, %v283, 0.0
    %316 = vadd.xlane.f32.xlu0 %v315
    %v317 = vpop.xlane.xlu0 %316
    %v318 = vsel %vm193, %v284, 0.0
    %319 = vadd.xlane.f32.xlu0 %v318
    %v320 = vpop.xlane.xlu0 %319
    %v321 = vsel %vm193, %v285, 0.0
    %322 = vadd.xlane.f32.xlu0 %v321
    %v323 = vpop.xlane.xlu0 %322
    %v324 = vsel %vm193, %v286, 0.0
    %325 = vadd.xlane.f32.xlu0 %v324
    %v326 = vpop.xlane.xlu0 %325
    %v327 = vsel %vm193, %v287, 0.0
    %328 = vadd.xlane.f32.xlu0 %v327
    %v329 = vpop.xlane.xlu0 %328
    %v330 = vsel %vm193, %v288, 0.0
    %331 = vadd.xlane.f32.xlu0 %v330
    %v332 = vpop.xlane.xlu0 %331
    %v333 = vsel %vm193, %v289, 0.0
    %334 = vadd.xlane.f32.xlu0 %v333
    %v335 = vpop.xlane.xlu0 %334
    %v336 = vsel %vm193, %v290, 0.0
    %337 = vadd.xlane.f32.xlu0 %v336
    %v338 = vpop.xlane.xlu0 %337
    %v339 = vmul.f32 %v293, %v242
    %v340 = vmul.f32 %v296, %v242
    %v341 = vmul.f32 %v299, %v242
    %v342 = vmul.f32 %v302, %v242
    %v343 = vmul.f32 %v305, %v242
    %v344 = vmul.f32 %v308, %v242
    %v345 = vmul.f32 %v311, %v242
    %v346 = vmul.f32 %v314, %v242
    %v347 = vmul.f32 %v317, %v242
    %v348 = vmul.f32 %v320, %v242
    %v349 = vmul.f32 %v323, %v242
    %v350 = vmul.f32 %v326, %v242
    %v351 = vmul.f32 %v329, %v242
    %v352 = vmul.f32 %v332, %v242
    %v353 = vmul.f32 %v335, %v242
    %v354 = vmul.f32 %v338, %v242
    %v355 = vadd.f32 %v339, 1e-05
    %v356 = vadd.f32 %v340, 1e-05
    %v357 = vadd.f32 %v341, 1e-05
    %v358 = vadd.f32 %v342, 1e-05
    %v359 = vadd.f32 %v343, 1e-05
    %v360 = vadd.f32 %v344, 1e-05
    %v361 = vadd.f32 %v345, 1e-05
    %v362 = vadd.f32 %v346, 1e-05
    %v363 = vadd.f32 %v347, 1e-05
    %v364 = vadd.f32 %v348, 1e-05
    %v365 = vadd.f32 %v349, 1e-05
    %v366 = vadd.f32 %v350, 1e-05
    %v367 = vadd.f32 %v351, 1e-05
    %v368 = vadd.f32 %v352, 1e-05
    %v369 = vadd.f32 %v353, 1e-05
    %v370 = vadd.f32 %v354, 1e-05
    %v371 = vrsqrt.pop %v355
    %v372 = vrsqrt.pop %v356
    %v373 = vrsqrt.pop %v357
    %v374 = vrsqrt.pop %v358
    %v375 = vrsqrt.pop %v359
    %v376 = vrsqrt.pop %v360
    %v377 = vrsqrt.pop %v361
    %v378 = vrsqrt.pop %v362
    %v379 = vrsqrt.pop %v363
    %v380 = vrsqrt.pop %v364
    %v381 = vrsqrt.pop %v365
    %v382 = vrsqrt.pop %v366
    %v383 = vrsqrt.pop %v367
    %v384 = vrsqrt.pop %v368
    %v385 = vrsqrt.pop %v369
    %v386 = vrsqrt.pop %v370
    %v387 = vmul.f32 %v259, %v371
    %v388 = vmul.f32 %v260, %v372
    %v389 = vmul.f32 %v261, %v373
    %v390 = vmul.f32 %v262, %v374
    %v391 = vmul.f32 %v263, %v375
    %v392 = vmul.f32 %v264, %v376
    %v393 = vmul.f32 %v265, %v377
    %v394 = vmul.f32 %v266, %v378
    %v395 = vmul.f32 %v267, %v379
    %v396 = vmul.f32 %v268, %v380
    %v397 = vmul.f32 %v269, %v381
    %v398 = vmul.f32 %v270, %v382
    %v399 = vmul.f32 %v271, %v383
    %v400 = vmul.f32 %v272, %v384
    %v401 = vmul.f32 %v273, %v385
    %v402 = vmul.f32 %v274, %v386
    %v403 = vlaneseq
    %v404 = vshrl.u32 %v403, 7
    %v405 = vsub.s32 0, %v404
    %v406 = vrot.slane %v191, %v405
    %v407 = vmul.f32 %v387, %v406
    %v408 = vmul.f32 %v388, %v406
    %v409 = vmul.f32 %v389, %v406
    %v410 = vmul.f32 %v390, %v406
    %v411 = vmul.f32 %v391, %v406
    %v412 = vmul.f32 %v392, %v406
    %v413 = vmul.f32 %v393, %v406
    %v414 = vmul.f32 %v394, %v406
    %v415 = vmul.f32 %v395, %v406
    %v416 = vmul.f32 %v396, %v406
    %v417 = vmul.f32 %v397, %v406
    %v418 = vmul.f32 %v398, %v406
    %v419 = vmul.f32 %v399, %v406
    %v420 = vmul.f32 %v400, %v406
    %v421 = vmul.f32 %v401, %v406
    %v422 = vmul.f32 %v402, %v406
    %v423 = vlaneseq
    %v424 = vshrl.u32 %v423, 7
    %v425 = vsub.s32 0, %v424
    %v426 = vrot.slane %v192, %v425
    %v427 = vadd.f32 %v407, %v426
    %v428 = vadd.f32 %v408, %v426
    %v429 = vadd.f32 %v409, %v426
    %v430 = vadd.f32 %v410, %v426
    %v431 = vadd.f32 %v411, %v426
    %v432 = vadd.f32 %v412, %v426
    %v433 = vadd.f32 %v413, %v426
    %v434 = vadd.f32 %v414, %v426
    %v435 = vadd.f32 %v415, %v426
    %v436 = vadd.f32 %v416, %v426
    %v437 = vadd.f32 %v417, %v426
    %v438 = vadd.f32 %v418, %v426
    %v439 = vadd.f32 %v419, %v426
    %v440 = vadd.f32 %v420, %v426
    %v441 = vadd.f32 %v421, %v426
    %v442 = vadd.f32 %v422, %v426
    %v443 = vld [vmem:[%s2 + $0x70] sm:$0xff]
    %v444 = vld [vmem:[%s2 + $0x78] sm:$0xff]
    %v445 = vld [vmem:[%s2 + $0x80] sm:$0xff]
    %v446 = vld [vmem:[%s2 + $0x88] sm:$0xff]
    %v447 = vld [vmem:[%s2 + $0x90] sm:$0xff]
    %v448 = vld [vmem:[%s2 + $0x98] sm:$0xff]
    %v449 = vld [vmem:[%s2 + $0xa0] sm:$0xff]
    %v450 = vld [vmem:[%s2 + $0xa8] sm:$0xff]
    %v451 = vld [vmem:[%s2 + $0xb0] sm:$0xff]
    %v452 = vld [vmem:[%s2 + $0xb8] sm:$0xff]
    %v453 = vld [vmem:[%s2 + $0xc0] sm:$0xff]
    %v454 = vld [vmem:[%s2 + $0xc8] sm:$0xff]
    %v455 = vld [vmem:[%s2 + $0xd0] sm:$0xff]
    %v456 = vld [vmem:[%s2 + $0xd8] sm:$0xff]
    %v457 = vld [vmem:[%s2 + $0xe0] sm:$0xff]
    %v458 = vld [vmem:[%s2 + $0xe8] sm:$0xff]
    %460 = vset.pattern.permute.xlu0 0
    %461 = vperm.xlu0 %460, %v443
    %v462 = vpop.permute.xlu0 %461
    %465 = vset.pattern.permute.xlu0 0
    %466 = vperm.xlu0 %465, %v444
    %v467 = vpop.permute.xlu0 %466
    %470 = vset.pattern.permute.xlu0 0
    %471 = vperm.xlu0 %470, %v445
    %v472 = vpop.permute.xlu0 %471
    %475 = vset.pattern.permute.xlu0 0
    %476 = vperm.xlu0 %475, %v446
    %v477 = vpop.permute.xlu0 %476
    %480 = vset.pattern.permute.xlu0 0
    %481 = vperm.xlu0 %480, %v447
    %v482 = vpop.permute.xlu0 %481
    %485 = vset.pattern.permute.xlu0 0
    %486 = vperm.xlu0 %485, %v448
    %v487 = vpop.permute.xlu0 %486
    %490 = vset.pattern.permute.xlu0 0
    %491 = vperm.xlu0 %490, %v449
    %v492 = vpop.permute.xlu0 %491
    %495 = vset.pattern.permute.xlu0 0
    %496 = vperm.xlu0 %495, %v450
    %v497 = vpop.permute.xlu0 %496
    %500 = vset.pattern.permute.xlu0 0
    %501 = vperm.xlu0 %500, %v451
    %v502 = vpop.permute.xlu0 %501
    %505 = vset.pattern.permute.xlu0 0
    %506 = vperm.xlu0 %505, %v452
    %v507 = vpop.permute.xlu0 %506
    %510 = vset.pattern.permute.xlu0 0
    %511 = vperm.xlu0 %510, %v453
    %v512 = vpop.permute.xlu0 %511
    %515 = vset.pattern.permute.xlu0 0
    %516 = vperm.xlu0 %515, %v454
    %v517 = vpop.permute.xlu0 %516
    %520 = vset.pattern.permute.xlu0 0
    %521 = vperm.xlu0 %520, %v455
    %v522 = vpop.permute.xlu0 %521
    %525 = vset.pattern.permute.xlu0 0
    %526 = vperm.xlu0 %525, %v456
    %v527 = vpop.permute.xlu0 %526
    %530 = vset.pattern.permute.xlu0 0
    %531 = vperm.xlu0 %530, %v457
    %v532 = vpop.permute.xlu0 %531
    %535 = vset.pattern.permute.xlu0 0
    %536 = vperm.xlu0 %535, %v458
    %v537 = vpop.permute.xlu0 %536
    %v539 = vmul.f32 %v427, %v462
    %v540 = vmul.f32 %v428, %v467
    %v541 = vmul.f32 %v429, %v472
    %v542 = vmul.f32 %v430, %v477
    %v543 = vmul.f32 %v431, %v482
    %v544 = vmul.f32 %v432, %v487
    %v545 = vmul.f32 %v433, %v492
    %v546 = vmul.f32 %v434, %v497
    %v547 = vmul.f32 %v435, %v502
    %v548 = vmul.f32 %v436, %v507
    %v549 = vmul.f32 %v437, %v512
    %v550 = vmul.f32 %v438, %v517
    %v551 = vmul.f32 %v439, %v522
    %v552 = vmul.f32 %v440, %v527
    %v553 = vmul.f32 %v441, %v532
    %v554 = vmul.f32 %v442, %v537
    %vm557 = vcmask 1040384
    %v558 = vrot.slane %v441, 7
    %v559 = vrot.slane %v442, 7
    %v560 = vsel %vm557, %v558, %v559
    %v577 = vrot.slane %v427, 7
    %v578 = vrot.slane %v428, 7
    %v579 = vsel %vm557, %v577, %v578
    %v580 = vrot.slane %v429, 7
    %v581 = vsel %vm557, %v578, %v580
    %v582 = vrot.slane %v430, 7
    %v583 = vsel %vm557, %v580, %v582
    %v584 = vrot.slane %v431, 7
    %v585 = vsel %vm557, %v582, %v584
    %v586 = vrot.slane %v432, 7
    %v587 = vsel %vm557, %v584, %v586
    %v588 = vrot.slane %v433, 7
    %v589 = vsel %vm557, %v586, %v588
    %v590 = vrot.slane %v434, 7
    %v591 = vsel %vm557, %v588, %v590
    %v592 = vrot.slane %v435, 7
    %v593 = vsel %vm557, %v590, %v592
    %v594 = vrot.slane %v436, 7
    %v595 = vsel %vm557, %v592, %v594
    %v596 = vrot.slane %v437, 7
    %v597 = vsel %vm557, %v594, %v596
    %v598 = vrot.slane %v438, 7
    %v599 = vsel %vm557, %v596, %v598
    %v600 = vrot.slane %v439, 7
    %v601 = vsel %vm557, %v598, %v600
    %v602 = vrot.slane %v440, 7
    %v603 = vsel %vm557, %v600, %v602
    %v604 = vsel %vm557, %v602, %v558
    %v620 = vsel %vm557, %v559, %v577
    %621 = vset.pattern.permute.xlu0 1
    %622 = vperm.xlu0 %621, %v443
    %v623 = vpop.permute.xlu0 %622
    %625 = vset.pattern.permute.xlu0 1
    %626 = vperm.xlu0 %625, %v444
    %v627 = vpop.permute.xlu0 %626
    %629 = vset.pattern.permute.xlu0 1
    %630 = vperm.xlu0 %629, %v445
    %v631 = vpop.permute.xlu0 %630
    %633 = vset.pattern.permute.xlu0 1
    %634 = vperm.xlu0 %633, %v446
    %v635 = vpop.permute.xlu0 %634
    %637 = vset.pattern.permute.xlu0 1
    %638 = vperm.xlu0 %637, %v447
    %v639 = vpop.permute.xlu0 %638
    %641 = vset.pattern.permute.xlu0 1
    %642 = vperm.xlu0 %641, %v448
    %v643 = vpop.permute.xlu0 %642
    %645 = vset.pattern.permute.xlu0 1
    %646 = vperm.xlu0 %645, %v449
    %v647 = vpop.permute.xlu0 %646
    %649 = vset.pattern.permute.xlu0 1
    %650 = vperm.xlu0 %649, %v450
    %v651 = vpop.permute.xlu0 %650
    %653 = vset.pattern.permute.xlu0 1
    %654 = vperm.xlu0 %653, %v451
    %v655 = vpop.permute.xlu0 %654
    %657 = vset.pattern.permute.xlu0 1
    %658 = vperm.xlu0 %657, %v452
    %v659 = vpop.permute.xlu0 %658
    %661 = vset.pattern.permute.xlu0 1
    %662 = vperm.xlu0 %661, %v453
    %v663 = vpop.permute.xlu0 %662
    %665 = vset.pattern.permute.xlu0 1
    %666 = vperm.xlu0 %665, %v454
    %v667 = vpop.permute.xlu0 %666
    %669 = vset.pattern.permute.xlu0 1
    %670 = vperm.xlu0 %669, %v455
    %v671 = vpop.permute.xlu0 %670
    %673 = vset.pattern.permute.xlu0 1
    %674 = vperm.xlu0 %673, %v456
    %v675 = vpop.permute.xlu0 %674
    %677 = vset.pattern.permute.xlu0 1
    %678 = vperm.xlu0 %677, %v457
    %v679 = vpop.permute.xlu0 %678
    %681 = vset.pattern.permute.xlu0 1
    %682 = vperm.xlu0 %681, %v458
    %v683 = vpop.permute.xlu0 %682
    %v685 = vmul.f32 %v560, %v623
    %v686 = vmul.f32 %v620, %v627
    %v687 = vmul.f32 %v579, %v631
    %v688 = vmul.f32 %v581, %v635
    %v689 = vmul.f32 %v583, %v639
    %v690 = vmul.f32 %v585, %v643
    %v691 = vmul.f32 %v587, %v647
    %v692 = vmul.f32 %v589, %v651
    %v693 = vmul.f32 %v591, %v655
    %v694 = vmul.f32 %v593, %v659
    %v695 = vmul.f32 %v595, %v663
    %v696 = vmul.f32 %v597, %v667
    %v697 = vmul.f32 %v599, %v671
    %v698 = vmul.f32 %v601, %v675
    %v699 = vmul.f32 %v603, %v679
    %v700 = vmul.f32 %v604, %v683
    %v701 = vadd.f32 %v539, %v685
    %v702 = vadd.f32 %v540, %v686
    %v703 = vadd.f32 %v541, %v687
    %v704 = vadd.f32 %v542, %v688
    %v705 = vadd.f32 %v543, %v689
    %v706 = vadd.f32 %v544, %v690
    %v707 = vadd.f32 %v545, %v691
    %v708 = vadd.f32 %v546, %v692
    %v709 = vadd.f32 %v547, %v693
    %v710 = vadd.f32 %v548, %v694
    %v711 = vadd.f32 %v549, %v695
    %v712 = vadd.f32 %v550, %v696
    %v713 = vadd.f32 %v551, %v697
    %v714 = vadd.f32 %v552, %v698
    %v715 = vadd.f32 %v553, %v699
    %v716 = vadd.f32 %v554, %v700
    %717 = vset.pattern.permute.xlu0 2
    %718 = vperm.xlu0 %717, %v443
    %v719 = vpop.permute.xlu0 %718
    %721 = vset.pattern.permute.xlu0 2
    %722 = vperm.xlu0 %721, %v444
    %v723 = vpop.permute.xlu0 %722
    %725 = vset.pattern.permute.xlu0 2
    %726 = vperm.xlu0 %725, %v445
    %v727 = vpop.permute.xlu0 %726
    %729 = vset.pattern.permute.xlu0 2
    %730 = vperm.xlu0 %729, %v446
    %v731 = vpop.permute.xlu0 %730
    %733 = vset.pattern.permute.xlu0 2
    %734 = vperm.xlu0 %733, %v447
    %v735 = vpop.permute.xlu0 %734
    %737 = vset.pattern.permute.xlu0 2
    %738 = vperm.xlu0 %737, %v448
    %v739 = vpop.permute.xlu0 %738
    %741 = vset.pattern.permute.xlu0 2
    %742 = vperm.xlu0 %741, %v449
    %v743 = vpop.permute.xlu0 %742
    %745 = vset.pattern.permute.xlu0 2
    %746 = vperm.xlu0 %745, %v450
    %v747 = vpop.permute.xlu0 %746
    %749 = vset.pattern.permute.xlu0 2
    %750 = vperm.xlu0 %749, %v451
    %v751 = vpop.permute.xlu0 %750
    %753 = vset.pattern.permute.xlu0 2
    %754 = vperm.xlu0 %753, %v452
    %v755 = vpop.permute.xlu0 %754
    %757 = vset.pattern.permute.xlu0 2
    %758 = vperm.xlu0 %757, %v453
    %v759 = vpop.permute.xlu0 %758
    %761 = vset.pattern.permute.xlu0 2
    %762 = vperm.xlu0 %761, %v454
    %v763 = vpop.permute.xlu0 %762
    %765 = vset.pattern.permute.xlu0 2
    %766 = vperm.xlu0 %765, %v455
    %v767 = vpop.permute.xlu0 %766
    %769 = vset.pattern.permute.xlu0 2
    %770 = vperm.xlu0 %769, %v456
    %v771 = vpop.permute.xlu0 %770
    %773 = vset.pattern.permute.xlu0 2
    %774 = vperm.xlu0 %773, %v457
    %v775 = vpop.permute.xlu0 %774
    %777 = vset.pattern.permute.xlu0 2
    %778 = vperm.xlu0 %777, %v458
    %v779 = vpop.permute.xlu0 %778
    %v781 = vmul.f32 %v442, %v719
    %v782 = vmul.f32 %v427, %v723
    %v783 = vmul.f32 %v428, %v727
    %v784 = vmul.f32 %v429, %v731
    %v785 = vmul.f32 %v430, %v735
    %v786 = vmul.f32 %v431, %v739
    %v787 = vmul.f32 %v432, %v743
    %v788 = vmul.f32 %v433, %v747
    %v789 = vmul.f32 %v434, %v751
    %v790 = vmul.f32 %v435, %v755
    %v791 = vmul.f32 %v436, %v759
    %v792 = vmul.f32 %v437, %v763
    %v793 = vmul.f32 %v438, %v767
    %v794 = vmul.f32 %v439, %v771
    %v795 = vmul.f32 %v440, %v775
    %v796 = vmul.f32 %v441, %v779
    %v797 = vadd.f32 %v701, %v781
    %v798 = vadd.f32 %v702, %v782
    %v799 = vadd.f32 %v703, %v783
    %v800 = vadd.f32 %v704, %v784
    %v801 = vadd.f32 %v705, %v785
    %v802 = vadd.f32 %v706, %v786
    %v803 = vadd.f32 %v707, %v787
    %v804 = vadd.f32 %v708, %v788
    %v805 = vadd.f32 %v709, %v789
    %v806 = vadd.f32 %v710, %v790
    %v807 = vadd.f32 %v711, %v791
    %v808 = vadd.f32 %v712, %v792
    %v809 = vadd.f32 %v713, %v793
    %v810 = vadd.f32 %v714, %v794
    %v811 = vadd.f32 %v715, %v795
    %v812 = vadd.f32 %v716, %v796
    %v813 = vrot.slane %v442, 1
    %vm815 = vcmask 1046528
    %v816 = vrot.slane %v427, 1
    %v817 = vrot.slane %v428, 1
    %v818 = vsel %vm815, %v816, %v817
    %v819 = vrot.slane %v429, 1
    %v820 = vsel %vm815, %v817, %v819
    %v821 = vrot.slane %v430, 1
    %v822 = vsel %vm815, %v819, %v821
    %v823 = vrot.slane %v431, 1
    %v824 = vsel %vm815, %v821, %v823
    %v825 = vrot.slane %v432, 1
    %v826 = vsel %vm815, %v823, %v825
    %v827 = vrot.slane %v433, 1
    %v828 = vsel %vm815, %v825, %v827
    %v829 = vrot.slane %v434, 1
    %v830 = vsel %vm815, %v827, %v829
    %v831 = vrot.slane %v435, 1
    %v832 = vsel %vm815, %v829, %v831
    %v833 = vrot.slane %v436, 1
    %v834 = vsel %vm815, %v831, %v833
    %v835 = vrot.slane %v437, 1
    %v836 = vsel %vm815, %v833, %v835
    %v837 = vrot.slane %v438, 1
    %v838 = vsel %vm815, %v835, %v837
    %v839 = vrot.slane %v439, 1
    %v840 = vsel %vm815, %v837, %v839
    %v841 = vrot.slane %v440, 1
    %v842 = vsel %vm815, %v839, %v841
    %v843 = vrot.slane %v441, 1
    %v844 = vsel %vm815, %v841, %v843
    %v845 = vsel %vm815, %v843, %v813
    %v862 = vsel %vm815, %v813, %v816
    %863 = vset.pattern.permute.xlu0 3
    %864 = vperm.xlu0 %863, %v443
    %v865 = vpop.permute.xlu0 %864
    %867 = vset.pattern.permute.xlu0 3
    %868 = vperm.xlu0 %867, %v444
    %v869 = vpop.permute.xlu0 %868
    %871 = vset.pattern.permute.xlu0 3
    %872 = vperm.xlu0 %871, %v445
    %v873 = vpop.permute.xlu0 %872
    %875 = vset.pattern.permute.xlu0 3
    %876 = vperm.xlu0 %875, %v446
    %v877 = vpop.permute.xlu0 %876
    %879 = vset.pattern.permute.xlu0 3
    %880 = vperm.xlu0 %879, %v447
    %v881 = vpop.permute.xlu0 %880
    %883 = vset.pattern.permute.xlu0 3
    %884 = vperm.xlu0 %883, %v448
    %v885 = vpop.permute.xlu0 %884
    %887 = vset.pattern.permute.xlu0 3
    %888 = vperm.xlu0 %887, %v449
    %v889 = vpop.permute.xlu0 %888
    %891 = vset.pattern.permute.xlu0 3
    %892 = vperm.xlu0 %891, %v450
    %v893 = vpop.permute.xlu0 %892
    %895 = vset.pattern.permute.xlu0 3
    %896 = vperm.xlu0 %895, %v451
    %v897 = vpop.permute.xlu0 %896
    %899 = vset.pattern.permute.xlu0 3
    %900 = vperm.xlu0 %899, %v452
    %v901 = vpop.permute.xlu0 %900
    %903 = vset.pattern.permute.xlu0 3
    %904 = vperm.xlu0 %903, %v453
    %v905 = vpop.permute.xlu0 %904
    %907 = vset.pattern.permute.xlu0 3
    %908 = vperm.xlu0 %907, %v454
    %v909 = vpop.permute.xlu0 %908
    %911 = vset.pattern.permute.xlu0 3
    %912 = vperm.xlu0 %911, %v455
    %v913 = vpop.permute.xlu0 %912
    %915 = vset.pattern.permute.xlu0 3
    %916 = vperm.xlu0 %915, %v456
    %v917 = vpop.permute.xlu0 %916
    %919 = vset.pattern.permute.xlu0 3
    %920 = vperm.xlu0 %919, %v457
    %v921 = vpop.permute.xlu0 %920
    %923 = vset.pattern.permute.xlu0 3
    %924 = vperm.xlu0 %923, %v458
    %v925 = vpop.permute.xlu0 %924
    %v927 = vmul.f32 %v862, %v865
    %v928 = vmul.f32 %v818, %v869
    %v929 = vmul.f32 %v820, %v873
    %v930 = vmul.f32 %v822, %v877
    %v931 = vmul.f32 %v824, %v881
    %v932 = vmul.f32 %v826, %v885
    %v933 = vmul.f32 %v828, %v889
    %v934 = vmul.f32 %v830, %v893
    %v935 = vmul.f32 %v832, %v897
    %v936 = vmul.f32 %v834, %v901
    %v937 = vmul.f32 %v836, %v905
    %v938 = vmul.f32 %v838, %v909
    %v939 = vmul.f32 %v840, %v913
    %v940 = vmul.f32 %v842, %v917
    %v941 = vmul.f32 %v844, %v921
    %v942 = vmul.f32 %v845, %v925
    %v943 = vadd.f32 %v797, %v927
    %v944 = vadd.f32 %v798, %v928
    %v945 = vadd.f32 %v799, %v929
    %v946 = vadd.f32 %v800, %v930
    %v947 = vadd.f32 %v801, %v931
    %v948 = vadd.f32 %v802, %v932
    %v949 = vadd.f32 %v803, %v933
    %v950 = vadd.f32 %v804, %v934
    %v951 = vadd.f32 %v805, %v935
    %v952 = vadd.f32 %v806, %v936
    %v953 = vadd.f32 %v807, %v937
    %v954 = vadd.f32 %v808, %v938
    %v955 = vadd.f32 %v809, %v939
    %v956 = vadd.f32 %v810, %v940
    %v957 = vadd.f32 %v811, %v941
    %v958 = vadd.f32 %v812, %v942
    %959 = vset.pattern.permute.xlu0 4
    %960 = vperm.xlu0 %959, %v443
    %v961 = vpop.permute.xlu0 %960
    %963 = vset.pattern.permute.xlu0 4
    %964 = vperm.xlu0 %963, %v444
    %v965 = vpop.permute.xlu0 %964
    %967 = vset.pattern.permute.xlu0 4
    %968 = vperm.xlu0 %967, %v445
    %v969 = vpop.permute.xlu0 %968
    %971 = vset.pattern.permute.xlu0 4
    %972 = vperm.xlu0 %971, %v446
    %v973 = vpop.permute.xlu0 %972
    %975 = vset.pattern.permute.xlu0 4
    %976 = vperm.xlu0 %975, %v447
    %v977 = vpop.permute.xlu0 %976
    %979 = vset.pattern.permute.xlu0 4
    %980 = vperm.xlu0 %979, %v448
    %v981 = vpop.permute.xlu0 %980
    %983 = vset.pattern.permute.xlu0 4
    %984 = vperm.xlu0 %983, %v449
    %v985 = vpop.permute.xlu0 %984
    %987 = vset.pattern.permute.xlu0 4
    %988 = vperm.xlu0 %987, %v450
    %v989 = vpop.permute.xlu0 %988
    %991 = vset.pattern.permute.xlu0 4
    %992 = vperm.xlu0 %991, %v451
    %v993 = vpop.permute.xlu0 %992
    %995 = vset.pattern.permute.xlu0 4
    %996 = vperm.xlu0 %995, %v452
    %v997 = vpop.permute.xlu0 %996
    %999 = vset.pattern.permute.xlu0 4
    %1000 = vperm.xlu0 %999, %v453
    %v1001 = vpop.permute.xlu0 %1000
    %1003 = vset.pattern.permute.xlu0 4
    %1004 = vperm.xlu0 %1003, %v454
    %v1005 = vpop.permute.xlu0 %1004
    %1007 = vset.pattern.permute.xlu0 4
    %1008 = vperm.xlu0 %1007, %v455
    %v1009 = vpop.permute.xlu0 %1008
    %1011 = vset.pattern.permute.xlu0 4
    %1012 = vperm.xlu0 %1011, %v456
    %v1013 = vpop.permute.xlu0 %1012
    %1015 = vset.pattern.permute.xlu0 4
    %1016 = vperm.xlu0 %1015, %v457
    %v1017 = vpop.permute.xlu0 %1016
    %1019 = vset.pattern.permute.xlu0 4
    %1020 = vperm.xlu0 %1019, %v458
    %v1021 = vpop.permute.xlu0 %1020
    %v1023 = vmul.f32 %v620, %v961
    %v1024 = vmul.f32 %v579, %v965
    %v1025 = vmul.f32 %v581, %v969
    %v1026 = vmul.f32 %v583, %v973
    %v1027 = vmul.f32 %v585, %v977
    %v1028 = vmul.f32 %v587, %v981
    %v1029 = vmul.f32 %v589, %v985
    %v1030 = vmul.f32 %v591, %v989
    %v1031 = vmul.f32 %v593, %v993
    %v1032 = vmul.f32 %v595, %v997
    %v1033 = vmul.f32 %v597, %v1001
    %v1034 = vmul.f32 %v599, %v1005
    %v1035 = vmul.f32 %v601, %v1009
    %v1036 = vmul.f32 %v603, %v1013
    %v1037 = vmul.f32 %v604, %v1017
    %v1038 = vmul.f32 %v560, %v1021
    %v1039 = vadd.f32 %v943, %v1023
    %v1040 = vadd.f32 %v944, %v1024
    %v1041 = vadd.f32 %v945, %v1025
    %v1042 = vadd.f32 %v946, %v1026
    %v1043 = vadd.f32 %v947, %v1027
    %v1044 = vadd.f32 %v948, %v1028
    %v1045 = vadd.f32 %v949, %v1029
    %v1046 = vadd.f32 %v950, %v1030
    %v1047 = vadd.f32 %v951, %v1031
    %v1048 = vadd.f32 %v952, %v1032
    %v1049 = vadd.f32 %v953, %v1033
    %v1050 = vadd.f32 %v954, %v1034
    %v1051 = vadd.f32 %v955, %v1035
    %v1052 = vadd.f32 %v956, %v1036
    %v1053 = vadd.f32 %v957, %v1037
    %v1054 = vadd.f32 %v958, %v1038
    %1055 = vset.pattern.permute.xlu0 5
    %1056 = vperm.xlu0 %1055, %v443
    %v1057 = vpop.permute.xlu0 %1056
    %1059 = vset.pattern.permute.xlu0 5
    %1060 = vperm.xlu0 %1059, %v444
    %v1061 = vpop.permute.xlu0 %1060
    %1063 = vset.pattern.permute.xlu0 5
    %1064 = vperm.xlu0 %1063, %v445
    %v1065 = vpop.permute.xlu0 %1064
    %1067 = vset.pattern.permute.xlu0 5
    %1068 = vperm.xlu0 %1067, %v446
    %v1069 = vpop.permute.xlu0 %1068
    %1071 = vset.pattern.permute.xlu0 5
    %1072 = vperm.xlu0 %1071, %v447
    %v1073 = vpop.permute.xlu0 %1072
    %1075 = vset.pattern.permute.xlu0 5
    %1076 = vperm.xlu0 %1075, %v448
    %v1077 = vpop.permute.xlu0 %1076
    %1079 = vset.pattern.permute.xlu0 5
    %1080 = vperm.xlu0 %1079, %v449
    %v1081 = vpop.permute.xlu0 %1080
    %1083 = vset.pattern.permute.xlu0 5
    %1084 = vperm.xlu0 %1083, %v450
    %v1085 = vpop.permute.xlu0 %1084
    %1087 = vset.pattern.permute.xlu0 5
    %1088 = vperm.xlu0 %1087, %v451
    %v1089 = vpop.permute.xlu0 %1088
    %1091 = vset.pattern.permute.xlu0 5
    %1092 = vperm.xlu0 %1091, %v452
    %v1093 = vpop.permute.xlu0 %1092
    %1095 = vset.pattern.permute.xlu0 5
    %1096 = vperm.xlu0 %1095, %v453
    %v1097 = vpop.permute.xlu0 %1096
    %1099 = vset.pattern.permute.xlu0 5
    %1100 = vperm.xlu0 %1099, %v454
    %v1101 = vpop.permute.xlu0 %1100
    %1103 = vset.pattern.permute.xlu0 5
    %1104 = vperm.xlu0 %1103, %v455
    %v1105 = vpop.permute.xlu0 %1104
    %1107 = vset.pattern.permute.xlu0 5
    %1108 = vperm.xlu0 %1107, %v456
    %v1109 = vpop.permute.xlu0 %1108
    %1111 = vset.pattern.permute.xlu0 5
    %1112 = vperm.xlu0 %1111, %v457
    %v1113 = vpop.permute.xlu0 %1112
    %1115 = vset.pattern.permute.xlu0 5
    %1116 = vperm.xlu0 %1115, %v458
    %v1117 = vpop.permute.xlu0 %1116
    %v1119 = vmul.f32 %v818, %v1057
    %v1120 = vmul.f32 %v820, %v1061
    %v1121 = vmul.f32 %v822, %v1065
    %v1122 = vmul.f32 %v824, %v1069
    %v1123 = vmul.f32 %v826, %v1073
    %v1124 = vmul.f32 %v828, %v1077
    %v1125 = vmul.f32 %v830, %v1081
    %v1126 = vmul.f32 %v832, %v1085
    %v1127 = vmul.f32 %v834, %v1089
    %v1128 = vmul.f32 %v836, %v1093
    %v1129 = vmul.f32 %v838, %v1097
    %v1130 = vmul.f32 %v840, %v1101
    %v1131 = vmul.f32 %v842, %v1105
    %v1132 = vmul.f32 %v844, %v1109
    %v1133 = vmul.f32 %v845, %v1113
    %v1134 = vmul.f32 %v862, %v1117
    %v1135 = vadd.f32 %v1039, %v1119
    %v1136 = vadd.f32 %v1040, %v1120
    %v1137 = vadd.f32 %v1041, %v1121
    %v1138 = vadd.f32 %v1042, %v1122
    %v1139 = vadd.f32 %v1043, %v1123
    %v1140 = vadd.f32 %v1044, %v1124
    %v1141 = vadd.f32 %v1045, %v1125
    %v1142 = vadd.f32 %v1046, %v1126
    %v1143 = vadd.f32 %v1047, %v1127
    %v1144 = vadd.f32 %v1048, %v1128
    %v1145 = vadd.f32 %v1049, %v1129
    %v1146 = vadd.f32 %v1050, %v1130
    %v1147 = vadd.f32 %v1051, %v1131
    %v1148 = vadd.f32 %v1052, %v1132
    %v1149 = vadd.f32 %v1053, %v1133
    %v1150 = vadd.f32 %v1054, %v1134
    %1151 = vset.pattern.permute.xlu0 6
    %1152 = vperm.xlu0 %1151, %v443
    %v1153 = vpop.permute.xlu0 %1152
    %1155 = vset.pattern.permute.xlu0 6
    %1156 = vperm.xlu0 %1155, %v444
    %v1157 = vpop.permute.xlu0 %1156
    %1159 = vset.pattern.permute.xlu0 6
    %1160 = vperm.xlu0 %1159, %v445
    %v1161 = vpop.permute.xlu0 %1160
    %1163 = vset.pattern.permute.xlu0 6
    %1164 = vperm.xlu0 %1163, %v446
    %v1165 = vpop.permute.xlu0 %1164
    %1167 = vset.pattern.permute.xlu0 6
    %1168 = vperm.xlu0 %1167, %v447
    %v1169 = vpop.permute.xlu0 %1168
    %1171 = vset.pattern.permute.xlu0 6
    %1172 = vperm.xlu0 %1171, %v448
    %v1173 = vpop.permute.xlu0 %1172
    %1175 = vset.pattern.permute.xlu0 6
    %1176 = vperm.xlu0 %1175, %v449
    %v1177 = vpop.permute.xlu0 %1176
    %1179 = vset.pattern.permute.xlu0 6
    %1180 = vperm.xlu0 %1179, %v450
    %v1181 = vpop.permute.xlu0 %1180
    %1183 = vset.pattern.permute.xlu0 6
    %1184 = vperm.xlu0 %1183, %v451
    %v1185 = vpop.permute.xlu0 %1184
    %1187 = vset.pattern.permute.xlu0 6
    %1188 = vperm.xlu0 %1187, %v452
    %v1189 = vpop.permute.xlu0 %1188
    %1191 = vset.pattern.permute.xlu0 6
    %1192 = vperm.xlu0 %1191, %v453
    %v1193 = vpop.permute.xlu0 %1192
    %1195 = vset.pattern.permute.xlu0 6
    %1196 = vperm.xlu0 %1195, %v454
    %v1197 = vpop.permute.xlu0 %1196
    %1199 = vset.pattern.permute.xlu0 6
    %1200 = vperm.xlu0 %1199, %v455
    %v1201 = vpop.permute.xlu0 %1200
    %1203 = vset.pattern.permute.xlu0 6
    %1204 = vperm.xlu0 %1203, %v456
    %v1205 = vpop.permute.xlu0 %1204
    %1207 = vset.pattern.permute.xlu0 6
    %1208 = vperm.xlu0 %1207, %v457
    %v1209 = vpop.permute.xlu0 %1208
    %1211 = vset.pattern.permute.xlu0 6
    %1212 = vperm.xlu0 %1211, %v458
    %v1213 = vpop.permute.xlu0 %1212
    %v1215 = vmul.f32 %v579, %v1153
    %v1216 = vmul.f32 %v581, %v1157
    %v1217 = vmul.f32 %v583, %v1161
    %v1218 = vmul.f32 %v585, %v1165
    %v1219 = vmul.f32 %v587, %v1169
    %v1220 = vmul.f32 %v589, %v1173
    %v1221 = vmul.f32 %v591, %v1177
    %v1222 = vmul.f32 %v593, %v1181
    %v1223 = vmul.f32 %v595, %v1185
    %v1224 = vmul.f32 %v597, %v1189
    %v1225 = vmul.f32 %v599, %v1193
    %v1226 = vmul.f32 %v601, %v1197
    %v1227 = vmul.f32 %v603, %v1201
    %v1228 = vmul.f32 %v604, %v1205
    %v1229 = vmul.f32 %v560, %v1209
    %v1230 = vmul.f32 %v620, %v1213
    %v1231 = vadd.f32 %v1135, %v1215
    %v1232 = vadd.f32 %v1136, %v1216
    %v1233 = vadd.f32 %v1137, %v1217
    %v1234 = vadd.f32 %v1138, %v1218
    %v1235 = vadd.f32 %v1139, %v1219
    %v1236 = vadd.f32 %v1140, %v1220
    %v1237 = vadd.f32 %v1141, %v1221
    %v1238 = vadd.f32 %v1142, %v1222
    %v1239 = vadd.f32 %v1143, %v1223
    %v1240 = vadd.f32 %v1144, %v1224
    %v1241 = vadd.f32 %v1145, %v1225
    %v1242 = vadd.f32 %v1146, %v1226
    %v1243 = vadd.f32 %v1147, %v1227
    %v1244 = vadd.f32 %v1148, %v1228
    %v1245 = vadd.f32 %v1149, %v1229
    %v1246 = vadd.f32 %v1150, %v1230
    %1247 = vset.pattern.permute.xlu0 7
    %1248 = vperm.xlu0 %1247, %v443
    %v1249 = vpop.permute.xlu0 %1248
    %1251 = vset.pattern.permute.xlu0 7
    %1252 = vperm.xlu0 %1251, %v444
    %v1253 = vpop.permute.xlu0 %1252
    %1255 = vset.pattern.permute.xlu0 7
    %1256 = vperm.xlu0 %1255, %v445
    %v1257 = vpop.permute.xlu0 %1256
    %1259 = vset.pattern.permute.xlu0 7
    %1260 = vperm.xlu0 %1259, %v446
    %v1261 = vpop.permute.xlu0 %1260
    %1263 = vset.pattern.permute.xlu0 7
    %1264 = vperm.xlu0 %1263, %v447
    %v1265 = vpop.permute.xlu0 %1264
    %1267 = vset.pattern.permute.xlu0 7
    %1268 = vperm.xlu0 %1267, %v448
    %v1269 = vpop.permute.xlu0 %1268
    %1271 = vset.pattern.permute.xlu0 7
    %1272 = vperm.xlu0 %1271, %v449
    %v1273 = vpop.permute.xlu0 %1272
    %1275 = vset.pattern.permute.xlu0 7
    %1276 = vperm.xlu0 %1275, %v450
    %v1277 = vpop.permute.xlu0 %1276
    %1279 = vset.pattern.permute.xlu0 7
    %1280 = vperm.xlu0 %1279, %v451
    %v1281 = vpop.permute.xlu0 %1280
    %1283 = vset.pattern.permute.xlu0 7
    %1284 = vperm.xlu0 %1283, %v452
    %v1285 = vpop.permute.xlu0 %1284
    %1287 = vset.pattern.permute.xlu0 7
    %1288 = vperm.xlu0 %1287, %v453
    %v1289 = vpop.permute.xlu0 %1288
    %1291 = vset.pattern.permute.xlu0 7
    %1292 = vperm.xlu0 %1291, %v454
    %v1293 = vpop.permute.xlu0 %1292
    %1295 = vset.pattern.permute.xlu0 7
    %1296 = vperm.xlu0 %1295, %v455
    %v1297 = vpop.permute.xlu0 %1296
    %1299 = vset.pattern.permute.xlu0 7
    %1300 = vperm.xlu0 %1299, %v456
    %v1301 = vpop.permute.xlu0 %1300
    %1303 = vset.pattern.permute.xlu0 7
    %1304 = vperm.xlu0 %1303, %v457
    %v1305 = vpop.permute.xlu0 %1304
    %1307 = vset.pattern.permute.xlu0 7
    %1308 = vperm.xlu0 %1307, %v458
    %v1309 = vpop.permute.xlu0 %1308
    %v1311 = vmul.f32 %v428, %v1249
    %v1312 = vmul.f32 %v429, %v1253
    %v1313 = vmul.f32 %v430, %v1257
    %v1314 = vmul.f32 %v431, %v1261
    %v1315 = vmul.f32 %v432, %v1265
    %v1316 = vmul.f32 %v433, %v1269
    %v1317 = vmul.f32 %v434, %v1273
    %v1318 = vmul.f32 %v435, %v1277
    %v1319 = vmul.f32 %v436, %v1281
    %v1320 = vmul.f32 %v437, %v1285
    %v1321 = vmul.f32 %v438, %v1289
    %v1322 = vmul.f32 %v439, %v1293
    %v1323 = vmul.f32 %v440, %v1297
    %v1324 = vmul.f32 %v441, %v1301
    %v1325 = vmul.f32 %v442, %v1305
    %v1326 = vmul.f32 %v427, %v1309
    %v1327 = vadd.f32 %v1231, %v1311
    %v1328 = vadd.f32 %v1232, %v1312
    %v1329 = vadd.f32 %v1233, %v1313
    %v1330 = vadd.f32 %v1234, %v1314
    %v1331 = vadd.f32 %v1235, %v1315
    %v1332 = vadd.f32 %v1236, %v1316
    %v1333 = vadd.f32 %v1237, %v1317
    %v1334 = vadd.f32 %v1238, %v1318
    %v1335 = vadd.f32 %v1239, %v1319
    %v1336 = vadd.f32 %v1240, %v1320
    %v1337 = vadd.f32 %v1241, %v1321
    %v1338 = vadd.f32 %v1242, %v1322
    %v1339 = vadd.f32 %v1243, %v1323
    %v1340 = vadd.f32 %v1244, %v1324
    %v1341 = vadd.f32 %v1245, %v1325
    %v1342 = vadd.f32 %v1246, %v1326
    %1343 = vset.pattern.permute.xlu0 8
    %1344 = vperm.xlu0 %1343, %v443
    %v1345 = vpop.permute.xlu0 %1344
    %1347 = vset.pattern.permute.xlu0 8
    %1348 = vperm.xlu0 %1347, %v444
    %v1349 = vpop.permute.xlu0 %1348
    %1351 = vset.pattern.permute.xlu0 8
    %1352 = vperm.xlu0 %1351, %v445
    %v1353 = vpop.permute.xlu0 %1352
    %1355 = vset.pattern.permute.xlu0 8
    %1356 = vperm.xlu0 %1355, %v446
    %v1357 = vpop.permute.xlu0 %1356
    %1359 = vset.pattern.permute.xlu0 8
    %1360 = vperm.xlu0 %1359, %v447
    %v1361 = vpop.permute.xlu0 %1360
    %1363 = vset.pattern.permute.xlu0 8
    %1364 = vperm.xlu0 %1363, %v448
    %v1365 = vpop.permute.xlu0 %1364
    %1367 = vset.pattern.permute.xlu0 8
    %1368 = vperm.xlu0 %1367, %v449
    %v1369 = vpop.permute.xlu0 %1368
    %1371 = vset.pattern.permute.xlu0 8
    %1372 = vperm.xlu0 %1371, %v450
    %v1373 = vpop.permute.xlu0 %1372
    %1375 = vset.pattern.permute.xlu0 8
    %1376 = vperm.xlu0 %1375, %v451
    %v1377 = vpop.permute.xlu0 %1376
    %1379 = vset.pattern.permute.xlu0 8
    %1380 = vperm.xlu0 %1379, %v452
    %v1381 = vpop.permute.xlu0 %1380
    %1383 = vset.pattern.permute.xlu0 8
    %1384 = vperm.xlu0 %1383, %v453
    %v1385 = vpop.permute.xlu0 %1384
    %1387 = vset.pattern.permute.xlu0 8
    %1388 = vperm.xlu0 %1387, %v454
    %v1389 = vpop.permute.xlu0 %1388
    %1391 = vset.pattern.permute.xlu0 8
    %1392 = vperm.xlu0 %1391, %v455
    %v1393 = vpop.permute.xlu0 %1392
    %1395 = vset.pattern.permute.xlu0 8
    %1396 = vperm.xlu0 %1395, %v456
    %v1397 = vpop.permute.xlu0 %1396
    %1399 = vset.pattern.permute.xlu0 8
    %1400 = vperm.xlu0 %1399, %v457
    %v1401 = vpop.permute.xlu0 %1400
    %1403 = vset.pattern.permute.xlu0 8
    %1404 = vperm.xlu0 %1403, %v458
    %v1405 = vpop.permute.xlu0 %1404
    %v1407 = vmul.f32 %v820, %v1345
    %v1408 = vmul.f32 %v822, %v1349
    %v1409 = vmul.f32 %v824, %v1353
    %v1410 = vmul.f32 %v826, %v1357
    %v1411 = vmul.f32 %v828, %v1361
    %v1412 = vmul.f32 %v830, %v1365
    %v1413 = vmul.f32 %v832, %v1369
    %v1414 = vmul.f32 %v834, %v1373
    %v1415 = vmul.f32 %v836, %v1377
    %v1416 = vmul.f32 %v838, %v1381
    %v1417 = vmul.f32 %v840, %v1385
    %v1418 = vmul.f32 %v842, %v1389
    %v1419 = vmul.f32 %v844, %v1393
    %v1420 = vmul.f32 %v845, %v1397
    %v1421 = vmul.f32 %v862, %v1401
    %v1422 = vmul.f32 %v818, %v1405
    %v1423 = vadd.f32 %v1327, %v1407
    %v1424 = vadd.f32 %v1328, %v1408
    %v1425 = vadd.f32 %v1329, %v1409
    %v1426 = vadd.f32 %v1330, %v1410
    %v1427 = vadd.f32 %v1331, %v1411
    %v1428 = vadd.f32 %v1332, %v1412
    %v1429 = vadd.f32 %v1333, %v1413
    %v1430 = vadd.f32 %v1334, %v1414
    %v1431 = vadd.f32 %v1335, %v1415
    %v1432 = vadd.f32 %v1336, %v1416
    %v1433 = vadd.f32 %v1337, %v1417
    %v1434 = vadd.f32 %v1338, %v1418
    %v1435 = vadd.f32 %v1339, %v1419
    %v1436 = vadd.f32 %v1340, %v1420
    %v1437 = vadd.f32 %v1341, %v1421
    %v1438 = vadd.f32 %v1342, %v1422
    %v1439 = vadd.f32 %v129, %v1423
    %v1440 = vadd.f32 %v132, %v1424
    %v1441 = vadd.f32 %v137, %v1425
    %v1442 = vadd.f32 %v140, %v1426
    %v1443 = vadd.f32 %v145, %v1427
    %v1444 = vadd.f32 %v148, %v1428
    %v1445 = vadd.f32 %v153, %v1429
    %v1446 = vadd.f32 %v156, %v1430
    %v1447 = vadd.f32 %v161, %v1431
    %v1448 = vadd.f32 %v164, %v1432
    %v1449 = vadd.f32 %v169, %v1433
    %v1450 = vadd.f32 %v172, %v1434
    %v1451 = vadd.f32 %v177, %v1435
    %v1452 = vadd.f32 %v180, %v1436
    %v1453 = vadd.f32 %v185, %v1437
    %v1454 = vadd.f32 %v188, %v1438
    %v1455 = vld [vmem:[%s2 + $0x20] sm:$0x1]
    %v1456 = vld [vmem:[%s2 + $0x28] sm:$0x1]
    %v1457 = vsel %vm193, %v1439, 0.0
    %1458 = vadd.xlane.f32.xlu0 %v1457
    %v1459 = vpop.xlane.xlu0 %1458
    %v1460 = vsel %vm193, %v1440, 0.0
    %1461 = vadd.xlane.f32.xlu0 %v1460
    %v1462 = vpop.xlane.xlu0 %1461
    %v1463 = vsel %vm193, %v1441, 0.0
    %1464 = vadd.xlane.f32.xlu0 %v1463
    %v1465 = vpop.xlane.xlu0 %1464
    %v1466 = vsel %vm193, %v1442, 0.0
    %1467 = vadd.xlane.f32.xlu0 %v1466
    %v1468 = vpop.xlane.xlu0 %1467
    %v1469 = vsel %vm193, %v1443, 0.0
    %1470 = vadd.xlane.f32.xlu0 %v1469
    %v1471 = vpop.xlane.xlu0 %1470
    %v1472 = vsel %vm193, %v1444, 0.0
    %1473 = vadd.xlane.f32.xlu0 %v1472
    %v1474 = vpop.xlane.xlu0 %1473
    %v1475 = vsel %vm193, %v1445, 0.0
    %1476 = vadd.xlane.f32.xlu0 %v1475
    %v1477 = vpop.xlane.xlu0 %1476
    %v1478 = vsel %vm193, %v1446, 0.0
    %1479 = vadd.xlane.f32.xlu0 %v1478
    %v1480 = vpop.xlane.xlu0 %1479
    %v1481 = vsel %vm193, %v1447, 0.0
    %1482 = vadd.xlane.f32.xlu0 %v1481
    %v1483 = vpop.xlane.xlu0 %1482
    %v1484 = vsel %vm193, %v1448, 0.0
    %1485 = vadd.xlane.f32.xlu0 %v1484
    %v1486 = vpop.xlane.xlu0 %1485
    %v1487 = vsel %vm193, %v1449, 0.0
    %1488 = vadd.xlane.f32.xlu0 %v1487
    %v1489 = vpop.xlane.xlu0 %1488
    %v1490 = vsel %vm193, %v1450, 0.0
    %1491 = vadd.xlane.f32.xlu0 %v1490
    %v1492 = vpop.xlane.xlu0 %1491
    %v1493 = vsel %vm193, %v1451, 0.0
    %1494 = vadd.xlane.f32.xlu0 %v1493
    %v1495 = vpop.xlane.xlu0 %1494
    %v1496 = vsel %vm193, %v1452, 0.0
    %1497 = vadd.xlane.f32.xlu0 %v1496
    %v1498 = vpop.xlane.xlu0 %1497
    %v1499 = vsel %vm193, %v1453, 0.0
    %1500 = vadd.xlane.f32.xlu0 %v1499
    %v1501 = vpop.xlane.xlu0 %1500
    %v1502 = vsel %vm193, %v1454, 0.0
    %1503 = vadd.xlane.f32.xlu0 %v1502
    %v1504 = vpop.xlane.xlu0 %1503
    %v1505 = vmul.f32 %v1459, %v242
    %v1506 = vmul.f32 %v1462, %v242
    %v1507 = vmul.f32 %v1465, %v242
    %v1508 = vmul.f32 %v1468, %v242
    %v1509 = vmul.f32 %v1471, %v242
    %v1510 = vmul.f32 %v1474, %v242
    %v1511 = vmul.f32 %v1477, %v242
    %v1512 = vmul.f32 %v1480, %v242
    %v1513 = vmul.f32 %v1483, %v242
    %v1514 = vmul.f32 %v1486, %v242
    %v1515 = vmul.f32 %v1489, %v242
    %v1516 = vmul.f32 %v1492, %v242
    %v1517 = vmul.f32 %v1495, %v242
    %v1518 = vmul.f32 %v1498, %v242
    %v1519 = vmul.f32 %v1501, %v242
    %v1520 = vmul.f32 %v1504, %v242
    %v1521 = vsub.f32 %v1439, %v1505
    %v1522 = vsub.f32 %v1440, %v1506
    %v1523 = vsub.f32 %v1441, %v1507
    %v1524 = vsub.f32 %v1442, %v1508
    %v1525 = vsub.f32 %v1443, %v1509
    %v1526 = vsub.f32 %v1444, %v1510
    %v1527 = vsub.f32 %v1445, %v1511
    %v1528 = vsub.f32 %v1446, %v1512
    %v1529 = vsub.f32 %v1447, %v1513
    %v1530 = vsub.f32 %v1448, %v1514
    %v1531 = vsub.f32 %v1449, %v1515
    %v1532 = vsub.f32 %v1450, %v1516
    %v1533 = vsub.f32 %v1451, %v1517
    %v1534 = vsub.f32 %v1452, %v1518
    %v1535 = vsub.f32 %v1453, %v1519
    %v1536 = vsub.f32 %v1454, %v1520
    %v1537 = vmul.f32 %v1521, %v1521
    %v1538 = vmul.f32 %v1522, %v1522
    %v1539 = vmul.f32 %v1523, %v1523
    %v1540 = vmul.f32 %v1524, %v1524
    %v1541 = vmul.f32 %v1525, %v1525
    %v1542 = vmul.f32 %v1526, %v1526
    %v1543 = vmul.f32 %v1527, %v1527
    %v1544 = vmul.f32 %v1528, %v1528
    %v1545 = vmul.f32 %v1529, %v1529
    %v1546 = vmul.f32 %v1530, %v1530
    %v1547 = vmul.f32 %v1531, %v1531
    %v1548 = vmul.f32 %v1532, %v1532
    %v1549 = vmul.f32 %v1533, %v1533
    %v1550 = vmul.f32 %v1534, %v1534
    %v1551 = vmul.f32 %v1535, %v1535
    %v1552 = vmul.f32 %v1536, %v1536
    %v1553 = vsel %vm193, %v1537, 0.0
    %1554 = vadd.xlane.f32.xlu0 %v1553
    %v1555 = vpop.xlane.xlu0 %1554
    %v1556 = vsel %vm193, %v1538, 0.0
    %1557 = vadd.xlane.f32.xlu0 %v1556
    %v1558 = vpop.xlane.xlu0 %1557
    %v1559 = vsel %vm193, %v1539, 0.0
    %1560 = vadd.xlane.f32.xlu0 %v1559
    %v1561 = vpop.xlane.xlu0 %1560
    %v1562 = vsel %vm193, %v1540, 0.0
    %1563 = vadd.xlane.f32.xlu0 %v1562
    %v1564 = vpop.xlane.xlu0 %1563
    %v1565 = vsel %vm193, %v1541, 0.0
    %1566 = vadd.xlane.f32.xlu0 %v1565
    %v1567 = vpop.xlane.xlu0 %1566
    %v1568 = vsel %vm193, %v1542, 0.0
    %1569 = vadd.xlane.f32.xlu0 %v1568
    %v1570 = vpop.xlane.xlu0 %1569
    %v1571 = vsel %vm193, %v1543, 0.0
    %1572 = vadd.xlane.f32.xlu0 %v1571
    %v1573 = vpop.xlane.xlu0 %1572
    %v1574 = vsel %vm193, %v1544, 0.0
    %1575 = vadd.xlane.f32.xlu0 %v1574
    %v1576 = vpop.xlane.xlu0 %1575
    %v1577 = vsel %vm193, %v1545, 0.0
    %1578 = vadd.xlane.f32.xlu0 %v1577
    %v1579 = vpop.xlane.xlu0 %1578
    %v1580 = vsel %vm193, %v1546, 0.0
    %1581 = vadd.xlane.f32.xlu0 %v1580
    %v1582 = vpop.xlane.xlu0 %1581
    %v1583 = vsel %vm193, %v1547, 0.0
    %1584 = vadd.xlane.f32.xlu0 %v1583
    %v1585 = vpop.xlane.xlu0 %1584
    %v1586 = vsel %vm193, %v1548, 0.0
    %1587 = vadd.xlane.f32.xlu0 %v1586
    %v1588 = vpop.xlane.xlu0 %1587
    %v1589 = vsel %vm193, %v1549, 0.0
    %1590 = vadd.xlane.f32.xlu0 %v1589
    %v1591 = vpop.xlane.xlu0 %1590
    %v1592 = vsel %vm193, %v1550, 0.0
    %1593 = vadd.xlane.f32.xlu0 %v1592
    %v1594 = vpop.xlane.xlu0 %1593
    %v1595 = vsel %vm193, %v1551, 0.0
    %1596 = vadd.xlane.f32.xlu0 %v1595
    %v1597 = vpop.xlane.xlu0 %1596
    %v1598 = vsel %vm193, %v1552, 0.0
    %1599 = vadd.xlane.f32.xlu0 %v1598
    %v1600 = vpop.xlane.xlu0 %1599
    %v1601 = vmul.f32 %v1555, %v242
    %v1602 = vmul.f32 %v1558, %v242
    %v1603 = vmul.f32 %v1561, %v242
    %v1604 = vmul.f32 %v1564, %v242
    %v1605 = vmul.f32 %v1567, %v242
    %v1606 = vmul.f32 %v1570, %v242
    %v1607 = vmul.f32 %v1573, %v242
    %v1608 = vmul.f32 %v1576, %v242
    %v1609 = vmul.f32 %v1579, %v242
    %v1610 = vmul.f32 %v1582, %v242
    %v1611 = vmul.f32 %v1585, %v242
    %v1612 = vmul.f32 %v1588, %v242
    %v1613 = vmul.f32 %v1591, %v242
    %v1614 = vmul.f32 %v1594, %v242
    %v1615 = vmul.f32 %v1597, %v242
    %v1616 = vmul.f32 %v1600, %v242
    %v1617 = vadd.f32 %v1601, 1e-05
    %v1618 = vadd.f32 %v1602, 1e-05
    %v1619 = vadd.f32 %v1603, 1e-05
    %v1620 = vadd.f32 %v1604, 1e-05
    %v1621 = vadd.f32 %v1605, 1e-05
    %v1622 = vadd.f32 %v1606, 1e-05
    %v1623 = vadd.f32 %v1607, 1e-05
    %v1624 = vadd.f32 %v1608, 1e-05
    %v1625 = vadd.f32 %v1609, 1e-05
    %v1626 = vadd.f32 %v1610, 1e-05
    %v1627 = vadd.f32 %v1611, 1e-05
    %v1628 = vadd.f32 %v1612, 1e-05
    %v1629 = vadd.f32 %v1613, 1e-05
    %v1630 = vadd.f32 %v1614, 1e-05
    %v1631 = vadd.f32 %v1615, 1e-05
    %v1632 = vadd.f32 %v1616, 1e-05
    %v1633 = vrsqrt.pop %v1617
    %v1634 = vrsqrt.pop %v1618
    %v1635 = vrsqrt.pop %v1619
    %v1636 = vrsqrt.pop %v1620
    %v1637 = vrsqrt.pop %v1621
    %v1638 = vrsqrt.pop %v1622
    %v1639 = vrsqrt.pop %v1623
    %v1640 = vrsqrt.pop %v1624
    %v1641 = vrsqrt.pop %v1625
    %v1642 = vrsqrt.pop %v1626
    %v1643 = vrsqrt.pop %v1627
    %v1644 = vrsqrt.pop %v1628
    %v1645 = vrsqrt.pop %v1629
    %v1646 = vrsqrt.pop %v1630
    %v1647 = vrsqrt.pop %v1631
    %v1648 = vrsqrt.pop %v1632
    %v1649 = vmul.f32 %v1521, %v1633
    %v1650 = vmul.f32 %v1522, %v1634
    %v1651 = vmul.f32 %v1523, %v1635
    %v1652 = vmul.f32 %v1524, %v1636
    %v1653 = vmul.f32 %v1525, %v1637
    %v1654 = vmul.f32 %v1526, %v1638
    %v1655 = vmul.f32 %v1527, %v1639
    %v1656 = vmul.f32 %v1528, %v1640
    %v1657 = vmul.f32 %v1529, %v1641
    %v1658 = vmul.f32 %v1530, %v1642
    %v1659 = vmul.f32 %v1531, %v1643
    %v1660 = vmul.f32 %v1532, %v1644
    %v1661 = vmul.f32 %v1533, %v1645
    %v1662 = vmul.f32 %v1534, %v1646
    %v1663 = vmul.f32 %v1535, %v1647
    %v1664 = vmul.f32 %v1536, %v1648
    %v1665 = vlaneseq
    %v1666 = vshrl.u32 %v1665, 7
    %v1667 = vsub.s32 0, %v1666
    %v1668 = vrot.slane %v1455, %v1667
    %v1669 = vmul.f32 %v1649, %v1668
    %v1670 = vmul.f32 %v1650, %v1668
    %v1671 = vmul.f32 %v1651, %v1668
    %v1672 = vmul.f32 %v1652, %v1668
    %v1673 = vmul.f32 %v1653, %v1668
    %v1674 = vmul.f32 %v1654, %v1668
    %v1675 = vmul.f32 %v1655, %v1668
    %v1676 = vmul.f32 %v1656, %v1668
    %v1677 = vmul.f32 %v1657, %v1668
    %v1678 = vmul.f32 %v1658, %v1668
    %v1679 = vmul.f32 %v1659, %v1668
    %v1680 = vmul.f32 %v1660, %v1668
    %v1681 = vmul.f32 %v1661, %v1668
    %v1682 = vmul.f32 %v1662, %v1668
    %v1683 = vmul.f32 %v1663, %v1668
    %v1684 = vmul.f32 %v1664, %v1668
    %v1685 = vlaneseq
    %v1686 = vshrl.u32 %v1685, 7
    %v1687 = vsub.s32 0, %v1686
    %v1688 = vrot.slane %v1456, %v1687
    %v1689 = vadd.f32 %v1669, %v1688
    %v1690 = vadd.f32 %v1670, %v1688
    %v1691 = vadd.f32 %v1671, %v1688
    %v1692 = vadd.f32 %v1672, %v1688
    %v1693 = vadd.f32 %v1673, %v1688
    %v1694 = vadd.f32 %v1674, %v1688
    %v1695 = vadd.f32 %v1675, %v1688
    %v1696 = vadd.f32 %v1676, %v1688
    %v1697 = vadd.f32 %v1677, %v1688
    %v1698 = vadd.f32 %v1678, %v1688
    %v1699 = vadd.f32 %v1679, %v1688
    %v1700 = vadd.f32 %v1680, %v1688
    %v1701 = vadd.f32 %v1681, %v1688
    %v1702 = vadd.f32 %v1682, %v1688
    %v1703 = vadd.f32 %v1683, %v1688
    %v1704 = vadd.f32 %v1684, %v1688
    %v1705 = vld [vmem:[%s1 + $0x78] sm:$0xf]
    %v1706 = vld [vmem:[%s1 + $0x7c] sm:$0xf]
    %v1707 = vpack.c.bf16 %v1690, %v1689
    %v1708 = vpack.c.bf16 %v1692, %v1691
    %v1709 = vpack.c.bf16 %v1694, %v1693
    %v1710 = vpack.c.bf16 %v1696, %v1695
    %v1711 = vpack.c.bf16 %v1698, %v1697
    %v1712 = vpack.c.bf16 %v1700, %v1699
    %v1713 = vpack.c.bf16 %v1702, %v1701
    %v1714 = vpack.c.bf16 %v1704, %v1703
    %v1715 = vld [vmem:[%s2 + $0x30] sm:$0x1]
    %v1716 = vlaneseq
    %v1717 = vshrl.u32 %v1716, 7
    %v1718 = vsub.s32 0, %v1717
    %v1719 = vrot.slane %v1715, %v1718
    %v1722 = vunpack.c.l.b16 %v1705
    %v1723 = vunpack.c.l.b16 %v1706
    %v1724 = vpack.c.b16 %v1723, %v1722
    %v1727 = vsel %vm193, %v1707, 0
    %v1730 = vsel %vm193, %v1708, 0
    %v1733 = vsel %vm193, %v1709, 0
    %v1736 = vsel %vm193, %v1710, 0
    %v1739 = vsel %vm193, %v1711, 0
    %v1742 = vsel %vm193, %v1712, 0
    %v1745 = vsel %vm193, %v1713, 0
    %v1748 = vsel %vm193, %v1714, 0
    %1750 = vmatprep.subr.bf16.mxu0 0
    %1751 = vmatpush1.bf16.msra.mxu0 %v1724
    %1752 = vmatprep.subr.bf16.mxu0 0
    %1753 = vmatpush1.bf16.msra.mxu0 0
    %1754 = vmatprep.subr.bf16.mxu0 0
    %1755 = vmatpush1.bf16.msra.mxu0 0
    %1756 = vmatprep.subr.bf16.mxu0 0
    %1757 = vmatpush1.bf16.msra.mxu0 0
    %1758 = vmatprep.subr.bf16.mxu0 0
    %1759 = vmatpush1.bf16.msra.mxu0 0
    %1760 = vmatprep.subr.bf16.mxu0 0
    %1761 = vmatpush1.bf16.msra.mxu0 0
    %1762 = vmatprep.subr.bf16.mxu0 0
    %1763 = vmatpush1.bf16.msra.mxu0 0
    %1764 = vmatprep.subr.bf16.mxu0 0
    %1765 = vmatpush1.bf16.msra.mxu0 0
    %1766 = vmatprep.subr.bf16.mxu0 0
    %1767 = vmatpush1.bf16.msra.mxu0 0
    %1768 = vmatprep.subr.bf16.mxu0 0
    %1769 = vmatpush1.bf16.msra.mxu0 0
    %1770 = vmatprep.subr.bf16.mxu0 0
    %1771 = vmatpush1.bf16.msra.mxu0 0
    %1772 = vmatprep.subr.bf16.mxu0 0
    %1773 = vmatpush1.bf16.msra.mxu0 0
    %1774 = vmatprep.subr.bf16.mxu0 0
    %1775 = vmatpush1.bf16.msra.mxu0 0
    %1776 = vmatprep.subr.bf16.mxu0 0
    %1777 = vmatpush1.bf16.msra.mxu0 0
    %1778 = vmatprep.subr.bf16.mxu0 0
    %1779 = vmatpush1.bf16.msra.mxu0 0
    %1780 = vmatprep.subr.bf16.mxu0 0
    %1781 = vmatpush1.bf16.msra.mxu0 0
    %1782 = vmatprep.mubr.bf16.mxu0 0
    %1783 = vmatmul.mubr.bf16.gmra.mrb[0].mxu0 %v1727
    %v1784 = vpop.f32.mrb[0].mxu0
    %v1785 = vadd.f32 %v1719, %v1784
    %v1786 = vpop.f32.mrb[0].mxu0
    %v1787 = vpop.f32.mrb[0].mxu0
    %v1788 = vadd.f32 %v1719, %v1787
    %v1789 = vpop.f32.mrb[0].mxu0
    %1790 = vmatprep.mubr.bf16.mxu0 0
    %1791 = vmatmul.mubr.bf16.gmra.mrb[0].mxu0 %v1730
    %v1792 = vpop.f32.mrb[0].mxu0
    %v1793 = vadd.f32 %v1719, %v1792
    %v1794 = vpop.f32.mrb[0].mxu0
    %v1795 = vpop.f32.mrb[0].mxu0
    %v1796 = vadd.f32 %v1719, %v1795
    %v1797 = vpop.f32.mrb[0].mxu0
    %1798 = vmatprep.mubr.bf16.mxu0 0
    %1799 = vmatmul.mubr.bf16.gmra.mrb[0].mxu0 %v1733
    %v1800 = vpop.f32.mrb[0].mxu0
    %v1801 = vadd.f32 %v1719, %v1800
    %v1802 = vpop.f32.mrb[0].mxu0
    %v1803 = vpop.f32.mrb[0].mxu0
    %v1804 = vadd.f32 %v1719, %v1803
    %v1805 = vpop.f32.mrb[0].mxu0
    %1806 = vmatprep.mubr.bf16.mxu0 0
    %1807 = vmatmul.mubr.bf16.gmra.mrb[0].mxu0 %v1736
    %v1808 = vpop.f32.mrb[0].mxu0
    %v1809 = vadd.f32 %v1719, %v1808
    %v1810 = vpop.f32.mrb[0].mxu0
    %v1811 = vpop.f32.mrb[0].mxu0
    %v1812 = vadd.f32 %v1719, %v1811
    %v1813 = vpop.f32.mrb[0].mxu0
    %1814 = vmatprep.mubr.bf16.mxu0 0
    %1815 = vmatmul.mubr.bf16.gmra.mrb[0].mxu0 %v1739
    %v1816 = vpop.f32.mrb[0].mxu0
    %v1817 = vadd.f32 %v1719, %v1816
    %v1818 = vpop.f32.mrb[0].mxu0
    %v1819 = vpop.f32.mrb[0].mxu0
    %v1820 = vadd.f32 %v1719, %v1819
    %v1821 = vpop.f32.mrb[0].mxu0
    %1822 = vmatprep.mubr.bf16.mxu0 0
    %1823 = vmatmul.mubr.bf16.gmra.mrb[0].mxu0 %v1742
    %v1824 = vpop.f32.mrb[0].mxu0
    %v1825 = vadd.f32 %v1719, %v1824
    %v1826 = vpop.f32.mrb[0].mxu0
    %v1827 = vpop.f32.mrb[0].mxu0
    %v1828 = vadd.f32 %v1719, %v1827
    %v1829 = vpop.f32.mrb[0].mxu0
    %1830 = vmatprep.mubr.bf16.mxu0 0
    %1831 = vmatmul.mubr.bf16.gmra.mrb[0].mxu0 %v1745
    %v1832 = vpop.f32.mrb[0].mxu0
    %v1833 = vadd.f32 %v1719, %v1832
    %v1834 = vpop.f32.mrb[0].mxu0
    %v1835 = vpop.f32.mrb[0].mxu0
    %v1836 = vadd.f32 %v1719, %v1835
    %v1837 = vpop.f32.mrb[0].mxu0
    %1838 = vmatprep.mubr.bf16.mxu0 0
    %1839 = vmatmul.mubr.bf16.gmra.mrb[0].mxu0 %v1748
    %v1840 = vpop.f32.mrb[0].mxu0
    %v1841 = vadd.f32 %v1719, %v1840
    %v1842 = vpop.f32.mrb[0].mxu0
    %v1843 = vpop.f32.mrb[0].mxu0
    %v1844 = vadd.f32 %v1719, %v1843
    %v1845 = vpop.f32.mrb[0].mxu0
    %1846 = vdwg.mxu0
    %v1847 = vmul.f32 %v1785, %v1785
    %v1848 = vmul.f32 %v1788, %v1788
    %v1849 = vmul.f32 %v1793, %v1793
    %v1850 = vmul.f32 %v1796, %v1796
    %v1851 = vmul.f32 %v1801, %v1801
    %v1852 = vmul.f32 %v1804, %v1804
    %v1853 = vmul.f32 %v1809, %v1809
    %v1854 = vmul.f32 %v1812, %v1812
    %v1855 = vmul.f32 %v1817, %v1817
    %v1856 = vmul.f32 %v1820, %v1820
    %v1857 = vmul.f32 %v1825, %v1825
    %v1858 = vmul.f32 %v1828, %v1828
    %v1859 = vmul.f32 %v1833, %v1833
    %v1860 = vmul.f32 %v1836, %v1836
    %v1861 = vmul.f32 %v1841, %v1841
    %v1862 = vmul.f32 %v1844, %v1844
    %v1863 = vmul.f32 %v1785, %v1847
    %v1864 = vmul.f32 %v1788, %v1848
    %v1865 = vmul.f32 %v1793, %v1849
    %v1866 = vmul.f32 %v1796, %v1850
    %v1867 = vmul.f32 %v1801, %v1851
    %v1868 = vmul.f32 %v1804, %v1852
    %v1869 = vmul.f32 %v1809, %v1853
    %v1870 = vmul.f32 %v1812, %v1854
    %v1871 = vmul.f32 %v1817, %v1855
    %v1872 = vmul.f32 %v1820, %v1856
    %v1873 = vmul.f32 %v1825, %v1857
    %v1874 = vmul.f32 %v1828, %v1858
    %v1875 = vmul.f32 %v1833, %v1859
    %v1876 = vmul.f32 %v1836, %v1860
    %v1877 = vmul.f32 %v1841, %v1861
    %v1878 = vmul.f32 %v1844, %v1862
    %v1879 = vmul.f32 %v1863, 0.044715
    %v1880 = vmul.f32 %v1864, 0.044715
    %v1881 = vmul.f32 %v1865, 0.044715
    %v1882 = vmul.f32 %v1866, 0.044715
    %v1883 = vmul.f32 %v1867, 0.044715
    %v1884 = vmul.f32 %v1868, 0.044715
    %v1885 = vmul.f32 %v1869, 0.044715
    %v1886 = vmul.f32 %v1870, 0.044715
    %v1887 = vmul.f32 %v1871, 0.044715
    %v1888 = vmul.f32 %v1872, 0.044715
    %v1889 = vmul.f32 %v1873, 0.044715
    %v1890 = vmul.f32 %v1874, 0.044715
    %v1891 = vmul.f32 %v1875, 0.044715
    %v1892 = vmul.f32 %v1876, 0.044715
    %v1893 = vmul.f32 %v1877, 0.044715
    %v1894 = vmul.f32 %v1878, 0.044715
    %v1895 = vadd.f32 %v1785, %v1879
    %v1896 = vadd.f32 %v1788, %v1880
    %v1897 = vadd.f32 %v1793, %v1881
    %v1898 = vadd.f32 %v1796, %v1882
    %v1899 = vadd.f32 %v1801, %v1883
    %v1900 = vadd.f32 %v1804, %v1884
    %v1901 = vadd.f32 %v1809, %v1885
    %v1902 = vadd.f32 %v1812, %v1886
    %v1903 = vadd.f32 %v1817, %v1887
    %v1904 = vadd.f32 %v1820, %v1888
    %v1905 = vadd.f32 %v1825, %v1889
    %v1906 = vadd.f32 %v1828, %v1890
    %v1907 = vadd.f32 %v1833, %v1891
    %v1908 = vadd.f32 %v1836, %v1892
    %v1909 = vadd.f32 %v1841, %v1893
    %v1910 = vadd.f32 %v1844, %v1894
    %v1911 = vmul.f32 %v1895, 0.7978846
    %v1912 = vmul.f32 %v1896, 0.7978846
    %v1913 = vmul.f32 %v1897, 0.7978846
    %v1914 = vmul.f32 %v1898, 0.7978846
    %v1915 = vmul.f32 %v1899, 0.7978846
    %v1916 = vmul.f32 %v1900, 0.7978846
    %v1917 = vmul.f32 %v1901, 0.7978846
    %v1918 = vmul.f32 %v1902, 0.7978846
    %v1919 = vmul.f32 %v1903, 0.7978846
    %v1920 = vmul.f32 %v1904, 0.7978846
    %v1921 = vmul.f32 %v1905, 0.7978846
    %v1922 = vmul.f32 %v1906, 0.7978846
    %v1923 = vmul.f32 %v1907, 0.7978846
    %v1924 = vmul.f32 %v1908, 0.7978846
    %v1925 = vmul.f32 %v1909, 0.7978846
    %v1926 = vmul.f32 %v1910, 0.7978846
    %v1927 = vtanh.pop %v1911
    %v1928 = vtanh.pop %v1912
    %v1929 = vtanh.pop %v1913
    %v1930 = vtanh.pop %v1914
    %v1931 = vtanh.pop %v1915
    %v1932 = vtanh.pop %v1916
    %v1933 = vtanh.pop %v1917
    %v1934 = vtanh.pop %v1918
    %v1935 = vtanh.pop %v1919
    %v1936 = vtanh.pop %v1920
    %v1937 = vtanh.pop %v1921
    %v1938 = vtanh.pop %v1922
    %v1939 = vtanh.pop %v1923
    %v1940 = vtanh.pop %v1924
    %v1941 = vtanh.pop %v1925
    %v1942 = vtanh.pop %v1926
    %v1943 = vadd.f32 %v1927, 1.0
    %v1944 = vadd.f32 %v1928, 1.0
    %v1945 = vadd.f32 %v1929, 1.0
    %v1946 = vadd.f32 %v1930, 1.0
    %v1947 = vadd.f32 %v1931, 1.0
    %v1948 = vadd.f32 %v1932, 1.0
    %v1949 = vadd.f32 %v1933, 1.0
    %v1950 = vadd.f32 %v1934, 1.0
    %v1951 = vadd.f32 %v1935, 1.0
    %v1952 = vadd.f32 %v1936, 1.0
    %v1953 = vadd.f32 %v1937, 1.0
    %v1954 = vadd.f32 %v1938, 1.0
    %v1955 = vadd.f32 %v1939, 1.0
    %v1956 = vadd.f32 %v1940, 1.0
    %v1957 = vadd.f32 %v1941, 1.0
    %v1958 = vadd.f32 %v1942, 1.0
    %v1959 = vmul.f32 %v1943, 0.5
    %v1960 = vmul.f32 %v1944, 0.5
    %v1961 = vmul.f32 %v1945, 0.5
    %v1962 = vmul.f32 %v1946, 0.5
    %v1963 = vmul.f32 %v1947, 0.5
    %v1964 = vmul.f32 %v1948, 0.5
    %v1965 = vmul.f32 %v1949, 0.5
    %v1966 = vmul.f32 %v1950, 0.5
    %v1967 = vmul.f32 %v1951, 0.5
    %v1968 = vmul.f32 %v1952, 0.5
    %v1969 = vmul.f32 %v1953, 0.5
    %v1970 = vmul.f32 %v1954, 0.5
    %v1971 = vmul.f32 %v1955, 0.5
    %v1972 = vmul.f32 %v1956, 0.5
    %v1973 = vmul.f32 %v1957, 0.5
    %v1974 = vmul.f32 %v1958, 0.5
    %v1975 = vmul.f32 %v1785, %v1959
    %v1976 = vmul.f32 %v1788, %v1960
    %v1977 = vmul.f32 %v1793, %v1961
    %v1978 = vmul.f32 %v1796, %v1962
    %v1979 = vmul.f32 %v1801, %v1963
    %v1980 = vmul.f32 %v1804, %v1964
    %v1981 = vmul.f32 %v1809, %v1965
    %v1982 = vmul.f32 %v1812, %v1966
    %v1983 = vmul.f32 %v1817, %v1967
    %v1984 = vmul.f32 %v1820, %v1968
    %v1985 = vmul.f32 %v1825, %v1969
    %v1986 = vmul.f32 %v1828, %v1970
    %v1987 = vmul.f32 %v1833, %v1971
    %v1988 = vmul.f32 %v1836, %v1972
    %v1989 = vmul.f32 %v1841, %v1973
    %v1990 = vmul.f32 %v1844, %v1974
    %v1991 = vld [vmem:[%s1 + $0x80] sm:$0xf]
    %v1992 = vld [vmem:[%s1 + $0x84] sm:$0xf]
    %v1993 = vld [vmem:[%s1 + $0x88] sm:$0xf]
    %v1994 = vld [vmem:[%s1 + $0x8c] sm:$0xf]
    %v1995 = vpack.c.bf16 %v1976, %v1975
    %v1996 = vpack.c.bf16 %v1978, %v1977
    %v1997 = vpack.c.bf16 %v1980, %v1979
    %v1998 = vpack.c.bf16 %v1982, %v1981
    %v1999 = vpack.c.bf16 %v1984, %v1983
    %v2000 = vpack.c.bf16 %v1986, %v1985
    %v2001 = vpack.c.bf16 %v1988, %v1987
    %v2002 = vpack.c.bf16 %v1990, %v1989
    %v2007 = vunpack.c.l.b16 %v1991
    %v2008 = vunpack.c.l.b16 %v1992
    %v2009 = vunpack.c.l.b16 %v1993
    %v2010 = vunpack.c.l.b16 %v1994
    %v2011 = vpack.c.b16 %v2008, %v2007
    %v2012 = vpack.c.b16 %v2010, %v2009
    %vm2015 = vcmask 261120
    %v2017 = vsel %vm2015, %v1995, 0
    %v2020 = vsel %vm2015, %v1996, 0
    %v2023 = vsel %vm2015, %v1997, 0
    %v2026 = vsel %vm2015, %v1998, 0
    %v2029 = vsel %vm2015, %v1999, 0
    %v2032 = vsel %vm2015, %v2000, 0
    %v2035 = vsel %vm2015, %v2001, 0
    %v2038 = vsel %vm2015, %v2002, 0
    %2040 = vmatprep.subr.bf16.mxu0 0
    %2041 = vmatpush1.bf16.msra.mxu0 %v2011
    %2042 = vmatprep.subr.bf16.mxu0 0
    %2043 = vmatpush1.bf16.msra.mxu0 %v2012
    %2044 = vmatprep.subr.bf16.mxu0 0
    %2045 = vmatpush1.bf16.msra.mxu0 0
    %2046 = vmatprep.subr.bf16.mxu0 0
    %2047 = vmatpush1.bf16.msra.mxu0 0
    %2048 = vmatprep.subr.bf16.mxu0 0
    %2049 = vmatpush1.bf16.msra.mxu0 0
    %2050 = vmatprep.subr.bf16.mxu0 0
    %2051 = vmatpush1.bf16.msra.mxu0 0
    %2052 = vmatprep.subr.bf16.mxu0 0
    %2053 = vmatpush1.bf16.msra.mxu0 0
    %2054 = vmatprep.subr.bf16.mxu0 0
    %2055 = vmatpush1.bf16.msra.mxu0 0
    %2056 = vmatprep.subr.bf16.mxu0 0
    %2057 = vmatpush1.bf16.msra.mxu0 0
    %2058 = vmatprep.subr.bf16.mxu0 0
    %2059 = vmatpush1.bf16.msra.mxu0 0
    %2060 = vmatprep.subr.bf16.mxu0 0
    %2061 = vmatpush1.bf16.msra.mxu0 0
    %2062 = vmatprep.subr.bf16.mxu0 0
    %2063 = vmatpush1.bf16.msra.mxu0 0
    %2064 = vmatprep.subr.bf16.mxu0 0
    %2065 = vmatpush1.bf16.msra.mxu0 0
    %2066 = vmatprep.subr.bf16.mxu0 0
    %2067 = vmatpush1.bf16.msra.mxu0 0
    %2068 = vmatprep.subr.bf16.mxu0 0
    %2069 = vmatpush1.bf16.msra.mxu0 0
    %2070 = vmatprep.subr.bf16.mxu0 0
    %2071 = vmatpush1.bf16.msra.mxu0 0
    %2072 = vmatprep.mubr.bf16.mxu0 0
    %2073 = vmatmul.mubr.bf16.gmra.mrb[0].mxu0 %v2017
    %v2074 = vpop.f32.mrb[0].mxu0
    %v2075 = vadd.f32 0.0, %v2074
    %v2076 = vpop.f32.mrb[0].mxu0
    %v2077 = vpop.f32.mrb[0].mxu0
    %v2078 = vadd.f32 0.0, %v2077
    %v2079 = vpop.f32.mrb[0].mxu0
    %2080 = vmatprep.mubr.bf16.mxu0 0
    %2081 = vmatmul.mubr.bf16.gmra.mrb[0].mxu0 %v2020
    %v2082 = vpop.f32.mrb[0].mxu0
    %v2083 = vadd.f32 0.0, %v2082
    %v2084 = vpop.f32.mrb[0].mxu0
    %v2085 = vpop.f32.mrb[0].mxu0
    %v2086 = vadd.f32 0.0, %v2085
    %v2087 = vpop.f32.mrb[0].mxu0
    %2088 = vmatprep.mubr.bf16.mxu0 0
    %2089 = vmatmul.mubr.bf16.gmra.mrb[0].mxu0 %v2023
    %v2090 = vpop.f32.mrb[0].mxu0
    %v2091 = vadd.f32 0.0, %v2090
    %v2092 = vpop.f32.mrb[0].mxu0
    %v2093 = vpop.f32.mrb[0].mxu0
    %v2094 = vadd.f32 0.0, %v2093
    %v2095 = vpop.f32.mrb[0].mxu0
    %2096 = vmatprep.mubr.bf16.mxu0 0
    %2097 = vmatmul.mubr.bf16.gmra.mrb[0].mxu0 %v2026
    %v2098 = vpop.f32.mrb[0].mxu0
    %v2099 = vadd.f32 0.0, %v2098
    %v2100 = vpop.f32.mrb[0].mxu0
    %v2101 = vpop.f32.mrb[0].mxu0
    %v2102 = vadd.f32 0.0, %v2101
    %v2103 = vpop.f32.mrb[0].mxu0
    %2104 = vmatprep.mubr.bf16.mxu0 0
    %2105 = vmatmul.mubr.bf16.gmra.mrb[0].mxu0 %v2029
    %v2106 = vpop.f32.mrb[0].mxu0
    %v2107 = vadd.f32 0.0, %v2106
    %v2108 = vpop.f32.mrb[0].mxu0
    %v2109 = vpop.f32.mrb[0].mxu0
    %v2110 = vadd.f32 0.0, %v2109
    %v2111 = vpop.f32.mrb[0].mxu0
    %2112 = vmatprep.mubr.bf16.mxu0 0
    %2113 = vmatmul.mubr.bf16.gmra.mrb[0].mxu0 %v2032
    %v2114 = vpop.f32.mrb[0].mxu0
    %v2115 = vadd.f32 0.0, %v2114
    %v2116 = vpop.f32.mrb[0].mxu0
    %v2117 = vpop.f32.mrb[0].mxu0
    %v2118 = vadd.f32 0.0, %v2117
    %v2119 = vpop.f32.mrb[0].mxu0
    %2120 = vmatprep.mubr.bf16.mxu0 0
    %2121 = vmatmul.mubr.bf16.gmra.mrb[0].mxu0 %v2035
    %v2122 = vpop.f32.mrb[0].mxu0
    %v2123 = vadd.f32 0.0, %v2122
    %v2124 = vpop.f32.mrb[0].mxu0
    %v2125 = vpop.f32.mrb[0].mxu0
    %v2126 = vadd.f32 0.0, %v2125
    %v2127 = vpop.f32.mrb[0].mxu0
    %2128 = vmatprep.mubr.bf16.mxu0 0
    %2129 = vmatmul.mubr.bf16.gmra.mrb[0].mxu0 %v2038
    %v2130 = vpop.f32.mrb[0].mxu0
    %v2131 = vadd.f32 0.0, %v2130
    %v2132 = vpop.f32.mrb[0].mxu0
    %v2133 = vpop.f32.mrb[0].mxu0
    %v2134 = vadd.f32 0.0, %v2133
    %v2135 = vpop.f32.mrb[0].mxu0
    %2136 = vdwg.mxu0
    %v2137 = vadd.f32 %v1439, %v2075
    %v2138 = vadd.f32 %v1440, %v2078
    %v2139 = vadd.f32 %v1441, %v2083
    %v2140 = vadd.f32 %v1442, %v2086
    %v2141 = vadd.f32 %v1443, %v2091
    %v2142 = vadd.f32 %v1444, %v2094
    %v2143 = vadd.f32 %v1445, %v2099
    %v2144 = vadd.f32 %v1446, %v2102
    %v2145 = vadd.f32 %v1447, %v2107
    %v2146 = vadd.f32 %v1448, %v2110
    %v2147 = vadd.f32 %v1449, %v2115
    %v2148 = vadd.f32 %v1450, %v2118
    %v2149 = vadd.f32 %v1451, %v2123
    %v2150 = vadd.f32 %v1452, %v2126
    %v2151 = vadd.f32 %v1453, %v2131
    %v2152 = vadd.f32 %v1454, %v2134
    %v2153 = vld [vmem:[%s2 + $0x38] sm:$0x1]
    %v2154 = vlaneseq
    %v2155 = vshrl.u32 %v2154, 7
    %v2156 = vsub.s32 0, %v2155
    %v2157 = vrot.slane %v2153, %v2156
    %v2158 = vadd.f32 %v2137, %v2157
    %v2159 = vadd.f32 %v2138, %v2157
    %v2160 = vadd.f32 %v2139, %v2157
    %v2161 = vadd.f32 %v2140, %v2157
    %v2162 = vadd.f32 %v2141, %v2157
    %v2163 = vadd.f32 %v2142, %v2157
    %v2164 = vadd.f32 %v2143, %v2157
    %v2165 = vadd.f32 %v2144, %v2157
    %v2166 = vadd.f32 %v2145, %v2157
    %v2167 = vadd.f32 %v2146, %v2157
    %v2168 = vadd.f32 %v2147, %v2157
    %v2169 = vadd.f32 %v2148, %v2157
    %v2170 = vadd.f32 %v2149, %v2157
    %v2171 = vadd.f32 %v2150, %v2157
    %v2172 = vadd.f32 %v2151, %v2157
    %v2173 = vadd.f32 %v2152, %v2157
    %v2174 = vld [vmem:[%s1 + $0x38] sm:$0xf]
    %v2175 = vld [vmem:[%s1 + $0x3c] sm:$0xf]
    %v2176 = vld [vmem:[%s1 + $0x40] sm:$0xf]
    %v2177 = vld [vmem:[%s1 + $0x44] sm:$0xf]
    %v2178 = vld [vmem:[%s1 + $0x48] sm:$0xf]
    %v2179 = vld [vmem:[%s1 + $0x4c] sm:$0xf]
    %v2180 = vld [vmem:[%s1 + $0x50] sm:$0xf]
    %v2181 = vld [vmem:[%s1 + $0x54] sm:$0xf]
    %v2182 = vld [vmem:[%s1 + $0x58] sm:$0xf]
    %v2183 = vld [vmem:[%s1 + $0x5c] sm:$0xf]
    %v2184 = vld [vmem:[%s1 + $0x60] sm:$0xf]
    %v2185 = vld [vmem:[%s1 + $0x64] sm:$0xf]
    %v2186 = vld [vmem:[%s1 + $0x68] sm:$0xf]
    %v2187 = vld [vmem:[%s1 + $0x6c] sm:$0xf]
    %v2188 = vld [vmem:[%s1 + $0x70] sm:$0xf]
    %v2189 = vld [vmem:[%s1 + $0x74] sm:$0xf]
    %v2190 = vpack.c.bf16 %v2159, %v2158
    %v2191 = vpack.c.bf16 %v2161, %v2160
    %v2192 = vpack.c.bf16 %v2163, %v2162
    %v2193 = vpack.c.bf16 %v2165, %v2164
    %v2194 = vpack.c.bf16 %v2167, %v2166
    %v2195 = vpack.c.bf16 %v2169, %v2168
    %v2196 = vpack.c.bf16 %v2171, %v2170
    %v2197 = vpack.c.bf16 %v2173, %v2172
    %v2214 = vunpack.c.l.b16 %v2174
    %v2215 = vunpack.c.l.b16 %v2175
    %v2216 = vunpack.c.l.b16 %v2176
    %v2217 = vunpack.c.l.b16 %v2177
    %v2218 = vunpack.c.l.b16 %v2178
    %v2219 = vunpack.c.l.b16 %v2179
    %v2220 = vunpack.c.l.b16 %v2180
    %v2221 = vunpack.c.l.b16 %v2181
    %v2222 = vunpack.c.l.b16 %v2182
    %v2223 = vunpack.c.l.b16 %v2183
    %v2224 = vunpack.c.l.b16 %v2184
    %v2225 = vunpack.c.l.b16 %v2185
    %v2226 = vunpack.c.l.b16 %v2186
    %v2227 = vunpack.c.l.b16 %v2187
    %v2228 = vunpack.c.l.b16 %v2188
    %v2229 = vunpack.c.l.b16 %v2189
    %v2230 = vpack.c.b16 %v2215, %v2214
    %v2231 = vpack.c.b16 %v2217, %v2216
    %v2232 = vpack.c.b16 %v2219, %v2218
    %v2233 = vpack.c.b16 %v2221, %v2220
    %v2234 = vpack.c.b16 %v2223, %v2222
    %v2235 = vpack.c.b16 %v2225, %v2224
    %v2236 = vpack.c.b16 %v2227, %v2226
    %v2237 = vpack.c.b16 %v2229, %v2228
    %2246 = vmatprep.subr.bf16.mxu0 0
    %2247 = vmatpush1.bf16.msra.mxu0 %v2190
    %2248 = vmatprep.subr.bf16.mxu0 0
    %2249 = vmatpush1.bf16.msra.mxu0 %v2191
    %2250 = vmatprep.subr.bf16.mxu0 0
    %2251 = vmatpush1.bf16.msra.mxu0 %v2192
    %2252 = vmatprep.subr.bf16.mxu0 0
    %2253 = vmatpush1.bf16.msra.mxu0 %v2193
    %2254 = vmatprep.subr.bf16.mxu0 0
    %2255 = vmatpush1.bf16.msra.mxu0 %v2194
    %2256 = vmatprep.subr.bf16.mxu0 0
    %2257 = vmatpush1.bf16.msra.mxu0 %v2195
    %2258 = vmatprep.subr.bf16.mxu0 0
    %2259 = vmatpush1.bf16.msra.mxu0 %v2196
    %2260 = vmatprep.subr.bf16.mxu0 0
    %2261 = vmatpush1.bf16.msra.mxu0 %v2197
    %2262 = vmatprep.subr.bf16.mxu0 0
    %2263 = vmatpush1.bf16.msra.mxu0 0
    %2264 = vmatprep.subr.bf16.mxu0 0
    %2265 = vmatpush1.bf16.msra.mxu0 0
    %2266 = vmatprep.subr.bf16.mxu0 0
    %2267 = vmatpush1.bf16.msra.mxu0 0
    %2268 = vmatprep.subr.bf16.mxu0 0
    %2269 = vmatpush1.bf16.msra.mxu0 0
    %2270 = vmatprep.subr.bf16.mxu0 0
    %2271 = vmatpush1.bf16.msra.mxu0 0
    %2272 = vmatprep.subr.bf16.mxu0 0
    %2273 = vmatpush1.bf16.msra.mxu0 0
    %2274 = vmatprep.subr.bf16.mxu0 0
    %2275 = vmatpush1.bf16.msra.mxu0 0
    %2276 = vmatprep.subr.bf16.mxu0 0
    %2277 = vmatpush1.bf16.msra.mxu0 0
    %2278 = vmatprep.mubr.bf16.mxu0 0
    %2279 = vmatmul.mubr.bf16.gmra.mrb[0].mxu0 %v2230
    %v2280 = vpop.f32.mrb[0].mxu0
    %v2281 = vadd.f32 0.0, %v2280
    %v2282 = vpop.f32.mrb[0].mxu0
    %v2283 = vpop.f32.mrb[0].mxu0
    %v2284 = vadd.f32 0.0, %v2283
    %v2285 = vpop.f32.mrb[0].mxu0
    %2286 = vmatprep.mubr.bf16.mxu0 0
    %2287 = vmatmul.mubr.bf16.gmra.mrb[0].mxu0 %v2231
    %v2288 = vpop.f32.mrb[0].mxu0
    %v2289 = vadd.f32 0.0, %v2288
    %v2290 = vpop.f32.mrb[0].mxu0
    %v2291 = vpop.f32.mrb[0].mxu0
    %v2292 = vadd.f32 0.0, %v2291
    %v2293 = vpop.f32.mrb[0].mxu0
    %2294 = vmatprep.mubr.bf16.mxu0 0
    %2295 = vmatmul.mubr.bf16.gmra.mrb[0].mxu0 %v2232
    %v2296 = vpop.f32.mrb[0].mxu0
    %v2297 = vadd.f32 0.0, %v2296
    %v2298 = vpop.f32.mrb[0].mxu0
    %v2299 = vpop.f32.mrb[0].mxu0
    %v2300 = vadd.f32 0.0, %v2299
    %v2301 = vpop.f32.mrb[0].mxu0
    %2302 = vmatprep.mubr.bf16.mxu0 0
    %2303 = vmatmul.mubr.bf16.gmra.mrb[0].mxu0 %v2233
    %v2304 = vpop.f32.mrb[0].mxu0
    %v2305 = vadd.f32 0.0, %v2304
    %v2306 = vpop.f32.mrb[0].mxu0
    %v2307 = vpop.f32.mrb[0].mxu0
    %v2308 = vadd.f32 0.0, %v2307
    %v2309 = vpop.f32.mrb[0].mxu0
    %2310 = vmatprep.mubr.bf16.mxu0 0
    %2311 = vmatmul.mubr.bf16.gmra.mrb[0].mxu0 %v2234
    %v2312 = vpop.f32.mrb[0].mxu0
    %v2313 = vadd.f32 0.0, %v2312
    %v2314 = vpop.f32.mrb[0].mxu0
    %v2315 = vpop.f32.mrb[0].mxu0
    %v2316 = vadd.f32 0.0, %v2315
    %v2317 = vpop.f32.mrb[0].mxu0
    %2318 = vmatprep.mubr.bf16.mxu0 0
    %2319 = vmatmul.mubr.bf16.gmra.mrb[0].mxu0 %v2235
    %v2320 = vpop.f32.mrb[0].mxu0
    %v2321 = vadd.f32 0.0, %v2320
    %v2322 = vpop.f32.mrb[0].mxu0
    %v2323 = vpop.f32.mrb[0].mxu0
    %v2324 = vadd.f32 0.0, %v2323
    %v2325 = vpop.f32.mrb[0].mxu0
    %2326 = vmatprep.mubr.bf16.mxu0 0
    %2327 = vmatmul.mubr.bf16.gmra.mrb[0].mxu0 %v2236
    %v2328 = vpop.f32.mrb[0].mxu0
    %v2329 = vadd.f32 0.0, %v2328
    %v2330 = vpop.f32.mrb[0].mxu0
    %v2331 = vpop.f32.mrb[0].mxu0
    %v2332 = vadd.f32 0.0, %v2331
    %v2333 = vpop.f32.mrb[0].mxu0
    %2334 = vmatprep.mubr.bf16.mxu0 0
    %2335 = vmatmul.mubr.bf16.gmra.mrb[0].mxu0 %v2237
    %v2336 = vpop.f32.mrb[0].mxu0
    %v2337 = vadd.f32 0.0, %v2336
    %v2338 = vpop.f32.mrb[0].mxu0
    %v2339 = vpop.f32.mrb[0].mxu0
    %v2340 = vadd.f32 0.0, %v2339
    %v2341 = vpop.f32.mrb[0].mxu0
    %2342 = vdwg.mxu0
    %2347 = vrot.lane.b32.xlu0 %v2297, 16
    %v2348 = vpop.permute.xlu0 %2347
    %2349 = vrot.lane.b32.xlu0 %v2300, 16
    %v2350 = vpop.permute.xlu0 %2349
    %2351 = vrot.lane.b32.xlu0 %v2305, 16
    %v2352 = vpop.permute.xlu0 %2351
    %2353 = vrot.lane.b32.xlu0 %v2308, 16
    %v2354 = vpop.permute.xlu0 %2353
    %2363 = vrot.lane.b32.xlu0 %v2313, 32
    %v2364 = vpop.permute.xlu0 %2363
    %2365 = vrot.lane.b32.xlu0 %v2316, 32
    %v2366 = vpop.permute.xlu0 %2365
    %2367 = vrot.lane.b32.xlu0 %v2321, 32
    %v2368 = vpop.permute.xlu0 %2367
    %2369 = vrot.lane.b32.xlu0 %v2324, 32
    %v2370 = vpop.permute.xlu0 %2369
    %2379 = vrot.lane.b32.xlu0 %v2329, 48
    %v2380 = vpop.permute.xlu0 %2379
    %2381 = vrot.lane.b32.xlu0 %v2332, 48
    %v2382 = vpop.permute.xlu0 %2381
    %2383 = vrot.lane.b32.xlu0 %v2337, 48
    %v2384 = vpop.permute.xlu0 %2383
    %2385 = vrot.lane.b32.xlu0 %v2340, 48
    %v2386 = vpop.permute.xlu0 %2385
    %v2391 = vsel %vm193, %v2281, %v2348
    %v2392 = vsel %vm193, %v2284, %v2350
    %v2393 = vsel %vm193, %v2289, %v2352
    %v2394 = vsel %vm193, %v2292, %v2354
    %v2395 = vsel %vm2015, %v2391, %v2364
    %v2396 = vsel %vm2015, %v2392, %v2366
    %v2397 = vsel %vm2015, %v2393, %v2368
    %v2398 = vsel %vm2015, %v2394, %v2370
    %v2399 = vsel %vm69, %v2395, %v2380
    %v2400 = vsel %vm69, %v2396, %v2382
    %v2401 = vsel %vm69, %v2397, %v2384
    %v2402 = vsel %vm69, %v2398, %v2386
    %v2403 = vld [vmem:[%s1 + $0x18] sm:$0xf]
    %v2404 = vld [vmem:[%s1 + $0x1c] sm:$0xf]
    %v2405 = vld [vmem:[%s1 + $0x20] sm:$0xf]
    %v2406 = vld [vmem:[%s1 + $0x24] sm:$0xf]
    %v2407 = vld [vmem:[%s1 + $0x28] sm:$0xf]
    %v2408 = vld [vmem:[%s1 + $0x2c] sm:$0xf]
    %v2409 = vld [vmem:[%s1 + $0x30] sm:$0xf]
    %v2410 = vld [vmem:[%s1 + $0x34] sm:$0xf]
    %v2411 = vpack.c.bf16 %v2400, %v2399
    %v2412 = vpack.c.bf16 %v2402, %v2401
    %v2413 = vld [vmem:[%s2 + $0x8] sm:$0x1]
    %v2414 = vlaneseq
    %v2415 = vshrl.u32 %v2414, 7
    %v2416 = vsub.s32 0, %v2415
    %v2417 = vrot.slane %v2413, %v2416
    %v2426 = vunpack.c.l.b16 %v2403
    %v2427 = vunpack.c.l.b16 %v2404
    %v2428 = vunpack.c.l.b16 %v2405
    %v2429 = vunpack.c.l.b16 %v2406
    %v2430 = vunpack.c.l.b16 %v2407
    %v2431 = vunpack.c.l.b16 %v2408
    %v2432 = vunpack.c.l.b16 %v2409
    %v2433 = vunpack.c.l.b16 %v2410
    %v2434 = vpack.c.b16 %v2427, %v2426
    %v2435 = vpack.c.b16 %v2429, %v2428
    %v2436 = vpack.c.b16 %v2431, %v2430
    %v2437 = vpack.c.b16 %v2433, %v2432
    %vm2442 = vcmask 523264
    %v2444 = vsel %vm2442, %v2411, 0
    %v2447 = vsel %vm2442, %v2412, 0
    %2449 = vmatprep.subr.bf16.mxu0 0
    %2450 = vmatpush1.bf16.msra.mxu0 %v2434
    %2451 = vmatprep.subr.bf16.mxu0 0
    %2452 = vmatpush1.bf16.msra.mxu0 %v2435
    %2453 = vmatprep.subr.bf16.mxu0 0
    %2454 = vmatpush1.bf16.msra.mxu0 %v2436
    %2455 = vmatprep.subr.bf16.mxu0 0
    %2456 = vmatpush1.bf16.msra.mxu0 %v2437
    %2457 = vmatprep.subr.bf16.mxu0 0
    %2458 = vmatpush1.bf16.msra.mxu0 0
    %2459 = vmatprep.subr.bf16.mxu0 0
    %2460 = vmatpush1.bf16.msra.mxu0 0
    %2461 = vmatprep.subr.bf16.mxu0 0
    %2462 = vmatpush1.bf16.msra.mxu0 0
    %2463 = vmatprep.subr.bf16.mxu0 0
    %2464 = vmatpush1.bf16.msra.mxu0 0
    %2465 = vmatprep.subr.bf16.mxu0 0
    %2466 = vmatpush1.bf16.msra.mxu0 0
    %2467 = vmatprep.subr.bf16.mxu0 0
    %2468 = vmatpush1.bf16.msra.mxu0 0
    %2469 = vmatprep.subr.bf16.mxu0 0
    %2470 = vmatpush1.bf16.msra.mxu0 0
    %2471 = vmatprep.subr.bf16.mxu0 0
    %2472 = vmatpush1.bf16.msra.mxu0 0
    %2473 = vmatprep.subr.bf16.mxu0 0
    %2474 = vmatpush1.bf16.msra.mxu0 0
    %2475 = vmatprep.subr.bf16.mxu0 0
    %2476 = vmatpush1.bf16.msra.mxu0 0
    %2477 = vmatprep.subr.bf16.mxu0 0
    %2478 = vmatpush1.bf16.msra.mxu0 0
    %2479 = vmatprep.subr.bf16.mxu0 0
    %2480 = vmatpush1.bf16.msra.mxu0 0
    %2481 = vmatprep.mubr.bf16.mxu0 0
    %2482 = vmatmul.mubr.bf16.gmra.mrb[0].mxu0 %v2444
    %v2483 = vpop.f32.mrb[0].mxu0
    %v2484 = vadd.f32 %v2417, %v2483
    %v2485 = vpop.f32.mrb[0].mxu0
    %v2486 = vpop.f32.mrb[0].mxu0
    %v2487 = vadd.f32 %v2417, %v2486
    %v2488 = vpop.f32.mrb[0].mxu0
    %2489 = vmatprep.mubr.bf16.mxu0 0
    %2490 = vmatmul.mubr.bf16.gmra.mrb[0].mxu0 %v2447
    %v2491 = vpop.f32.mrb[0].mxu0
    %v2492 = vadd.f32 %v2417, %v2491
    %v2493 = vpop.f32.mrb[0].mxu0
    %v2494 = vpop.f32.mrb[0].mxu0
    %v2495 = vadd.f32 %v2417, %v2494
    %v2496 = vpop.f32.mrb[0].mxu0
    %2497 = vdwg.mxu0
    %v2498 = vld [vmem:[%s2 + $0x40] sm:$0x1]
    %v2499 = vld [vmem:[%s2 + $0x48] sm:$0x1]
    %v2500 = vsel %vm2015, %v2484, 0.0
    %2501 = vadd.xlane.f32.xlu0 %v2500
    %v2502 = vpop.xlane.xlu0 %2501
    %v2503 = vsel %vm2015, %v2487, 0.0
    %2504 = vadd.xlane.f32.xlu0 %v2503
    %v2505 = vpop.xlane.xlu0 %2504
    %v2506 = vsel %vm2015, %v2492, 0.0
    %2507 = vadd.xlane.f32.xlu0 %v2506
    %v2508 = vpop.xlane.xlu0 %2507
    %v2509 = vsel %vm2015, %v2495, 0.0
    %2510 = vadd.xlane.f32.xlu0 %v2509
    %v2511 = vpop.xlane.xlu0 %2510
    %v2512 = vrcp.pop 32.0
    %v2513 = vmul.f32 %v2502, %v2512
    %v2514 = vmul.f32 %v2505, %v2512
    %v2515 = vmul.f32 %v2508, %v2512
    %v2516 = vmul.f32 %v2511, %v2512
    %v2517 = vsub.f32 %v2484, %v2513
    %v2518 = vsub.f32 %v2487, %v2514
    %v2519 = vsub.f32 %v2492, %v2515
    %v2520 = vsub.f32 %v2495, %v2516
    %v2521 = vmul.f32 %v2517, %v2517
    %v2522 = vmul.f32 %v2518, %v2518
    %v2523 = vmul.f32 %v2519, %v2519
    %v2524 = vmul.f32 %v2520, %v2520
    %v2525 = vsel %vm2015, %v2521, 0.0
    %2526 = vadd.xlane.f32.xlu0 %v2525
    %v2527 = vpop.xlane.xlu0 %2526
    %v2528 = vsel %vm2015, %v2522, 0.0
    %2529 = vadd.xlane.f32.xlu0 %v2528
    %v2530 = vpop.xlane.xlu0 %2529
    %v2531 = vsel %vm2015, %v2523, 0.0
    %2532 = vadd.xlane.f32.xlu0 %v2531
    %v2533 = vpop.xlane.xlu0 %2532
    %v2534 = vsel %vm2015, %v2524, 0.0
    %2535 = vadd.xlane.f32.xlu0 %v2534
    %v2536 = vpop.xlane.xlu0 %2535
    %v2537 = vmul.f32 %v2527, %v2512
    %v2538 = vmul.f32 %v2530, %v2512
    %v2539 = vmul.f32 %v2533, %v2512
    %v2540 = vmul.f32 %v2536, %v2512
    %v2541 = vadd.f32 %v2537, 1e-05
    %v2542 = vadd.f32 %v2538, 1e-05
    %v2543 = vadd.f32 %v2539, 1e-05
    %v2544 = vadd.f32 %v2540, 1e-05
    %v2545 = vrsqrt.pop %v2541
    %v2546 = vrsqrt.pop %v2542
    %v2547 = vrsqrt.pop %v2543
    %v2548 = vrsqrt.pop %v2544
    %v2549 = vmul.f32 %v2517, %v2545
    %v2550 = vmul.f32 %v2518, %v2546
    %v2551 = vmul.f32 %v2519, %v2547
    %v2552 = vmul.f32 %v2520, %v2548
    %v2553 = vlaneseq
    %v2554 = vshrl.u32 %v2553, 7
    %v2555 = vsub.s32 0, %v2554
    %v2556 = vrot.slane %v2498, %v2555
    %v2557 = vmul.f32 %v2549, %v2556
    %v2558 = vmul.f32 %v2550, %v2556
    %v2559 = vmul.f32 %v2551, %v2556
    %v2560 = vmul.f32 %v2552, %v2556
    %v2561 = vlaneseq
    %v2562 = vshrl.u32 %v2561, 7
    %v2563 = vsub.s32 0, %v2562
    %v2564 = vrot.slane %v2499, %v2563
    %v2565 = vadd.f32 %v2557, %v2564
    %v2566 = vadd.f32 %v2558, %v2564
    %v2567 = vadd.f32 %v2559, %v2564
    %v2568 = vadd.f32 %v2560, %v2564
    %v2569 = vld [vmem:[%s2 + $0xf0] sm:$0xff]
    %v2570 = vld [vmem:[%s2 + $0xf8] sm:$0xff]
    %v2571 = vld [vmem:[%s2 + $0x100] sm:$0xff]
    %v2572 = vld [vmem:[%s2 + $0x108] sm:$0xff]
    %2574 = vset.pattern.permute.xlu0 0
    %2575 = vperm.xlu0 %2574, %v2569
    %v2576 = vpop.permute.xlu0 %2575
    %2579 = vset.pattern.permute.xlu0 0
    %2580 = vperm.xlu0 %2579, %v2570
    %v2581 = vpop.permute.xlu0 %2580
    %2584 = vset.pattern.permute.xlu0 0
    %2585 = vperm.xlu0 %2584, %v2571
    %v2586 = vpop.permute.xlu0 %2585
    %2589 = vset.pattern.permute.xlu0 0
    %2590 = vperm.xlu0 %2589, %v2572
    %v2591 = vpop.permute.xlu0 %2590
    %v2593 = vmul.f32 %v2565, %v2576
    %v2594 = vmul.f32 %v2566, %v2581
    %v2595 = vmul.f32 %v2567, %v2586
    %v2596 = vmul.f32 %v2568, %v2591
    %v2598 = vrot.slane %v2568, 3
    %vm2603 = vcmask 1044480
    %v2604 = vrot.slane %v2565, 3
    %v2605 = vrot.slane %v2566, 3
    %v2606 = vsel %vm2603, %v2604, %v2605
    %v2607 = vrot.slane %v2567, 3
    %v2608 = vsel %vm2603, %v2605, %v2607
    %v2609 = vsel %vm2603, %v2607, %v2598
    %v2614 = vsel %vm2603, %v2598, %v2604
    %2615 = vset.pattern.permute.xlu0 1
    %2616 = vperm.xlu0 %2615, %v2569
    %v2617 = vpop.permute.xlu0 %2616
    %2619 = vset.pattern.permute.xlu0 1
    %2620 = vperm.xlu0 %2619, %v2570
    %v2621 = vpop.permute.xlu0 %2620
    %2623 = vset.pattern.permute.xlu0 1
    %2624 = vperm.xlu0 %2623, %v2571
    %v2625 = vpop.permute.xlu0 %2624
    %2627 = vset.pattern.permute.xlu0 1
    %2628 = vperm.xlu0 %2627, %v2572
    %v2629 = vpop.permute.xlu0 %2628
    %v2631 = vmul.f32 %v2614, %v2617
    %v2632 = vmul.f32 %v2606, %v2621
    %v2633 = vmul.f32 %v2608, %v2625
    %v2634 = vmul.f32 %v2609, %v2629
    %v2635 = vadd.f32 %v2593, %v2631
    %v2636 = vadd.f32 %v2594, %v2632
    %v2637 = vadd.f32 %v2595, %v2633
    %v2638 = vadd.f32 %v2596, %v2634
    %v2639 = vrot.slane %v2568, 4
    %vm2641 = vcmask 1043456
    %v2642 = vrot.slane %v2565, 4
    %v2643 = vrot.slane %v2566, 4
    %v2644 = vsel %vm2641, %v2642, %v2643
    %v2645 = vrot.slane %v2567, 4
    %v2646 = vsel %vm2641, %v2643, %v2645
    %v2647 = vsel %vm2641, %v2645, %v2639
    %v2652 = vsel %vm2641, %v2639, %v2642
    %2653 = vset.pattern.permute.xlu0 2
    %2654 = vperm.xlu0 %2653, %v2569
    %v2655 = vpop.permute.xlu0 %2654
    %2657 = vset.pattern.permute.xlu0 2
    %2658 = vperm.xlu0 %2657, %v2570
    %v2659 = vpop.permute.xlu0 %2658
    %2661 = vset.pattern.permute.xlu0 2
    %2662 = vperm.xlu0 %2661, %v2571
    %v2663 = vpop.permute.xlu0 %2662
    %2665 = vset.pattern.permute.xlu0 2
    %2666 = vperm.xlu0 %2665, %v2572
    %v2667 = vpop.permute.xlu0 %2666
    %v2669 = vmul.f32 %v2652, %v2655
    %v2670 = vmul.f32 %v2644, %v2659
    %v2671 = vmul.f32 %v2646, %v2663
    %v2672 = vmul.f32 %v2647, %v2667
    %v2673 = vadd.f32 %v2635, %v2669
    %v2674 = vadd.f32 %v2636, %v2670
    %v2675 = vadd.f32 %v2637, %v2671
    %v2676 = vadd.f32 %v2638, %v2672
    %v2677 = vrot.slane %v2568, 5
    %vm2679 = vcmask 1042432
    %v2680 = vrot.slane %v2565, 5
    %v2681 = vrot.slane %v2566, 5
    %v2682 = vsel %vm2679, %v2680, %v2681
    %v2683 = vrot.slane %v2567, 5
    %v2684 = vsel %vm2679, %v2681, %v2683
    %v2685 = vsel %vm2679, %v2683, %v2677
    %v2690 = vsel %vm2679, %v2677, %v2680
    %2691 = vset.pattern.permute.xlu0 3
    %2692 = vperm.xlu0 %2691, %v2569
    %v2693 = vpop.permute.xlu0 %2692
    %2695 = vset.pattern.permute.xlu0 3
    %2696 = vperm.xlu0 %2695, %v2570
    %v2697 = vpop.permute.xlu0 %2696
    %2699 = vset.pattern.permute.xlu0 3
    %2700 = vperm.xlu0 %2699, %v2571
    %v2701 = vpop.permute.xlu0 %2700
    %2703 = vset.pattern.permute.xlu0 3
    %2704 = vperm.xlu0 %2703, %v2572
    %v2705 = vpop.permute.xlu0 %2704
    %v2707 = vmul.f32 %v2690, %v2693
    %v2708 = vmul.f32 %v2682, %v2697
    %v2709 = vmul.f32 %v2684, %v2701
    %v2710 = vmul.f32 %v2685, %v2705
    %v2711 = vadd.f32 %v2673, %v2707
    %v2712 = vadd.f32 %v2674, %v2708
    %v2713 = vadd.f32 %v2675, %v2709
    %v2714 = vadd.f32 %v2676, %v2710
    %v2715 = vrot.slane %v2568, 7
    %v2717 = vrot.slane %v2565, 7
    %v2718 = vrot.slane %v2566, 7
    %v2719 = vsel %vm557, %v2717, %v2718
    %v2720 = vrot.slane %v2567, 7
    %v2721 = vsel %vm557, %v2718, %v2720
    %v2722 = vsel %vm557, %v2720, %v2715
    %v2727 = vsel %vm557, %v2715, %v2717
    %2728 = vset.pattern.permute.xlu0 4
    %2729 = vperm.xlu0 %2728, %v2569
    %v2730 = vpop.permute.xlu0 %2729
    %2732 = vset.pattern.permute.xlu0 4
    %2733 = vperm.xlu0 %2732, %v2570
    %v2734 = vpop.permute.xlu0 %2733
    %2736 = vset.pattern.permute.xlu0 4
    %2737 = vperm.xlu0 %2736, %v2571
    %v2738 = vpop.permute.xlu0 %2737
    %2740 = vset.pattern.permute.xlu0 4
    %2741 = vperm.xlu0 %2740, %v2572
    %v2742 = vpop.permute.xlu0 %2741
    %v2744 = vmul.f32 %v2727, %v2730
    %v2745 = vmul.f32 %v2719, %v2734
    %v2746 = vmul.f32 %v2721, %v2738
    %v2747 = vmul.f32 %v2722, %v2742
    %v2748 = vadd.f32 %v2711, %v2744
    %v2749 = vadd.f32 %v2712, %v2745
    %v2750 = vadd.f32 %v2713, %v2746
    %v2751 = vadd.f32 %v2714, %v2747
    %v2752 = vrot.slane %v2565, 1
    %v2753 = vrot.slane %v2566, 1
    %v2754 = vsel %vm815, %v2752, %v2753
    %v2755 = vrot.slane %v2567, 1
    %v2756 = vsel %vm815, %v2753, %v2755
    %v2757 = vrot.slane %v2568, 1
    %v2758 = vsel %vm815, %v2755, %v2757
    %v2764 = vsel %vm815, %v2757, %v2752
    %2765 = vset.pattern.permute.xlu0 5
    %2766 = vperm.xlu0 %2765, %v2569
    %v2767 = vpop.permute.xlu0 %2766
    %2769 = vset.pattern.permute.xlu0 5
    %2770 = vperm.xlu0 %2769, %v2570
    %v2771 = vpop.permute.xlu0 %2770
    %2773 = vset.pattern.permute.xlu0 5
    %2774 = vperm.xlu0 %2773, %v2571
    %v2775 = vpop.permute.xlu0 %2774
    %2777 = vset.pattern.permute.xlu0 5
    %2778 = vperm.xlu0 %2777, %v2572
    %v2779 = vpop.permute.xlu0 %2778
    %v2781 = vmul.f32 %v2754, %v2767
    %v2782 = vmul.f32 %v2756, %v2771
    %v2783 = vmul.f32 %v2758, %v2775
    %v2784 = vmul.f32 %v2764, %v2779
    %v2785 = vadd.f32 %v2748, %v2781
    %v2786 = vadd.f32 %v2749, %v2782
    %v2787 = vadd.f32 %v2750, %v2783
    %v2788 = vadd.f32 %v2751, %v2784
    %2789 = vset.pattern.permute.xlu0 6
    %2790 = vperm.xlu0 %2789, %v2569
    %v2791 = vpop.permute.xlu0 %2790
    %2793 = vset.pattern.permute.xlu0 6
    %2794 = vperm.xlu0 %2793, %v2570
    %v2795 = vpop.permute.xlu0 %2794
    %2797 = vset.pattern.permute.xlu0 6
    %2798 = vperm.xlu0 %2797, %v2571
    %v2799 = vpop.permute.xlu0 %2798
    %2801 = vset.pattern.permute.xlu0 6
    %2802 = vperm.xlu0 %2801, %v2572
    %v2803 = vpop.permute.xlu0 %2802
    %v2805 = vmul.f32 %v2606, %v2791
    %v2806 = vmul.f32 %v2608, %v2795
    %v2807 = vmul.f32 %v2609, %v2799
    %v2808 = vmul.f32 %v2614, %v2803
    %v2809 = vadd.f32 %v2785, %v2805
    %v2810 = vadd.f32 %v2786, %v2806
    %v2811 = vadd.f32 %v2787, %v2807
    %v2812 = vadd.f32 %v2788, %v2808
    %2813 = vset.pattern.permute.xlu0 7
    %2814 = vperm.xlu0 %2813, %v2569
    %v2815 = vpop.permute.xlu0 %2814
    %2817 = vset.pattern.permute.xlu0 7
    %2818 = vperm.xlu0 %2817, %v2570
    %v2819 = vpop.permute.xlu0 %2818
    %2821 = vset.pattern.permute.xlu0 7
    %2822 = vperm.xlu0 %2821, %v2571
    %v2823 = vpop.permute.xlu0 %2822
    %2825 = vset.pattern.permute.xlu0 7
    %2826 = vperm.xlu0 %2825, %v2572
    %v2827 = vpop.permute.xlu0 %2826
    %v2829 = vmul.f32 %v2644, %v2815
    %v2830 = vmul.f32 %v2646, %v2819
    %v2831 = vmul.f32 %v2647, %v2823
    %v2832 = vmul.f32 %v2652, %v2827
    %v2833 = vadd.f32 %v2809, %v2829
    %v2834 = vadd.f32 %v2810, %v2830
    %v2835 = vadd.f32 %v2811, %v2831
    %v2836 = vadd.f32 %v2812, %v2832
    %2837 = vset.pattern.permute.xlu0 8
    %2838 = vperm.xlu0 %2837, %v2569
    %v2839 = vpop.permute.xlu0 %2838
    %2841 = vset.pattern.permute.xlu0 8
    %2842 = vperm.xlu0 %2841, %v2570
    %v2843 = vpop.permute.xlu0 %2842
    %2845 = vset.pattern.permute.xlu0 8
    %2846 = vperm.xlu0 %2845, %v2571
    %v2847 = vpop.permute.xlu0 %2846
    %2849 = vset.pattern.permute.xlu0 8
    %2850 = vperm.xlu0 %2849, %v2572
    %v2851 = vpop.permute.xlu0 %2850
    %v2853 = vmul.f32 %v2682, %v2839
    %v2854 = vmul.f32 %v2684, %v2843
    %v2855 = vmul.f32 %v2685, %v2847
    %v2856 = vmul.f32 %v2690, %v2851
    %v2857 = vadd.f32 %v2833, %v2853
    %v2858 = vadd.f32 %v2834, %v2854
    %v2859 = vadd.f32 %v2835, %v2855
    %v2860 = vadd.f32 %v2836, %v2856
    %v2861 = vadd.f32 %v2484, %v2857
    %v2862 = vadd.f32 %v2487, %v2858
    %v2863 = vadd.f32 %v2492, %v2859
    %v2864 = vadd.f32 %v2495, %v2860
    %v2865 = vld [vmem:[%s2 + $0x50] sm:$0x1]
    %v2866 = vld [vmem:[%s2 + $0x58] sm:$0x1]
    %v2867 = vsel %vm2015, %v2861, 0.0
    %2868 = vadd.xlane.f32.xlu0 %v2867
    %v2869 = vpop.xlane.xlu0 %2868
    %v2870 = vsel %vm2015, %v2862, 0.0
    %2871 = vadd.xlane.f32.xlu0 %v2870
    %v2872 = vpop.xlane.xlu0 %2871
    %v2873 = vsel %vm2015, %v2863, 0.0
    %2874 = vadd.xlane.f32.xlu0 %v2873
    %v2875 = vpop.xlane.xlu0 %2874
    %v2876 = vsel %vm2015, %v2864, 0.0
    %2877 = vadd.xlane.f32.xlu0 %v2876
    %v2878 = vpop.xlane.xlu0 %2877
    %v2879 = vmul.f32 %v2869, %v2512
    %v2880 = vmul.f32 %v2872, %v2512
    %v2881 = vmul.f32 %v2875, %v2512
    %v2882 = vmul.f32 %v2878, %v2512
    %v2883 = vsub.f32 %v2861, %v2879
    %v2884 = vsub.f32 %v2862, %v2880
    %v2885 = vsub.f32 %v2863, %v2881
    %v2886 = vsub.f32 %v2864, %v2882
    %v2887 = vmul.f32 %v2883, %v2883
    %v2888 = vmul.f32 %v2884, %v2884
    %v2889 = vmul.f32 %v2885, %v2885
    %v2890 = vmul.f32 %v2886, %v2886
    %v2891 = vsel %vm2015, %v2887, 0.0
    %2892 = vadd.xlane.f32.xlu0 %v2891
    %v2893 = vpop.xlane.xlu0 %2892
    %v2894 = vsel %vm2015, %v2888, 0.0
    %2895 = vadd.xlane.f32.xlu0 %v2894
    %v2896 = vpop.xlane.xlu0 %2895
    %v2897 = vsel %vm2015, %v2889, 0.0
    %2898 = vadd.xlane.f32.xlu0 %v2897
    %v2899 = vpop.xlane.xlu0 %2898
    %v2900 = vsel %vm2015, %v2890, 0.0
    %2901 = vadd.xlane.f32.xlu0 %v2900
    %v2902 = vpop.xlane.xlu0 %2901
    %v2903 = vmul.f32 %v2893, %v2512
    %v2904 = vmul.f32 %v2896, %v2512
    %v2905 = vmul.f32 %v2899, %v2512
    %v2906 = vmul.f32 %v2902, %v2512
    %v2907 = vadd.f32 %v2903, 1e-05
    %v2908 = vadd.f32 %v2904, 1e-05
    %v2909 = vadd.f32 %v2905, 1e-05
    %v2910 = vadd.f32 %v2906, 1e-05
    %v2911 = vrsqrt.pop %v2907
    %v2912 = vrsqrt.pop %v2908
    %v2913 = vrsqrt.pop %v2909
    %v2914 = vrsqrt.pop %v2910
    %v2915 = vmul.f32 %v2883, %v2911
    %v2916 = vmul.f32 %v2884, %v2912
    %v2917 = vmul.f32 %v2885, %v2913
    %v2918 = vmul.f32 %v2886, %v2914
    %v2919 = vlaneseq
    %v2920 = vshrl.u32 %v2919, 7
    %v2921 = vsub.s32 0, %v2920
    %v2922 = vrot.slane %v2865, %v2921
    %v2923 = vmul.f32 %v2915, %v2922
    %v2924 = vmul.f32 %v2916, %v2922
    %v2925 = vmul.f32 %v2917, %v2922
    %v2926 = vmul.f32 %v2918, %v2922
    %v2927 = vlaneseq
    %v2928 = vshrl.u32 %v2927, 7
    %v2929 = vsub.s32 0, %v2928
    %v2930 = vrot.slane %v2866, %v2929
    %v2931 = vadd.f32 %v2923, %v2930
    %v2932 = vadd.f32 %v2924, %v2930
    %v2933 = vadd.f32 %v2925, %v2930
    %v2934 = vadd.f32 %v2926, %v2930
    %v2935 = vld [vmem:[%s1 + $0x90] sm:$0xf]
    %v2936 = vld [vmem:[%s1 + $0x94] sm:$0xf]
    %v2937 = vld [vmem:[%s1 + $0x98] sm:$0xf]
    %v2938 = vld [vmem:[%s1 + $0x9c] sm:$0xf]
    %v2939 = vpack.c.bf16 %v2932, %v2931
    %v2940 = vpack.c.bf16 %v2934, %v2933
    %v2941 = vld [vmem:[%s2 + $0x60] sm:$0x1]
    %v2942 = vlaneseq
    %v2943 = vshrl.u32 %v2942, 7
    %v2944 = vsub.s32 0, %v2943
    %v2945 = vrot.slane %v2941, %v2944
    %v2950 = vunpack.c.l.b16 %v2935
    %v2951 = vunpack.c.l.b16 %v2936
    %v2952 = vunpack.c.l.b16 %v2937
    %v2953 = vunpack.c.l.b16 %v2938
    %v2954 = vpack.c.b16 %v2951, %v2950
    %v2955 = vpack.c.b16 %v2953, %v2952
    %v2959 = vsel %vm2015, %v2939, 0
    %v2962 = vsel %vm2015, %v2940, 0
    %2964 = vmatprep.subr.bf16.mxu0 0
    %2965 = vmatpush1.bf16.msra.mxu0 %v2954
    %2966 = vmatprep.subr.bf16.mxu0 0
    %2967 = vmatpush1.bf16.msra.mxu0 %v2955
    %2968 = vmatprep.subr.bf16.mxu0 0
    %2969 = vmatpush1.bf16.msra.mxu0 0
    %2970 = vmatprep.subr.bf16.mxu0 0
    %2971 = vmatpush1.bf16.msra.mxu0 0
    %2972 = vmatprep.subr.bf16.mxu0 0
    %2973 = vmatpush1.bf16.msra.mxu0 0
    %2974 = vmatprep.subr.bf16.mxu0 0
    %2975 = vmatpush1.bf16.msra.mxu0 0
    %2976 = vmatprep.subr.bf16.mxu0 0
    %2977 = vmatpush1.bf16.msra.mxu0 0
    %2978 = vmatprep.subr.bf16.mxu0 0
    %2979 = vmatpush1.bf16.msra.mxu0 0
    %2980 = vmatprep.subr.bf16.mxu0 0
    %2981 = vmatpush1.bf16.msra.mxu0 0
    %2982 = vmatprep.subr.bf16.mxu0 0
    %2983 = vmatpush1.bf16.msra.mxu0 0
    %2984 = vmatprep.subr.bf16.mxu0 0
    %2985 = vmatpush1.bf16.msra.mxu0 0
    %2986 = vmatprep.subr.bf16.mxu0 0
    %2987 = vmatpush1.bf16.msra.mxu0 0
    %2988 = vmatprep.subr.bf16.mxu0 0
    %2989 = vmatpush1.bf16.msra.mxu0 0
    %2990 = vmatprep.subr.bf16.mxu0 0
    %2991 = vmatpush1.bf16.msra.mxu0 0
    %2992 = vmatprep.subr.bf16.mxu0 0
    %2993 = vmatpush1.bf16.msra.mxu0 0
    %2994 = vmatprep.subr.bf16.mxu0 0
    %2995 = vmatpush1.bf16.msra.mxu0 0
    %2996 = vmatprep.mubr.bf16.mxu0 0
    %2997 = vmatmul.mubr.bf16.gmra.mrb[0].mxu0 %v2959
    %v2998 = vpop.f32.mrb[0].mxu0
    %v2999 = vadd.f32 %v2945, %v2998
    %v3000 = vpop.f32.mrb[0].mxu0
    %v3001 = vpop.f32.mrb[0].mxu0
    %v3002 = vadd.f32 %v2945, %v3001
    %v3003 = vpop.f32.mrb[0].mxu0
    %3004 = vmatprep.mubr.bf16.mxu0 0
    %3005 = vmatmul.mubr.bf16.gmra.mrb[0].mxu0 %v2962
    %v3006 = vpop.f32.mrb[0].mxu0
    %v3007 = vadd.f32 %v2945, %v3006
    %v3008 = vpop.f32.mrb[0].mxu0
    %v3009 = vpop.f32.mrb[0].mxu0
    %v3010 = vadd.f32 %v2945, %v3009
    %v3011 = vpop.f32.mrb[0].mxu0
    %3012 = vdwg.mxu0
    %v3013 = vmul.f32 %v2999, %v2999
    %v3014 = vmul.f32 %v3002, %v3002
    %v3015 = vmul.f32 %v3007, %v3007
    %v3016 = vmul.f32 %v3010, %v3010
    %v3017 = vmul.f32 %v2999, %v3013
    %v3018 = vmul.f32 %v3002, %v3014
    %v3019 = vmul.f32 %v3007, %v3015
    %v3020 = vmul.f32 %v3010, %v3016
    %v3021 = vmul.f32 %v3017, 0.044715
    %v3022 = vmul.f32 %v3018, 0.044715
    %v3023 = vmul.f32 %v3019, 0.044715
    %v3024 = vmul.f32 %v3020, 0.044715
    %v3025 = vadd.f32 %v2999, %v3021
    %v3026 = vadd.f32 %v3002, %v3022
    %v3027 = vadd.f32 %v3007, %v3023
    %v3028 = vadd.f32 %v3010, %v3024
    %v3029 = vmul.f32 %v3025, 0.7978846
    %v3030 = vmul.f32 %v3026, 0.7978846
    %v3031 = vmul.f32 %v3027, 0.7978846
    %v3032 = vmul.f32 %v3028, 0.7978846
    %v3033 = vtanh.pop %v3029
    %v3034 = vtanh.pop %v3030
    %v3035 = vtanh.pop %v3031
    %v3036 = vtanh.pop %v3032
    %v3037 = vadd.f32 %v3033, 1.0
    %v3038 = vadd.f32 %v3034, 1.0
    %v3039 = vadd.f32 %v3035, 1.0
    %v3040 = vadd.f32 %v3036, 1.0
    %v3041 = vmul.f32 %v3037, 0.5
    %v3042 = vmul.f32 %v3038, 0.5
    %v3043 = vmul.f32 %v3039, 0.5
    %v3044 = vmul.f32 %v3040, 0.5
    %v3045 = vmul.f32 %v2999, %v3041
    %v3046 = vmul.f32 %v3002, %v3042
    %v3047 = vmul.f32 %v3007, %v3043
    %v3048 = vmul.f32 %v3010, %v3044
    %v3049 = vld [vmem:[%s1 + $0xa0] sm:$0xf]
    %v3050 = vld [vmem:[%s1 + $0xa4] sm:$0xf]
    %v3051 = vld [vmem:[%s1 + $0xa8] sm:$0xf]
    %v3052 = vld [vmem:[%s1 + $0xac] sm:$0xf]
    %v3053 = vld [vmem:[%s1 + $0xb0] sm:$0xf]
    %v3054 = vld [vmem:[%s1 + $0xb4] sm:$0xf]
    %v3055 = vld [vmem:[%s1 + $0xb8] sm:$0xf]
    %v3056 = vld [vmem:[%s1 + $0xbc] sm:$0xf]
    %v3057 = vpack.c.bf16 %v3046, %v3045
    %v3058 = vpack.c.bf16 %v3048, %v3047
    %v3067 = vunpack.c.l.b16 %v3049
    %v3068 = vunpack.c.l.b16 %v3050
    %v3069 = vunpack.c.l.b16 %v3051
    %v3070 = vunpack.c.l.b16 %v3052
    %v3071 = vunpack.c.l.b16 %v3053
    %v3072 = vunpack.c.l.b16 %v3054
    %v3073 = vunpack.c.l.b16 %v3055
    %v3074 = vunpack.c.l.b16 %v3056
    %v3075 = vpack.c.b16 %v3068, %v3067
    %v3076 = vpack.c.b16 %v3070, %v3069
    %v3077 = vpack.c.b16 %v3072, %v3071
    %v3078 = vpack.c.b16 %v3074, %v3073
    %v3084 = vsel %vm2442, %v3057, 0
    %v3087 = vsel %vm2442, %v3058, 0
    %3089 = vmatprep.subr.bf16.mxu0 0
    %3090 = vmatpush1.bf16.msra.mxu0 %v3075
    %3091 = vmatprep.subr.bf16.mxu0 0
    %3092 = vmatpush1.bf16.msra.mxu0 %v3076
    %3093 = vmatprep.subr.bf16.mxu0 0
    %3094 = vmatpush1.bf16.msra.mxu0 %v3077
    %3095 = vmatprep.subr.bf16.mxu0 0
    %3096 = vmatpush1.bf16.msra.mxu0 %v3078
    %3097 = vmatprep.subr.bf16.mxu0 0
    %3098 = vmatpush1.bf16.msra.mxu0 0
    %3099 = vmatprep.subr.bf16.mxu0 0
    %3100 = vmatpush1.bf16.msra.mxu0 0
    %3101 = vmatprep.subr.bf16.mxu0 0
    %3102 = vmatpush1.bf16.msra.mxu0 0
    %3103 = vmatprep.subr.bf16.mxu0 0
    %3104 = vmatpush1.bf16.msra.mxu0 0
    %3105 = vmatprep.subr.bf16.mxu0 0
    %3106 = vmatpush1.bf16.msra.mxu0 0
    %3107 = vmatprep.subr.bf16.mxu0 0
    %3108 = vmatpush1.bf16.msra.mxu0 0
    %3109 = vmatprep.subr.bf16.mxu0 0
    %3110 = vmatpush1.bf16.msra.mxu0 0
    %3111 = vmatprep.subr.bf16.mxu0 0
    %3112 = vmatpush1.bf16.msra.mxu0 0
    %3113 = vmatprep.subr.bf16.mxu0 0
    %3114 = vmatpush1.bf16.msra.mxu0 0
    %3115 = vmatprep.subr.bf16.mxu0 0
    %3116 = vmatpush1.bf16.msra.mxu0 0
    %3117 = vmatprep.subr.bf16.mxu0 0
    %3118 = vmatpush1.bf16.msra.mxu0 0
    %3119 = vmatprep.subr.bf16.mxu0 0
    %3120 = vmatpush1.bf16.msra.mxu0 0
    %3121 = vmatprep.mubr.bf16.mxu0 0
    %3122 = vmatmul.mubr.bf16.gmra.mrb[0].mxu0 %v3084
    %v3123 = vpop.f32.mrb[0].mxu0
    %v3124 = vadd.f32 0.0, %v3123
    %v3125 = vpop.f32.mrb[0].mxu0
    %v3126 = vpop.f32.mrb[0].mxu0
    %v3127 = vadd.f32 0.0, %v3126
    %v3128 = vpop.f32.mrb[0].mxu0
    %3129 = vmatprep.mubr.bf16.mxu0 0
    %3130 = vmatmul.mubr.bf16.gmra.mrb[0].mxu0 %v3087
    %v3131 = vpop.f32.mrb[0].mxu0
    %v3132 = vadd.f32 0.0, %v3131
    %v3133 = vpop.f32.mrb[0].mxu0
    %v3134 = vpop.f32.mrb[0].mxu0
    %v3135 = vadd.f32 0.0, %v3134
    %v3136 = vpop.f32.mrb[0].mxu0
    %3137 = vdwg.mxu0
    %v3138 = vadd.f32 %v2861, %v3124
    %v3139 = vadd.f32 %v2862, %v3127
    %v3140 = vadd.f32 %v2863, %v3132
    %v3141 = vadd.f32 %v2864, %v3135
    %v3142 = vld [vmem:[%s2 + $0x68] sm:$0x1]
    %v3143 = vlaneseq
    %v3144 = vshrl.u32 %v3143, 7
    %v3145 = vsub.s32 0, %v3144
    %v3146 = vrot.slane %v3142, %v3145
    %v3147 = vadd.f32 %v3138, %v3146
    %v3148 = vadd.f32 %v3139, %v3146
    %v3149 = vadd.f32 %v3140, %v3146
    %v3150 = vadd.f32 %v3141, %v3146
    %v3151 = vld [vmem:[%s2 + $0x110] sm:$0x1]
    %v3152 = vld [vmem:[%s2 + $0x118] sm:$0x1]
    %v3153 = vsel %vm193, %v2158, 0.0
    %3154 = vadd.xlane.f32.xlu0 %v3153
    %v3155 = vpop.xlane.xlu0 %3154
    %v3156 = vsel %vm193, %v2159, 0.0
    %3157 = vadd.xlane.f32.xlu0 %v3156
    %v3158 = vpop.xlane.xlu0 %3157
    %v3159 = vsel %vm193, %v2160, 0.0
    %3160 = vadd.xlane.f32.xlu0 %v3159
    %v3161 = vpop.xlane.xlu0 %3160
    %v3162 = vsel %vm193, %v2161, 0.0
    %3163 = vadd.xlane.f32.xlu0 %v3162
    %v3164 = vpop.xlane.xlu0 %3163
    %v3165 = vsel %vm193, %v2162, 0.0
    %3166 = vadd.xlane.f32.xlu0 %v3165
    %v3167 = vpop.xlane.xlu0 %3166
    %v3168 = vsel %vm193, %v2163, 0.0
    %3169 = vadd.xlane.f32.xlu0 %v3168
    %v3170 = vpop.xlane.xlu0 %3169
    %v3171 = vsel %vm193, %v2164, 0.0
    %3172 = vadd.xlane.f32.xlu0 %v3171
    %v3173 = vpop.xlane.xlu0 %3172
    %v3174 = vsel %vm193, %v2165, 0.0
    %3175 = vadd.xlane.f32.xlu0 %v3174
    %v3176 = vpop.xlane.xlu0 %3175
    %v3177 = vsel %vm193, %v2166, 0.0
    %3178 = vadd.xlane.f32.xlu0 %v3177
    %v3179 = vpop.xlane.xlu0 %3178
    %v3180 = vsel %vm193, %v2167, 0.0
    %3181 = vadd.xlane.f32.xlu0 %v3180
    %v3182 = vpop.xlane.xlu0 %3181
    %v3183 = vsel %vm193, %v2168, 0.0
    %3184 = vadd.xlane.f32.xlu0 %v3183
    %v3185 = vpop.xlane.xlu0 %3184
    %v3186 = vsel %vm193, %v2169, 0.0
    %3187 = vadd.xlane.f32.xlu0 %v3186
    %v3188 = vpop.xlane.xlu0 %3187
    %v3189 = vsel %vm193, %v2170, 0.0
    %3190 = vadd.xlane.f32.xlu0 %v3189
    %v3191 = vpop.xlane.xlu0 %3190
    %v3192 = vsel %vm193, %v2171, 0.0
    %3193 = vadd.xlane.f32.xlu0 %v3192
    %v3194 = vpop.xlane.xlu0 %3193
    %v3195 = vsel %vm193, %v2172, 0.0
    %3196 = vadd.xlane.f32.xlu0 %v3195
    %v3197 = vpop.xlane.xlu0 %3196
    %v3198 = vsel %vm193, %v2173, 0.0
    %3199 = vadd.xlane.f32.xlu0 %v3198
    %v3200 = vpop.xlane.xlu0 %3199
    %v3201 = vmul.f32 %v3155, %v242
    %v3202 = vmul.f32 %v3158, %v242
    %v3203 = vmul.f32 %v3161, %v242
    %v3204 = vmul.f32 %v3164, %v242
    %v3205 = vmul.f32 %v3167, %v242
    %v3206 = vmul.f32 %v3170, %v242
    %v3207 = vmul.f32 %v3173, %v242
    %v3208 = vmul.f32 %v3176, %v242
    %v3209 = vmul.f32 %v3179, %v242
    %v3210 = vmul.f32 %v3182, %v242
    %v3211 = vmul.f32 %v3185, %v242
    %v3212 = vmul.f32 %v3188, %v242
    %v3213 = vmul.f32 %v3191, %v242
    %v3214 = vmul.f32 %v3194, %v242
    %v3215 = vmul.f32 %v3197, %v242
    %v3216 = vmul.f32 %v3200, %v242
    %v3217 = vsub.f32 %v2158, %v3201
    %v3218 = vsub.f32 %v2159, %v3202
    %v3219 = vsub.f32 %v2160, %v3203
    %v3220 = vsub.f32 %v2161, %v3204
    %v3221 = vsub.f32 %v2162, %v3205
    %v3222 = vsub.f32 %v2163, %v3206
    %v3223 = vsub.f32 %v2164, %v3207
    %v3224 = vsub.f32 %v2165, %v3208
    %v3225 = vsub.f32 %v2166, %v3209
    %v3226 = vsub.f32 %v2167, %v3210
    %v3227 = vsub.f32 %v2168, %v3211
    %v3228 = vsub.f32 %v2169, %v3212
    %v3229 = vsub.f32 %v2170, %v3213
    %v3230 = vsub.f32 %v2171, %v3214
    %v3231 = vsub.f32 %v2172, %v3215
    %v3232 = vsub.f32 %v2173, %v3216
    %v3233 = vmul.f32 %v3217, %v3217
    %v3234 = vmul.f32 %v3218, %v3218
    %v3235 = vmul.f32 %v3219, %v3219
    %v3236 = vmul.f32 %v3220, %v3220
    %v3237 = vmul.f32 %v3221, %v3221
    %v3238 = vmul.f32 %v3222, %v3222
    %v3239 = vmul.f32 %v3223, %v3223
    %v3240 = vmul.f32 %v3224, %v3224
    %v3241 = vmul.f32 %v3225, %v3225
    %v3242 = vmul.f32 %v3226, %v3226
    %v3243 = vmul.f32 %v3227, %v3227
    %v3244 = vmul.f32 %v3228, %v3228
    %v3245 = vmul.f32 %v3229, %v3229
    %v3246 = vmul.f32 %v3230, %v3230
    %v3247 = vmul.f32 %v3231, %v3231
    %v3248 = vmul.f32 %v3232, %v3232
    %v3249 = vsel %vm193, %v3233, 0.0
    %3250 = vadd.xlane.f32.xlu0 %v3249
    %v3251 = vpop.xlane.xlu0 %3250
    %v3252 = vsel %vm193, %v3234, 0.0
    %3253 = vadd.xlane.f32.xlu0 %v3252
    %v3254 = vpop.xlane.xlu0 %3253
    %v3255 = vsel %vm193, %v3235, 0.0
    %3256 = vadd.xlane.f32.xlu0 %v3255
    %v3257 = vpop.xlane.xlu0 %3256
    %v3258 = vsel %vm193, %v3236, 0.0
    %3259 = vadd.xlane.f32.xlu0 %v3258
    %v3260 = vpop.xlane.xlu0 %3259
    %v3261 = vsel %vm193, %v3237, 0.0
    %3262 = vadd.xlane.f32.xlu0 %v3261
    %v3263 = vpop.xlane.xlu0 %3262
    %v3264 = vsel %vm193, %v3238, 0.0
    %3265 = vadd.xlane.f32.xlu0 %v3264
    %v3266 = vpop.xlane.xlu0 %3265
    %v3267 = vsel %vm193, %v3239, 0.0
    %3268 = vadd.xlane.f32.xlu0 %v3267
    %v3269 = vpop.xlane.xlu0 %3268
    %v3270 = vsel %vm193, %v3240, 0.0
    %3271 = vadd.xlane.f32.xlu0 %v3270
    %v3272 = vpop.xlane.xlu0 %3271
    %v3273 = vsel %vm193, %v3241, 0.0
    %3274 = vadd.xlane.f32.xlu0 %v3273
    %v3275 = vpop.xlane.xlu0 %3274
    %v3276 = vsel %vm193, %v3242, 0.0
    %3277 = vadd.xlane.f32.xlu0 %v3276
    %v3278 = vpop.xlane.xlu0 %3277
    %v3279 = vsel %vm193, %v3243, 0.0
    %3280 = vadd.xlane.f32.xlu0 %v3279
    %v3281 = vpop.xlane.xlu0 %3280
    %v3282 = vsel %vm193, %v3244, 0.0
    %3283 = vadd.xlane.f32.xlu0 %v3282
    %v3284 = vpop.xlane.xlu0 %3283
    %v3285 = vsel %vm193, %v3245, 0.0
    %3286 = vadd.xlane.f32.xlu0 %v3285
    %v3287 = vpop.xlane.xlu0 %3286
    %v3288 = vsel %vm193, %v3246, 0.0
    %3289 = vadd.xlane.f32.xlu0 %v3288
    %v3290 = vpop.xlane.xlu0 %3289
    %v3291 = vsel %vm193, %v3247, 0.0
    %3292 = vadd.xlane.f32.xlu0 %v3291
    %v3293 = vpop.xlane.xlu0 %3292
    %v3294 = vsel %vm193, %v3248, 0.0
    %3295 = vadd.xlane.f32.xlu0 %v3294
    %v3296 = vpop.xlane.xlu0 %3295
    %v3297 = vmul.f32 %v3251, %v242
    %v3298 = vmul.f32 %v3254, %v242
    %v3299 = vmul.f32 %v3257, %v242
    %v3300 = vmul.f32 %v3260, %v242
    %v3301 = vmul.f32 %v3263, %v242
    %v3302 = vmul.f32 %v3266, %v242
    %v3303 = vmul.f32 %v3269, %v242
    %v3304 = vmul.f32 %v3272, %v242
    %v3305 = vmul.f32 %v3275, %v242
    %v3306 = vmul.f32 %v3278, %v242
    %v3307 = vmul.f32 %v3281, %v242
    %v3308 = vmul.f32 %v3284, %v242
    %v3309 = vmul.f32 %v3287, %v242
    %v3310 = vmul.f32 %v3290, %v242
    %v3311 = vmul.f32 %v3293, %v242
    %v3312 = vmul.f32 %v3296, %v242
    %v3313 = vadd.f32 %v3297, 1e-05
    %v3314 = vadd.f32 %v3298, 1e-05
    %v3315 = vadd.f32 %v3299, 1e-05
    %v3316 = vadd.f32 %v3300, 1e-05
    %v3317 = vadd.f32 %v3301, 1e-05
    %v3318 = vadd.f32 %v3302, 1e-05
    %v3319 = vadd.f32 %v3303, 1e-05
    %v3320 = vadd.f32 %v3304, 1e-05
    %v3321 = vadd.f32 %v3305, 1e-05
    %v3322 = vadd.f32 %v3306, 1e-05
    %v3323 = vadd.f32 %v3307, 1e-05
    %v3324 = vadd.f32 %v3308, 1e-05
    %v3325 = vadd.f32 %v3309, 1e-05
    %v3326 = vadd.f32 %v3310, 1e-05
    %v3327 = vadd.f32 %v3311, 1e-05
    %v3328 = vadd.f32 %v3312, 1e-05
    %v3329 = vrsqrt.pop %v3313
    %v3330 = vrsqrt.pop %v3314
    %v3331 = vrsqrt.pop %v3315
    %v3332 = vrsqrt.pop %v3316
    %v3333 = vrsqrt.pop %v3317
    %v3334 = vrsqrt.pop %v3318
    %v3335 = vrsqrt.pop %v3319
    %v3336 = vrsqrt.pop %v3320
    %v3337 = vrsqrt.pop %v3321
    %v3338 = vrsqrt.pop %v3322
    %v3339 = vrsqrt.pop %v3323
    %v3340 = vrsqrt.pop %v3324
    %v3341 = vrsqrt.pop %v3325
    %v3342 = vrsqrt.pop %v3326
    %v3343 = vrsqrt.pop %v3327
    %v3344 = vrsqrt.pop %v3328
    %v3345 = vmul.f32 %v3217, %v3329
    %v3346 = vmul.f32 %v3218, %v3330
    %v3347 = vmul.f32 %v3219, %v3331
    %v3348 = vmul.f32 %v3220, %v3332
    %v3349 = vmul.f32 %v3221, %v3333
    %v3350 = vmul.f32 %v3222, %v3334
    %v3351 = vmul.f32 %v3223, %v3335
    %v3352 = vmul.f32 %v3224, %v3336
    %v3353 = vmul.f32 %v3225, %v3337
    %v3354 = vmul.f32 %v3226, %v3338
    %v3355 = vmul.f32 %v3227, %v3339
    %v3356 = vmul.f32 %v3228, %v3340
    %v3357 = vmul.f32 %v3229, %v3341
    %v3358 = vmul.f32 %v3230, %v3342
    %v3359 = vmul.f32 %v3231, %v3343
    %v3360 = vmul.f32 %v3232, %v3344
    %v3361 = vlaneseq
    %v3362 = vshrl.u32 %v3361, 7
    %v3363 = vsub.s32 0, %v3362
    %v3364 = vrot.slane %v3151, %v3363
    %v3365 = vmul.f32 %v3345, %v3364
    %v3366 = vmul.f32 %v3346, %v3364
    %v3367 = vmul.f32 %v3347, %v3364
    %v3368 = vmul.f32 %v3348, %v3364
    %v3369 = vmul.f32 %v3349, %v3364
    %v3370 = vmul.f32 %v3350, %v3364
    %v3371 = vmul.f32 %v3351, %v3364
    %v3372 = vmul.f32 %v3352, %v3364
    %v3373 = vmul.f32 %v3353, %v3364
    %v3374 = vmul.f32 %v3354, %v3364
    %v3375 = vmul.f32 %v3355, %v3364
    %v3376 = vmul.f32 %v3356, %v3364
    %v3377 = vmul.f32 %v3357, %v3364
    %v3378 = vmul.f32 %v3358, %v3364
    %v3379 = vmul.f32 %v3359, %v3364
    %v3380 = vmul.f32 %v3360, %v3364
    %v3381 = vlaneseq
    %v3382 = vshrl.u32 %v3381, 7
    %v3383 = vsub.s32 0, %v3382
    %v3384 = vrot.slane %v3152, %v3383
    %v3385 = vadd.f32 %v3365, %v3384
    %v3386 = vadd.f32 %v3366, %v3384
    %v3387 = vadd.f32 %v3367, %v3384
    %v3388 = vadd.f32 %v3368, %v3384
    %v3389 = vadd.f32 %v3369, %v3384
    %v3390 = vadd.f32 %v3370, %v3384
    %v3391 = vadd.f32 %v3371, %v3384
    %v3392 = vadd.f32 %v3372, %v3384
    %v3393 = vadd.f32 %v3373, %v3384
    %v3394 = vadd.f32 %v3374, %v3384
    %v3395 = vadd.f32 %v3375, %v3384
    %v3396 = vadd.f32 %v3376, %v3384
    %v3397 = vadd.f32 %v3377, %v3384
    %v3398 = vadd.f32 %v3378, %v3384
    %v3399 = vadd.f32 %v3379, %v3384
    %v3400 = vadd.f32 %v3380, %v3384
    %v3401 = vld [vmem:[%s1 + $0xc0] sm:$0xf]
    %v3402 = vld [vmem:[%s1 + $0xc4] sm:$0xf]
    %v3403 = vpack.c.bf16 %v3386, %v3385
    %v3404 = vpack.c.bf16 %v3388, %v3387
    %v3405 = vpack.c.bf16 %v3390, %v3389
    %v3406 = vpack.c.bf16 %v3392, %v3391
    %v3407 = vpack.c.bf16 %v3394, %v3393
    %v3408 = vpack.c.bf16 %v3396, %v3395
    %v3409 = vpack.c.bf16 %v3398, %v3397
    %v3410 = vpack.c.bf16 %v3400, %v3399
    %v3411 = vld [vmem:[%s2 + $0x120] sm:$0x1]
    %v3412 = vlaneseq
    %v3413 = vshrl.u32 %v3412, 7
    %v3414 = vsub.s32 0, %v3413
    %v3415 = vrot.slane %v3411, %v3414
    %v3418 = vunpack.c.l.b16 %v3401
    %v3419 = vunpack.c.l.b16 %v3402
    %v3420 = vpack.c.b16 %v3419, %v3418
    %v3423 = vsel %vm193, %v3403, 0
    %v3426 = vsel %vm193, %v3404, 0
    %v3429 = vsel %vm193, %v3405, 0
    %v3432 = vsel %vm193, %v3406, 0
    %v3435 = vsel %vm193, %v3407, 0
    %v3438 = vsel %vm193, %v3408, 0
    %v3441 = vsel %vm193, %v3409, 0
    %v3444 = vsel %vm193, %v3410, 0
    %3446 = vmatprep.subr.bf16.mxu0 0
    %3447 = vmatpush1.bf16.msra.mxu0 %v3420
    %3448 = vmatprep.subr.bf16.mxu0 0
    %3449 = vmatpush1.bf16.msra.mxu0 0
    %3450 = vmatprep.subr.bf16.mxu0 0
    %3451 = vmatpush1.bf16.msra.mxu0 0
    %3452 = vmatprep.subr.bf16.mxu0 0
    %3453 = vmatpush1.bf16.msra.mxu0 0
    %3454 = vmatprep.subr.bf16.mxu0 0
    %3455 = vmatpush1.bf16.msra.mxu0 0
    %3456 = vmatprep.subr.bf16.mxu0 0
    %3457 = vmatpush1.bf16.msra.mxu0 0
    %3458 = vmatprep.subr.bf16.mxu0 0
    %3459 = vmatpush1.bf16.msra.mxu0 0
    %3460 = vmatprep.subr.bf16.mxu0 0
    %3461 = vmatpush1.bf16.msra.mxu0 0
    %3462 = vmatprep.subr.bf16.mxu0 0
    %3463 = vmatpush1.bf16.msra.mxu0 0
    %3464 = vmatprep.subr.bf16.mxu0 0
    %3465 = vmatpush1.bf16.msra.mxu0 0
    %3466 = vmatprep.subr.bf16.mxu0 0
    %3467 = vmatpush1.bf16.msra.mxu0 0
    %3468 = vmatprep.subr.bf16.mxu0 0
    %3469 = vmatpush1.bf16.msra.mxu0 0
    %3470 = vmatprep.subr.bf16.mxu0 0
    %3471 = vmatpush1.bf16.msra.mxu0 0
    %3472 = vmatprep.subr.bf16.mxu0 0
    %3473 = vmatpush1.bf16.msra.mxu0 0
    %3474 = vmatprep.subr.bf16.mxu0 0
    %3475 = vmatpush1.bf16.msra.mxu0 0
    %3476 = vmatprep.subr.bf16.mxu0 0
    %3477 = vmatpush1.bf16.msra.mxu0 0
    %3478 = vmatprep.mubr.bf16.mxu0 0
    %3479 = vmatmul.mubr.bf16.gmra.mrb[0].mxu0 %v3423
    %v3480 = vpop.f32.mrb[0].mxu0
    %v3481 = vadd.f32 %v3415, %v3480
    %v3482 = vpop.f32.mrb[0].mxu0
    %v3483 = vpop.f32.mrb[0].mxu0
    %v3484 = vadd.f32 %v3415, %v3483
    %v3485 = vpop.f32.mrb[0].mxu0
    %3486 = vmatprep.mubr.bf16.mxu0 0
    %3487 = vmatmul.mubr.bf16.gmra.mrb[0].mxu0 %v3426
    %v3488 = vpop.f32.mrb[0].mxu0
    %v3489 = vadd.f32 %v3415, %v3488
    %v3490 = vpop.f32.mrb[0].mxu0
    %v3491 = vpop.f32.mrb[0].mxu0
    %v3492 = vadd.f32 %v3415, %v3491
    %v3493 = vpop.f32.mrb[0].mxu0
    %3494 = vmatprep.mubr.bf16.mxu0 0
    %3495 = vmatmul.mubr.bf16.gmra.mrb[0].mxu0 %v3429
    %v3496 = vpop.f32.mrb[0].mxu0
    %v3497 = vadd.f32 %v3415, %v3496
    %v3498 = vpop.f32.mrb[0].mxu0
    %v3499 = vpop.f32.mrb[0].mxu0
    %v3500 = vadd.f32 %v3415, %v3499
    %v3501 = vpop.f32.mrb[0].mxu0
    %3502 = vmatprep.mubr.bf16.mxu0 0
    %3503 = vmatmul.mubr.bf16.gmra.mrb[0].mxu0 %v3432
    %v3504 = vpop.f32.mrb[0].mxu0
    %v3505 = vadd.f32 %v3415, %v3504
    %v3506 = vpop.f32.mrb[0].mxu0
    %v3507 = vpop.f32.mrb[0].mxu0
    %v3508 = vadd.f32 %v3415, %v3507
    %v3509 = vpop.f32.mrb[0].mxu0
    %3510 = vmatprep.mubr.bf16.mxu0 0
    %3511 = vmatmul.mubr.bf16.gmra.mrb[0].mxu0 %v3435
    %v3512 = vpop.f32.mrb[0].mxu0
    %v3513 = vadd.f32 %v3415, %v3512
    %v3514 = vpop.f32.mrb[0].mxu0
    %v3515 = vpop.f32.mrb[0].mxu0
    %v3516 = vadd.f32 %v3415, %v3515
    %v3517 = vpop.f32.mrb[0].mxu0
    %3518 = vmatprep.mubr.bf16.mxu0 0
    %3519 = vmatmul.mubr.bf16.gmra.mrb[0].mxu0 %v3438
    %v3520 = vpop.f32.mrb[0].mxu0
    %v3521 = vadd.f32 %v3415, %v3520
    %v3522 = vpop.f32.mrb[0].mxu0
    %v3523 = vpop.f32.mrb[0].mxu0
    %v3524 = vadd.f32 %v3415, %v3523
    %v3525 = vpop.f32.mrb[0].mxu0
    %3526 = vmatprep.mubr.bf16.mxu0 0
    %3527 = vmatmul.mubr.bf16.gmra.mrb[0].mxu0 %v3441
    %v3528 = vpop.f32.mrb[0].mxu0
    %v3529 = vadd.f32 %v3415, %v3528
    %v3530 = vpop.f32.mrb[0].mxu0
    %v3531 = vpop.f32.mrb[0].mxu0
    %v3532 = vadd.f32 %v3415, %v3531
    %v3533 = vpop.f32.mrb[0].mxu0
    %3534 = vmatprep.mubr.bf16.mxu0 0
    %3535 = vmatmul.mubr.bf16.gmra.mrb[0].mxu0 %v3444
    %v3536 = vpop.f32.mrb[0].mxu0
    %v3537 = vadd.f32 %v3415, %v3536
    %v3538 = vpop.f32.mrb[0].mxu0
    %v3539 = vpop.f32.mrb[0].mxu0
    %v3540 = vadd.f32 %v3415, %v3539
    %v3541 = vpop.f32.mrb[0].mxu0
    %3542 = vdwg.mxu0
    %v3543 = vld [vmem:[%s2 + $0x128] sm:$0x1]
    %v3544 = vld [vmem:[%s2 + $0x130] sm:$0x1]
    %v3545 = vsel %vm2015, %v3481, 0.0
    %3546 = vadd.xlane.f32.xlu0 %v3545
    %v3547 = vpop.xlane.xlu0 %3546
    %v3548 = vsel %vm2015, %v3484, 0.0
    %3549 = vadd.xlane.f32.xlu0 %v3548
    %v3550 = vpop.xlane.xlu0 %3549
    %v3551 = vsel %vm2015, %v3489, 0.0
    %3552 = vadd.xlane.f32.xlu0 %v3551
    %v3553 = vpop.xlane.xlu0 %3552
    %v3554 = vsel %vm2015, %v3492, 0.0
    %3555 = vadd.xlane.f32.xlu0 %v3554
    %v3556 = vpop.xlane.xlu0 %3555
    %v3557 = vsel %vm2015, %v3497, 0.0
    %3558 = vadd.xlane.f32.xlu0 %v3557
    %v3559 = vpop.xlane.xlu0 %3558
    %v3560 = vsel %vm2015, %v3500, 0.0
    %3561 = vadd.xlane.f32.xlu0 %v3560
    %v3562 = vpop.xlane.xlu0 %3561
    %v3563 = vsel %vm2015, %v3505, 0.0
    %3564 = vadd.xlane.f32.xlu0 %v3563
    %v3565 = vpop.xlane.xlu0 %3564
    %v3566 = vsel %vm2015, %v3508, 0.0
    %3567 = vadd.xlane.f32.xlu0 %v3566
    %v3568 = vpop.xlane.xlu0 %3567
    %v3569 = vsel %vm2015, %v3513, 0.0
    %3570 = vadd.xlane.f32.xlu0 %v3569
    %v3571 = vpop.xlane.xlu0 %3570
    %v3572 = vsel %vm2015, %v3516, 0.0
    %3573 = vadd.xlane.f32.xlu0 %v3572
    %v3574 = vpop.xlane.xlu0 %3573
    %v3575 = vsel %vm2015, %v3521, 0.0
    %3576 = vadd.xlane.f32.xlu0 %v3575
    %v3577 = vpop.xlane.xlu0 %3576
    %v3578 = vsel %vm2015, %v3524, 0.0
    %3579 = vadd.xlane.f32.xlu0 %v3578
    %v3580 = vpop.xlane.xlu0 %3579
    %v3581 = vsel %vm2015, %v3529, 0.0
    %3582 = vadd.xlane.f32.xlu0 %v3581
    %v3583 = vpop.xlane.xlu0 %3582
    %v3584 = vsel %vm2015, %v3532, 0.0
    %3585 = vadd.xlane.f32.xlu0 %v3584
    %v3586 = vpop.xlane.xlu0 %3585
    %v3587 = vsel %vm2015, %v3537, 0.0
    %3588 = vadd.xlane.f32.xlu0 %v3587
    %v3589 = vpop.xlane.xlu0 %3588
    %v3590 = vsel %vm2015, %v3540, 0.0
    %3591 = vadd.xlane.f32.xlu0 %v3590
    %v3592 = vpop.xlane.xlu0 %3591
    %v3593 = vmul.f32 %v3547, %v2512
    %v3594 = vmul.f32 %v3550, %v2512
    %v3595 = vmul.f32 %v3553, %v2512
    %v3596 = vmul.f32 %v3556, %v2512
    %v3597 = vmul.f32 %v3559, %v2512
    %v3598 = vmul.f32 %v3562, %v2512
    %v3599 = vmul.f32 %v3565, %v2512
    %v3600 = vmul.f32 %v3568, %v2512
    %v3601 = vmul.f32 %v3571, %v2512
    %v3602 = vmul.f32 %v3574, %v2512
    %v3603 = vmul.f32 %v3577, %v2512
    %v3604 = vmul.f32 %v3580, %v2512
    %v3605 = vmul.f32 %v3583, %v2512
    %v3606 = vmul.f32 %v3586, %v2512
    %v3607 = vmul.f32 %v3589, %v2512
    %v3608 = vmul.f32 %v3592, %v2512
    %v3609 = vsub.f32 %v3481, %v3593
    %v3610 = vsub.f32 %v3484, %v3594
    %v3611 = vsub.f32 %v3489, %v3595
    %v3612 = vsub.f32 %v3492, %v3596
    %v3613 = vsub.f32 %v3497, %v3597
    %v3614 = vsub.f32 %v3500, %v3598
    %v3615 = vsub.f32 %v3505, %v3599
    %v3616 = vsub.f32 %v3508, %v3600
    %v3617 = vsub.f32 %v3513, %v3601
    %v3618 = vsub.f32 %v3516, %v3602
    %v3619 = vsub.f32 %v3521, %v3603
    %v3620 = vsub.f32 %v3524, %v3604
    %v3621 = vsub.f32 %v3529, %v3605
    %v3622 = vsub.f32 %v3532, %v3606
    %v3623 = vsub.f32 %v3537, %v3607
    %v3624 = vsub.f32 %v3540, %v3608
    %v3625 = vmul.f32 %v3609, %v3609
    %v3626 = vmul.f32 %v3610, %v3610
    %v3627 = vmul.f32 %v3611, %v3611
    %v3628 = vmul.f32 %v3612, %v3612
    %v3629 = vmul.f32 %v3613, %v3613
    %v3630 = vmul.f32 %v3614, %v3614
    %v3631 = vmul.f32 %v3615, %v3615
    %v3632 = vmul.f32 %v3616, %v3616
    %v3633 = vmul.f32 %v3617, %v3617
    %v3634 = vmul.f32 %v3618, %v3618
    %v3635 = vmul.f32 %v3619, %v3619
    %v3636 = vmul.f32 %v3620, %v3620
    %v3637 = vmul.f32 %v3621, %v3621
    %v3638 = vmul.f32 %v3622, %v3622
    %v3639 = vmul.f32 %v3623, %v3623
    %v3640 = vmul.f32 %v3624, %v3624
    %v3641 = vsel %vm2015, %v3625, 0.0
    %3642 = vadd.xlane.f32.xlu0 %v3641
    %v3643 = vpop.xlane.xlu0 %3642
    %v3644 = vsel %vm2015, %v3626, 0.0
    %3645 = vadd.xlane.f32.xlu0 %v3644
    %v3646 = vpop.xlane.xlu0 %3645
    %v3647 = vsel %vm2015, %v3627, 0.0
    %3648 = vadd.xlane.f32.xlu0 %v3647
    %v3649 = vpop.xlane.xlu0 %3648
    %v3650 = vsel %vm2015, %v3628, 0.0
    %3651 = vadd.xlane.f32.xlu0 %v3650
    %v3652 = vpop.xlane.xlu0 %3651
    %v3653 = vsel %vm2015, %v3629, 0.0
    %3654 = vadd.xlane.f32.xlu0 %v3653
    %v3655 = vpop.xlane.xlu0 %3654
    %v3656 = vsel %vm2015, %v3630, 0.0
    %3657 = vadd.xlane.f32.xlu0 %v3656
    %v3658 = vpop.xlane.xlu0 %3657
    %v3659 = vsel %vm2015, %v3631, 0.0
    %3660 = vadd.xlane.f32.xlu0 %v3659
    %v3661 = vpop.xlane.xlu0 %3660
    %v3662 = vsel %vm2015, %v3632, 0.0
    %3663 = vadd.xlane.f32.xlu0 %v3662
    %v3664 = vpop.xlane.xlu0 %3663
    %v3665 = vsel %vm2015, %v3633, 0.0
    %3666 = vadd.xlane.f32.xlu0 %v3665
    %v3667 = vpop.xlane.xlu0 %3666
    %v3668 = vsel %vm2015, %v3634, 0.0
    %3669 = vadd.xlane.f32.xlu0 %v3668
    %v3670 = vpop.xlane.xlu0 %3669
    %v3671 = vsel %vm2015, %v3635, 0.0
    %3672 = vadd.xlane.f32.xlu0 %v3671
    %v3673 = vpop.xlane.xlu0 %3672
    %v3674 = vsel %vm2015, %v3636, 0.0
    %3675 = vadd.xlane.f32.xlu0 %v3674
    %v3676 = vpop.xlane.xlu0 %3675
    %v3677 = vsel %vm2015, %v3637, 0.0
    %3678 = vadd.xlane.f32.xlu0 %v3677
    %v3679 = vpop.xlane.xlu0 %3678
    %v3680 = vsel %vm2015, %v3638, 0.0
    %3681 = vadd.xlane.f32.xlu0 %v3680
    %v3682 = vpop.xlane.xlu0 %3681
    %v3683 = vsel %vm2015, %v3639, 0.0
    %3684 = vadd.xlane.f32.xlu0 %v3683
    %v3685 = vpop.xlane.xlu0 %3684
    %v3686 = vsel %vm2015, %v3640, 0.0
    %3687 = vadd.xlane.f32.xlu0 %v3686
    %v3688 = vpop.xlane.xlu0 %3687
    %v3689 = vmul.f32 %v3643, %v2512
    %v3690 = vmul.f32 %v3646, %v2512
    %v3691 = vmul.f32 %v3649, %v2512
    %v3692 = vmul.f32 %v3652, %v2512
    %v3693 = vmul.f32 %v3655, %v2512
    %v3694 = vmul.f32 %v3658, %v2512
    %v3695 = vmul.f32 %v3661, %v2512
    %v3696 = vmul.f32 %v3664, %v2512
    %v3697 = vmul.f32 %v3667, %v2512
    %v3698 = vmul.f32 %v3670, %v2512
    %v3699 = vmul.f32 %v3673, %v2512
    %v3700 = vmul.f32 %v3676, %v2512
    %v3701 = vmul.f32 %v3679, %v2512
    %v3702 = vmul.f32 %v3682, %v2512
    %v3703 = vmul.f32 %v3685, %v2512
    %v3704 = vmul.f32 %v3688, %v2512
    %v3705 = vadd.f32 %v3689, 1e-05
    %v3706 = vadd.f32 %v3690, 1e-05
    %v3707 = vadd.f32 %v3691, 1e-05
    %v3708 = vadd.f32 %v3692, 1e-05
    %v3709 = vadd.f32 %v3693, 1e-05
    %v3710 = vadd.f32 %v3694, 1e-05
    %v3711 = vadd.f32 %v3695, 1e-05
    %v3712 = vadd.f32 %v3696, 1e-05
    %v3713 = vadd.f32 %v3697, 1e-05
    %v3714 = vadd.f32 %v3698, 1e-05
    %v3715 = vadd.f32 %v3699, 1e-05
    %v3716 = vadd.f32 %v3700, 1e-05
    %v3717 = vadd.f32 %v3701, 1e-05
    %v3718 = vadd.f32 %v3702, 1e-05
    %v3719 = vadd.f32 %v3703, 1e-05
    %v3720 = vadd.f32 %v3704, 1e-05
    %v3721 = vrsqrt.pop %v3705
    %v3722 = vrsqrt.pop %v3706
    %v3723 = vrsqrt.pop %v3707
    %v3724 = vrsqrt.pop %v3708
    %v3725 = vrsqrt.pop %v3709
    %v3726 = vrsqrt.pop %v3710
    %v3727 = vrsqrt.pop %v3711
    %v3728 = vrsqrt.pop %v3712
    %v3729 = vrsqrt.pop %v3713
    %v3730 = vrsqrt.pop %v3714
    %v3731 = vrsqrt.pop %v3715
    %v3732 = vrsqrt.pop %v3716
    %v3733 = vrsqrt.pop %v3717
    %v3734 = vrsqrt.pop %v3718
    %v3735 = vrsqrt.pop %v3719
    %v3736 = vrsqrt.pop %v3720
    %v3737 = vmul.f32 %v3609, %v3721
    %v3738 = vmul.f32 %v3610, %v3722
    %v3739 = vmul.f32 %v3611, %v3723
    %v3740 = vmul.f32 %v3612, %v3724
    %v3741 = vmul.f32 %v3613, %v3725
    %v3742 = vmul.f32 %v3614, %v3726
    %v3743 = vmul.f32 %v3615, %v3727
    %v3744 = vmul.f32 %v3616, %v3728
    %v3745 = vmul.f32 %v3617, %v3729
    %v3746 = vmul.f32 %v3618, %v3730
    %v3747 = vmul.f32 %v3619, %v3731
    %v3748 = vmul.f32 %v3620, %v3732
    %v3749 = vmul.f32 %v3621, %v3733
    %v3750 = vmul.f32 %v3622, %v3734
    %v3751 = vmul.f32 %v3623, %v3735
    %v3752 = vmul.f32 %v3624, %v3736
    %v3753 = vlaneseq
    %v3754 = vshrl.u32 %v3753, 7
    %v3755 = vsub.s32 0, %v3754
    %v3756 = vrot.slane %v3543, %v3755
    %v3757 = vmul.f32 %v3737, %v3756
    %v3758 = vmul.f32 %v3738, %v3756
    %v3759 = vmul.f32 %v3739, %v3756
    %v3760 = vmul.f32 %v3740, %v3756
    %v3761 = vmul.f32 %v3741, %v3756
    %v3762 = vmul.f32 %v3742, %v3756
    %v3763 = vmul.f32 %v3743, %v3756
    %v3764 = vmul.f32 %v3744, %v3756
    %v3765 = vmul.f32 %v3745, %v3756
    %v3766 = vmul.f32 %v3746, %v3756
    %v3767 = vmul.f32 %v3747, %v3756
    %v3768 = vmul.f32 %v3748, %v3756
    %v3769 = vmul.f32 %v3749, %v3756
    %v3770 = vmul.f32 %v3750, %v3756
    %v3771 = vmul.f32 %v3751, %v3756
    %v3772 = vmul.f32 %v3752, %v3756
    %v3773 = vlaneseq
    %v3774 = vshrl.u32 %v3773, 7
    %v3775 = vsub.s32 0, %v3774
    %v3776 = vrot.slane %v3544, %v3775
    %v3777 = vadd.f32 %v3757, %v3776
    %v3778 = vadd.f32 %v3758, %v3776
    %v3779 = vadd.f32 %v3759, %v3776
    %v3780 = vadd.f32 %v3760, %v3776
    %v3781 = vadd.f32 %v3761, %v3776
    %v3782 = vadd.f32 %v3762, %v3776
    %v3783 = vadd.f32 %v3763, %v3776
    %v3784 = vadd.f32 %v3764, %v3776
    %v3785 = vadd.f32 %v3765, %v3776
    %v3786 = vadd.f32 %v3766, %v3776
    %v3787 = vadd.f32 %v3767, %v3776
    %v3788 = vadd.f32 %v3768, %v3776
    %v3789 = vadd.f32 %v3769, %v3776
    %v3790 = vadd.f32 %v3770, %v3776
    %v3791 = vadd.f32 %v3771, %v3776
    %v3792 = vadd.f32 %v3772, %v3776
    %v3793 = vld [vmem:[%s2 + $0x138] sm:$0x1]
    %v3794 = vld [vmem:[%s2 + $0x140] sm:$0x1]
    %v3795 = vsel %vm2015, %v3147, 0.0
    %3796 = vadd.xlane.f32.xlu0 %v3795
    %v3797 = vpop.xlane.xlu0 %3796
    %v3798 = vsel %vm2015, %v3148, 0.0
    %3799 = vadd.xlane.f32.xlu0 %v3798
    %v3800 = vpop.xlane.xlu0 %3799
    %v3801 = vsel %vm2015, %v3149, 0.0
    %3802 = vadd.xlane.f32.xlu0 %v3801
    %v3803 = vpop.xlane.xlu0 %3802
    %v3804 = vsel %vm2015, %v3150, 0.0
    %3805 = vadd.xlane.f32.xlu0 %v3804
    %v3806 = vpop.xlane.xlu0 %3805
    %v3807 = vmul.f32 %v3797, %v2512
    %v3808 = vmul.f32 %v3800, %v2512
    %v3809 = vmul.f32 %v3803, %v2512
    %v3810 = vmul.f32 %v3806, %v2512
    %v3811 = vsub.f32 %v3147, %v3807
    %v3812 = vsub.f32 %v3148, %v3808
    %v3813 = vsub.f32 %v3149, %v3809
    %v3814 = vsub.f32 %v3150, %v3810
    %v3815 = vmul.f32 %v3811, %v3811
    %v3816 = vmul.f32 %v3812, %v3812
    %v3817 = vmul.f32 %v3813, %v3813
    %v3818 = vmul.f32 %v3814, %v3814
    %v3819 = vsel %vm2015, %v3815, 0.0
    %3820 = vadd.xlane.f32.xlu0 %v3819
    %v3821 = vpop.xlane.xlu0 %3820
    %v3822 = vsel %vm2015, %v3816, 0.0
    %3823 = vadd.xlane.f32.xlu0 %v3822
    %v3824 = vpop.xlane.xlu0 %3823
    %v3825 = vsel %vm2015, %v3817, 0.0
    %3826 = vadd.xlane.f32.xlu0 %v3825
    %v3827 = vpop.xlane.xlu0 %3826
    %v3828 = vsel %vm2015, %v3818, 0.0
    %3829 = vadd.xlane.f32.xlu0 %v3828
    %v3830 = vpop.xlane.xlu0 %3829
    %v3831 = vmul.f32 %v3821, %v2512
    %v3832 = vmul.f32 %v3824, %v2512
    %v3833 = vmul.f32 %v3827, %v2512
    %v3834 = vmul.f32 %v3830, %v2512
    %v3835 = vadd.f32 %v3831, 1e-05
    %v3836 = vadd.f32 %v3832, 1e-05
    %v3837 = vadd.f32 %v3833, 1e-05
    %v3838 = vadd.f32 %v3834, 1e-05
    %v3839 = vrsqrt.pop %v3835
    %v3840 = vrsqrt.pop %v3836
    %v3841 = vrsqrt.pop %v3837
    %v3842 = vrsqrt.pop %v3838
    %v3843 = vmul.f32 %v3811, %v3839
    %v3844 = vmul.f32 %v3812, %v3840
    %v3845 = vmul.f32 %v3813, %v3841
    %v3846 = vmul.f32 %v3814, %v3842
    %v3847 = vlaneseq
    %v3848 = vshrl.u32 %v3847, 7
    %v3849 = vsub.s32 0, %v3848
    %v3850 = vrot.slane %v3793, %v3849
    %v3851 = vmul.f32 %v3843, %v3850
    %v3852 = vmul.f32 %v3844, %v3850
    %v3853 = vmul.f32 %v3845, %v3850
    %v3854 = vmul.f32 %v3846, %v3850
    %v3855 = vlaneseq
    %v3856 = vshrl.u32 %v3855, 7
    %v3857 = vsub.s32 0, %v3856
    %v3858 = vrot.slane %v3794, %v3857
    %v3859 = vadd.f32 %v3851, %v3858
    %v3860 = vadd.f32 %v3852, %v3858
    %v3861 = vadd.f32 %v3853, %v3858
    %v3862 = vadd.f32 %v3854, %v3858
    %v3863 = vld [vmem:[%s1 + $0xc8] sm:$0xf]
    %v3864 = vld [vmem:[%s1 + $0xcc] sm:$0xf]
    %v3865 = vld [vmem:[%s1 + $0xd0] sm:$0xf]
    %v3866 = vld [vmem:[%s1 + $0xd4] sm:$0xf]
    %v3867 = vpack.c.bf16 %v3860, %v3859
    %v3868 = vpack.c.bf16 %v3862, %v3861
    %v3869 = vld [vmem:[%s2 + $0x148] sm:$0x1]
    %v3870 = vlaneseq
    %v3871 = vshrl.u32 %v3870, 7
    %v3872 = vsub.s32 0, %v3871
    %v3873 = vrot.slane %v3869, %v3872
    %v3878 = vunpack.c.l.b16 %v3863
    %v3879 = vunpack.c.l.b16 %v3864
    %v3880 = vunpack.c.l.b16 %v3865
    %v3881 = vunpack.c.l.b16 %v3866
    %v3882 = vpack.c.b16 %v3879, %v3878
    %v3883 = vpack.c.b16 %v3881, %v3880
    %v3887 = vsel %vm2015, %v3867, 0
    %v3890 = vsel %vm2015, %v3868, 0
    %3892 = vmatprep.subr.bf16.mxu0 0
    %3893 = vmatpush1.bf16.msra.mxu0 %v3882
    %3894 = vmatprep.subr.bf16.mxu0 0
    %3895 = vmatpush1.bf16.msra.mxu0 %v3883
    %3896 = vmatprep.subr.bf16.mxu0 0
    %3897 = vmatpush1.bf16.msra.mxu0 0
    %3898 = vmatprep.subr.bf16.mxu0 0
    %3899 = vmatpush1.bf16.msra.mxu0 0
    %3900 = vmatprep.subr.bf16.mxu0 0
    %3901 = vmatpush1.bf16.msra.mxu0 0
    %3902 = vmatprep.subr.bf16.mxu0 0
    %3903 = vmatpush1.bf16.msra.mxu0 0
    %3904 = vmatprep.subr.bf16.mxu0 0
    %3905 = vmatpush1.bf16.msra.mxu0 0
    %3906 = vmatprep.subr.bf16.mxu0 0
    %3907 = vmatpush1.bf16.msra.mxu0 0
    %3908 = vmatprep.subr.bf16.mxu0 0
    %3909 = vmatpush1.bf16.msra.mxu0 0
    %3910 = vmatprep.subr.bf16.mxu0 0
    %3911 = vmatpush1.bf16.msra.mxu0 0
    %3912 = vmatprep.subr.bf16.mxu0 0
    %3913 = vmatpush1.bf16.msra.mxu0 0
    %3914 = vmatprep.subr.bf16.mxu0 0
    %3915 = vmatpush1.bf16.msra.mxu0 0
    %3916 = vmatprep.subr.bf16.mxu0 0
    %3917 = vmatpush1.bf16.msra.mxu0 0
    %3918 = vmatprep.subr.bf16.mxu0 0
    %3919 = vmatpush1.bf16.msra.mxu0 0
    %3920 = vmatprep.subr.bf16.mxu0 0
    %3921 = vmatpush1.bf16.msra.mxu0 0
    %3922 = vmatprep.subr.bf16.mxu0 0
    %3923 = vmatpush1.bf16.msra.mxu0 0
    %3924 = vmatprep.mubr.bf16.mxu0 0
    %3925 = vmatmul.mubr.bf16.gmra.mrb[0].mxu0 %v3887
    %v3926 = vpop.f32.mrb[0].mxu0
    %v3927 = vadd.f32 %v3873, %v3926
    %v3928 = vpop.f32.mrb[0].mxu0
    %v3929 = vpop.f32.mrb[0].mxu0
    %v3930 = vadd.f32 %v3873, %v3929
    %v3931 = vpop.f32.mrb[0].mxu0
    %3932 = vmatprep.mubr.bf16.mxu0 0
    %3933 = vmatmul.mubr.bf16.gmra.mrb[0].mxu0 %v3890
    %v3934 = vpop.f32.mrb[0].mxu0
    %v3935 = vadd.f32 %v3873, %v3934
    %v3936 = vpop.f32.mrb[0].mxu0
    %v3937 = vpop.f32.mrb[0].mxu0
    %v3938 = vadd.f32 %v3873, %v3937
    %v3939 = vpop.f32.mrb[0].mxu0
    %3940 = vdwg.mxu0
    %v3941 = vld [vmem:[%s2 + $0x150] sm:$0x1]
    %v3942 = vld [vmem:[%s2 + $0x158] sm:$0x1]
    %v3943 = vsel %vm2015, %v3927, 0.0
    %3944 = vadd.xlane.f32.xlu0 %v3943
    %v3945 = vpop.xlane.xlu0 %3944
    %v3946 = vsel %vm2015, %v3930, 0.0
    %3947 = vadd.xlane.f32.xlu0 %v3946
    %v3948 = vpop.xlane.xlu0 %3947
    %v3949 = vsel %vm2015, %v3935, 0.0
    %3950 = vadd.xlane.f32.xlu0 %v3949
    %v3951 = vpop.xlane.xlu0 %3950
    %v3952 = vsel %vm2015, %v3938, 0.0
    %3953 = vadd.xlane.f32.xlu0 %v3952
    %v3954 = vpop.xlane.xlu0 %3953
    %v3955 = vmul.f32 %v3945, %v2512
    %v3956 = vmul.f32 %v3948, %v2512
    %v3957 = vmul.f32 %v3951, %v2512
    %v3958 = vmul.f32 %v3954, %v2512
    %v3959 = vsub.f32 %v3927, %v3955
    %v3960 = vsub.f32 %v3930, %v3956
    %v3961 = vsub.f32 %v3935, %v3957
    %v3962 = vsub.f32 %v3938, %v3958
    %v3963 = vmul.f32 %v3959, %v3959
    %v3964 = vmul.f32 %v3960, %v3960
    %v3965 = vmul.f32 %v3961, %v3961
    %v3966 = vmul.f32 %v3962, %v3962
    %v3967 = vsel %vm2015, %v3963, 0.0
    %3968 = vadd.xlane.f32.xlu0 %v3967
    %v3969 = vpop.xlane.xlu0 %3968
    %v3970 = vsel %vm2015, %v3964, 0.0
    %3971 = vadd.xlane.f32.xlu0 %v3970
    %v3972 = vpop.xlane.xlu0 %3971
    %v3973 = vsel %vm2015, %v3965, 0.0
    %3974 = vadd.xlane.f32.xlu0 %v3973
    %v3975 = vpop.xlane.xlu0 %3974
    %v3976 = vsel %vm2015, %v3966, 0.0
    %3977 = vadd.xlane.f32.xlu0 %v3976
    %v3978 = vpop.xlane.xlu0 %3977
    %v3979 = vmul.f32 %v3969, %v2512
    %v3980 = vmul.f32 %v3972, %v2512
    %v3981 = vmul.f32 %v3975, %v2512
    %v3982 = vmul.f32 %v3978, %v2512
    %v3983 = vadd.f32 %v3979, 1e-05
    %v3984 = vadd.f32 %v3980, 1e-05
    %v3985 = vadd.f32 %v3981, 1e-05
    %v3986 = vadd.f32 %v3982, 1e-05
    %v3987 = vrsqrt.pop %v3983
    %v3988 = vrsqrt.pop %v3984
    %v3989 = vrsqrt.pop %v3985
    %v3990 = vrsqrt.pop %v3986
    %v3991 = vmul.f32 %v3959, %v3987
    %v3992 = vmul.f32 %v3960, %v3988
    %v3993 = vmul.f32 %v3961, %v3989
    %v3994 = vmul.f32 %v3962, %v3990
    %v3995 = vlaneseq
    %v3996 = vshrl.u32 %v3995, 7
    %v3997 = vsub.s32 0, %v3996
    %v3998 = vrot.slane %v3941, %v3997
    %v3999 = vmul.f32 %v3991, %v3998
    %v4000 = vmul.f32 %v3992, %v3998
    %v4001 = vmul.f32 %v3993, %v3998
    %v4002 = vmul.f32 %v3994, %v3998
    %v4003 = vlaneseq
    %v4004 = vshrl.u32 %v4003, 7
    %v4005 = vsub.s32 0, %v4004
    %v4006 = vrot.slane %v3942, %v4005
    %v4007 = vadd.f32 %v3999, %v4006
    %v4008 = vadd.f32 %v4000, %v4006
    %v4009 = vadd.f32 %v4001, %v4006
    %v4010 = vadd.f32 %v4002, %v4006
    %v4011 = vld [vmem:[%s2 + $0x160] sm:$0xff]
    %v4012 = vld [vmem:[%s2 + $0x168] sm:$0xff]
    %v4013 = vld [vmem:[%s2 + $0x200] sm:$0xff]
    %v4014 = vld [vmem:[%s2 + $0x208] sm:$0xff]
    %v4015 = vld [vmem:[%s2 + $0x210] sm:$0xff]
    %v4016 = vld [vmem:[%s2 + $0x218] sm:$0xff]
    %v4018 = vsel %vm2015, %v4011, 0
    %v4021 = vsel %vm2015, %v4012, 0
    %4023 = vmatprep.subr.mxu0 0.0
    %4024 = vmatpush1.msra.mxu0 %v4013
    %4025 = vmatprep.subr.mxu0 0.0
    %4026 = vmatpush1.msra.mxu0 %v4014
    %4027 = vmatprep.subr.mxu0 0.0
    %4028 = vmatpush1.msra.mxu0 %v4015
    %4029 = vmatprep.subr.mxu0 0.0
    %4030 = vmatpush1.msra.mxu0 %v4016
    %4031 = vmatprep.subr.mxu0 0.0
    %4032 = vmatpush1.msra.mxu0 0.0
    %4033 = vmatprep.subr.mxu0 0.0
    %4034 = vmatpush1.msra.mxu0 0.0
    %4035 = vmatprep.subr.mxu0 0.0
    %4036 = vmatpush1.msra.mxu0 0.0
    %4037 = vmatprep.subr.mxu0 0.0
    %4038 = vmatpush1.msra.mxu0 0.0
    %4039 = vmatprep.subr.mxu0 0.0
    %4040 = vmatpush1.msra.mxu0 0.0
    %4041 = vmatprep.subr.mxu0 0.0
    %4042 = vmatpush1.msra.mxu0 0.0
    %4043 = vmatprep.subr.mxu0 0.0
    %4044 = vmatpush1.msra.mxu0 0.0
    %4045 = vmatprep.subr.mxu0 0.0
    %4046 = vmatpush1.msra.mxu0 0.0
    %4047 = vmatprep.subr.mxu0 0.0
    %4048 = vmatpush1.msra.mxu0 0.0
    %4049 = vmatprep.subr.mxu0 0.0
    %4050 = vmatpush1.msra.mxu0 0.0
    %4051 = vmatprep.subr.mxu0 0.0
    %4052 = vmatpush1.msra.mxu0 0.0
    %4053 = vmatprep.subr.mxu0 0.0
    %4054 = vmatpush1.msra.mxu0 0.0
    %4055 = vmatprep.subr.mxu0 0.0
    %4056 = vmatpush1.msra.mxu0 0.0
    %4057 = vmatprep.subr.mxu0 0.0
    %4058 = vmatpush1.msra.mxu0 0.0
    %4059 = vmatprep.subr.mxu0 0.0
    %4060 = vmatpush1.msra.mxu0 0.0
    %4061 = vmatprep.subr.mxu0 0.0
    %4062 = vmatpush1.msra.mxu0 0.0
    %4063 = vmatprep.subr.mxu0 0.0
    %4064 = vmatpush1.msra.mxu0 0.0
    %4065 = vmatprep.subr.mxu0 0.0
    %4066 = vmatpush1.msra.mxu0 0.0
    %4067 = vmatprep.subr.mxu0 0.0
    %4068 = vmatpush1.msra.mxu0 0.0
    %4069 = vmatprep.subr.mxu0 0.0
    %4070 = vmatpush1.msra.mxu0 0.0
    %4071 = vmatprep.subr.mxu0 0.0
    %4072 = vmatpush1.msra.mxu0 0.0
    %4073 = vmatprep.subr.mxu0 0.0
    %4074 = vmatpush1.msra.mxu0 0.0
    %4075 = vmatprep.subr.mxu0 0.0
    %4076 = vmatpush1.msra.mxu0 0.0
    %4077 = vmatprep.subr.mxu0 0.0
    %4078 = vmatpush1.msra.mxu0 0.0
    %4079 = vmatprep.subr.mxu0 0.0
    %4080 = vmatpush1.msra.mxu0 0.0
    %4081 = vmatprep.subr.mxu0 0.0
    %4082 = vmatpush1.msra.mxu0 0.0
    %4083 = vmatprep.subr.mxu0 0.0
    %4084 = vmatpush1.msra.mxu0 0.0
    %4085 = vmatprep.subr.mxu0 0.0
    %4086 = vmatpush1.msra.mxu0 0.0
    %4087 = vmatprep.mubr.f32.mxu0 0.0
    %4088 = vmatmul.mubr.f32.gmra.mrb[0].mxu0 %v4018
    %v4089 = vpop.f32.mrb[0].mxu0
    %v4090 = vadd.f32 0.0, %v4089
    %v4091 = vpop.f32.mrb[0].mxu0
    %4092 = vmatprep.mubr.f32.mxu0 0.0
    %4093 = vmatmul.mubr.f32.gmra.mrb[0].mxu0 %v4021
    %v4094 = vpop.f32.mrb[0].mxu0
    %v4095 = vadd.f32 0.0, %v4094
    %v4096 = vpop.f32.mrb[0].mxu0
    %4097 = vdwg.mxu0
    %v4098 = vld [vmem:[%s1 + $0xd8] sm:$0xf]
    %v4099 = vld [vmem:[%s1 + $0xdc] sm:$0xf]
    %v4100 = vld [vmem:[%s1 + $0xe0] sm:$0xf]
    %v4101 = vld [vmem:[%s1 + $0xe4] sm:$0xf]
    %v4102 = vpack.c.bf16 %v3778, %v3777
    %v4103 = vpack.c.bf16 %v3780, %v3779
    %v4104 = vpack.c.bf16 %v3782, %v3781
    %v4105 = vpack.c.bf16 %v3784, %v3783
    %v4106 = vpack.c.bf16 %v3786, %v3785
    %v4107 = vpack.c.bf16 %v3788, %v3787
    %v4108 = vpack.c.bf16 %v3790, %v3789
    %v4109 = vpack.c.bf16 %v3792, %v3791
    %v4114 = vunpack.c.l.b16 %v4098
    %v4115 = vunpack.c.l.b16 %v4099
    %v4116 = vunpack.c.l.b16 %v4100
    %v4117 = vunpack.c.l.b16 %v4101
    %v4118 = vpack.c.b16 %v4115, %v4114
    %v4119 = vpack.c.b16 %v4117, %v4116
    %v4123 = vsel %vm2015, %v4102, 0
    %v4126 = vsel %vm2015, %v4103, 0
    %v4129 = vsel %vm2015, %v4104, 0
    %v4132 = vsel %vm2015, %v4105, 0
    %v4135 = vsel %vm2015, %v4106, 0
    %v4138 = vsel %vm2015, %v4107, 0
    %v4141 = vsel %vm2015, %v4108, 0
    %v4144 = vsel %vm2015, %v4109, 0
    %4146 = vmatprep.subr.bf16.mxu0 0
    %4147 = vmatpush1.bf16.msra.mxu0 %v4118
    %4148 = vmatprep.subr.bf16.mxu0 0
    %4149 = vmatpush1.bf16.msra.mxu0 %v4119
    %4150 = vmatprep.subr.bf16.mxu0 0
    %4151 = vmatpush1.bf16.msra.mxu0 0
    %4152 = vmatprep.subr.bf16.mxu0 0
    %4153 = vmatpush1.bf16.msra.mxu0 0
    %4154 = vmatprep.subr.bf16.mxu0 0
    %4155 = vmatpush1.bf16.msra.mxu0 0
    %4156 = vmatprep.subr.bf16.mxu0 0
    %4157 = vmatpush1.bf16.msra.mxu0 0
    %4158 = vmatprep.subr.bf16.mxu0 0
    %4159 = vmatpush1.bf16.msra.mxu0 0
    %4160 = vmatprep.subr.bf16.mxu0 0
    %4161 = vmatpush1.bf16.msra.mxu0 0
    %4162 = vmatprep.subr.bf16.mxu0 0
    %4163 = vmatpush1.bf16.msra.mxu0 0
    %4164 = vmatprep.subr.bf16.mxu0 0
    %4165 = vmatpush1.bf16.msra.mxu0 0
    %4166 = vmatprep.subr.bf16.mxu0 0
    %4167 = vmatpush1.bf16.msra.mxu0 0
    %4168 = vmatprep.subr.bf16.mxu0 0
    %4169 = vmatpush1.bf16.msra.mxu0 0
    %4170 = vmatprep.subr.bf16.mxu0 0
    %4171 = vmatpush1.bf16.msra.mxu0 0
    %4172 = vmatprep.subr.bf16.mxu0 0
    %4173 = vmatpush1.bf16.msra.mxu0 0
    %4174 = vmatprep.subr.bf16.mxu0 0
    %4175 = vmatpush1.bf16.msra.mxu0 0
    %4176 = vmatprep.subr.bf16.mxu0 0
    %4177 = vmatpush1.bf16.msra.mxu0 0
    %4178 = vmatprep.mubr.bf16.mxu0 0
    %4179 = vmatmul.mubr.bf16.gmra.mrb[0].mxu0 %v4123
    %v4180 = vpop.f32.mrb[0].mxu0
    %v4181 = vadd.f32 0.0, %v4180
    %v4182 = vpop.f32.mrb[0].mxu0
    %v4183 = vpop.f32.mrb[0].mxu0
    %v4184 = vadd.f32 0.0, %v4183
    %v4185 = vpop.f32.mrb[0].mxu0
    %4186 = vmatprep.mubr.bf16.mxu0 0
    %4187 = vmatmul.mubr.bf16.gmra.mrb[0].mxu0 %v4126
    %v4188 = vpop.f32.mrb[0].mxu0
    %v4189 = vadd.f32 0.0, %v4188
    %v4190 = vpop.f32.mrb[0].mxu0
    %v4191 = vpop.f32.mrb[0].mxu0
    %v4192 = vadd.f32 0.0, %v4191
    %v4193 = vpop.f32.mrb[0].mxu0
    %4194 = vmatprep.mubr.bf16.mxu0 0
    %4195 = vmatmul.mubr.bf16.gmra.mrb[0].mxu0 %v4129
    %v4196 = vpop.f32.mrb[0].mxu0
    %v4197 = vadd.f32 0.0, %v4196
    %v4198 = vpop.f32.mrb[0].mxu0
    %v4199 = vpop.f32.mrb[0].mxu0
    %v4200 = vadd.f32 0.0, %v4199
    %v4201 = vpop.f32.mrb[0].mxu0
    %4202 = vmatprep.mubr.bf16.mxu0 0
    %4203 = vmatmul.mubr.bf16.gmra.mrb[0].mxu0 %v4132
    %v4204 = vpop.f32.mrb[0].mxu0
    %v4205 = vadd.f32 0.0, %v4204
    %v4206 = vpop.f32.mrb[0].mxu0
    %v4207 = vpop.f32.mrb[0].mxu0
    %v4208 = vadd.f32 0.0, %v4207
    %v4209 = vpop.f32.mrb[0].mxu0
    %4210 = vmatprep.mubr.bf16.mxu0 0
    %4211 = vmatmul.mubr.bf16.gmra.mrb[0].mxu0 %v4135
    %v4212 = vpop.f32.mrb[0].mxu0
    %v4213 = vadd.f32 0.0, %v4212
    %v4214 = vpop.f32.mrb[0].mxu0
    %v4215 = vpop.f32.mrb[0].mxu0
    %v4216 = vadd.f32 0.0, %v4215
    %v4217 = vpop.f32.mrb[0].mxu0
    %4218 = vmatprep.mubr.bf16.mxu0 0
    %4219 = vmatmul.mubr.bf16.gmra.mrb[0].mxu0 %v4138
    %v4220 = vpop.f32.mrb[0].mxu0
    %v4221 = vadd.f32 0.0, %v4220
    %v4222 = vpop.f32.mrb[0].mxu0
    %v4223 = vpop.f32.mrb[0].mxu0
    %v4224 = vadd.f32 0.0, %v4223
    %v4225 = vpop.f32.mrb[0].mxu0
    %4226 = vmatprep.mubr.bf16.mxu0 0
    %4227 = vmatmul.mubr.bf16.gmra.mrb[0].mxu0 %v4141
    %v4228 = vpop.f32.mrb[0].mxu0
    %v4229 = vadd.f32 0.0, %v4228
    %v4230 = vpop.f32.mrb[0].mxu0
    %v4231 = vpop.f32.mrb[0].mxu0
    %v4232 = vadd.f32 0.0, %v4231
    %v4233 = vpop.f32.mrb[0].mxu0
    %4234 = vmatprep.mubr.bf16.mxu0 0
    %4235 = vmatmul.mubr.bf16.gmra.mrb[0].mxu0 %v4144
    %v4236 = vpop.f32.mrb[0].mxu0
    %v4237 = vadd.f32 0.0, %v4236
    %v4238 = vpop.f32.mrb[0].mxu0
    %v4239 = vpop.f32.mrb[0].mxu0
    %v4240 = vadd.f32 0.0, %v4239
    %v4241 = vpop.f32.mrb[0].mxu0
    %4242 = vdwg.mxu0
    %v4243 = vld [vmem:[%s2 + $0x170] sm:$0xff]
    %v4244 = vld [vmem:[%s2 + $0x178] sm:$0xff]
    %v4245 = vld [vmem:[%s2 + $0x180] sm:$0xff]
    %v4246 = vld [vmem:[%s2 + $0x188] sm:$0xff]
    %v4247 = vld [vmem:[%s2 + $0x190] sm:$0xff]
    %v4248 = vld [vmem:[%s2 + $0x198] sm:$0xff]
    %v4249 = vld [vmem:[%s2 + $0x1a0] sm:$0xff]
    %v4250 = vld [vmem:[%s2 + $0x1a8] sm:$0xff]
    %v4251 = vld [vmem:[%s2 + $0x1b0] sm:$0xff]
    %v4252 = vld [vmem:[%s2 + $0x1b8] sm:$0xff]
    %v4253 = vld [vmem:[%s2 + $0x1c0] sm:$0xff]
    %v4254 = vld [vmem:[%s2 + $0x1c8] sm:$0xff]
    %v4255 = vld [vmem:[%s2 + $0x1d0] sm:$0xff]
    %v4256 = vld [vmem:[%s2 + $0x1d8] sm:$0xff]
    %v4257 = vld [vmem:[%s2 + $0x1e0] sm:$0xff]
    %v4258 = vld [vmem:[%s2 + $0x1e8] sm:$0xff]
    %v4259 = vadd.f32 %v4181, %v4243
    %v4260 = vadd.f32 %v4184, %v4244
    %v4261 = vadd.f32 %v4189, %v4245
    %v4262 = vadd.f32 %v4192, %v4246
    %v4263 = vadd.f32 %v4197, %v4247
    %v4264 = vadd.f32 %v4200, %v4248
    %v4265 = vadd.f32 %v4205, %v4249
    %v4266 = vadd.f32 %v4208, %v4250
    %v4267 = vadd.f32 %v4213, %v4251
    %v4268 = vadd.f32 %v4216, %v4252
    %v4269 = vadd.f32 %v4221, %v4253
    %v4270 = vadd.f32 %v4224, %v4254
    %v4271 = vadd.f32 %v4229, %v4255
    %v4272 = vadd.f32 %v4232, %v4256
    %v4273 = vadd.f32 %v4237, %v4257
    %v4274 = vadd.f32 %v4240, %v4258
    %v4276 = vsel %vm2015, %v4090, 0
    %v4279 = vsel %vm2015, %v4095, 0
    %v4282 = vsel %vm2015, %v4259, 0
    %v4285 = vsel %vm2015, %v4260, 0
    %v4288 = vsel %vm2015, %v4261, 0
    %v4291 = vsel %vm2015, %v4262, 0
    %v4294 = vsel %vm2015, %v4263, 0
    %v4297 = vsel %vm2015, %v4264, 0
    %v4300 = vsel %vm2015, %v4265, 0
    %v4303 = vsel %vm2015, %v4266, 0
    %v4306 = vsel %vm2015, %v4267, 0
    %v4309 = vsel %vm2015, %v4268, 0
    %v4312 = vsel %vm2015, %v4269, 0
    %v4315 = vsel %vm2015, %v4270, 0
    %v4318 = vsel %vm2015, %v4271, 0
    %v4321 = vsel %vm2015, %v4272, 0
    %v4324 = vsel %vm2015, %v4273, 0
    %v4327 = vsel %vm2015, %v4274, 0
    %4329 = vmatprep.subr.mxu0 0.0
    %4330 = vmatpush1.xpose.msra.mxu0 %v4282
    %4331 = vmatprep.subr.mxu0 0.0
    %4332 = vmatpush1.xpose.msra.mxu0 %v4285
    %4333 = vmatprep.subr.mxu0 0.0
    %4334 = vmatpush1.xpose.msra.mxu0 %v4288
    %4335 = vmatprep.subr.mxu0 0.0
    %4336 = vmatpush1.xpose.msra.mxu0 %v4291
    %4337 = vmatprep.subr.mxu0 0.0
    %4338 = vmatpush1.xpose.msra.mxu0 %v4294
    %4339 = vmatprep.subr.mxu0 0.0
    %4340 = vmatpush1.xpose.msra.mxu0 %v4297
    %4341 = vmatprep.subr.mxu0 0.0
    %4342 = vmatpush1.xpose.msra.mxu0 %v4300
    %4343 = vmatprep.subr.mxu0 0.0
    %4344 = vmatpush1.xpose.msra.mxu0 %v4303
    %4345 = vmatprep.subr.mxu0 0.0
    %4346 = vmatpush1.xpose.msra.mxu0 %v4306
    %4347 = vmatprep.subr.mxu0 0.0
    %4348 = vmatpush1.xpose.msra.mxu0 %v4309
    %4349 = vmatprep.subr.mxu0 0.0
    %4350 = vmatpush1.xpose.msra.mxu0 %v4312
    %4351 = vmatprep.subr.mxu0 0.0
    %4352 = vmatpush1.xpose.msra.mxu0 %v4315
    %4353 = vmatprep.subr.mxu0 0.0
    %4354 = vmatpush1.xpose.msra.mxu0 %v4318
    %4355 = vmatprep.subr.mxu0 0.0
    %4356 = vmatpush1.xpose.msra.mxu0 %v4321
    %4357 = vmatprep.subr.mxu0 0.0
    %4358 = vmatpush1.xpose.msra.mxu0 %v4324
    %4359 = vmatprep.subr.mxu0 0.0
    %4360 = vmatpush1.xpose.msra.mxu0 %v4327
    %4361 = vmatprep.subr.mxu0 0.0
    %4362 = vmatpush1.xpose.msra.mxu0 0.0
    %4363 = vmatprep.subr.mxu0 0.0
    %4364 = vmatpush1.xpose.msra.mxu0 0.0
    %4365 = vmatprep.subr.mxu0 0.0
    %4366 = vmatpush1.xpose.msra.mxu0 0.0
    %4367 = vmatprep.subr.mxu0 0.0
    %4368 = vmatpush1.xpose.msra.mxu0 0.0
    %4369 = vmatprep.subr.mxu0 0.0
    %4370 = vmatpush1.xpose.msra.mxu0 0.0
    %4371 = vmatprep.subr.mxu0 0.0
    %4372 = vmatpush1.xpose.msra.mxu0 0.0
    %4373 = vmatprep.subr.mxu0 0.0
    %4374 = vmatpush1.xpose.msra.mxu0 0.0
    %4375 = vmatprep.subr.mxu0 0.0
    %4376 = vmatpush1.xpose.msra.mxu0 0.0
    %4377 = vmatprep.subr.mxu0 0.0
    %4378 = vmatpush1.xpose.msra.mxu0 0.0
    %4379 = vmatprep.subr.mxu0 0.0
    %4380 = vmatpush1.xpose.msra.mxu0 0.0
    %4381 = vmatprep.subr.mxu0 0.0
    %4382 = vmatpush1.xpose.msra.mxu0 0.0
    %4383 = vmatprep.subr.mxu0 0.0
    %4384 = vmatpush1.xpose.msra.mxu0 0.0
    %4385 = vmatprep.subr.mxu0 0.0
    %4386 = vmatpush1.xpose.msra.mxu0 0.0
    %4387 = vmatprep.subr.mxu0 0.0
    %4388 = vmatpush1.xpose.msra.mxu0 0.0
    %4389 = vmatprep.subr.mxu0 0.0
    %4390 = vmatpush1.xpose.msra.mxu0 0.0
    %4391 = vmatprep.subr.mxu0 0.0
    %4392 = vmatpush1.xpose.msra.mxu0 0.0
    %4393 = vmatprep.mubr.f32.mxu0 0.0
    %4394 = vmatmul.mubr.f32.gmra.mrb[0].mxu0 %v4276
    %v4395 = vpop.f32.mrb[0].mxu0
    %v4396 = vadd.f32 0.0, %v4395
    %v4397 = vpop.f32.mrb[0].mxu0
    %4398 = vmatprep.mubr.f32.mxu0 0.0
    %4399 = vmatmul.mubr.f32.gmra.mrb[0].mxu0 %v4279
    %v4400 = vpop.f32.mrb[0].mxu0
    %v4401 = vadd.f32 0.0, %v4400
    %v4402 = vpop.f32.mrb[0].mxu0
    %4403 = vdwg.mxu0
    %v4404 = vmul.f32 %v4396, 0.17677669
    %v4405 = vmul.f32 %v4401, 0.17677669
    %v4406 = vld [vmem:[%s2 + $0x1f0] sm:$0xff]
    %v4407 = vld [vmem:[%s2 + $0x1f8] sm:$0xff]
    %v4408 = vadd.f32 %v4404, %v4406
    %v4409 = vadd.f32 %v4405, %v4407
    %4410 = vmax.xlane.f32.xlu0 %v4408
    %v4411 = vpop.xlane.xlu0 %4410
    %4412 = vmax.xlane.f32.xlu0 %v4409
    %v4413 = vpop.xlane.xlu0 %4412
    %v4414 = vsub.f32 %v4408, %v4411
    %v4415 = vsub.f32 %v4409, %v4413
    %v4416 = vmul.f32 %v4414, 1.442695
    %v4417 = vpow.pop %v4416
    %v4418 = vmul.f32 %v4415, 1.442695
    %v4419 = vpow.pop %v4418
    %4420 = vadd.xlane.f32.xlu0 %v4417
    %v4421 = vpop.xlane.xlu0 %4420
    %4422 = vadd.xlane.f32.xlu0 %v4419
    %v4423 = vpop.xlane.xlu0 %4422
    %v4424 = vrcp.pop %v4421
    %v4425 = vrcp.pop %v4423
    %v4426 = vmul.f32 %v4417, %v4424
    %v4427 = vmul.f32 %v4419, %v4425
    %4444 = vrot.lane.b32.xlu0 %v4181, 96
    %v4445 = vpop.permute.xlu0 %4444
    %4446 = vrot.lane.b32.xlu0 %v4184, 96
    %v4447 = vpop.permute.xlu0 %4446
    %4448 = vrot.lane.b32.xlu0 %v4189, 96
    %v4449 = vpop.permute.xlu0 %4448
    %4450 = vrot.lane.b32.xlu0 %v4192, 96
    %v4451 = vpop.permute.xlu0 %4450
    %4452 = vrot.lane.b32.xlu0 %v4197, 96
    %v4453 = vpop.permute.xlu0 %4452
    %4454 = vrot.lane.b32.xlu0 %v4200, 96
    %v4455 = vpop.permute.xlu0 %4454
    %4456 = vrot.lane.b32.xlu0 %v4205, 96
    %v4457 = vpop.permute.xlu0 %4456
    %4458 = vrot.lane.b32.xlu0 %v4208, 96
    %v4459 = vpop.permute.xlu0 %4458
    %4460 = vrot.lane.b32.xlu0 %v4213, 96
    %v4461 = vpop.permute.xlu0 %4460
    %4462 = vrot.lane.b32.xlu0 %v4216, 96
    %v4463 = vpop.permute.xlu0 %4462
    %4464 = vrot.lane.b32.xlu0 %v4221, 96
    %v4465 = vpop.permute.xlu0 %4464
    %4466 = vrot.lane.b32.xlu0 %v4224, 96
    %v4467 = vpop.permute.xlu0 %4466
    %4468 = vrot.lane.b32.xlu0 %v4229, 96
    %v4469 = vpop.permute.xlu0 %4468
    %4470 = vrot.lane.b32.xlu0 %v4232, 96
    %v4471 = vpop.permute.xlu0 %4470
    %4472 = vrot.lane.b32.xlu0 %v4237, 96
    %v4473 = vpop.permute.xlu0 %4472
    %4474 = vrot.lane.b32.xlu0 %v4240, 96
    %v4475 = vpop.permute.xlu0 %4474
    %4492 = vmatprep.subr.mxu0 0.0
    %4493 = vmatpush1.msra.mxu0 %v4445
    %4494 = vmatprep.subr.mxu0 0.0
    %4495 = vmatpush1.msra.mxu0 %v4447
    %4496 = vmatprep.subr.mxu0 0.0
    %4497 = vmatpush1.msra.mxu0 %v4449
    %4498 = vmatprep.subr.mxu0 0.0
    %4499 = vmatpush1.msra.mxu0 %v4451
    %4500 = vmatprep.subr.mxu0 0.0
    %4501 = vmatpush1.msra.mxu0 %v4453
    %4502 = vmatprep.subr.mxu0 0.0
    %4503 = vmatpush1.msra.mxu0 %v4455
    %4504 = vmatprep.subr.mxu0 0.0
    %4505 = vmatpush1.msra.mxu0 %v4457
    %4506 = vmatprep.subr.mxu0 0.0
    %4507 = vmatpush1.msra.mxu0 %v4459
    %4508 = vmatprep.subr.mxu0 0.0
    %4509 = vmatpush1.msra.mxu0 %v4461
    %4510 = vmatprep.subr.mxu0 0.0
    %4511 = vmatpush1.msra.mxu0 %v4463
    %4512 = vmatprep.subr.mxu0 0.0
    %4513 = vmatpush1.msra.mxu0 %v4465
    %4514 = vmatprep.subr.mxu0 0.0
    %4515 = vmatpush1.msra.mxu0 %v4467
    %4516 = vmatprep.subr.mxu0 0.0
    %4517 = vmatpush1.msra.mxu0 %v4469
    %4518 = vmatprep.subr.mxu0 0.0
    %4519 = vmatpush1.msra.mxu0 %v4471
    %4520 = vmatprep.subr.mxu0 0.0
    %4521 = vmatpush1.msra.mxu0 %v4473
    %4522 = vmatprep.subr.mxu0 0.0
    %4523 = vmatpush1.msra.mxu0 %v4475
    %4524 = vmatprep.subr.mxu0 0.0
    %4525 = vmatpush1.msra.mxu0 0.0
    %4526 = vmatprep.subr.mxu0 0.0
    %4527 = vmatpush1.msra.mxu0 0.0
    %4528 = vmatprep.subr.mxu0 0.0
    %4529 = vmatpush1.msra.mxu0 0.0
    %4530 = vmatprep.subr.mxu0 0.0
    %4531 = vmatpush1.msra.mxu0 0.0
    %4532 = vmatprep.subr.mxu0 0.0
    %4533 = vmatpush1.msra.mxu0 0.0
    %4534 = vmatprep.subr.mxu0 0.0
    %4535 = vmatpush1.msra.mxu0 0.0
    %4536 = vmatprep.subr.mxu0 0.0
    %4537 = vmatpush1.msra.mxu0 0.0
    %4538 = vmatprep.subr.mxu0 0.0
    %4539 = vmatpush1.msra.mxu0 0.0
    %4540 = vmatprep.subr.mxu0 0.0
    %4541 = vmatpush1.msra.mxu0 0.0
    %4542 = vmatprep.subr.mxu0 0.0
    %4543 = vmatpush1.msra.mxu0 0.0
    %4544 = vmatprep.subr.mxu0 0.0
    %4545 = vmatpush1.msra.mxu0 0.0
    %4546 = vmatprep.subr.mxu0 0.0
    %4547 = vmatpush1.msra.mxu0 0.0
    %4548 = vmatprep.subr.mxu0 0.0
    %4549 = vmatpush1.msra.mxu0 0.0
    %4550 = vmatprep.subr.mxu0 0.0
    %4551 = vmatpush1.msra.mxu0 0.0
    %4552 = vmatprep.subr.mxu0 0.0
    %4553 = vmatpush1.msra.mxu0 0.0
    %4554 = vmatprep.subr.mxu0 0.0
    %4555 = vmatpush1.msra.mxu0 0.0
    %4556 = vmatprep.mubr.f32.mxu0 0.0
    %4557 = vmatmul.mubr.f32.gmra.mrb[0].mxu0 %v4426
    %v4558 = vpop.f32.mrb[0].mxu0
    %v4559 = vadd.f32 0.0, %v4558
    %v4560 = vpop.f32.mrb[0].mxu0
    %4561 = vmatprep.mubr.f32.mxu0 0.0
    %4562 = vmatmul.mubr.f32.gmra.mrb[0].mxu0 %v4427
    %v4563 = vpop.f32.mrb[0].mxu0
    %v4564 = vadd.f32 0.0, %v4563
    %v4565 = vpop.f32.mrb[0].mxu0
    %4566 = vdwg.mxu0
    %v4567 = vld [vmem:[%s2 + $0x220] sm:$0xff]
    %v4568 = vld [vmem:[%s2 + $0x228] sm:$0xff]
    %v4569 = vld [vmem:[%s2 + $0x230] sm:$0xff]
    %v4570 = vld [vmem:[%s2 + $0x238] sm:$0xff]
    %v4572 = vsel %vm2015, %v4559, 0
    %v4575 = vsel %vm2015, %v4564, 0
    %4577 = vmatprep.subr.mxu0 0.0
    %4578 = vmatpush1.msra.mxu0 %v4567
    %4579 = vmatprep.subr.mxu0 0.0
    %4580 = vmatpush1.msra.mxu0 %v4568
    %4581 = vmatprep.subr.mxu0 0.0
    %4582 = vmatpush1.msra.mxu0 %v4569
    %4583 = vmatprep.subr.mxu0 0.0
    %4584 = vmatpush1.msra.mxu0 %v4570
    %4585 = vmatprep.subr.mxu0 0.0
    %4586 = vmatpush1.msra.mxu0 0.0
    %4587 = vmatprep.subr.mxu0 0.0
    %4588 = vmatpush1.msra.mxu0 0.0
    %4589 = vmatprep.subr.mxu0 0.0
    %4590 = vmatpush1.msra.mxu0 0.0
    %4591 = vmatprep.subr.mxu0 0.0
    %4592 = vmatpush1.msra.mxu0 0.0
    %4593 = vmatprep.subr.mxu0 0.0
    %4594 = vmatpush1.msra.mxu0 0.0
    %4595 = vmatprep.subr.mxu0 0.0
    %4596 = vmatpush1.msra.mxu0 0.0
    %4597 = vmatprep.subr.mxu0 0.0
    %4598 = vmatpush1.msra.mxu0 0.0
    %4599 = vmatprep.subr.mxu0 0.0
    %4600 = vmatpush1.msra.mxu0 0.0
    %4601 = vmatprep.subr.mxu0 0.0
    %4602 = vmatpush1.msra.mxu0 0.0
    %4603 = vmatprep.subr.mxu0 0.0
    %4604 = vmatpush1.msra.mxu0 0.0
    %4605 = vmatprep.subr.mxu0 0.0
    %4606 = vmatpush1.msra.mxu0 0.0
    %4607 = vmatprep.subr.mxu0 0.0
    %4608 = vmatpush1.msra.mxu0 0.0
    %4609 = vmatprep.subr.mxu0 0.0
    %4610 = vmatpush1.msra.mxu0 0.0
    %4611 = vmatprep.subr.mxu0 0.0
    %4612 = vmatpush1.msra.mxu0 0.0
    %4613 = vmatprep.subr.mxu0 0.0
    %4614 = vmatpush1.msra.mxu0 0.0
    %4615 = vmatprep.subr.mxu0 0.0
    %4616 = vmatpush1.msra.mxu0 0.0
    %4617 = vmatprep.subr.mxu0 0.0
    %4618 = vmatpush1.msra.mxu0 0.0
    %4619 = vmatprep.subr.mxu0 0.0
    %4620 = vmatpush1.msra.mxu0 0.0
    %4621 = vmatprep.subr.mxu0 0.0
    %4622 = vmatpush1.msra.mxu0 0.0
    %4623 = vmatprep.subr.mxu0 0.0
    %4624 = vmatpush1.msra.mxu0 0.0
    %4625 = vmatprep.subr.mxu0 0.0
    %4626 = vmatpush1.msra.mxu0 0.0
    %4627 = vmatprep.subr.mxu0 0.0
    %4628 = vmatpush1.msra.mxu0 0.0
    %4629 = vmatprep.subr.mxu0 0.0
    %4630 = vmatpush1.msra.mxu0 0.0
    %4631 = vmatprep.subr.mxu0 0.0
    %4632 = vmatpush1.msra.mxu0 0.0
    %4633 = vmatprep.subr.mxu0 0.0
    %4634 = vmatpush1.msra.mxu0 0.0
    %4635 = vmatprep.subr.mxu0 0.0
    %4636 = vmatpush1.msra.mxu0 0.0
    %4637 = vmatprep.subr.mxu0 0.0
    %4638 = vmatpush1.msra.mxu0 0.0
    %4639 = vmatprep.subr.mxu0 0.0
    %4640 = vmatpush1.msra.mxu0 0.0
    %4641 = vmatprep.mubr.f32.mxu0 0.0
    %4642 = vmatmul.mubr.f32.gmra.mrb[0].mxu0 %v4572
    %v4643 = vpop.f32.mrb[0].mxu0
    %v4644 = vadd.f32 0.0, %v4643
    %v4645 = vpop.f32.mrb[0].mxu0
    %4646 = vmatprep.mubr.f32.mxu0 0.0
    %4647 = vmatmul.mubr.f32.gmra.mrb[0].mxu0 %v4575
    %v4648 = vpop.f32.mrb[0].mxu0
    %v4649 = vadd.f32 0.0, %v4648
    %v4650 = vpop.f32.mrb[0].mxu0
    %4651 = vdwg.mxu0
    %v4652 = vadd.f32 %v4011, %v4644
    %v4653 = vadd.f32 %v4012, %v4649
    %v4654 = vld [vmem:[%s2 + $0x2a0] sm:$0x1]
    %v4655 = vld [vmem:[%s2 + $0x2a8] sm:$0x1]
    %v4656 = vsel %vm2015, %v4652, 0.0
    %4657 = vadd.xlane.f32.xlu0 %v4656
    %v4658 = vpop.xlane.xlu0 %4657
    %v4659 = vsel %vm2015, %v4653, 0.0
    %4660 = vadd.xlane.f32.xlu0 %v4659
    %v4661 = vpop.xlane.xlu0 %4660
    %v4662 = vmul.f32 %v4658, %v2512
    %v4663 = vmul.f32 %v4661, %v2512
    %v4664 = vsub.f32 %v4652, %v4662
    %v4665 = vsub.f32 %v4653, %v4663
    %v4666 = vmul.f32 %v4664, %v4664
    %v4667 = vmul.f32 %v4665, %v4665
    %v4668 = vsel %vm2015, %v4666, 0.0
    %4669 = vadd.xlane.f32.xlu0 %v4668
    %v4670 = vpop.xlane.xlu0 %4669
    %v4671 = vsel %vm2015, %v4667, 0.0
    %4672 = vadd.xlane.f32.xlu0 %v4671
    %v4673 = vpop.xlane.xlu0 %4672
    %v4674 = vmul.f32 %v4670, %v2512
    %v4675 = vmul.f32 %v4673, %v2512
    %v4676 = vadd.f32 %v4674, 1e-05
    %v4677 = vadd.f32 %v4675, 1e-05
    %v4678 = vrsqrt.pop %v4676
    %v4679 = vrsqrt.pop %v4677
    %v4680 = vmul.f32 %v4664, %v4678
    %v4681 = vmul.f32 %v4665, %v4679
    %v4682 = vlaneseq
    %v4683 = vshrl.u32 %v4682, 7
    %v4684 = vsub.s32 0, %v4683
    %v4685 = vrot.slane %v4654, %v4684
    %v4686 = vmul.f32 %v4680, %v4685
    %v4687 = vmul.f32 %v4681, %v4685
    %v4688 = vlaneseq
    %v4689 = vshrl.u32 %v4688, 7
    %v4690 = vsub.s32 0, %v4689
    %v4691 = vrot.slane %v4655, %v4690
    %v4692 = vadd.f32 %v4686, %v4691
    %v4693 = vadd.f32 %v4687, %v4691
    %v4694 = vld [vmem:[%s2 + $0x240] sm:$0xff]
    %v4695 = vld [vmem:[%s2 + $0x248] sm:$0xff]
    %v4696 = vld [vmem:[%s2 + $0x250] sm:$0xff]
    %v4697 = vld [vmem:[%s2 + $0x258] sm:$0xff]
    %v4698 = vld [vmem:[%s2 + $0x2b0] sm:$0x1]
    %v4699 = vlaneseq
    %v4700 = vshrl.u32 %v4699, 7
    %v4701 = vsub.s32 0, %v4700
    %v4702 = vrot.slane %v4698, %v4701
    %v4704 = vsel %vm2015, %v4692, 0
    %v4707 = vsel %vm2015, %v4693, 0
    %4709 = vmatprep.subr.mxu0 0.0
    %4710 = vmatpush1.msra.mxu0 %v4694
    %4711 = vmatprep.subr.mxu0 0.0
    %4712 = vmatpush1.msra.mxu0 %v4695
    %4713 = vmatprep.subr.mxu0 0.0
    %4714 = vmatpush1.msra.mxu0 %v4696
    %4715 = vmatprep.subr.mxu0 0.0
    %4716 = vmatpush1.msra.mxu0 %v4697
    %4717 = vmatprep.subr.mxu0 0.0
    %4718 = vmatpush1.msra.mxu0 0.0
    %4719 = vmatprep.subr.mxu0 0.0
    %4720 = vmatpush1.msra.mxu0 0.0
    %4721 = vmatprep.subr.mxu0 0.0
    %4722 = vmatpush1.msra.mxu0 0.0
    %4723 = vmatprep.subr.mxu0 0.0
    %4724 = vmatpush1.msra.mxu0 0.0
    %4725 = vmatprep.subr.mxu0 0.0
    %4726 = vmatpush1.msra.mxu0 0.0
    %4727 = vmatprep.subr.mxu0 0.0
    %4728 = vmatpush1.msra.mxu0 0.0
    %4729 = vmatprep.subr.mxu0 0.0
    %4730 = vmatpush1.msra.mxu0 0.0
    %4731 = vmatprep.subr.mxu0 0.0
    %4732 = vmatpush1.msra.mxu0 0.0
    %4733 = vmatprep.subr.mxu0 0.0
    %4734 = vmatpush1.msra.mxu0 0.0
    %4735 = vmatprep.subr.mxu0 0.0
    %4736 = vmatpush1.msra.mxu0 0.0
    %4737 = vmatprep.subr.mxu0 0.0
    %4738 = vmatpush1.msra.mxu0 0.0
    %4739 = vmatprep.subr.mxu0 0.0
    %4740 = vmatpush1.msra.mxu0 0.0
    %4741 = vmatprep.subr.mxu0 0.0
    %4742 = vmatpush1.msra.mxu0 0.0
    %4743 = vmatprep.subr.mxu0 0.0
    %4744 = vmatpush1.msra.mxu0 0.0
    %4745 = vmatprep.subr.mxu0 0.0
    %4746 = vmatpush1.msra.mxu0 0.0
    %4747 = vmatprep.subr.mxu0 0.0
    %4748 = vmatpush1.msra.mxu0 0.0
    %4749 = vmatprep.subr.mxu0 0.0
    %4750 = vmatpush1.msra.mxu0 0.0
    %4751 = vmatprep.subr.mxu0 0.0
    %4752 = vmatpush1.msra.mxu0 0.0
    %4753 = vmatprep.subr.mxu0 0.0
    %4754 = vmatpush1.msra.mxu0 0.0
    %4755 = vmatprep.subr.mxu0 0.0
    %4756 = vmatpush1.msra.mxu0 0.0
    %4757 = vmatprep.subr.mxu0 0.0
    %4758 = vmatpush1.msra.mxu0 0.0
    %4759 = vmatprep.subr.mxu0 0.0
    %4760 = vmatpush1.msra.mxu0 0.0
    %4761 = vmatprep.subr.mxu0 0.0
    %4762 = vmatpush1.msra.mxu0 0.0
    %4763 = vmatprep.subr.mxu0 0.0
    %4764 = vmatpush1.msra.mxu0 0.0
    %4765 = vmatprep.subr.mxu0 0.0
    %4766 = vmatpush1.msra.mxu0 0.0
    %4767 = vmatprep.subr.mxu0 0.0
    %4768 = vmatpush1.msra.mxu0 0.0
    %4769 = vmatprep.subr.mxu0 0.0
    %4770 = vmatpush1.msra.mxu0 0.0
    %4771 = vmatprep.subr.mxu0 0.0
    %4772 = vmatpush1.msra.mxu0 0.0
    %4773 = vmatprep.mubr.f32.mxu0 0.0
    %4774 = vmatmul.mubr.f32.gmra.mrb[0].mxu0 %v4704
    %v4775 = vpop.f32.mrb[0].mxu0
    %v4776 = vadd.f32 %v4702, %v4775
    %v4777 = vpop.f32.mrb[0].mxu0
    %4778 = vmatprep.mubr.f32.mxu0 0.0
    %4779 = vmatmul.mubr.f32.gmra.mrb[0].mxu0 %v4707
    %v4780 = vpop.f32.mrb[0].mxu0
    %v4781 = vadd.f32 %v4702, %v4780
    %v4782 = vpop.f32.mrb[0].mxu0
    %4783 = vdwg.mxu0
    %v4784 = vmul.f32 %v4776, %v4776
    %v4785 = vmul.f32 %v4781, %v4781
    %v4786 = vmul.f32 %v4776, %v4784
    %v4787 = vmul.f32 %v4781, %v4785
    %v4788 = vmul.f32 %v4786, 0.044715
    %v4789 = vmul.f32 %v4787, 0.044715
    %v4790 = vadd.f32 %v4776, %v4788
    %v4791 = vadd.f32 %v4781, %v4789
    %v4792 = vmul.f32 %v4790, 0.7978846
    %v4793 = vmul.f32 %v4791, 0.7978846
    %v4794 = vtanh.pop %v4792
    %v4795 = vtanh.pop %v4793
    %v4796 = vadd.f32 %v4794, 1.0
    %v4797 = vadd.f32 %v4795, 1.0
    %v4798 = vmul.f32 %v4796, 0.5
    %v4799 = vmul.f32 %v4797, 0.5
    %v4800 = vmul.f32 %v4776, %v4798
    %v4801 = vmul.f32 %v4781, %v4799
    %v4802 = vld [vmem:[%s2 + $0x260] sm:$0xff]
    %v4803 = vld [vmem:[%s2 + $0x268] sm:$0xff]
    %v4804 = vld [vmem:[%s2 + $0x270] sm:$0xff]
    %v4805 = vld [vmem:[%s2 + $0x278] sm:$0xff]
    %v4806 = vld [vmem:[%s2 + $0x280] sm:$0xff]
    %v4807 = vld [vmem:[%s2 + $0x288] sm:$0xff]
    %v4808 = vld [vmem:[%s2 + $0x290] sm:$0xff]
    %v4809 = vld [vmem:[%s2 + $0x298] sm:$0xff]
    %v4810 = vld [vmem:[%s2 + $0x2b8] sm:$0x1]
    %v4811 = vlaneseq
    %v4812 = vshrl.u32 %v4811, 7
    %v4813 = vsub.s32 0, %v4812
    %v4814 = vrot.slane %v4810, %v4813
    %v4816 = vsel %vm2442, %v4800, 0
    %v4819 = vsel %vm2442, %v4801, 0
    %4821 = vmatprep.subr.mxu0 0.0
    %4822 = vmatpush1.msra.mxu0 %v4802
    %4823 = vmatprep.subr.mxu0 0.0
    %4824 = vmatpush1.msra.mxu0 %v4803
    %4825 = vmatprep.subr.mxu0 0.0
    %4826 = vmatpush1.msra.mxu0 %v4804
    %4827 = vmatprep.subr.mxu0 0.0
    %4828 = vmatpush1.msra.mxu0 %v4805
    %4829 = vmatprep.subr.mxu0 0.0
    %4830 = vmatpush1.msra.mxu0 %v4806
    %4831 = vmatprep.subr.mxu0 0.0
    %4832 = vmatpush1.msra.mxu0 %v4807
    %4833 = vmatprep.subr.mxu0 0.0
    %4834 = vmatpush1.msra.mxu0 %v4808
    %4835 = vmatprep.subr.mxu0 0.0
    %4836 = vmatpush1.msra.mxu0 %v4809
    %4837 = vmatprep.subr.mxu0 0.0
    %4838 = vmatpush1.msra.mxu0 0.0
    %4839 = vmatprep.subr.mxu0 0.0
    %4840 = vmatpush1.msra.mxu0 0.0
    %4841 = vmatprep.subr.mxu0 0.0
    %4842 = vmatpush1.msra.mxu0 0.0
    %4843 = vmatprep.subr.mxu0 0.0
    %4844 = vmatpush1.msra.mxu0 0.0
    %4845 = vmatprep.subr.mxu0 0.0
    %4846 = vmatpush1.msra.mxu0 0.0
    %4847 = vmatprep.subr.mxu0 0.0
    %4848 = vmatpush1.msra.mxu0 0.0
    %4849 = vmatprep.subr.mxu0 0.0
    %4850 = vmatpush1.msra.mxu0 0.0
    %4851 = vmatprep.subr.mxu0 0.0
    %4852 = vmatpush1.msra.mxu0 0.0
    %4853 = vmatprep.subr.mxu0 0.0
    %4854 = vmatpush1.msra.mxu0 0.0
    %4855 = vmatprep.subr.mxu0 0.0
    %4856 = vmatpush1.msra.mxu0 0.0
    %4857 = vmatprep.subr.mxu0 0.0
    %4858 = vmatpush1.msra.mxu0 0.0
    %4859 = vmatprep.subr.mxu0 0.0
    %4860 = vmatpush1.msra.mxu0 0.0
    %4861 = vmatprep.subr.mxu0 0.0
    %4862 = vmatpush1.msra.mxu0 0.0
    %4863 = vmatprep.subr.mxu0 0.0
    %4864 = vmatpush1.msra.mxu0 0.0
    %4865 = vmatprep.subr.mxu0 0.0
    %4866 = vmatpush1.msra.mxu0 0.0
    %4867 = vmatprep.subr.mxu0 0.0
    %4868 = vmatpush1.msra.mxu0 0.0
    %4869 = vmatprep.subr.mxu0 0.0
    %4870 = vmatpush1.msra.mxu0 0.0
    %4871 = vmatprep.subr.mxu0 0.0
    %4872 = vmatpush1.msra.mxu0 0.0
    %4873 = vmatprep.subr.mxu0 0.0
    %4874 = vmatpush1.msra.mxu0 0.0
    %4875 = vmatprep.subr.mxu0 0.0
    %4876 = vmatpush1.msra.mxu0 0.0
    %4877 = vmatprep.subr.mxu0 0.0
    %4878 = vmatpush1.msra.mxu0 0.0
    %4879 = vmatprep.subr.mxu0 0.0
    %4880 = vmatpush1.msra.mxu0 0.0
    %4881 = vmatprep.subr.mxu0 0.0
    %4882 = vmatpush1.msra.mxu0 0.0
    %4883 = vmatprep.subr.mxu0 0.0
    %4884 = vmatpush1.msra.mxu0 0.0
    %4885 = vmatprep.mubr.f32.mxu0 0.0
    %4886 = vmatmul.mubr.f32.gmra.mrb[0].mxu0 %v4816
    %v4887 = vpop.f32.mrb[0].mxu0
    %v4888 = vadd.f32 %v4814, %v4887
    %v4889 = vpop.f32.mrb[0].mxu0
    %4890 = vmatprep.mubr.f32.mxu0 0.0
    %4891 = vmatmul.mubr.f32.gmra.mrb[0].mxu0 %v4819
    %v4892 = vpop.f32.mrb[0].mxu0
    %v4893 = vadd.f32 %v4814, %v4892
    %v4894 = vpop.f32.mrb[0].mxu0
    %4895 = vdwg.mxu0
    %v4896 = vadd.f32 %v4692, %v4888
    %v4897 = vadd.f32 %v4693, %v4893
    %v4898 = vld [vmem:[%s2 + $0x2c0] sm:$0x1]
    %v4899 = vld [vmem:[%s2 + $0x2c8] sm:$0x1]
    %v4900 = vsel %vm2015, %v4896, 0.0
    %4901 = vadd.xlane.f32.xlu0 %v4900
    %v4902 = vpop.xlane.xlu0 %4901
    %v4903 = vsel %vm2015, %v4897, 0.0
    %4904 = vadd.xlane.f32.xlu0 %v4903
    %v4905 = vpop.xlane.xlu0 %4904
    %v4906 = vmul.f32 %v4902, %v2512
    %v4907 = vmul.f32 %v4905, %v2512
    %v4908 = vsub.f32 %v4896, %v4906
    %v4909 = vsub.f32 %v4897, %v4907
    %v4910 = vmul.f32 %v4908, %v4908
    %v4911 = vmul.f32 %v4909, %v4909
    %v4912 = vsel %vm2015, %v4910, 0.0
    %4913 = vadd.xlane.f32.xlu0 %v4912
    %v4914 = vpop.xlane.xlu0 %4913
    %v4915 = vsel %vm2015, %v4911, 0.0
    %4916 = vadd.xlane.f32.xlu0 %v4915
    %v4917 = vpop.xlane.xlu0 %4916
    %v4918 = vmul.f32 %v4914, %v2512
    %v4919 = vmul.f32 %v4917, %v2512
    %v4920 = vadd.f32 %v4918, 1e-05
    %v4921 = vadd.f32 %v4919, 1e-05
    %v4922 = vrsqrt.pop %v4920
    %v4923 = vrsqrt.pop %v4921
    %v4924 = vmul.f32 %v4908, %v4922
    %v4925 = vmul.f32 %v4909, %v4923
    %v4926 = vlaneseq
    %v4927 = vshrl.u32 %v4926, 7
    %v4928 = vsub.s32 0, %v4927
    %v4929 = vrot.slane %v4898, %v4928
    %v4930 = vmul.f32 %v4924, %v4929
    %v4931 = vmul.f32 %v4925, %v4929
    %v4932 = vlaneseq
    %v4933 = vshrl.u32 %v4932, 7
    %v4934 = vsub.s32 0, %v4933
    %v4935 = vrot.slane %v4899, %v4934
    %v4936 = vadd.f32 %v4930, %v4935
    %v4937 = vadd.f32 %v4931, %v4935
    %v4938 = vld [vmem:[%s2 + $0x300] sm:$0xff]
    %v4939 = vld [vmem:[%s2 + $0x308] sm:$0xff]
    %v4940 = vld [vmem:[%s2 + $0x310] sm:$0xff]
    %v4941 = vld [vmem:[%s2 + $0x318] sm:$0xff]
    %v4943 = vsel %vm2015, %v4936, 0
    %v4946 = vsel %vm2015, %v4937, 0
    %4948 = vmatprep.subr.mxu0 0.0
    %4949 = vmatpush1.msra.mxu0 %v4938
    %4950 = vmatprep.subr.mxu0 0.0
    %4951 = vmatpush1.msra.mxu0 %v4939
    %4952 = vmatprep.subr.mxu0 0.0
    %4953 = vmatpush1.msra.mxu0 %v4940
    %4954 = vmatprep.subr.mxu0 0.0
    %4955 = vmatpush1.msra.mxu0 %v4941
    %4956 = vmatprep.subr.mxu0 0.0
    %4957 = vmatpush1.msra.mxu0 0.0
    %4958 = vmatprep.subr.mxu0 0.0
    %4959 = vmatpush1.msra.mxu0 0.0
    %4960 = vmatprep.subr.mxu0 0.0
    %4961 = vmatpush1.msra.mxu0 0.0
    %4962 = vmatprep.subr.mxu0 0.0
    %4963 = vmatpush1.msra.mxu0 0.0
    %4964 = vmatprep.subr.mxu0 0.0
    %4965 = vmatpush1.msra.mxu0 0.0
    %4966 = vmatprep.subr.mxu0 0.0
    %4967 = vmatpush1.msra.mxu0 0.0
    %4968 = vmatprep.subr.mxu0 0.0
    %4969 = vmatpush1.msra.mxu0 0.0
    %4970 = vmatprep.subr.mxu0 0.0
    %4971 = vmatpush1.msra.mxu0 0.0
    %4972 = vmatprep.subr.mxu0 0.0
    %4973 = vmatpush1.msra.mxu0 0.0
    %4974 = vmatprep.subr.mxu0 0.0
    %4975 = vmatpush1.msra.mxu0 0.0
    %4976 = vmatprep.subr.mxu0 0.0
    %4977 = vmatpush1.msra.mxu0 0.0
    %4978 = vmatprep.subr.mxu0 0.0
    %4979 = vmatpush1.msra.mxu0 0.0
    %4980 = vmatprep.subr.mxu0 0.0
    %4981 = vmatpush1.msra.mxu0 0.0
    %4982 = vmatprep.subr.mxu0 0.0
    %4983 = vmatpush1.msra.mxu0 0.0
    %4984 = vmatprep.subr.mxu0 0.0
    %4985 = vmatpush1.msra.mxu0 0.0
    %4986 = vmatprep.subr.mxu0 0.0
    %4987 = vmatpush1.msra.mxu0 0.0
    %4988 = vmatprep.subr.mxu0 0.0
    %4989 = vmatpush1.msra.mxu0 0.0
    %4990 = vmatprep.subr.mxu0 0.0
    %4991 = vmatpush1.msra.mxu0 0.0
    %4992 = vmatprep.subr.mxu0 0.0
    %4993 = vmatpush1.msra.mxu0 0.0
    %4994 = vmatprep.subr.mxu0 0.0
    %4995 = vmatpush1.msra.mxu0 0.0
    %4996 = vmatprep.subr.mxu0 0.0
    %4997 = vmatpush1.msra.mxu0 0.0
    %4998 = vmatprep.subr.mxu0 0.0
    %4999 = vmatpush1.msra.mxu0 0.0
    %5000 = vmatprep.subr.mxu0 0.0
    %5001 = vmatpush1.msra.mxu0 0.0
    %5002 = vmatprep.subr.mxu0 0.0
    %5003 = vmatpush1.msra.mxu0 0.0
    %5004 = vmatprep.subr.mxu0 0.0
    %5005 = vmatpush1.msra.mxu0 0.0
    %5006 = vmatprep.subr.mxu0 0.0
    %5007 = vmatpush1.msra.mxu0 0.0
    %5008 = vmatprep.subr.mxu0 0.0
    %5009 = vmatpush1.msra.mxu0 0.0
    %5010 = vmatprep.subr.mxu0 0.0
    %5011 = vmatpush1.msra.mxu0 0.0
    %5012 = vmatprep.mubr.f32.mxu0 0.0
    %5013 = vmatmul.mubr.f32.gmra.mrb[0].mxu0 %v4943
    %v5014 = vpop.f32.mrb[0].mxu0
    %v5015 = vadd.f32 0.0, %v5014
    %v5016 = vpop.f32.mrb[0].mxu0
    %5017 = vmatprep.mubr.f32.mxu0 0.0
    %5018 = vmatmul.mubr.f32.gmra.mrb[0].mxu0 %v4946
    %v5019 = vpop.f32.mrb[0].mxu0
    %v5020 = vadd.f32 0.0, %v5019
    %v5021 = vpop.f32.mrb[0].mxu0
    %5022 = vdwg.mxu0
    %v5023 = vld [vmem:[%s1 + $0xe8] sm:$0xf]
    %v5024 = vld [vmem:[%s1 + $0xec] sm:$0xf]
    %v5025 = vld [vmem:[%s1 + $0xf0] sm:$0xf]
    %v5026 = vld [vmem:[%s1 + $0xf4] sm:$0xf]
    %v5027 = vpack.c.bf16 %v4008, %v4007
    %v5028 = vpack.c.bf16 %v4010, %v4009
    %v5033 = vunpack.c.l.b16 %v5023
    %v5034 = vunpack.c.l.b16 %v5024
    %v5035 = vunpack.c.l.b16 %v5025
    %v5036 = vunpack.c.l.b16 %v5026
    %v5037 = vpack.c.b16 %v5034, %v5033
    %v5038 = vpack.c.b16 %v5036, %v5035
    %v5042 = vsel %vm2015, %v5027, 0
    %v5045 = vsel %vm2015, %v5028, 0
    %5047 = vmatprep.subr.bf16.mxu0 0
    %5048 = vmatpush1.bf16.msra.mxu0 %v5037
    %5049 = vmatprep.subr.bf16.mxu0 0
    %5050 = vmatpush1.bf16.msra.mxu0 %v5038
    %5051 = vmatprep.subr.bf16.mxu0 0
    %5052 = vmatpush1.bf16.msra.mxu0 0
    %5053 = vmatprep.subr.bf16.mxu0 0
    %5054 = vmatpush1.bf16.msra.mxu0 0
    %5055 = vmatprep.subr.bf16.mxu0 0
    %5056 = vmatpush1.bf16.msra.mxu0 0
    %5057 = vmatprep.subr.bf16.mxu0 0
    %5058 = vmatpush1.bf16.msra.mxu0 0
    %5059 = vmatprep.subr.bf16.mxu0 0
    %5060 = vmatpush1.bf16.msra.mxu0 0
    %5061 = vmatprep.subr.bf16.mxu0 0
    %5062 = vmatpush1.bf16.msra.mxu0 0
    %5063 = vmatprep.subr.bf16.mxu0 0
    %5064 = vmatpush1.bf16.msra.mxu0 0
    %5065 = vmatprep.subr.bf16.mxu0 0
    %5066 = vmatpush1.bf16.msra.mxu0 0
    %5067 = vmatprep.subr.bf16.mxu0 0
    %5068 = vmatpush1.bf16.msra.mxu0 0
    %5069 = vmatprep.subr.bf16.mxu0 0
    %5070 = vmatpush1.bf16.msra.mxu0 0
    %5071 = vmatprep.subr.bf16.mxu0 0
    %5072 = vmatpush1.bf16.msra.mxu0 0
    %5073 = vmatprep.subr.bf16.mxu0 0
    %5074 = vmatpush1.bf16.msra.mxu0 0
    %5075 = vmatprep.subr.bf16.mxu0 0
    %5076 = vmatpush1.bf16.msra.mxu0 0
    %5077 = vmatprep.subr.bf16.mxu0 0
    %5078 = vmatpush1.bf16.msra.mxu0 0
    %5079 = vmatprep.mubr.bf16.mxu0 0
    %5080 = vmatmul.mubr.bf16.gmra.mrb[0].mxu0 %v5042
    %v5081 = vpop.f32.mrb[0].mxu0
    %v5082 = vadd.f32 0.0, %v5081
    %v5083 = vpop.f32.mrb[0].mxu0
    %v5084 = vpop.f32.mrb[0].mxu0
    %v5085 = vadd.f32 0.0, %v5084
    %v5086 = vpop.f32.mrb[0].mxu0
    %5087 = vmatprep.mubr.bf16.mxu0 0
    %5088 = vmatmul.mubr.bf16.gmra.mrb[0].mxu0 %v5045
    %v5089 = vpop.f32.mrb[0].mxu0
    %v5090 = vadd.f32 0.0, %v5089
    %v5091 = vpop.f32.mrb[0].mxu0
    %v5092 = vpop.f32.mrb[0].mxu0
    %v5093 = vadd.f32 0.0, %v5092
    %v5094 = vpop.f32.mrb[0].mxu0
    %5095 = vdwg.mxu0
    %v5096 = vld [vmem:[%s2 + $0x2d0] sm:$0xff]
    %v5097 = vld [vmem:[%s2 + $0x2d8] sm:$0xff]
    %v5098 = vld [vmem:[%s2 + $0x2e0] sm:$0xff]
    %v5099 = vld [vmem:[%s2 + $0x2e8] sm:$0xff]
    %v5100 = vadd.f32 %v5082, %v5096
    %v5101 = vadd.f32 %v5085, %v5097
    %v5102 = vadd.f32 %v5090, %v5098
    %v5103 = vadd.f32 %v5093, %v5099
    %v5105 = vsel %vm2015, %v5015, 0
    %v5108 = vsel %vm2015, %v5020, 0
    %v5111 = vsel %vm2015, %v5100, 0
    %v5114 = vsel %vm2015, %v5101, 0
    %v5117 = vsel %vm2015, %v5102, 0
    %v5120 = vsel %vm2015, %v5103, 0
    %5122 = vmatprep.subr.mxu0 0.0
    %5123 = vmatpush1.xpose.msra.mxu0 %v5111
    %5124 = vmatprep.subr.mxu0 0.0
    %5125 = vmatpush1.xpose.msra.mxu0 %v5114
    %5126 = vmatprep.subr.mxu0 0.0
    %5127 = vmatpush1.xpose.msra.mxu0 %v5117
    %5128 = vmatprep.subr.mxu0 0.0
    %5129 = vmatpush1.xpose.msra.mxu0 %v5120
    %5130 = vmatprep.subr.mxu0 0.0
    %5131 = vmatpush1.xpose.msra.mxu0 0.0
    %5132 = vmatprep.subr.mxu0 0.0
    %5133 = vmatpush1.xpose.msra.mxu0 0.0
    %5134 = vmatprep.subr.mxu0 0.0
    %5135 = vmatpush1.xpose.msra.mxu0 0.0
    %5136 = vmatprep.subr.mxu0 0.0
    %5137 = vmatpush1.xpose.msra.mxu0 0.0
    %5138 = vmatprep.subr.mxu0 0.0
    %5139 = vmatpush1.xpose.msra.mxu0 0.0
    %5140 = vmatprep.subr.mxu0 0.0
    %5141 = vmatpush1.xpose.msra.mxu0 0.0
    %5142 = vmatprep.subr.mxu0 0.0
    %5143 = vmatpush1.xpose.msra.mxu0 0.0
    %5144 = vmatprep.subr.mxu0 0.0
    %5145 = vmatpush1.xpose.msra.mxu0 0.0
    %5146 = vmatprep.subr.mxu0 0.0
    %5147 = vmatpush1.xpose.msra.mxu0 0.0
    %5148 = vmatprep.subr.mxu0 0.0
    %5149 = vmatpush1.xpose.msra.mxu0 0.0
    %5150 = vmatprep.subr.mxu0 0.0
    %5151 = vmatpush1.xpose.msra.mxu0 0.0
    %5152 = vmatprep.subr.mxu0 0.0
    %5153 = vmatpush1.xpose.msra.mxu0 0.0
    %5154 = vmatprep.subr.mxu0 0.0
    %5155 = vmatpush1.xpose.msra.mxu0 0.0
    %5156 = vmatprep.subr.mxu0 0.0
    %5157 = vmatpush1.xpose.msra.mxu0 0.0
    %5158 = vmatprep.subr.mxu0 0.0
    %5159 = vmatpush1.xpose.msra.mxu0 0.0
    %5160 = vmatprep.subr.mxu0 0.0
    %5161 = vmatpush1.xpose.msra.mxu0 0.0
    %5162 = vmatprep.subr.mxu0 0.0
    %5163 = vmatpush1.xpose.msra.mxu0 0.0
    %5164 = vmatprep.subr.mxu0 0.0
    %5165 = vmatpush1.xpose.msra.mxu0 0.0
    %5166 = vmatprep.subr.mxu0 0.0
    %5167 = vmatpush1.xpose.msra.mxu0 0.0
    %5168 = vmatprep.subr.mxu0 0.0
    %5169 = vmatpush1.xpose.msra.mxu0 0.0
    %5170 = vmatprep.subr.mxu0 0.0
    %5171 = vmatpush1.xpose.msra.mxu0 0.0
    %5172 = vmatprep.subr.mxu0 0.0
    %5173 = vmatpush1.xpose.msra.mxu0 0.0
    %5174 = vmatprep.subr.mxu0 0.0
    %5175 = vmatpush1.xpose.msra.mxu0 0.0
    %5176 = vmatprep.subr.mxu0 0.0
    %5177 = vmatpush1.xpose.msra.mxu0 0.0
    %5178 = vmatprep.subr.mxu0 0.0
    %5179 = vmatpush1.xpose.msra.mxu0 0.0
    %5180 = vmatprep.subr.mxu0 0.0
    %5181 = vmatpush1.xpose.msra.mxu0 0.0
    %5182 = vmatprep.subr.mxu0 0.0
    %5183 = vmatpush1.xpose.msra.mxu0 0.0
    %5184 = vmatprep.subr.mxu0 0.0
    %5185 = vmatpush1.xpose.msra.mxu0 0.0
    %5186 = vmatprep.mubr.f32.mxu0 0.0
    %5187 = vmatmul.mubr.f32.gmra.mrb[0].mxu0 %v5105
    %v5188 = vpop.f32.mrb[0].mxu0
    %v5189 = vadd.f32 0.0, %v5188
    %v5190 = vpop.f32.mrb[0].mxu0
    %5191 = vmatprep.mubr.f32.mxu0 0.0
    %5192 = vmatmul.mubr.f32.gmra.mrb[0].mxu0 %v5108
    %v5193 = vpop.f32.mrb[0].mxu0
    %v5194 = vadd.f32 0.0, %v5193
    %v5195 = vpop.f32.mrb[0].mxu0
    %5196 = vdwg.mxu0
    %v5197 = vmul.f32 %v5189, 0.17677669
    %v5198 = vmul.f32 %v5194, 0.17677669
    %v5199 = vld [vmem:[%s2 + $0x2f0] sm:$0xff]
    %v5200 = vld [vmem:[%s2 + $0x2f8] sm:$0xff]
    %v5201 = vadd.f32 %v5197, %v5199
    %v5202 = vadd.f32 %v5198, %v5200
    %v5203 = vsel %vm2015, %v5201, -inf
    %5204 = vmax.xlane.f32.xlu0 %v5203
    %v5205 = vpop.xlane.xlu0 %5204
    %v5206 = vsel %vm2015, %v5202, -inf
    %5207 = vmax.xlane.f32.xlu0 %v5206
    %v5208 = vpop.xlane.xlu0 %5207
    %v5209 = vsub.f32 %v5201, %v5205
    %v5210 = vsub.f32 %v5202, %v5208
    %v5211 = vmul.f32 %v5209, 1.442695
    %v5212 = vpow.pop %v5211
    %v5213 = vmul.f32 %v5210, 1.442695
    %v5214 = vpow.pop %v5213
    %v5215 = vsel %vm2015, %v5212, 0.0
    %5216 = vadd.xlane.f32.xlu0 %v5215
    %v5217 = vpop.xlane.xlu0 %5216
    %v5218 = vsel %vm2015, %v5214, 0.0
    %5219 = vadd.xlane.f32.xlu0 %v5218
    %v5220 = vpop.xlane.xlu0 %5219
    %v5221 = vrcp.pop %v5217
    %v5222 = vrcp.pop %v5220
    %v5223 = vmul.f32 %v5212, %v5221
    %v5224 = vmul.f32 %v5214, %v5222
    %5229 = vrot.lane.b32.xlu0 %v5082, 96
    %v5230 = vpop.permute.xlu0 %5229
    %5231 = vrot.lane.b32.xlu0 %v5085, 96
    %v5232 = vpop.permute.xlu0 %5231
    %5233 = vrot.lane.b32.xlu0 %v5090, 96
    %v5234 = vpop.permute.xlu0 %5233
    %5235 = vrot.lane.b32.xlu0 %v5093, 96
    %v5236 = vpop.permute.xlu0 %5235
    %v5242 = vsel %vm2015, %v5223, 0
    %v5245 = vsel %vm2015, %v5224, 0
    %5247 = vmatprep.subr.mxu0 0.0
    %5248 = vmatpush1.msra.mxu0 %v5230
    %5249 = vmatprep.subr.mxu0 0.0
    %5250 = vmatpush1.msra.mxu0 %v5232
    %5251 = vmatprep.subr.mxu0 0.0
    %5252 = vmatpush1.msra.mxu0 %v5234
    %5253 = vmatprep.subr.mxu0 0.0
    %5254 = vmatpush1.msra.mxu0 %v5236
    %5255 = vmatprep.subr.mxu0 0.0
    %5256 = vmatpush1.msra.mxu0 0.0
    %5257 = vmatprep.subr.mxu0 0.0
    %5258 = vmatpush1.msra.mxu0 0.0
    %5259 = vmatprep.subr.mxu0 0.0
    %5260 = vmatpush1.msra.mxu0 0.0
    %5261 = vmatprep.subr.mxu0 0.0
    %5262 = vmatpush1.msra.mxu0 0.0
    %5263 = vmatprep.subr.mxu0 0.0
    %5264 = vmatpush1.msra.mxu0 0.0
    %5265 = vmatprep.subr.mxu0 0.0
    %5266 = vmatpush1.msra.mxu0 0.0
    %5267 = vmatprep.subr.mxu0 0.0
    %5268 = vmatpush1.msra.mxu0 0.0
    %5269 = vmatprep.subr.mxu0 0.0
    %5270 = vmatpush1.msra.mxu0 0.0
    %5271 = vmatprep.subr.mxu0 0.0
    %5272 = vmatpush1.msra.mxu0 0.0
    %5273 = vmatprep.subr.mxu0 0.0
    %5274 = vmatpush1.msra.mxu0 0.0
    %5275 = vmatprep.subr.mxu0 0.0
    %5276 = vmatpush1.msra.mxu0 0.0
    %5277 = vmatprep.subr.mxu0 0.0
    %5278 = vmatpush1.msra.mxu0 0.0
    %5279 = vmatprep.subr.mxu0 0.0
    %5280 = vmatpush1.msra.mxu0 0.0
    %5281 = vmatprep.subr.mxu0 0.0
    %5282 = vmatpush1.msra.mxu0 0.0
    %5283 = vmatprep.subr.mxu0 0.0
    %5284 = vmatpush1.msra.mxu0 0.0
    %5285 = vmatprep.subr.mxu0 0.0
    %5286 = vmatpush1.msra.mxu0 0.0
    %5287 = vmatprep.subr.mxu0 0.0
    %5288 = vmatpush1.msra.mxu0 0.0
    %5289 = vmatprep.subr.mxu0 0.0
    %5290 = vmatpush1.msra.mxu0 0.0
    %5291 = vmatprep.subr.mxu0 0.0
    %5292 = vmatpush1.msra.mxu0 0.0
    %5293 = vmatprep.subr.mxu0 0.0
    %5294 = vmatpush1.msra.mxu0 0.0
    %5295 = vmatprep.subr.mxu0 0.0
    %5296 = vmatpush1.msra.mxu0 0.0
    %5297 = vmatprep.subr.mxu0 0.0
    %5298 = vmatpush1.msra.mxu0 0.0
    %5299 = vmatprep.subr.mxu0 0.0
    %5300 = vmatpush1.msra.mxu0 0.0
    %5301 = vmatprep.subr.mxu0 0.0
    %5302 = vmatpush1.msra.mxu0 0.0
    %5303 = vmatprep.subr.mxu0 0.0
    %5304 = vmatpush1.msra.mxu0 0.0
    %5305 = vmatprep.subr.mxu0 0.0
    %5306 = vmatpush1.msra.mxu0 0.0
    %5307 = vmatprep.subr.mxu0 0.0
    %5308 = vmatpush1.msra.mxu0 0.0
    %5309 = vmatprep.subr.mxu0 0.0
    %5310 = vmatpush1.msra.mxu0 0.0
    %5311 = vmatprep.mubr.f32.mxu0 0.0
    %5312 = vmatmul.mubr.f32.gmra.mrb[0].mxu0 %v5242
    %v5313 = vpop.f32.mrb[0].mxu0
    %v5314 = vadd.f32 0.0, %v5313
    %v5315 = vpop.f32.mrb[0].mxu0
    %5316 = vmatprep.mubr.f32.mxu0 0.0
    %5317 = vmatmul.mubr.f32.gmra.mrb[0].mxu0 %v5245
    %v5318 = vpop.f32.mrb[0].mxu0
    %v5319 = vadd.f32 0.0, %v5318
    %v5320 = vpop.f32.mrb[0].mxu0
    %5321 = vdwg.mxu0
    %v5322 = vld [vmem:[%s2 + $0x320] sm:$0xff]
    %v5323 = vld [vmem:[%s2 + $0x328] sm:$0xff]
    %v5324 = vld [vmem:[%s2 + $0x330] sm:$0xff]
    %v5325 = vld [vmem:[%s2 + $0x338] sm:$0xff]
    %v5327 = vsel %vm2015, %v5314, 0
    %v5330 = vsel %vm2015, %v5319, 0
    %5332 = vmatprep.subr.mxu0 0.0
    %5333 = vmatpush1.msra.mxu0 %v5322
    %5334 = vmatprep.subr.mxu0 0.0
    %5335 = vmatpush1.msra.mxu0 %v5323
    %5336 = vmatprep.subr.mxu0 0.0
    %5337 = vmatpush1.msra.mxu0 %v5324
    %5338 = vmatprep.subr.mxu0 0.0
    %5339 = vmatpush1.msra.mxu0 %v5325
    %5340 = vmatprep.subr.mxu0 0.0
    %5341 = vmatpush1.msra.mxu0 0.0
    %5342 = vmatprep.subr.mxu0 0.0
    %5343 = vmatpush1.msra.mxu0 0.0
    %5344 = vmatprep.subr.mxu0 0.0
    %5345 = vmatpush1.msra.mxu0 0.0
    %5346 = vmatprep.subr.mxu0 0.0
    %5347 = vmatpush1.msra.mxu0 0.0
    %5348 = vmatprep.subr.mxu0 0.0
    %5349 = vmatpush1.msra.mxu0 0.0
    %5350 = vmatprep.subr.mxu0 0.0
    %5351 = vmatpush1.msra.mxu0 0.0
    %5352 = vmatprep.subr.mxu0 0.0
    %5353 = vmatpush1.msra.mxu0 0.0
    %5354 = vmatprep.subr.mxu0 0.0
    %5355 = vmatpush1.msra.mxu0 0.0
    %5356 = vmatprep.subr.mxu0 0.0
    %5357 = vmatpush1.msra.mxu0 0.0
    %5358 = vmatprep.subr.mxu0 0.0
    %5359 = vmatpush1.msra.mxu0 0.0
    %5360 = vmatprep.subr.mxu0 0.0
    %5361 = vmatpush1.msra.mxu0 0.0
    %5362 = vmatprep.subr.mxu0 0.0
    %5363 = vmatpush1.msra.mxu0 0.0
    %5364 = vmatprep.subr.mxu0 0.0
    %5365 = vmatpush1.msra.mxu0 0.0
    %5366 = vmatprep.subr.mxu0 0.0
    %5367 = vmatpush1.msra.mxu0 0.0
    %5368 = vmatprep.subr.mxu0 0.0
    %5369 = vmatpush1.msra.mxu0 0.0
    %5370 = vmatprep.subr.mxu0 0.0
    %5371 = vmatpush1.msra.mxu0 0.0
    %5372 = vmatprep.subr.mxu0 0.0
    %5373 = vmatpush1.msra.mxu0 0.0
    %5374 = vmatprep.subr.mxu0 0.0
    %5375 = vmatpush1.msra.mxu0 0.0
    %5376 = vmatprep.subr.mxu0 0.0
    %5377 = vmatpush1.msra.mxu0 0.0
    %5378 = vmatprep.subr.mxu0 0.0
    %5379 = vmatpush1.msra.mxu0 0.0
    %5380 = vmatprep.subr.mxu0 0.0
    %5381 = vmatpush1.msra.mxu0 0.0
    %5382 = vmatprep.subr.mxu0 0.0
    %5383 = vmatpush1.msra.mxu0 0.0
    %5384 = vmatprep.subr.mxu0 0.0
    %5385 = vmatpush1.msra.mxu0 0.0
    %5386 = vmatprep.subr.mxu0 0.0
    %5387 = vmatpush1.msra.mxu0 0.0
    %5388 = vmatprep.subr.mxu0 0.0
    %5389 = vmatpush1.msra.mxu0 0.0
    %5390 = vmatprep.subr.mxu0 0.0
    %5391 = vmatpush1.msra.mxu0 0.0
    %5392 = vmatprep.subr.mxu0 0.0
    %5393 = vmatpush1.msra.mxu0 0.0
    %5394 = vmatprep.subr.mxu0 0.0
    %5395 = vmatpush1.msra.mxu0 0.0
    %5396 = vmatprep.mubr.f32.mxu0 0.0
    %5397 = vmatmul.mubr.f32.gmra.mrb[0].mxu0 %v5327
    %v5398 = vpop.f32.mrb[0].mxu0
    %v5399 = vadd.f32 0.0, %v5398
    %v5400 = vpop.f32.mrb[0].mxu0
    %5401 = vmatprep.mubr.f32.mxu0 0.0
    %5402 = vmatmul.mubr.f32.gmra.mrb[0].mxu0 %v5330
    %v5403 = vpop.f32.mrb[0].mxu0
    %v5404 = vadd.f32 0.0, %v5403
    %v5405 = vpop.f32.mrb[0].mxu0
    %5406 = vdwg.mxu0
    %v5407 = vadd.f32 %v4936, %v5399
    %v5408 = vadd.f32 %v4937, %v5404
    %v5409 = vld [vmem:[%s2 + $0x3a0] sm:$0x1]
    %v5410 = vld [vmem:[%s2 + $0x3a8] sm:$0x1]
    %v5411 = vsel %vm2015, %v5407, 0.0
    %5412 = vadd.xlane.f32.xlu0 %v5411
    %v5413 = vpop.xlane.xlu0 %5412
    %v5414 = vsel %vm2015, %v5408, 0.0
    %5415 = vadd.xlane.f32.xlu0 %v5414
    %v5416 = vpop.xlane.xlu0 %5415
    %v5417 = vmul.f32 %v5413, %v2512
    %v5418 = vmul.f32 %v5416, %v2512
    %v5419 = vsub.f32 %v5407, %v5417
    %v5420 = vsub.f32 %v5408, %v5418
    %v5421 = vmul.f32 %v5419, %v5419
    %v5422 = vmul.f32 %v5420, %v5420
    %v5423 = vsel %vm2015, %v5421, 0.0
    %5424 = vadd.xlane.f32.xlu0 %v5423
    %v5425 = vpop.xlane.xlu0 %5424
    %v5426 = vsel %vm2015, %v5422, 0.0
    %5427 = vadd.xlane.f32.xlu0 %v5426
    %v5428 = vpop.xlane.xlu0 %5427
    %v5429 = vmul.f32 %v5425, %v2512
    %v5430 = vmul.f32 %v5428, %v2512
    %v5431 = vadd.f32 %v5429, 1e-05
    %v5432 = vadd.f32 %v5430, 1e-05
    %v5433 = vrsqrt.pop %v5431
    %v5434 = vrsqrt.pop %v5432
    %v5435 = vmul.f32 %v5419, %v5433
    %v5436 = vmul.f32 %v5420, %v5434
    %v5437 = vlaneseq
    %v5438 = vshrl.u32 %v5437, 7
    %v5439 = vsub.s32 0, %v5438
    %v5440 = vrot.slane %v5409, %v5439
    %v5441 = vmul.f32 %v5435, %v5440
    %v5442 = vmul.f32 %v5436, %v5440
    %v5443 = vlaneseq
    %v5444 = vshrl.u32 %v5443, 7
    %v5445 = vsub.s32 0, %v5444
    %v5446 = vrot.slane %v5410, %v5445
    %v5447 = vadd.f32 %v5441, %v5446
    %v5448 = vadd.f32 %v5442, %v5446
    %v5449 = vld [vmem:[%s2 + $0x340] sm:$0xff]
    %v5450 = vld [vmem:[%s2 + $0x348] sm:$0xff]
    %v5451 = vld [vmem:[%s2 + $0x350] sm:$0xff]
    %v5452 = vld [vmem:[%s2 + $0x358] sm:$0xff]
    %v5453 = vld [vmem:[%s2 + $0x3b0] sm:$0x1]
    %v5454 = vlaneseq
    %v5455 = vshrl.u32 %v5454, 7
    %v5456 = vsub.s32 0, %v5455
    %v5457 = vrot.slane %v5453, %v5456
    %v5459 = vsel %vm2015, %v5447, 0
    %v5462 = vsel %vm2015, %v5448, 0
    %5464 = vmatprep.subr.mxu0 0.0
    %5465 = vmatpush1.msra.mxu0 %v5449
    %5466 = vmatprep.subr.mxu0 0.0
    %5467 = vmatpush1.msra.mxu0 %v5450
    %5468 = vmatprep.subr.mxu0 0.0
    %5469 = vmatpush1.msra.mxu0 %v5451
    %5470 = vmatprep.subr.mxu0 0.0
    %5471 = vmatpush1.msra.mxu0 %v5452
    %5472 = vmatprep.subr.mxu0 0.0
    %5473 = vmatpush1.msra.mxu0 0.0
    %5474 = vmatprep.subr.mxu0 0.0
    %5475 = vmatpush1.msra.mxu0 0.0
    %5476 = vmatprep.subr.mxu0 0.0
    %5477 = vmatpush1.msra.mxu0 0.0
    %5478 = vmatprep.subr.mxu0 0.0
    %5479 = vmatpush1.msra.mxu0 0.0
    %5480 = vmatprep.subr.mxu0 0.0
    %5481 = vmatpush1.msra.mxu0 0.0
    %5482 = vmatprep.subr.mxu0 0.0
    %5483 = vmatpush1.msra.mxu0 0.0
    %5484 = vmatprep.subr.mxu0 0.0
    %5485 = vmatpush1.msra.mxu0 0.0
    %5486 = vmatprep.subr.mxu0 0.0
    %5487 = vmatpush1.msra.mxu0 0.0
    %5488 = vmatprep.subr.mxu0 0.0
    %5489 = vmatpush1.msra.mxu0 0.0
    %5490 = vmatprep.subr.mxu0 0.0
    %5491 = vmatpush1.msra.mxu0 0.0
    %5492 = vmatprep.subr.mxu0 0.0
    %5493 = vmatpush1.msra.mxu0 0.0
    %5494 = vmatprep.subr.mxu0 0.0
    %5495 = vmatpush1.msra.mxu0 0.0
    %5496 = vmatprep.subr.mxu0 0.0
    %5497 = vmatpush1.msra.mxu0 0.0
    %5498 = vmatprep.subr.mxu0 0.0
    %5499 = vmatpush1.msra.mxu0 0.0
    %5500 = vmatprep.subr.mxu0 0.0
    %5501 = vmatpush1.msra.mxu0 0.0
    %5502 = vmatprep.subr.mxu0 0.0
    %5503 = vmatpush1.msra.mxu0 0.0
    %5504 = vmatprep.subr.mxu0 0.0
    %5505 = vmatpush1.msra.mxu0 0.0
    %5506 = vmatprep.subr.mxu0 0.0
    %5507 = vmatpush1.msra.mxu0 0.0
    %5508 = vmatprep.subr.mxu0 0.0
    %5509 = vmatpush1.msra.mxu0 0.0
    %5510 = vmatprep.subr.mxu0 0.0
    %5511 = vmatpush1.msra.mxu0 0.0
    %5512 = vmatprep.subr.mxu0 0.0
    %5513 = vmatpush1.msra.mxu0 0.0
    %5514 = vmatprep.subr.mxu0 0.0
    %5515 = vmatpush1.msra.mxu0 0.0
    %5516 = vmatprep.subr.mxu0 0.0
    %5517 = vmatpush1.msra.mxu0 0.0
    %5518 = vmatprep.subr.mxu0 0.0
    %5519 = vmatpush1.msra.mxu0 0.0
    %5520 = vmatprep.subr.mxu0 0.0
    %5521 = vmatpush1.msra.mxu0 0.0
    %5522 = vmatprep.subr.mxu0 0.0
    %5523 = vmatpush1.msra.mxu0 0.0
    %5524 = vmatprep.subr.mxu0 0.0
    %5525 = vmatpush1.msra.mxu0 0.0
    %5526 = vmatprep.subr.mxu0 0.0
    %5527 = vmatpush1.msra.mxu0 0.0
    %5528 = vmatprep.mubr.f32.mxu0 0.0
    %5529 = vmatmul.mubr.f32.gmra.mrb[0].mxu0 %v5459
    %v5530 = vpop.f32.mrb[0].mxu0
    %v5531 = vadd.f32 %v5457, %v5530
    %v5532 = vpop.f32.mrb[0].mxu0
    %5533 = vmatprep.mubr.f32.mxu0 0.0
    %5534 = vmatmul.mubr.f32.gmra.mrb[0].mxu0 %v5462
    %v5535 = vpop.f32.mrb[0].mxu0
    %v5536 = vadd.f32 %v5457, %v5535
    %v5537 = vpop.f32.mrb[0].mxu0
    %5538 = vdwg.mxu0
    %v5539 = vmul.f32 %v5531, %v5531
    %v5540 = vmul.f32 %v5536, %v5536
    %v5541 = vmul.f32 %v5531, %v5539
    %v5542 = vmul.f32 %v5536, %v5540
    %v5543 = vmul.f32 %v5541, 0.044715
    %v5544 = vmul.f32 %v5542, 0.044715
    %v5545 = vadd.f32 %v5531, %v5543
    %v5546 = vadd.f32 %v5536, %v5544
    %v5547 = vmul.f32 %v5545, 0.7978846
    %v5548 = vmul.f32 %v5546, 0.7978846
    %v5549 = vtanh.pop %v5547
    %v5550 = vtanh.pop %v5548
    %v5551 = vadd.f32 %v5549, 1.0
    %v5552 = vadd.f32 %v5550, 1.0
    %v5553 = vmul.f32 %v5551, 0.5
    %v5554 = vmul.f32 %v5552, 0.5
    %v5555 = vmul.f32 %v5531, %v5553
    %v5556 = vmul.f32 %v5536, %v5554
    %v5557 = vld [vmem:[%s2 + $0x360] sm:$0xff]
    %v5558 = vld [vmem:[%s2 + $0x368] sm:$0xff]
    %v5559 = vld [vmem:[%s2 + $0x370] sm:$0xff]
    %v5560 = vld [vmem:[%s2 + $0x378] sm:$0xff]
    %v5561 = vld [vmem:[%s2 + $0x380] sm:$0xff]
    %v5562 = vld [vmem:[%s2 + $0x388] sm:$0xff]
    %v5563 = vld [vmem:[%s2 + $0x390] sm:$0xff]
    %v5564 = vld [vmem:[%s2 + $0x398] sm:$0xff]
    %v5565 = vld [vmem:[%s2 + $0x3b8] sm:$0x1]
    %v5566 = vlaneseq
    %v5567 = vshrl.u32 %v5566, 7
    %v5568 = vsub.s32 0, %v5567
    %v5569 = vrot.slane %v5565, %v5568
    %v5571 = vsel %vm2442, %v5555, 0
    %v5574 = vsel %vm2442, %v5556, 0
    %5576 = vmatprep.subr.mxu0 0.0
    %5577 = vmatpush1.msra.mxu0 %v5557
    %5578 = vmatprep.subr.mxu0 0.0
    %5579 = vmatpush1.msra.mxu0 %v5558
    %5580 = vmatprep.subr.mxu0 0.0
    %5581 = vmatpush1.msra.mxu0 %v5559
    %5582 = vmatprep.subr.mxu0 0.0
    %5583 = vmatpush1.msra.mxu0 %v5560
    %5584 = vmatprep.subr.mxu0 0.0
    %5585 = vmatpush1.msra.mxu0 %v5561
    %5586 = vmatprep.subr.mxu0 0.0
    %5587 = vmatpush1.msra.mxu0 %v5562
    %5588 = vmatprep.subr.mxu0 0.0
    %5589 = vmatpush1.msra.mxu0 %v5563
    %5590 = vmatprep.subr.mxu0 0.0
    %5591 = vmatpush1.msra.mxu0 %v5564
    %5592 = vmatprep.subr.mxu0 0.0
    %5593 = vmatpush1.msra.mxu0 0.0
    %5594 = vmatprep.subr.mxu0 0.0
    %5595 = vmatpush1.msra.mxu0 0.0
    %5596 = vmatprep.subr.mxu0 0.0
    %5597 = vmatpush1.msra.mxu0 0.0
    %5598 = vmatprep.subr.mxu0 0.0
    %5599 = vmatpush1.msra.mxu0 0.0
    %5600 = vmatprep.subr.mxu0 0.0
    %5601 = vmatpush1.msra.mxu0 0.0
    %5602 = vmatprep.subr.mxu0 0.0
    %5603 = vmatpush1.msra.mxu0 0.0
    %5604 = vmatprep.subr.mxu0 0.0
    %5605 = vmatpush1.msra.mxu0 0.0
    %5606 = vmatprep.subr.mxu0 0.0
    %5607 = vmatpush1.msra.mxu0 0.0
    %5608 = vmatprep.subr.mxu0 0.0
    %5609 = vmatpush1.msra.mxu0 0.0
    %5610 = vmatprep.subr.mxu0 0.0
    %5611 = vmatpush1.msra.mxu0 0.0
    %5612 = vmatprep.subr.mxu0 0.0
    %5613 = vmatpush1.msra.mxu0 0.0
    %5614 = vmatprep.subr.mxu0 0.0
    %5615 = vmatpush1.msra.mxu0 0.0
    %5616 = vmatprep.subr.mxu0 0.0
    %5617 = vmatpush1.msra.mxu0 0.0
    %5618 = vmatprep.subr.mxu0 0.0
    %5619 = vmatpush1.msra.mxu0 0.0
    %5620 = vmatprep.subr.mxu0 0.0
    %5621 = vmatpush1.msra.mxu0 0.0
    %5622 = vmatprep.subr.mxu0 0.0
    %5623 = vmatpush1.msra.mxu0 0.0
    %5624 = vmatprep.subr.mxu0 0.0
    %5625 = vmatpush1.msra.mxu0 0.0
    %5626 = vmatprep.subr.mxu0 0.0
    %5627 = vmatpush1.msra.mxu0 0.0
    %5628 = vmatprep.subr.mxu0 0.0
    %5629 = vmatpush1.msra.mxu0 0.0
    %5630 = vmatprep.subr.mxu0 0.0
    %5631 = vmatpush1.msra.mxu0 0.0
    %5632 = vmatprep.subr.mxu0 0.0
    %5633 = vmatpush1.msra.mxu0 0.0
    %5634 = vmatprep.subr.mxu0 0.0
    %5635 = vmatpush1.msra.mxu0 0.0
    %5636 = vmatprep.subr.mxu0 0.0
    %5637 = vmatpush1.msra.mxu0 0.0
    %5638 = vmatprep.subr.mxu0 0.0
    %5639 = vmatpush1.msra.mxu0 0.0
    %5640 = vmatprep.mubr.f32.mxu0 0.0
    %5641 = vmatmul.mubr.f32.gmra.mrb[0].mxu0 %v5571
    %v5642 = vpop.f32.mrb[0].mxu0
    %v5643 = vadd.f32 %v5569, %v5642
    %v5644 = vpop.f32.mrb[0].mxu0
    %5645 = vmatprep.mubr.f32.mxu0 0.0
    %5646 = vmatmul.mubr.f32.gmra.mrb[0].mxu0 %v5574
    %v5647 = vpop.f32.mrb[0].mxu0
    %v5648 = vadd.f32 %v5569, %v5647
    %v5649 = vpop.f32.mrb[0].mxu0
    %5650 = vdwg.mxu0
    %v5651 = vadd.f32 %v5447, %v5643
    %v5652 = vadd.f32 %v5448, %v5648
    %v5653 = vld [vmem:[%s2 + $0x3c0] sm:$0x1]
    %v5654 = vld [vmem:[%s2 + $0x3c8] sm:$0x1]
    %v5655 = vsel %vm2015, %v5651, 0.0
    %5656 = vadd.xlane.f32.xlu0 %v5655
    %v5657 = vpop.xlane.xlu0 %5656
    %v5658 = vsel %vm2015, %v5652, 0.0
    %5659 = vadd.xlane.f32.xlu0 %v5658
    %v5660 = vpop.xlane.xlu0 %5659
    %v5661 = vmul.f32 %v5657, %v2512
    %v5662 = vmul.f32 %v5660, %v2512
    %v5663 = vsub.f32 %v5651, %v5661
    %v5664 = vsub.f32 %v5652, %v5662
    %v5665 = vmul.f32 %v5663, %v5663
    %v5666 = vmul.f32 %v5664, %v5664
    %v5667 = vsel %vm2015, %v5665, 0.0
    %5668 = vadd.xlane.f32.xlu0 %v5667
    %v5669 = vpop.xlane.xlu0 %5668
    %v5670 = vsel %vm2015, %v5666, 0.0
    %5671 = vadd.xlane.f32.xlu0 %v5670
    %v5672 = vpop.xlane.xlu0 %5671
    %v5673 = vmul.f32 %v5669, %v2512
    %v5674 = vmul.f32 %v5672, %v2512
    %v5675 = vadd.f32 %v5673, 1e-05
    %v5676 = vadd.f32 %v5674, 1e-05
    %v5677 = vrsqrt.pop %v5675
    %v5678 = vrsqrt.pop %v5676
    %v5679 = vmul.f32 %v5663, %v5677
    %v5680 = vmul.f32 %v5664, %v5678
    %v5681 = vlaneseq
    %v5682 = vshrl.u32 %v5681, 7
    %v5683 = vsub.s32 0, %v5682
    %v5684 = vrot.slane %v5653, %v5683
    %v5685 = vmul.f32 %v5679, %v5684
    %v5686 = vmul.f32 %v5680, %v5684
    %v5687 = vlaneseq
    %v5688 = vshrl.u32 %v5687, 7
    %v5689 = vsub.s32 0, %v5688
    %v5690 = vrot.slane %v5654, %v5689
    %v5691 = vadd.f32 %v5685, %v5690
    %v5692 = vadd.f32 %v5686, %v5690
    %v5693 = vld [vmem:[%s2 + $0x3d0] sm:$0xff]
    %v5694 = vld [vmem:[%s2 + $0x3d8] sm:$0xff]
    %v5695 = vld [vmem:[%s2 + $0x3e0] sm:$0xff]
    %v5696 = vld [vmem:[%s2 + $0x3e8] sm:$0xff]
    %v5697 = vld [vmem:[%s2 + $0x3f0] sm:$0x1]
    %v5698 = vlaneseq
    %v5699 = vshrl.u32 %v5698, 7
    %v5700 = vsub.s32 0, %v5699
    %v5701 = vrot.slane %v5697, %v5700
    %v5703 = vsel %vm2015, %v5691, 0
    %v5706 = vsel %vm2015, %v5692, 0
    %5708 = vmatprep.subr.mxu0 0.0
    %5709 = vmatpush1.msra.mxu0 %v5693
    %5710 = vmatprep.subr.mxu0 0.0
    %5711 = vmatpush1.msra.mxu0 %v5694
    %5712 = vmatprep.subr.mxu0 0.0
    %5713 = vmatpush1.msra.mxu0 %v5695
    %5714 = vmatprep.subr.mxu0 0.0
    %5715 = vmatpush1.msra.mxu0 %v5696
    %5716 = vmatprep.subr.mxu0 0.0
    %5717 = vmatpush1.msra.mxu0 0.0
    %5718 = vmatprep.subr.mxu0 0.0
    %5719 = vmatpush1.msra.mxu0 0.0
    %5720 = vmatprep.subr.mxu0 0.0
    %5721 = vmatpush1.msra.mxu0 0.0
    %5722 = vmatprep.subr.mxu0 0.0
    %5723 = vmatpush1.msra.mxu0 0.0
    %5724 = vmatprep.subr.mxu0 0.0
    %5725 = vmatpush1.msra.mxu0 0.0
    %5726 = vmatprep.subr.mxu0 0.0
    %5727 = vmatpush1.msra.mxu0 0.0
    %5728 = vmatprep.subr.mxu0 0.0
    %5729 = vmatpush1.msra.mxu0 0.0
    %5730 = vmatprep.subr.mxu0 0.0
    %5731 = vmatpush1.msra.mxu0 0.0
    %5732 = vmatprep.subr.mxu0 0.0
    %5733 = vmatpush1.msra.mxu0 0.0
    %5734 = vmatprep.subr.mxu0 0.0
    %5735 = vmatpush1.msra.mxu0 0.0
    %5736 = vmatprep.subr.mxu0 0.0
    %5737 = vmatpush1.msra.mxu0 0.0
    %5738 = vmatprep.subr.mxu0 0.0
    %5739 = vmatpush1.msra.mxu0 0.0
    %5740 = vmatprep.subr.mxu0 0.0
    %5741 = vmatpush1.msra.mxu0 0.0
    %5742 = vmatprep.subr.mxu0 0.0
    %5743 = vmatpush1.msra.mxu0 0.0
    %5744 = vmatprep.subr.mxu0 0.0
    %5745 = vmatpush1.msra.mxu0 0.0
    %5746 = vmatprep.subr.mxu0 0.0
    %5747 = vmatpush1.msra.mxu0 0.0
    %5748 = vmatprep.subr.mxu0 0.0
    %5749 = vmatpush1.msra.mxu0 0.0
    %5750 = vmatprep.subr.mxu0 0.0
    %5751 = vmatpush1.msra.mxu0 0.0
    %5752 = vmatprep.subr.mxu0 0.0
    %5753 = vmatpush1.msra.mxu0 0.0
    %5754 = vmatprep.subr.mxu0 0.0
    %5755 = vmatpush1.msra.mxu0 0.0
    %5756 = vmatprep.subr.mxu0 0.0
    %5757 = vmatpush1.msra.mxu0 0.0
    %5758 = vmatprep.subr.mxu0 0.0
    %5759 = vmatpush1.msra.mxu0 0.0
    %5760 = vmatprep.subr.mxu0 0.0
    %5761 = vmatpush1.msra.mxu0 0.0
    %5762 = vmatprep.subr.mxu0 0.0
    %5763 = vmatpush1.msra.mxu0 0.0
    %5764 = vmatprep.subr.mxu0 0.0
    %5765 = vmatpush1.msra.mxu0 0.0
    %5766 = vmatprep.subr.mxu0 0.0
    %5767 = vmatpush1.msra.mxu0 0.0
    %5768 = vmatprep.subr.mxu0 0.0
    %5769 = vmatpush1.msra.mxu0 0.0
    %5770 = vmatprep.subr.mxu0 0.0
    %5771 = vmatpush1.msra.mxu0 0.0
    %5772 = vmatprep.mubr.f32.mxu0 0.0
    %5773 = vmatmul.mubr.f32.gmra.mrb[0].mxu0 %v5703
    %v5774 = vpop.f32.mrb[0].mxu0
    %v5775 = vadd.f32 %v5701, %v5774
    %v5776 = vpop.f32.mrb[0].mxu0
    %5777 = vmatprep.mubr.f32.mxu0 0.0
    %5778 = vmatmul.mubr.f32.gmra.mrb[0].mxu0 %v5706
    %v5779 = vpop.f32.mrb[0].mxu0
    %v5780 = vadd.f32 %v5701, %v5779
    %v5781 = vpop.f32.mrb[0].mxu0
    %5782 = vdwg.mxu0
    %v5783 = vsel %vm193, %v5775, -inf
    %v5784 = vsel %vm193, %v5780, -inf
    %v5785 = vmax.f32 %v5783, %v5784
    %v5786 = vrot.slane %v5785, 4
    %v5787 = vmax.f32 %v5785, %v5786
    %v5788 = vrot.slane %v5787, 2
    %v5789 = vmax.f32 %v5787, %v5788
    %v5790 = vrot.slane %v5789, 1
    %v5791 = vmax.f32 %v5789, %v5790
    %v5792 = vsub.f32 %v5775, %v5791
    %v5793 = vsub.f32 %v5780, %v5791
    %v5794 = vmul.f32 %v5792, 1.442695
    %v5795 = vpow.pop %v5794
    %v5796 = vmul.f32 %v5793, 1.442695
    %v5797 = vpow.pop %v5796
    %v5798 = vld [vmem:[%s2 + $0x3f8] sm:$0x3]
    %v5799 = vmul.f32 %v5775, %v5795
    %v5800 = vmul.f32 %v5780, %v5797
    %v5802 = vsel %vm193, %v5798, 0
    %5804 = vmatprep.subr.mxu0 0.0
    %5805 = vmatpush1.msra.mxu0 %v5799
    %5806 = vmatprep.subr.mxu0 0.0
    %5807 = vmatpush1.msra.mxu0 %v5800
    %5808 = vmatprep.subr.mxu0 0.0
    %5809 = vmatpush1.msra.mxu0 0.0
    %5810 = vmatprep.subr.mxu0 0.0
    %5811 = vmatpush1.msra.mxu0 0.0
    %5812 = vmatprep.subr.mxu0 0.0
    %5813 = vmatpush1.msra.mxu0 0.0
    %5814 = vmatprep.subr.mxu0 0.0
    %5815 = vmatpush1.msra.mxu0 0.0
    %5816 = vmatprep.subr.mxu0 0.0
    %5817 = vmatpush1.msra.mxu0 0.0
    %5818 = vmatprep.subr.mxu0 0.0
    %5819 = vmatpush1.msra.mxu0 0.0
    %5820 = vmatprep.subr.mxu0 0.0
    %5821 = vmatpush1.msra.mxu0 0.0
    %5822 = vmatprep.subr.mxu0 0.0
    %5823 = vmatpush1.msra.mxu0 0.0
    %5824 = vmatprep.subr.mxu0 0.0
    %5825 = vmatpush1.msra.mxu0 0.0
    %5826 = vmatprep.subr.mxu0 0.0
    %5827 = vmatpush1.msra.mxu0 0.0
    %5828 = vmatprep.subr.mxu0 0.0
    %5829 = vmatpush1.msra.mxu0 0.0
    %5830 = vmatprep.subr.mxu0 0.0
    %5831 = vmatpush1.msra.mxu0 0.0
    %5832 = vmatprep.subr.mxu0 0.0
    %5833 = vmatpush1.msra.mxu0 0.0
    %5834 = vmatprep.subr.mxu0 0.0
    %5835 = vmatpush1.msra.mxu0 0.0
    %5836 = vmatprep.subr.mxu0 0.0
    %5837 = vmatpush1.msra.mxu0 0.0
    %5838 = vmatprep.subr.mxu0 0.0
    %5839 = vmatpush1.msra.mxu0 0.0
    %5840 = vmatprep.subr.mxu0 0.0
    %5841 = vmatpush1.msra.mxu0 0.0
    %5842 = vmatprep.subr.mxu0 0.0
    %5843 = vmatpush1.msra.mxu0 0.0
    %5844 = vmatprep.subr.mxu0 0.0
    %5845 = vmatpush1.msra.mxu0 0.0
    %5846 = vmatprep.subr.mxu0 0.0
    %5847 = vmatpush1.msra.mxu0 0.0
    %5848 = vmatprep.subr.mxu0 0.0
    %5849 = vmatpush1.msra.mxu0 0.0
    %5850 = vmatprep.subr.mxu0 0.0
    %5851 = vmatpush1.msra.mxu0 0.0
    %5852 = vmatprep.subr.mxu0 0.0
    %5853 = vmatpush1.msra.mxu0 0.0
    %5854 = vmatprep.subr.mxu0 0.0
    %5855 = vmatpush1.msra.mxu0 0.0
    %5856 = vmatprep.subr.mxu0 0.0
    %5857 = vmatpush1.msra.mxu0 0.0
    %5858 = vmatprep.subr.mxu0 0.0
    %5859 = vmatpush1.msra.mxu0 0.0
    %5860 = vmatprep.subr.mxu0 0.0
    %5861 = vmatpush1.msra.mxu0 0.0
    %5862 = vmatprep.subr.mxu0 0.0
    %5863 = vmatpush1.msra.mxu0 0.0
    %5864 = vmatprep.subr.mxu0 0.0
    %5865 = vmatpush1.msra.mxu0 0.0
    %5866 = vmatprep.subr.mxu0 0.0
    %5867 = vmatpush1.msra.mxu0 0.0
    %5868 = vmatprep.mubr.f32.mxu0 0.0
    %5869 = vmatmul.mubr.f32.gmra.mrb[0].mxu0 %v5802
    %v5870 = vpop.f32.mrb[0].mxu0
    %v5871 = vadd.f32 0.0, %v5870
    %v5872 = vpop.f32.mrb[0].mxu0
    %5873 = vdwg.mxu0
    %5874 = vmatprep.subr.mxu0 0.0
    %5875 = vmatpush1.msra.mxu0 %v5795
    %5876 = vmatprep.subr.mxu0 0.0
    %5877 = vmatpush1.msra.mxu0 %v5797
    %5878 = vmatprep.subr.mxu0 0.0
    %5879 = vmatpush1.msra.mxu0 0.0
    %5880 = vmatprep.subr.mxu0 0.0
    %5881 = vmatpush1.msra.mxu0 0.0
    %5882 = vmatprep.subr.mxu0 0.0
    %5883 = vmatpush1.msra.mxu0 0.0
    %5884 = vmatprep.subr.mxu0 0.0
    %5885 = vmatpush1.msra.mxu0 0.0
    %5886 = vmatprep.subr.mxu0 0.0
    %5887 = vmatpush1.msra.mxu0 0.0
    %5888 = vmatprep.subr.mxu0 0.0
    %5889 = vmatpush1.msra.mxu0 0.0
    %5890 = vmatprep.subr.mxu0 0.0
    %5891 = vmatpush1.msra.mxu0 0.0
    %5892 = vmatprep.subr.mxu0 0.0
    %5893 = vmatpush1.msra.mxu0 0.0
    %5894 = vmatprep.subr.mxu0 0.0
    %5895 = vmatpush1.msra.mxu0 0.0
    %5896 = vmatprep.subr.mxu0 0.0
    %5897 = vmatpush1.msra.mxu0 0.0
    %5898 = vmatprep.subr.mxu0 0.0
    %5899 = vmatpush1.msra.mxu0 0.0
    %5900 = vmatprep.subr.mxu0 0.0
    %5901 = vmatpush1.msra.mxu0 0.0
    %5902 = vmatprep.subr.mxu0 0.0
    %5903 = vmatpush1.msra.mxu0 0.0
    %5904 = vmatprep.subr.mxu0 0.0
    %5905 = vmatpush1.msra.mxu0 0.0
    %5906 = vmatprep.subr.mxu0 0.0
    %5907 = vmatpush1.msra.mxu0 0.0
    %5908 = vmatprep.subr.mxu0 0.0
    %5909 = vmatpush1.msra.mxu0 0.0
    %5910 = vmatprep.subr.mxu0 0.0
    %5911 = vmatpush1.msra.mxu0 0.0
    %5912 = vmatprep.subr.mxu0 0.0
    %5913 = vmatpush1.msra.mxu0 0.0
    %5914 = vmatprep.subr.mxu0 0.0
    %5915 = vmatpush1.msra.mxu0 0.0
    %5916 = vmatprep.subr.mxu0 0.0
    %5917 = vmatpush1.msra.mxu0 0.0
    %5918 = vmatprep.subr.mxu0 0.0
    %5919 = vmatpush1.msra.mxu0 0.0
    %5920 = vmatprep.subr.mxu0 0.0
    %5921 = vmatpush1.msra.mxu0 0.0
    %5922 = vmatprep.subr.mxu0 0.0
    %5923 = vmatpush1.msra.mxu0 0.0
    %5924 = vmatprep.subr.mxu0 0.0
    %5925 = vmatpush1.msra.mxu0 0.0
    %5926 = vmatprep.subr.mxu0 0.0
    %5927 = vmatpush1.msra.mxu0 0.0
    %5928 = vmatprep.subr.mxu0 0.0
    %5929 = vmatpush1.msra.mxu0 0.0
    %5930 = vmatprep.subr.mxu0 0.0
    %5931 = vmatpush1.msra.mxu0 0.0
    %5932 = vmatprep.subr.mxu0 0.0
    %5933 = vmatpush1.msra.mxu0 0.0
    %5934 = vmatprep.subr.mxu0 0.0
    %5935 = vmatpush1.msra.mxu0 0.0
    %5936 = vmatprep.subr.mxu0 0.0
    %5937 = vmatpush1.msra.mxu0 0.0
    %5938 = vmatprep.mubr.f32.mxu0 0.0
    %5939 = vmatmul.mubr.f32.gmra.mrb[0].mxu0 %v5802
    %v5940 = vpop.f32.mrb[0].mxu0
    %v5941 = vadd.f32 0.0, %v5940
    %v5942 = vpop.f32.mrb[0].mxu0
    %5943 = vdwg.mxu0
    %v5944 = vrcp.pop %v5941
    %v5945 = vmul.f32 %v5871, %v5944
    %vm5946 = vcmask 123904
    %5947 = vst.msk [vmem:[#allocation2] sm:$0x3] %vm5946, %v5945
    // Predicated region
    $region14: #{_fwd.1} parent=1 // pred_check
      _
    $region15: #{_fwd.1} parent=1 // pred_check_branch
      %5949 = sbr.rel (0) target = $region17
    $region16: #{_fwd.1} parent=1 // pred_region
      %s5951 = ssub.s32 32, 32
      %5952 = vsyncadd [#allocation3], %s5951
      %s5954 = sshll.u32 [#allocation2], 4
      %s5955 = int_to_ptr.vmem [resolvable:$true] %s5954
      %5957 = dma.vmem_to_hbm [thread:$0]  %s5955, 32, %s3, [#allocation3]
    $region17: #{_fwd.1} parent=1 // pred_fallthru
      _
    // Predicated region
    $region18: #{_fwd.1} parent=1 // pred_check
      _
    $region19: #{_fwd.1} parent=1 // pred_check_branch
      %5959 = sbr.rel (0) target = $region21
    $region20: #{_fwd.1} parent=1 // pred_region
      %5960 = dma.done [#allocation3], 32
    $region21: #{_fwd.1} parent=1 // pred_fallthru
      _
    %5961 = vsyncpa [#allocation3], 1

</llo_original>
